<compile_context>
chip_gen: v7x
topology: tpu7x:2x2x1
jax: 0.10.0
libtpu: 0.0.40
codegen_flags: <defaults>
</compile_context>

<pallas_src>
import functools
import math

import jax
import jax.numpy as jnp
from jax.experimental import pallas as pl
from jax.experimental.pallas import tpu as pltpu


_VMEM_LIMIT = 48 * 1024 * 1024   # < v7x physical (64 MiB); plenty on v5e/v6e


def _mosaic(*sem):
    return pltpu.CompilerParams(dimension_semantics=sem,
                                vmem_limit_bytes=_VMEM_LIMIT)


# ----------------------------- tiling helpers -------------------------------

def _pick_tile(n, unit, cap):
    """Tile <= cap: full dim if it fits, else the largest dividing multiple of
    `unit`, else `cap` itself (partial last block handled by the cdiv grid with
    masked stores — never falls back to the full dimension)."""
    if n <= cap:
        return n
    t = (cap // unit) * unit
    while t >= unit:
        if n % t == 0:
            return t
        t -= unit
    return (cap // unit) * unit


def _pick_tm(m, cap):
    """Row tile: prefer >=2 blocks along M so both v7x TensorCores get work."""
    if m <= 8:
        return m
    half = max(8, (m // 2) // 8 * 8)
    return _pick_tile(m, 8, min(cap, half))


# --------------------------- tiled linear (x@w+b) ---------------------------

def _linear_kernel(x_ref, w_ref, b_ref, o_ref):
    acc = jnp.dot(x_ref[...], w_ref[...], preferred_element_type=jnp.float32)
    o_ref[...] = (acc + b_ref[...]).astype(o_ref.dtype)


def linear(x, w, b, *, out_dtype=jnp.bfloat16, tm_cap=256, tn_cap=1024):
    """y = x @ w + b, tiled over (M, N); K kept whole (weight streaming)."""
    lead = x.shape[:-1]
    K = x.shape[-1]
    N = w.shape[-1]
    x2 = x.reshape(-1, K).astype(jnp.bfloat16)
    M = x2.shape[0]
    tm = _pick_tm(M, tm_cap)
    tn = _pick_tile(N, 128, tn_cap)
    out = pl.pallas_call(
        _linear_kernel,
        out_shape=jax.ShapeDtypeStruct((M, N), out_dtype),
        grid=(pl.cdiv(M, tm), pl.cdiv(N, tn)),
        in_specs=[pl.BlockSpec((tm, K), lambda i, j: (i, 0)),
                  pl.BlockSpec((K, tn), lambda i, j: (0, j)),
                  pl.BlockSpec((1, tn), lambda i, j: (0, j))],
        out_specs=pl.BlockSpec((tm, tn), lambda i, j: (i, j)),
        compiler_params=_mosaic("parallel", "parallel"),
    )(x2, w.astype(jnp.bfloat16), b.reshape(1, N).astype(jnp.float32))
    return out.reshape(*lead, N)


# ------------------------------- LayerNorm ----------------------------------

def _ln_kernel(x_ref, g_ref, b_ref, o_ref, *, eps):
    x = x_ref[...].astype(jnp.float32)
    mean = jnp.mean(x, axis=-1, keepdims=True)
    var = jnp.mean(jnp.square(x - mean), axis=-1, keepdims=True)
    o_ref[...] = ((x - mean) * jax.lax.rsqrt(var + eps) * g_ref[...]
                  + b_ref[...]).astype(o_ref.dtype)


def layernorm(x, g, b, eps, *, out_dtype=jnp.float32):
    lead = x.shape[:-1]
    D = x.shape[-1]
    x2 = x.reshape(-1, D)
    M = x2.shape[0]
    tm = _pick_tm(M, 256)
    out = pl.pallas_call(
        functools.partial(_ln_kernel, eps=eps),
        out_shape=jax.ShapeDtypeStruct((M, D), out_dtype),
        grid=(pl.cdiv(M, tm),),
        in_specs=[pl.BlockSpec((tm, D), lambda i: (i, 0)),
                  pl.BlockSpec((1, D), lambda i: (0, 0)),
                  pl.BlockSpec((1, D), lambda i: (0, 0))],
        out_specs=pl.BlockSpec((tm, D), lambda i: (i, 0)),
        compiler_params=_mosaic("parallel"),
    )(x2, g.reshape(1, D).astype(jnp.float32),
      b.reshape(1, D).astype(jnp.float32))
    return out.reshape(*lead, D)


# ------------------ fused self-attention block (one kernel) -----------------
# QKV proj -> per-head attention -> out proj -> +residual -> LayerNorm.
# Attention scale is pre-folded into the Q weight columns.

def _self_block_kernel(hid_ref, qkvw_ref, qkvb_ref, ow_ref, ob_ref, g_ref,
                       be_ref, o_ref, qkv_s, ctx_s, *, nh, dh, eps):
    x = hid_ref[0].astype(jnp.float32)                       # (Lq, H) f32 residual
    qkv = jnp.dot(x.astype(jnp.bfloat16), qkvw_ref[...],
                  preferred_element_type=jnp.float32) + qkvb_ref[...]
    qkv_s[...] = qkv.astype(jnp.bfloat16)                    # stage once in VMEM
    hd = nh * dh
    for h in range(nh):
        q = qkv_s[:, h * dh:(h + 1) * dh]
        k = qkv_s[:, hd + h * dh: hd + (h + 1) * dh]
        v = qkv_s[:, 2 * hd + h * dh: 2 * hd + (h + 1) * dh]
        s = jax.lax.dot_general(q, k, (((1,), (1,)), ((), ())),
                                preferred_element_type=jnp.float32)
        m = jnp.max(s, axis=-1, keepdims=True)
        p = jnp.exp(s - m)
        l = jnp.sum(p, axis=-1, keepdims=True)
        ctx = jnp.dot(p.astype(jnp.bfloat16), v,
                      preferred_element_type=jnp.float32)
        # per-head result goes straight to scratch: one live ctx tile, no concat
        ctx_s[:, h * dh:(h + 1) * dh] = (
            ctx * pl.reciprocal(l, approx=True)).astype(jnp.bfloat16)
    out = jnp.dot(ctx_s[...], ow_ref[...], preferred_element_type=jnp.float32)
    out = out + ob_ref[...] + x                              # BertSelfOutput residual
    mean = jnp.mean(out, axis=-1, keepdims=True)
    var = jnp.mean(jnp.square(out - mean), axis=-1, keepdims=True)
    out = (out - mean) * jax.lax.rsqrt(var + eps)
    o_ref[0] = (out * g_ref[...] + be_ref[...]).astype(o_ref.dtype)


def self_attention_block(hid, p, *, nh):
    B, Lq, H = hid.shape
    dh = H // nh
    return pl.pallas_call(
        functools.partial(_self_block_kernel, nh=nh, dh=dh, eps=1e-12),
        out_shape=jax.ShapeDtypeStruct((B, Lq, H), jnp.float32),
        grid=(B,),
        in_specs=[pl.BlockSpec((1, Lq, H), lambda b: (b, 0, 0)),
                  pl.BlockSpec((H, 3 * H), lambda b: (0, 0)),
                  pl.BlockSpec((1, 3 * H), lambda b: (0, 0)),
                  pl.BlockSpec((H, H), lambda b: (0, 0)),
                  pl.BlockSpec((1, H), lambda b: (0, 0)),
                  pl.BlockSpec((1, H), lambda b: (0, 0)),
                  pl.BlockSpec((1, H), lambda b: (0, 0))],
        out_specs=pl.BlockSpec((1, Lq, H), lambda b: (b, 0, 0)),
        scratch_shapes=[pltpu.VMEM((Lq, 3 * H), jnp.bfloat16),
                        pltpu.VMEM((Lq, H), jnp.bfloat16)],
        compiler_params=_mosaic("parallel"),
    )(hid.astype(jnp.float32),
      p["qkv_w"].astype(jnp.bfloat16),
      p["qkv_b"].reshape(1, -1).astype(jnp.float32),
      p["o_w"].astype(jnp.bfloat16),
      p["o_b"].reshape(1, -1).astype(jnp.float32),
      p["ln_w"].reshape(1, -1).astype(jnp.float32),
      p["ln_b"].reshape(1, -1).astype(jnp.float32))


# ------------------ fused cross-attention block (one kernel) ----------------
# Q proj -> per-head cross attention against precomputed packed K|V ->
# out proj -> +residual -> LayerNorm.
# TODO(synk): for very long encoder sequences add an Lk grid axis with
# online-softmax (flash-style) accumulation; full Lk per block is fine here.

def _cross_block_kernel(hid_ref, qw_ref, qb_ref, kv_ref, bias_ref, ow_ref,
                        ob_ref, g_ref, be_ref, o_ref, q_s, ctx_s, *, nh, dh, eps):
    x = hid_ref[0].astype(jnp.float32)                       # (Lq, H) f32 residual
    q = jnp.dot(x.astype(jnp.bfloat16), qw_ref[...],
                preferred_element_type=jnp.float32) + qb_ref[...]
    q_s[...] = q.astype(jnp.bfloat16)
    bias = bias_ref[0]                                       # (1, Lk) additive mask
    hd = nh * dh
    for h in range(nh):
        qh = q_s[:, h * dh:(h + 1) * dh]
        kh = kv_ref[0, :, h * dh:(h + 1) * dh]
        vh = kv_ref[0, :, hd + h * dh: hd + (h + 1) * dh]
        s = jax.lax.dot_general(qh, kh, (((1,), (1,)), ((), ())),
                                preferred_element_type=jnp.float32) + bias
        m = jnp.max(s, axis=-1, keepdims=True)
        p = jnp.exp(s - m)
        l = jnp.sum(p, axis=-1, keepdims=True)
        ctx = jnp.dot(p.astype(jnp.bfloat16), vh,
                      preferred_element_type=jnp.float32)
        ctx_s[:, h * dh:(h + 1) * dh] = (
            ctx * pl.reciprocal(l, approx=True)).astype(jnp.bfloat16)
    out = jnp.dot(ctx_s[...], ow_ref[...], preferred_element_type=jnp.float32)
    out = out + ob_ref[...] + x
    mean = jnp.mean(out, axis=-1, keepdims=True)
    var = jnp.mean(jnp.square(out - mean), axis=-1, keepdims=True)
    out = (out - mean) * jax.lax.rsqrt(var + eps)
    o_ref[0] = (out * g_ref[...] + be_ref[...]).astype(o_ref.dtype)


def cross_attention_block(hid, kv, enc_bias, p, *, nh):
    B, Lq, H = hid.shape
    Lk = kv.shape[1]
    dh = H // nh
    return pl.pallas_call(
        functools.partial(_cross_block_kernel, nh=nh, dh=dh, eps=1e-12),
        out_shape=jax.ShapeDtypeStruct((B, Lq, H), jnp.float32),
        grid=(B,),
        in_specs=[pl.BlockSpec((1, Lq, H), lambda b: (b, 0, 0)),
                  pl.BlockSpec((H, H), lambda b: (0, 0)),
                  pl.BlockSpec((1, H), lambda b: (0, 0)),
                  pl.BlockSpec((1, Lk, 2 * H), lambda b: (b, 0, 0)),
                  pl.BlockSpec((1, 1, Lk), lambda b: (b, 0, 0)),
                  pl.BlockSpec((H, H), lambda b: (0, 0)),
                  pl.BlockSpec((1, H), lambda b: (0, 0)),
                  pl.BlockSpec((1, H), lambda b: (0, 0)),
                  pl.BlockSpec((1, H), lambda b: (0, 0))],
        out_specs=pl.BlockSpec((1, Lq, H), lambda b: (b, 0, 0)),
        scratch_shapes=[pltpu.VMEM((Lq, H), jnp.bfloat16),
                        pltpu.VMEM((Lq, H), jnp.bfloat16)],
        compiler_params=_mosaic("parallel"),
    )(hid.astype(jnp.float32),
      p["q_w"].astype(jnp.bfloat16),
      p["q_b"].reshape(1, -1).astype(jnp.float32),
      kv.astype(jnp.bfloat16), enc_bias,
      p["o_w"].astype(jnp.bfloat16),
      p["o_b"].reshape(1, -1).astype(jnp.float32),
      p["ln_w"].reshape(1, -1).astype(jnp.float32),
      p["ln_b"].reshape(1, -1).astype(jnp.float32))


# --------------------- fused FFN block (one kernel) -------------------------
# FFN1 + GELU -> FFN2 -> +residual -> LayerNorm.

def _ffn_block_kernel(x_ref, w1_ref, b1_ref, w2_ref, b2_ref, g_ref, be_ref,
                      o_ref, h_s, *, eps):
    x = x_ref[...].astype(jnp.float32)                       # (tm, H) f32 residual
    h = jnp.dot(x.astype(jnp.bfloat16), w1_ref[...],
                preferred_element_type=jnp.float32) + b1_ref[...]
    # TODO(synk): HF Q-Former uses exact-erf GELU; tanh approximation is used so
    # the transcendental lowers cleanly onto the EUP (small systematic delta).
    h = jax.nn.gelu(h, approximate=True)
    h_s[...] = h.astype(jnp.bfloat16)
    out = jnp.dot(h_s[...], w2_ref[...], preferred_element_type=jnp.float32)
    out = out + b2_ref[...] + x
    mean = jnp.mean(out, axis=-1, keepdims=True)
    var = jnp.mean(jnp.square(out - mean), axis=-1, keepdims=True)
    out = (out - mean) * jax.lax.rsqrt(var + eps)
    o_ref[...] = (out * g_ref[...] + be_ref[...]).astype(o_ref.dtype)


def ffn_block(hid, p):
    B, Lq, H = hid.shape
    inter = p["i_w"].shape[-1]
    x2 = hid.reshape(-1, H).astype(jnp.float32)
    M = x2.shape[0]
    tm = _pick_tm(M, 128)
    out = pl.pallas_call(
        functools.partial(_ffn_block_kernel, eps=1e-12),
        out_shape=jax.ShapeDtypeStruct((M, H), jnp.float32),
        grid=(pl.cdiv(M, tm),),
        in_specs=[pl.BlockSpec((tm, H), lambda i: (i, 0)),
                  pl.BlockSpec((H, inter), lambda i: (0, 0)),
                  pl.BlockSpec((1, inter), lambda i: (0, 0)),
                  pl.BlockSpec((inter, H), lambda i: (0, 0)),
                  pl.BlockSpec((1, H), lambda i: (0, 0)),
                  pl.BlockSpec((1, H), lambda i: (0, 0)),
                  pl.BlockSpec((1, H), lambda i: (0, 0))],
        out_specs=pl.BlockSpec((tm, H), lambda i: (i, 0)),
        scratch_shapes=[pltpu.VMEM((tm, inter), jnp.bfloat16)],
        compiler_params=_mosaic("parallel"),
    )(x2,
      p["i_w"].astype(jnp.bfloat16), p["i_b"].reshape(1, -1).astype(jnp.float32),
      p["o_w"].astype(jnp.bfloat16), p["o_b"].reshape(1, -1).astype(jnp.float32),
      p["ln_w"].reshape(1, -1).astype(jnp.float32),
      p["ln_b"].reshape(1, -1).astype(jnp.float32))
    return out.reshape(B, Lq, H)


# --------------------------- model composition ------------------------------

def encoder_projector_qformer(params, x, atts, *, nh):
    """Forward pass of EncoderProjectorQFormer (eval mode, dropout = identity)."""
    B = x.shape[0]
    query = params["query"]                                  # (1, Lq, H)
    Lq, H = query.shape[1], query.shape[2]

    # Batch-invariant prefix: until the first cross-attention, hid is an exact
    # broadcast of the same (1, Lq, H) tensor — compute it once at B=1.
    hid = layernorm(query, params["emb_ln_w"], params["emb_ln_b"], 1e-12)

    # Self-attn mask over queries is all-ones -> zero bias -> skipped entirely.
    # Encoder mask: (1 - mask) * (-1e30)  (large finite, avoids -inf/NaN).
    enc_bias = ((1.0 - atts.astype(jnp.float32)) * (-1e30)).reshape(B, 1, -1)
    x_bf = x.astype(jnp.bfloat16)

    for lp in params["layers"]:
        hid = self_attention_block(hid, lp["self"], nh=nh)
        if "cross" in lp:
            if hid.shape[0] != B:
                hid = jnp.broadcast_to(hid, (B, Lq, H))
            kv = linear(x_bf, lp["cross"]["kv_w"], lp["cross"]["kv_b"])  # packed K|V
            hid = cross_attention_block(hid, kv, enc_bias, lp["cross"], nh=nh)
        hid = ffn_block(hid, lp["ffn"])

    if hid.shape[0] != B:
        hid = jnp.broadcast_to(hid, (B, Lq, H))

    # Final projection (N-tiled) + separate LayerNorm: keeps the per-call VMEM
    # working set small even for large llm_dim (important on v7x's 64 MiB).
    proj = linear(hid, params["lin_w"], params["lin_b"], out_dtype=jnp.float32)
    return layernorm(proj, params["norm_w"], params["norm_b"], 1e-5,
                     out_dtype=jnp.float32)


# ------------------------------ parameters ----------------------------------

def init_params(key, *, encoder_dim, llm_dim, hidden, nh, intermediate,
                query_len, num_layers=2, cross_freq=2):
    keys = iter(jax.random.split(key, 64))
    dh = hidden // nh
    scale = 1.0 / math.sqrt(dh)   # folded into Q weights (and would fold into Q bias
                                  # when porting real checkpoints — biases are 0 here)

    def w(din, dout, std=0.02):
        return std * jax.random.normal(next(keys), (din, dout), jnp.float32)

    def ln_p(d):
        return jnp.ones((d,), jnp.float32), jnp.zeros((d,), jnp.float32)

    params = {"query": jax.random.normal(next(keys), (1, query_len, hidden),
                                         jnp.float32)}
    params["emb_ln_w"], params["emb_ln_b"] = ln_p(hidden)

    layers = []
    for i in range(num_layers):
        qw, kw, vw = w(hidden, hidden), w(hidden, hidden), w(hidden, hidden)
        self_p = dict(
            qkv_w=jnp.concatenate([qw * scale, kw, vw], 1).astype(jnp.bfloat16),
            qkv_b=jnp.zeros((3 * hidden,), jnp.float32),
            o_w=w(hidden, hidden).astype(jnp.bfloat16),
            o_b=jnp.zeros((hidden,), jnp.float32))
        self_p["ln_w"], self_p["ln_b"] = ln_p(hidden)
        lp = {"self": self_p}
        if i % cross_freq == 0:
            cross_p = dict(
                q_w=(w(hidden, hidden) * scale).astype(jnp.bfloat16),
                q_b=jnp.zeros((hidden,), jnp.float32),
                kv_w=jnp.concatenate([w(encoder_dim, hidden),
                                      w(encoder_dim, hidden)], 1).astype(jnp.bfloat16),
                kv_b=jnp.zeros((2 * hidden,), jnp.float32),
                o_w=w(hidden, hidden).astype(jnp.bfloat16),
                o_b=jnp.zeros((hidden,), jnp.float32))
            cross_p["ln_w"], cross_p["ln_b"] = ln_p(hidden)
            lp["cross"] = cross_p
        ffn_p = dict(
            i_w=w(hidden, intermediate).astype(jnp.bfloat16),
            i_b=jnp.zeros((intermediate,), jnp.float32),
            o_w=w(intermediate, hidden).astype(jnp.bfloat16),
            o_b=jnp.zeros((hidden,), jnp.float32))
        ffn_p["ln_w"], ffn_p["ln_b"] = ln_p(hidden)
        lp["ffn"] = ffn_p
        layers.append(lp)
    params["layers"] = layers

    params["lin_w"] = w(hidden, llm_dim).astype(jnp.bfloat16)
    params["lin_b"] = jnp.zeros((llm_dim,), jnp.float32)
    params["norm_w"], params["norm_b"] = ln_p(llm_dim)
    return params


# --------------------------------- main --------------------------------------

if __name__ == "__main__":
    # Small shapes consistent with the module (query_len is fixed at 64 in it).
    B, S_ENC, ENC_DIM = 2, 8, 32          # encoder features x: (B, S, encoder_dim)
    HIDDEN, N_HEADS, INTER = 64, 4, 128   # scaled-down Blip2QFormerConfig
    LLM_DIM = 128
    Q_LEN = 64

    key = jax.random.PRNGKey(0)
    kx, kp = jax.random.split(key, 2)
    x = jax.random.normal(kx, (B, S_ENC, ENC_DIM), jnp.float32)
    atts = jnp.ones((B, S_ENC), jnp.int32)

    params = init_params(kp, encoder_dim=ENC_DIM, llm_dim=LLM_DIM,
                         hidden=HIDDEN, nh=N_HEADS, intermediate=INTER,
                         query_len=Q_LEN)

    fwd = jax.jit(functools.partial(encoder_projector_qformer, nh=N_HEADS))
    out = jax.block_until_ready(fwd(params, x, atts))
    assert out.shape == (B, Q_LEN, LLM_DIM), out.shape
    assert bool(jnp.all(jnp.isfinite(out)))
    print("KERNEL_OK")
</pallas_src>

<mosaic_0001>
module attributes {stable_mosaic.version = 11 : i64} {
  func.func @_linear_kernel(%arg0: i32, %arg1: i32, %arg2: memref<8x32xbf16, #tpu.memory_space<vmem>>, %arg3: memref<32x128xbf16, #tpu.memory_space<vmem>>, %arg4: memref<1x128xf32, #tpu.memory_space<vmem>>, %arg5: memref<8x128xbf16, #tpu.memory_space<vmem>>) attributes {dimension_semantics = [#tpu.dimension_semantics<parallel>, #tpu.dimension_semantics<parallel>], iteration_bounds = array<i64: 2, 1>, scalar_prefetch = 0 : i64, scratch_operands = 0 : i64, tpu.core_type = #tpu.core_type<tc>, window_params = [{transform_indices = @transform_0, window_bounds = array<i64: 8, 32>}, {transform_indices = @transform_1, window_bounds = array<i64: 32, 128>}, {transform_indices = @transform_2, window_bounds = array<i64: 1, 128>}, {transform_indices = @transform_3, window_bounds = array<i64: 8, 128>}]} {
    %c0 = arith.constant 0 : index
    %c0_0 = arith.constant 0 : index
    %0 = vector.load %arg2[%c0, %c0_0] : memref<8x32xbf16, #tpu.memory_space<vmem>>, vector<8x32xbf16>
    %c0_1 = arith.constant 0 : index
    %c0_2 = arith.constant 0 : index
    %1 = vector.load %arg3[%c0_1, %c0_2] : memref<32x128xbf16, #tpu.memory_space<vmem>>, vector<32x128xbf16>
    %cst = arith.constant dense<0.000000e+00> : vector<8x128xf32>
    %2 = tpu.matmul %0, %1, %cst {dimension_numbers = #tpu.dot_dimension_numbers<[1], [0], [0], [1], [0, 0, 1, 1], [], []>} : vector<8x32xbf16>, vector<32x128xbf16>, vector<8x128xf32> -> vector<8x128xf32>
    %c0_3 = arith.constant 0 : index
    %c0_4 = arith.constant 0 : index
    %3 = vector.load %arg4[%c0_3, %c0_4] : memref<1x128xf32, #tpu.memory_space<vmem>>, vector<1x128xf32>
    %4 = vector.broadcast %3 : vector<1x128xf32> to vector<8x128xf32>
    %5 = arith.addf %2, %4 : vector<8x128xf32>
    %6 = arith.truncf %5 : vector<8x128xf32> to vector<8x128xbf16>
    %c0_5 = arith.constant 0 : index
    %c0_6 = arith.constant 0 : index
    %7 = vector.load %arg5[%c0_5, %c0_6] : memref<8x128xbf16, #tpu.memory_space<vmem>>, vector<8x128xbf16>
    tpu.vector_store %arg5[%c0_5, %c0_6], %6 {strides = array<i32>} : memref<8x128xbf16, #tpu.memory_space<vmem>>, vector<8x128xbf16>,
    return
  }
  func.func @transform_0(%arg0: i32, %arg1: i32) -> (i32, i32) {
    %c0_i32 = arith.constant 0 : i32
    %c0_i32_0 = arith.constant 0 : i32
    return %arg0, %c0_i32 : i32, i32
  }
  func.func @transform_1(%arg0: i32, %arg1: i32) -> (i32, i32) {
    %c0_i32 = arith.constant 0 : i32
    %c0_i32_0 = arith.constant 0 : i32
    return %c0_i32, %arg1 : i32, i32
  }
  func.func @transform_2(%arg0: i32, %arg1: i32) -> (i32, i32) {
    %c0_i32 = arith.constant 0 : i32
    %c0_i32_0 = arith.constant 0 : i32
    return %c0_i32, %arg1 : i32, i32
  }
  func.func @transform_3(%arg0: i32, %arg1: i32) -> (i32, i32) {
    %c0_i32 = arith.constant 0 : i32
    return %arg0, %arg1 : i32, i32
  }
}

module attributes {stable_mosaic.version = 11 : i64} {
  func.func @_ln_kernel(%arg0: i32, %arg1: memref<32x64xf32, #tpu.memory_space<vmem>>, %arg2: memref<1x64xf32, #tpu.memory_space<vmem>>, %arg3: memref<1x64xf32, #tpu.memory_space<vmem>>, %arg4: memref<32x64xf32, #tpu.memory_space<vmem>>) attributes {dimension_semantics = [#tpu.dimension_semantics<parallel>], iteration_bounds = array<i64: 2>, scalar_prefetch = 0 : i64, scratch_operands = 0 : i64, tpu.core_type = #tpu.core_type<tc>, window_params = [{transform_indices = @transform_0, window_bounds = array<i64: 32, 64>}, {pipeline_mode = #tpu.pipeline_mode<synchronous>, transform_indices = @transform_1, window_bounds = array<i64: 1, 64>}, {pipeline_mode = #tpu.pipeline_mode<synchronous>, transform_indices = @transform_2, window_bounds = array<i64: 1, 64>}, {transform_indices = @transform_3, window_bounds = array<i64: 32, 64>}]} {
    %c0 = arith.constant 0 : index
    %c0_0 = arith.constant 0 : index
    %0 = vector.load %arg1[%c0, %c0_0] : memref<32x64xf32, #tpu.memory_space<vmem>>, vector<32x64xf32>
    %cst = arith.constant dense<0.000000e+00> : vector<32xf32>
    %1 = vector.multi_reduction <add>, %0, %cst [1] : vector<32x64xf32> to vector<32xf32>
    %2 = vector.shape_cast %1 : vector<32xf32> to vector<32x1xf32>
    %cst_1 = arith.constant 6.400000e+01 : f32
    %3 = vector.broadcast %cst_1 : f32 to vector<32x1xf32>
    %4 = arith.divf %2, %3 : vector<32x1xf32>
    %5 = vector.broadcast %4 : vector<32x1xf32> to vector<32x64xf32>
    %6 = arith.subf %0, %5 : vector<32x64xf32>
    %7 = arith.mulf %6, %6 : vector<32x64xf32>
    %cst_2 = arith.constant dense<0.000000e+00> : vector<32xf32>
    %8 = vector.multi_reduction <add>, %7, %cst_2 [1] : vector<32x64xf32> to vector<32xf32>
    %9 = vector.shape_cast %8 : vector<32xf32> to vector<32x1xf32>
    %cst_3 = arith.constant 6.400000e+01 : f32
    %10 = vector.broadcast %cst_3 : f32 to vector<32x1xf32>
    %11 = arith.divf %9, %10 : vector<32x1xf32>
    %12 = vector.broadcast %4 : vector<32x1xf32> to vector<32x64xf32>
    %13 = arith.subf %0, %12 : vector<32x64xf32>
    %cst_4 = arith.constant 9.99999996E-13 : f32
    %14 = vector.broadcast %cst_4 : f32 to vector<32x1xf32>
    %15 = arith.addf %11, %14 : vector<32x1xf32>
    %16 = math.rsqrt %15 : vector<32x1xf32>
    %17 = vector.broadcast %16 : vector<32x1xf32> to vector<32x64xf32>
    %18 = arith.mulf %13, %17 : vector<32x64xf32>
    %c0_5 = arith.constant 0 : index
    %c0_6 = arith.constant 0 : index
    %19 = vector.load %arg2[%c0_5, %c0_6] : memref<1x64xf32, #tpu.memory_space<vmem>>, vector<1x64xf32>
    %20 = vector.broadcast %19 : vector<1x64xf32> to vector<32x64xf32>
    %21 = arith.mulf %18, %20 : vector<32x64xf32>
    %c0_7 = arith.constant 0 : index
    %c0_8 = arith.constant 0 : index
    %22 = vector.load %arg3[%c0_7, %c0_8] : memref<1x64xf32, #tpu.memory_space<vmem>>, vector<1x64xf32>
    %23 = vector.broadcast %22 : vector<1x64xf32> to vector<32x64xf32>
    %24 = arith.addf %21, %23 : vector<32x64xf32>
    %c0_9 = arith.constant 0 : index
    %c0_10 = arith.constant 0 : index
    %25 = vector.load %arg4[%c0_9, %c0_10] : memref<32x64xf32, #tpu.memory_space<vmem>>, vector<32x64xf32>
    tpu.vector_store %arg4[%c0_9, %c0_10], %24 {strides = array<i32>} : memref<32x64xf32, #tpu.memory_space<vmem>>, vector<32x64xf32>,
    return
  }
  func.func @transform_0(%arg0: i32) -> (i32, i32) {
    %c0_i32 = arith.constant 0 : i32
    %c0_i32_0 = arith.constant 0 : i32
    return %arg0, %c0_i32 : i32, i32
  }
  func.func @transform_1(%arg0: i32) -> (i32, i32) {
    %c0_i32 = arith.constant 0 : i32
    %c0_i32_0 = arith.constant 0 : i32
    %c0_i32_1 = arith.constant 0 : i32
    return %c0_i32, %c0_i32_0 : i32, i32
  }
  func.func @transform_2(%arg0: i32) -> (i32, i32) {
    %c0_i32 = arith.constant 0 : i32
    %c0_i32_0 = arith.constant 0 : i32
    %c0_i32_1 = arith.constant 0 : i32
    return %c0_i32, %c0_i32_0 : i32, i32
  }
  func.func @transform_3(%arg0: i32) -> (i32, i32) {
    %c0_i32 = arith.constant 0 : i32
    %c0_i32_0 = arith.constant 0 : i32
    return %arg0, %c0_i32 : i32, i32
  }
}

module attributes {stable_mosaic.version = 11 : i64} {
  func.func @_self_block_kernel(%arg0: i32, %arg1: memref<1x64x64xf32, #tpu.memory_space<vmem>>, %arg2: memref<64x192xbf16, #tpu.memory_space<vmem>>, %arg3: memref<1x192xf32, #tpu.memory_space<vmem>>, %arg4: memref<64x64xbf16, #tpu.memory_space<vmem>>, %arg5: memref<1x64xf32, #tpu.memory_space<vmem>>, %arg6: memref<1x64xf32, #tpu.memory_space<vmem>>, %arg7: memref<1x64xf32, #tpu.memory_space<vmem>>, %arg8: memref<1x64x64xf32, #tpu.memory_space<vmem>>, %arg9: memref<64x192xbf16, #tpu.memory_space<vmem>>, %arg10: memref<64x64xbf16, #tpu.memory_space<vmem>>) attributes {dimension_semantics = [#tpu.dimension_semantics<parallel>], iteration_bounds = array<i64: 1>, scalar_prefetch = 0 : i64, scratch_operands = 2 : i64, tpu.core_type = #tpu.core_type<tc>, window_params = [{transform_indices = @transform_0, window_bounds = array<i64: 1, 64, 64>}, {pipeline_mode = #tpu.pipeline_mode<synchronous>, transform_indices = @transform_1, window_bounds = array<i64: 64, 192>}, {pipeline_mode = #tpu.pipeline_mode<synchronous>, transform_indices = @transform_2, window_bounds = array<i64: 1, 192>}, {pipeline_mode = #tpu.pipeline_mode<synchronous>, transform_indices = @transform_3, window_bounds = array<i64: 64, 64>}, {pipeline_mode = #tpu.pipeline_mode<synchronous>, transform_indices = @transform_4, window_bounds = array<i64: 1, 64>}, {pipeline_mode = #tpu.pipeline_mode<synchronous>, transform_indices = @transform_5, window_bounds = array<i64: 1, 64>}, {pipeline_mode = #tpu.pipeline_mode<synchronous>, transform_indices = @transform_6, window_bounds = array<i64: 1, 64>}, {transform_indices = @transform_7, window_bounds = array<i64: 1, 64, 64>}]} {
    %c0 = arith.constant 0 : index
    %c0_0 = arith.constant 0 : index
    %c0_1 = arith.constant 0 : index
    %0 = vector.load %arg1[%c0, %c0_0, %c0_1] : memref<1x64x64xf32, #tpu.memory_space<vmem>>, vector<1x64x64xf32>
    %1 = vector.shape_cast %0 : vector<1x64x64xf32> to vector<64x64xf32>
    %2 = arith.truncf %1 : vector<64x64xf32> to vector<64x64xbf16>
    %c0_2 = arith.constant 0 : index
    %c0_3 = arith.constant 0 : index
    %3 = vector.load %arg2[%c0_2, %c0_3] : memref<64x192xbf16, #tpu.memory_space<vmem>>, vector<64x192xbf16>
    %cst = arith.constant dense<0.000000e+00> : vector<64x192xf32>
    %4 = tpu.matmul %2, %3, %cst {dimension_numbers = #tpu.dot_dimension_numbers<[1], [0], [0], [1], [0, 0, 1, 1], [], []>} : vector<64x64xbf16>, vector<64x192xbf16>, vector<64x192xf32> -> vector<64x192xf32>
    %c0_4 = arith.constant 0 : index
    %c0_5 = arith.constant 0 : index
    %5 = vector.load %arg3[%c0_4, %c0_5] : memref<1x192xf32, #tpu.memory_space<vmem>>, vector<1x192xf32>
    %6 = vector.broadcast %5 : vector<1x192xf32> to vector<64x192xf32>
    %7 = arith.addf %4, %6 : vector<64x192xf32>
    %8 = arith.truncf %7 : vector<64x192xf32> to vector<64x192xbf16>
    %c0_6 = arith.constant 0 : index
    %c0_7 = arith.constant 0 : index
    %9 = vector.load %arg9[%c0_6, %c0_7] : memref<64x192xbf16, #tpu.memory_space<vmem>>, vector<64x192xbf16>
    tpu.vector_store %arg9[%c0_6, %c0_7], %8 {strides = array<i32>} : memref<64x192xbf16, #tpu.memory_space<vmem>>, vector<64x192xbf16>,
    %c0_8 = arith.constant 0 : index
    %c0_9 = arith.constant 0 : index
    %10 = vector.load %arg9[%c0_8, %c0_9] : memref<64x192xbf16, #tpu.memory_space<vmem>>, vector<64x16xbf16>
    %c0_10 = arith.constant 0 : index
    %c64 = arith.constant 64 : index
    %11 = vector.load %arg9[%c0_10, %c64] : memref<64x192xbf16, #tpu.memory_space<vmem>>, vector<64x16xbf16>
    %c0_11 = arith.constant 0 : index
    %c128 = arith.constant 128 : index
    %12 = vector.load %arg9[%c0_11, %c128] : memref<64x192xbf16, #tpu.memory_space<vmem>>, vector<64x16xbf16>
    %cst_12 = arith.constant dense<0.000000e+00> : vector<64x64xf32>
    %13 = tpu.matmul %10, %11, %cst_12 {dimension_numbers = #tpu.dot_dimension_numbers<[1], [1], [0], [0], [0, 0, 1, 0], [], []>} : vector<64x16xbf16>, vector<64x16xbf16>, vector<64x64xf32> -> vector<64x64xf32>
    %cst_13 = arith.constant dense<0xFF800000> : vector<64xf32>
    %14 = vector.multi_reduction <maximumf>, %13, %cst_13 [1] : vector<64x64xf32> to vector<64xf32>
    %15 = vector.shape_cast %14 : vector<64xf32> to vector<64x1xf32>
    %16 = vector.broadcast %15 : vector<64x1xf32> to vector<64x64xf32>
    %17 = arith.subf %13, %16 : vector<64x64xf32>
    %18 = math.exp %17 : vector<64x64xf32>
    %cst_14 = arith.constant dense<0.000000e+00> : vector<64xf32>
    %19 = vector.multi_reduction <add>, %18, %cst_14 [1] : vector<64x64xf32> to vector<64xf32>
    %20 = vector.shape_cast %19 : vector<64xf32> to vector<64x1xf32>
    %21 = arith.truncf %18 : vector<64x64xf32> to vector<64x64xbf16>
    %cst_15 = arith.constant dense<0.000000e+00> : vector<64x16xf32>
    %22 = tpu.matmul %21, %12, %cst_15 {dimension_numbers = #tpu.dot_dimension_numbers<[1], [0], [0], [1], [0, 0, 1, 1], [], []>} : vector<64x64xbf16>, vector<64x16xbf16>, vector<64x16xf32> -> vector<64x16xf32>
    %23 = tpu.reciprocal %20 {approx = true} : vector<64x1xf32> -> vector<64x1xf32>
    %24 = vector.broadcast %23 : vector<64x1xf32> to vector<64x16xf32>
    %25 = arith.mulf %22, %24 : vector<64x16xf32>
    %26 = arith.truncf %25 : vector<64x16xf32> to vector<64x16xbf16>
    %c0_16 = arith.constant 0 : index
    %c0_17 = arith.constant 0 : index
    %27 = vector.load %arg10[%c0_16, %c0_17] : memref<64x64xbf16, #tpu.memory_space<vmem>>, vector<64x16xbf16>
    tpu.vector_store %arg10[%c0_16, %c0_17], %26 {strides = array<i32>} : memref<64x64xbf16, #tpu.memory_space<vmem>>, vector<64x16xbf16>,
    %c0_18 = arith.constant 0 : index
    %c16 = arith.constant 16 : index
    %28 = vector.load %arg9[%c0_18, %c16] : memref<64x192xbf16, #tpu.memory_space<vmem>>, vector<64x16xbf16>
    %c0_19 = arith.constant 0 : index
    %c80 = arith.constant 80 : index
    %29 = vector.load %arg9[%c0_19, %c80] : memref<64x192xbf16, #tpu.memory_space<vmem>>, vector<64x16xbf16>
    %c0_20 = arith.constant 0 : index
    %c144 = arith.constant 144 : index
    %30 = vector.load %arg9[%c0_20, %c144] : memref<64x192xbf16, #tpu.memory_space<vmem>>, vector<64x16xbf16>
    %cst_21 = arith.constant dense<0.000000e+00> : vector<64x64xf32>
    %31 = tpu.matmul %28, %29, %cst_21 {dimension_numbers = #tpu.dot_dimension_numbers<[1], [1], [0], [0], [0, 0, 1, 0], [], []>} : vector<64x16xbf16>, vector<64x16xbf16>, vector<64x64xf32> -> vector<64x64xf32>
    %cst_22 = arith.constant dense<0xFF800000> : vector<64xf32>
    %32 = vector.multi_reduction <maximumf>, %31, %cst_22 [1] : vector<64x64xf32> to vector<64xf32>
    %33 = vector.shape_cast %32 : vector<64xf32> to vector<64x1xf32>
    %34 = vector.broadcast %33 : vector<64x1xf32> to vector<64x64xf32>
    %35 = arith.subf %31, %34 : vector<64x64xf32>
    %36 = math.exp %35 : vector<64x64xf32>
    %cst_23 = arith.constant dense<0.000000e+00> : vector<64xf32>
    %37 = vector.multi_reduction <add>, %36, %cst_23 [1] : vector<64x64xf32> to vector<64xf32>
    %38 = vector.shape_cast %37 : vector<64xf32> to vector<64x1xf32>
    %39 = arith.truncf %36 : vector<64x64xf32> to vector<64x64xbf16>
    %cst_24 = arith.constant dense<0.000000e+00> : vector<64x16xf32>
    %40 = tpu.matmul %39, %30, %cst_24 {dimension_numbers = #tpu.dot_dimension_numbers<[1], [0], [0], [1], [0, 0, 1, 1], [], []>} : vector<64x64xbf16>, vector<64x16xbf16>, vector<64x16xf32> -> vector<64x16xf32>
    %41 = tpu.reciprocal %38 {approx = true} : vector<64x1xf32> -> vector<64x1xf32>
    %42 = vector.broadcast %41 : vector<64x1xf32> to vector<64x16xf32>
    %43 = arith.mulf %40, %42 : vector<64x16xf32>
    %44 = arith.truncf %43 : vector<64x16xf32> to vector<64x16xbf16>
    %c0_25 = arith.constant 0 : index
    %c16_26 = arith.constant 16 : index
    %45 = vector.load %arg10[%c0_25, %c16_26] : memref<64x64xbf16, #tpu.memory_space<vmem>>, vector<64x16xbf16>
    tpu.vector_store %arg10[%c0_25, %c16_26], %44 {strides = array<i32>} : memref<64x64xbf16, #tpu.memory_space<vmem>>, vector<64x16xbf16>,
    %c0_27 = arith.constant 0 : index
    %c32 = arith.constant 32 : index
    %46 = vector.load %arg9[%c0_27, %c32] : memref<64x192xbf16, #tpu.memory_space<vmem>>, vector<64x16xbf16>
    %c0_28 = arith.constant 0 : index
    %c96 = arith.constant 96 : index
    %47 = vector.load %arg9[%c0_28, %c96] : memref<64x192xbf16, #tpu.memory_space<vmem>>, vector<64x16xbf16>
    %c0_29 = arith.constant 0 : index
    %c160 = arith.constant 160 : index
    %48 = vector.load %arg9[%c0_29, %c160] : memref<64x192xbf16, #tpu.memory_space<vmem>>, vector<64x16xbf16>
    %cst_30 = arith.constant dense<0.000000e+00> : vector<64x64xf32>
    %49 = tpu.matmul %46, %47, %cst_30 {dimension_numbers = #tpu.dot_dimension_numbers<[1], [1], [0], [0], [0, 0, 1, 0], [], []>} : vector<64x16xbf16>, vector<64x16xbf16>, vector<64x64xf32> -> vector<64x64xf32>
    %cst_31 = arith.constant dense<0xFF800000> : vector<64xf32>
    %50 = vector.multi_reduction <maximumf>, %49, %cst_31 [1] : vector<64x64xf32> to vector<64xf32>
    %51 = vector.shape_cast %50 : vector<64xf32> to vector<64x1xf32>
    %52 = vector.broadcast %51 : vector<64x1xf32> to vector<64x64xf32>
    %53 = arith.subf %49, %52 : vector<64x64xf32>
    %54 = math.exp %53 : vector<64x64xf32>
    %cst_32 = arith.constant dense<0.000000e+00> : vector<64xf32>
    %55 = vector.multi_reduction <add>, %54, %cst_32 [1] : vector<64x64xf32> to vector<64xf32>
    %56 = vector.shape_cast %55 : vector<64xf32> to vector<64x1xf32>
    %57 = arith.truncf %54 : vector<64x64xf32> to vector<64x64xbf16>
    %cst_33 = arith.constant dense<0.000000e+00> : vector<64x16xf32>
    %58 = tpu.matmul %57, %48, %cst_33 {dimension_numbers = #tpu.dot_dimension_numbers<[1], [0], [0], [1], [0, 0, 1, 1], [], []>} : vector<64x64xbf16>, vector<64x16xbf16>, vector<64x16xf32> -> vector<64x16xf32>
    %59 = tpu.reciprocal %56 {approx = true} : vector<64x1xf32> -> vector<64x1xf32>
    %60 = vector.broadcast %59 : vector<64x1xf32> to vector<64x16xf32>
    %61 = arith.mulf %58, %60 : vector<64x16xf32>
    %62 = arith.truncf %61 : vector<64x16xf32> to vector<64x16xbf16>
    %c0_34 = arith.constant 0 : index
    %c32_35 = arith.constant 32 : index
    %63 = vector.load %arg10[%c0_34, %c32_35] : memref<64x64xbf16, #tpu.memory_space<vmem>>, vector<64x16xbf16>
    tpu.vector_store %arg10[%c0_34, %c32_35], %62 {strides = array<i32>} : memref<64x64xbf16, #tpu.memory_space<vmem>>, vector<64x16xbf16>,
    %c0_36 = arith.constant 0 : index
    %c48 = arith.constant 48 : index
    %64 = vector.load %arg9[%c0_36, %c48] : memref<64x192xbf16, #tpu.memory_space<vmem>>, vector<64x16xbf16>
    %c0_37 = arith.constant 0 : index
    %c112 = arith.constant 112 : index
    %65 = vector.load %arg9[%c0_37, %c112] : memref<64x192xbf16, #tpu.memory_space<vmem>>, vector<64x16xbf16>
    %c0_38 = arith.constant 0 : index
    %c176 = arith.constant 176 : index
    %66 = vector.load %arg9[%c0_38, %c176] : memref<64x192xbf16, #tpu.memory_space<vmem>>, vector<64x16xbf16>
    %cst_39 = arith.constant dense<0.000000e+00> : vector<64x64xf32>
    %67 = tpu.matmul %64, %65, %cst_39 {dimension_numbers = #tpu.dot_dimension_numbers<[1], [1], [0], [0], [0, 0, 1, 0], [], []>} : vector<64x16xbf16>, vector<64x16xbf16>, vector<64x64xf32> -> vector<64x64xf32>
    %cst_40 = arith.constant dense<0xFF800000> : vector<64xf32>
    %68 = vector.multi_reduction <maximumf>, %67, %cst_40 [1] : vector<64x64xf32> to vector<64xf32>
    %69 = vector.shape_cast %68 : vector<64xf32> to vector<64x1xf32>
    %70 = vector.broadcast %69 : vector<64x1xf32> to vector<64x64xf32>
    %71 = arith.subf %67, %70 : vector<64x64xf32>
    %72 = math.exp %71 : vector<64x64xf32>
    %cst_41 = arith.constant dense<0.000000e+00> : vector<64xf32>
    %73 = vector.multi_reduction <add>, %72, %cst_41 [1] : vector<64x64xf32> to vector<64xf32>
    %74 = vector.shape_cast %73 : vector<64xf32> to vector<64x1xf32>
    %75 = arith.truncf %72 : vector<64x64xf32> to vector<64x64xbf16>
    %cst_42 = arith.constant dense<0.000000e+00> : vector<64x16xf32>
    %76 = tpu.matmul %75, %66, %cst_42 {dimension_numbers = #tpu.dot_dimension_numbers<[1], [0], [0], [1], [0, 0, 1, 1], [], []>} : vector<64x64xbf16>, vector<64x16xbf16>, vector<64x16xf32> -> vector<64x16xf32>
    %77 = tpu.reciprocal %74 {approx = true} : vector<64x1xf32> -> vector<64x1xf32>
    %78 = vector.broadcast %77 : vector<64x1xf32> to vector<64x16xf32>
    %79 = arith.mulf %76, %78 : vector<64x16xf32>
    %80 = arith.truncf %79 : vector<64x16xf32> to vector<64x16xbf16>
    %c0_43 = arith.constant 0 : index
    %c48_44 = arith.constant 48 : index
    %81 = vector.load %arg10[%c0_43, %c48_44] : memref<64x64xbf16, #tpu.memory_space<vmem>>, vector<64x16xbf16>
    tpu.vector_store %arg10[%c0_43, %c48_44], %80 {strides = array<i32>} : memref<64x64xbf16, #tpu.memory_space<vmem>>, vector<64x16xbf16>,
    %c0_45 = arith.constant 0 : index
    %c0_46 = arith.constant 0 : index
    %82 = vector.load %arg10[%c0_45, %c0_46] : memref<64x64xbf16, #tpu.memory_space<vmem>>, vector<64x64xbf16>
    %c0_47 = arith.constant 0 : index
    %c0_48 = arith.constant 0 : index
    %83 = vector.load %arg4[%c0_47, %c0_48] : memref<64x64xbf16, #tpu.memory_space<vmem>>, vector<64x64xbf16>
    %cst_49 = arith.constant dense<0.000000e+00> : vector<64x64xf32>
    %84 = tpu.matmul %82, %83, %cst_49 {dimension_numbers = #tpu.dot_dimension_numbers<[1], [0], [0], [1], [0, 0, 1, 1], [], []>} : vector<64x64xbf16>, vector<64x64xbf16>, vector<64x64xf32> -> vector<64x64xf32>
    %c0_50 = arith.constant 0 : index
    %c0_51 = arith.constant 0 : index
    %85 = vector.load %arg5[%c0_50, %c0_51] : memref<1x64xf32, #tpu.memory_space<vmem>>, vector<1x64xf32>
    %86 = vector.broadcast %85 : vector<1x64xf32> to vector<64x64xf32>
    %87 = arith.addf %84, %86 : vector<64x64xf32>
    %88 = arith.addf %87, %1 : vector<64x64xf32>
    %cst_52 = arith.constant dense<0.000000e+00> : vector<64xf32>
    %89 = vector.multi_reduction <add>, %88, %cst_52 [1] : vector<64x64xf32> to vector<64xf32>
    %90 = vector.shape_cast %89 : vector<64xf32> to vector<64x1xf32>
    %cst_53 = arith.constant 6.400000e+01 : f32
    %91 = vector.broadcast %cst_53 : f32 to vector<64x1xf32>
    %92 = arith.divf %90, %91 : vector<64x1xf32>
    %93 = vector.broadcast %92 : vector<64x1xf32> to vector<64x64xf32>
    %94 = arith.subf %88, %93 : vector<64x64xf32>
    %95 = arith.mulf %94, %94 : vector<64x64xf32>
    %cst_54 = arith.constant dense<0.000000e+00> : vector<64xf32>
    %96 = vector.multi_reduction <add>, %95, %cst_54 [1] : vector<64x64xf32> to vector<64xf32>
    %97 = vector.shape_cast %96 : vector<64xf32> to vector<64x1xf32>
    %cst_55 = arith.constant 6.400000e+01 : f32
    %98 = vector.broadcast %cst_55 : f32 to vector<64x1xf32>
    %99 = arith.divf %97, %98 : vector<64x1xf32>
    %100 = vector.broadcast %92 : vector<64x1xf32> to vector<64x64xf32>
    %101 = arith.subf %88, %100 : vector<64x64xf32>
    %cst_56 = arith.constant 9.99999996E-13 : f32
    %102 = vector.broadcast %cst_56 : f32 to vector<64x1xf32>
    %103 = arith.addf %99, %102 : vector<64x1xf32>
    %104 = math.rsqrt %103 : vector<64x1xf32>
    %105 = vector.broadcast %104 : vector<64x1xf32> to vector<64x64xf32>
    %106 = arith.mulf %101, %105 : vector<64x64xf32>
    %c0_57 = arith.constant 0 : index
    %c0_58 = arith.constant 0 : index
    %107 = vector.load %arg6[%c0_57, %c0_58] : memref<1x64xf32, #tpu.memory_space<vmem>>, vector<1x64xf32>
    %108 = vector.broadcast %107 : vector<1x64xf32> to vector<64x64xf32>
    %109 = arith.mulf %106, %108 : vector<64x64xf32>
    %c0_59 = arith.constant 0 : index
    %c0_60 = arith.constant 0 : index
    %110 = vector.load %arg7[%c0_59, %c0_60] : memref<1x64xf32, #tpu.memory_space<vmem>>, vector<1x64xf32>
    %111 = vector.broadcast %110 : vector<1x64xf32> to vector<64x64xf32>
    %112 = arith.addf %109, %111 : vector<64x64xf32>
    %c0_61 = arith.constant 0 : index
    %c0_62 = arith.constant 0 : index
    %c0_63 = arith.constant 0 : index
    %113 = vector.load %arg8[%c0_61, %c0_62, %c0_63] : memref<1x64x64xf32, #tpu.memory_space<vmem>>, vector<1x64x64xf32>
    %114 = vector.shape_cast %113 : vector<1x64x64xf32> to vector<64x64xf32>
    %115 = vector.shape_cast %112 : vector<64x64xf32> to vector<1x64x64xf32>
    tpu.vector_store %arg8[%c0_61, %c0_62, %c0_63], %115 {strides = array<i32>} : memref<1x64x64xf32, #tpu.memory_space<vmem>>, vector<1x64x64xf32>,
    return
  }
  func.func @transform_0(%arg0: i32) -> (i32, i32, i32) {
    %c0_i32 = arith.constant 0 : i32
    %c0_i32_0 = arith.constant 0 : i32
    %c0_i32_1 = arith.constant 0 : i32
    return %arg0, %c0_i32, %c0_i32_0 : i32, i32, i32
  }
  func.func @transform_1(%arg0: i32) -> (i32, i32) {
    %c0_i32 = arith.constant 0 : i32
    %c0_i32_0 = arith.constant 0 : i32
    %c0_i32_1 = arith.constant 0 : i32
    return %c0_i32, %c0_i32_0 : i32, i32
  }
  func.func @transform_2(%arg0: i32) -> (i32, i32) {
    %c0_i32 = arith.constant 0 : i32
    %c0_i32_0 = arith.constant 0 : i32
    %c0_i32_1 = arith.constant 0 : i32
    return %c0_i32, %c0_i32_0 : i32, i32
  }
  func.func @transform_3(%arg0: i32) -> (i32, i32) {
    %c0_i32 = arith.constant 0 : i32
    %c0_i32_0 = arith.constant 0 : i32
    %c0_i32_1 = arith.constant 0 : i32
    return %c0_i32, %c0_i32_0 : i32, i32
  }
  func.func @transform_4(%arg0: i32) -> (i32, i32) {
    %c0_i32 = arith.constant 0 : i32
    %c0_i32_0 = arith.constant 0 : i32
    %c0_i32_1 = arith.constant 0 : i32
    return %c0_i32, %c0_i32_0 : i32, i32
  }
  func.func @transform_5(%arg0: i32) -> (i32, i32) {
    %c0_i32 = arith.constant 0 : i32
    %c0_i32_0 = arith.constant 0 : i32
    %c0_i32_1 = arith.constant 0 : i32
    return %c0_i32, %c0_i32_0 : i32, i32
  }
  func.func @transform_6(%arg0: i32) -> (i32, i32) {
    %c0_i32 = arith.constant 0 : i32
    %c0_i32_0 = arith.constant 0 : i32
    %c0_i32_1 = arith.constant 0 : i32
    return %c0_i32, %c0_i32_0 : i32, i32
  }
  func.func @transform_7(%arg0: i32) -> (i32, i32, i32) {
    %c0_i32 = arith.constant 0 : i32
    %c0_i32_0 = arith.constant 0 : i32
    %c0_i32_1 = arith.constant 0 : i32
    return %arg0, %c0_i32, %c0_i32_0 : i32, i32, i32
  }
}

module attributes {stable_mosaic.version = 11 : i64} {
  func.func @_cross_block_kernel(%arg0: i32, %arg1: memref<1x64x64xf32, #tpu.memory_space<vmem>>, %arg2: memref<64x64xbf16, #tpu.memory_space<vmem>>, %arg3: memref<1x64xf32, #tpu.memory_space<vmem>>, %arg4: memref<1x8x128xbf16, #tpu.memory_space<vmem>>, %arg5: memref<1x1x8xf32, #tpu.memory_space<vmem>>, %arg6: memref<64x64xbf16, #tpu.memory_space<vmem>>, %arg7: memref<1x64xf32, #tpu.memory_space<vmem>>, %arg8: memref<1x64xf32, #tpu.memory_space<vmem>>, %arg9: memref<1x64xf32, #tpu.memory_space<vmem>>, %arg10: memref<1x64x64xf32, #tpu.memory_space<vmem>>, %arg11: memref<64x64xbf16, #tpu.memory_space<vmem>>, %arg12: memref<64x64xbf16, #tpu.memory_space<vmem>>) attributes {dimension_semantics = [#tpu.dimension_semantics<parallel>], iteration_bounds = array<i64: 2>, scalar_prefetch = 0 : i64, scratch_operands = 2 : i64, tpu.core_type = #tpu.core_type<tc>, window_params = [{transform_indices = @transform_0, window_bounds = array<i64: 1, 64, 64>}, {pipeline_mode = #tpu.pipeline_mode<synchronous>, transform_indices = @transform_1, window_bounds = array<i64: 64, 64>}, {pipeline_mode = #tpu.pipeline_mode<synchronous>, transform_indices = @transform_2, window_bounds = array<i64: 1, 64>}, {transform_indices = @transform_3, window_bounds = array<i64: 1, 8, 128>}, {transform_indices = @transform_4, window_bounds = array<i64: 1, 1, 8>}, {pipeline_mode = #tpu.pipeline_mode<synchronous>, transform_indices = @transform_5, window_bounds = array<i64: 64, 64>}, {pipeline_mode = #tpu.pipeline_mode<synchronous>, transform_indices = @transform_6, window_bounds = array<i64: 1, 64>}, {pipeline_mode = #tpu.pipeline_mode<synchronous>, transform_indices = @transform_7, window_bounds = array<i64: 1, 64>}, {pipeline_mode = #tpu.pipeline_mode<synchronous>, transform_indices = @transform_8, window_bounds = array<i64: 1, 64>}, {transform_indices = @transform_9, window_bounds = array<i64: 1, 64, 64>}]} {
    %c0 = arith.constant 0 : index
    %c0_0 = arith.constant 0 : index
    %c0_1 = arith.constant 0 : index
    %0 = vector.load %arg1[%c0, %c0_0, %c0_1] : memref<1x64x64xf32, #tpu.memory_space<vmem>>, vector<1x64x64xf32>
    %1 = vector.shape_cast %0 : vector<1x64x64xf32> to vector<64x64xf32>
    %2 = arith.truncf %1 : vector<64x64xf32> to vector<64x64xbf16>
    %c0_2 = arith.constant 0 : index
    %c0_3 = arith.constant 0 : index
    %3 = vector.load %arg2[%c0_2, %c0_3] : memref<64x64xbf16, #tpu.memory_space<vmem>>, vector<64x64xbf16>
    %cst = arith.constant dense<0.000000e+00> : vector<64x64xf32>
    %4 = tpu.matmul %2, %3, %cst {dimension_numbers = #tpu.dot_dimension_numbers<[1], [0], [0], [1], [0, 0, 1, 1], [], []>} : vector<64x64xbf16>, vector<64x64xbf16>, vector<64x64xf32> -> vector<64x64xf32>
    %c0_4 = arith.constant 0 : index
    %c0_5 = arith.constant 0 : index
    %5 = vector.load %arg3[%c0_4, %c0_5] : memref<1x64xf32, #tpu.memory_space<vmem>>, vector<1x64xf32>
    %6 = vector.broadcast %5 : vector<1x64xf32> to vector<64x64xf32>
    %7 = arith.addf %4, %6 : vector<64x64xf32>
    %8 = arith.truncf %7 : vector<64x64xf32> to vector<64x64xbf16>
    %c0_6 = arith.constant 0 : index
    %c0_7 = arith.constant 0 : index
    %9 = vector.load %arg11[%c0_6, %c0_7] : memref<64x64xbf16, #tpu.memory_space<vmem>>, vector<64x64xbf16>
    tpu.vector_store %arg11[%c0_6, %c0_7], %8 {strides = array<i32>} : memref<64x64xbf16, #tpu.memory_space<vmem>>, vector<64x64xbf16>,
    %c0_8 = arith.constant 0 : index
    %c0_9 = arith.constant 0 : index
    %c0_10 = arith.constant 0 : index
    %10 = vector.load %arg5[%c0_8, %c0_9, %c0_10] : memref<1x1x8xf32, #tpu.memory_space<vmem>>, vector<1x1x8xf32>
    %11 = vector.shape_cast %10 : vector<1x1x8xf32> to vector<1x8xf32>
    %c0_11 = arith.constant 0 : index
    %c0_12 = arith.constant 0 : index
    %12 = vector.load %arg11[%c0_11, %c0_12] : memref<64x64xbf16, #tpu.memory_space<vmem>>, vector<64x16xbf16>
    %c0_13 = arith.constant 0 : index
    %c0_14 = arith.constant 0 : index
    %c0_15 = arith.constant 0 : index
    %13 = vector.load %arg4[%c0_13, %c0_14, %c0_15] : memref<1x8x128xbf16, #tpu.memory_space<vmem>>, vector<1x8x16xbf16>
    %14 = vector.shape_cast %13 : vector<1x8x16xbf16> to vector<8x16xbf16>
    %c0_16 = arith.constant 0 : index
    %c0_17 = arith.constant 0 : index
    %c64 = arith.constant 64 : index
    %15 = vector.load %arg4[%c0_16, %c0_17, %c64] : memref<1x8x128xbf16, #tpu.memory_space<vmem>>, vector<1x8x16xbf16>
    %16 = vector.shape_cast %15 : vector<1x8x16xbf16> to vector<8x16xbf16>
    %cst_18 = arith.constant dense<0.000000e+00> : vector<64x8xf32>
    %17 = tpu.matmul %12, %14, %cst_18 {dimension_numbers = #tpu.dot_dimension_numbers<[1], [1], [0], [0], [0, 0, 1, 0], [], []>} : vector<64x16xbf16>, vector<8x16xbf16>, vector<64x8xf32> -> vector<64x8xf32>
    %18 = vector.broadcast %11 : vector<1x8xf32> to vector<64x8xf32>
    %19 = arith.addf %17, %18 : vector<64x8xf32>
    %cst_19 = arith.constant dense<0xFF800000> : vector<64xf32>
    %20 = vector.multi_reduction <maximumf>, %19, %cst_19 [1] : vector<64x8xf32> to vector<64xf32>
    %21 = vector.shape_cast %20 : vector<64xf32> to vector<64x1xf32>
    %22 = vector.broadcast %21 : vector<64x1xf32> to vector<64x8xf32>
    %23 = arith.subf %19, %22 : vector<64x8xf32>
    %24 = math.exp %23 : vector<64x8xf32>
    %cst_20 = arith.constant dense<0.000000e+00> : vector<64xf32>
    %25 = vector.multi_reduction <add>, %24, %cst_20 [1] : vector<64x8xf32> to vector<64xf32>
    %26 = vector.shape_cast %25 : vector<64xf32> to vector<64x1xf32>
    %27 = arith.truncf %24 : vector<64x8xf32> to vector<64x8xbf16>
    %cst_21 = arith.constant dense<0.000000e+00> : vector<64x16xf32>
    %28 = tpu.matmul %27, %16, %cst_21 {dimension_numbers = #tpu.dot_dimension_numbers<[1], [0], [0], [1], [0, 0, 1, 1], [], []>} : vector<64x8xbf16>, vector<8x16xbf16>, vector<64x16xf32> -> vector<64x16xf32>
    %29 = tpu.reciprocal %26 {approx = true} : vector<64x1xf32> -> vector<64x1xf32>
    %30 = vector.broadcast %29 : vector<64x1xf32> to vector<64x16xf32>
    %31 = arith.mulf %28, %30 : vector<64x16xf32>
    %32 = arith.truncf %31 : vector<64x16xf32> to vector<64x16xbf16>
    %c0_22 = arith.constant 0 : index
    %c0_23 = arith.constant 0 : index
    %33 = vector.load %arg12[%c0_22, %c0_23] : memref<64x64xbf16, #tpu.memory_space<vmem>>, vector<64x16xbf16>
    tpu.vector_store %arg12[%c0_22, %c0_23], %32 {strides = array<i32>} : memref<64x64xbf16, #tpu.memory_space<vmem>>, vector<64x16xbf16>,
    %c0_24 = arith.constant 0 : index
    %c16 = arith.constant 16 : index
    %34 = vector.load %arg11[%c0_24, %c16] : memref<64x64xbf16, #tpu.memory_space<vmem>>, vector<64x16xbf16>
    %c0_25 = arith.constant 0 : index
    %c0_26 = arith.constant 0 : index
    %c16_27 = arith.constant 16 : index
    %35 = vector.load %arg4[%c0_25, %c0_26, %c16_27] : memref<1x8x128xbf16, #tpu.memory_space<vmem>>, vector<1x8x16xbf16>
    %36 = vector.shape_cast %35 : vector<1x8x16xbf16> to vector<8x16xbf16>
    %c0_28 = arith.constant 0 : index
    %c0_29 = arith.constant 0 : index
    %c80 = arith.constant 80 : index
    %37 = vector.load %arg4[%c0_28, %c0_29, %c80] : memref<1x8x128xbf16, #tpu.memory_space<vmem>>, vector<1x8x16xbf16>
    %38 = vector.shape_cast %37 : vector<1x8x16xbf16> to vector<8x16xbf16>
    %cst_30 = arith.constant dense<0.000000e+00> : vector<64x8xf32>
    %39 = tpu.matmul %34, %36, %cst_30 {dimension_numbers = #tpu.dot_dimension_numbers<[1], [1], [0], [0], [0, 0, 1, 0], [], []>} : vector<64x16xbf16>, vector<8x16xbf16>, vector<64x8xf32> -> vector<64x8xf32>
    %40 = vector.broadcast %11 : vector<1x8xf32> to vector<64x8xf32>
    %41 = arith.addf %39, %40 : vector<64x8xf32>
    %cst_31 = arith.constant dense<0xFF800000> : vector<64xf32>
    %42 = vector.multi_reduction <maximumf>, %41, %cst_31 [1] : vector<64x8xf32> to vector<64xf32>
    %43 = vector.shape_cast %42 : vector<64xf32> to vector<64x1xf32>
    %44 = vector.broadcast %43 : vector<64x1xf32> to vector<64x8xf32>
    %45 = arith.subf %41, %44 : vector<64x8xf32>
    %46 = math.exp %45 : vector<64x8xf32>
    %cst_32 = arith.constant dense<0.000000e+00> : vector<64xf32>
    %47 = vector.multi_reduction <add>, %46, %cst_32 [1] : vector<64x8xf32> to vector<64xf32>
    %48 = vector.shape_cast %47 : vector<64xf32> to vector<64x1xf32>
    %49 = arith.truncf %46 : vector<64x8xf32> to vector<64x8xbf16>
    %cst_33 = arith.constant dense<0.000000e+00> : vector<64x16xf32>
    %50 = tpu.matmul %49, %38, %cst_33 {dimension_numbers = #tpu.dot_dimension_numbers<[1], [0], [0], [1], [0, 0, 1, 1], [], []>} : vector<64x8xbf16>, vector<8x16xbf16>, vector<64x16xf32> -> vector<64x16xf32>
    %51 = tpu.reciprocal %48 {approx = true} : vector<64x1xf32> -> vector<64x1xf32>
    %52 = vector.broadcast %51 : vector<64x1xf32> to vector<64x16xf32>
    %53 = arith.mulf %50, %52 : vector<64x16xf32>
    %54 = arith.truncf %53 : vector<64x16xf32> to vector<64x16xbf16>
    %c0_34 = arith.constant 0 : index
    %c16_35 = arith.constant 16 : index
    %55 = vector.load %arg12[%c0_34, %c16_35] : memref<64x64xbf16, #tpu.memory_space<vmem>>, vector<64x16xbf16>
    tpu.vector_store %arg12[%c0_34, %c16_35], %54 {strides = array<i32>} : memref<64x64xbf16, #tpu.memory_space<vmem>>, vector<64x16xbf16>,
    %c0_36 = arith.constant 0 : index
    %c32 = arith.constant 32 : index
    %56 = vector.load %arg11[%c0_36, %c32] : memref<64x64xbf16, #tpu.memory_space<vmem>>, vector<64x16xbf16>
    %c0_37 = arith.constant 0 : index
    %c0_38 = arith.constant 0 : index
    %c32_39 = arith.constant 32 : index
    %57 = vector.load %arg4[%c0_37, %c0_38, %c32_39] : memref<1x8x128xbf16, #tpu.memory_space<vmem>>, vector<1x8x16xbf16>
    %58 = vector.shape_cast %57 : vector<1x8x16xbf16> to vector<8x16xbf16>
    %c0_40 = arith.constant 0 : index
    %c0_41 = arith.constant 0 : index
    %c96 = arith.constant 96 : index
    %59 = vector.load %arg4[%c0_40, %c0_41, %c96] : memref<1x8x128xbf16, #tpu.memory_space<vmem>>, vector<1x8x16xbf16>
    %60 = vector.shape_cast %59 : vector<1x8x16xbf16> to vector<8x16xbf16>
    %cst_42 = arith.constant dense<0.000000e+00> : vector<64x8xf32>
    %61 = tpu.matmul %56, %58, %cst_42 {dimension_numbers = #tpu.dot_dimension_numbers<[1], [1], [0], [0], [0, 0, 1, 0], [], []>} : vector<64x16xbf16>, vector<8x16xbf16>, vector<64x8xf32> -> vector<64x8xf32>
    %62 = vector.broadcast %11 : vector<1x8xf32> to vector<64x8xf32>
    %63 = arith.addf %61, %62 : vector<64x8xf32>
    %cst_43 = arith.constant dense<0xFF800000> : vector<64xf32>
    %64 = vector.multi_reduction <maximumf>, %63, %cst_43 [1] : vector<64x8xf32> to vector<64xf32>
    %65 = vector.shape_cast %64 : vector<64xf32> to vector<64x1xf32>
    %66 = vector.broadcast %65 : vector<64x1xf32> to vector<64x8xf32>
    %67 = arith.subf %63, %66 : vector<64x8xf32>
    %68 = math.exp %67 : vector<64x8xf32>
    %cst_44 = arith.constant dense<0.000000e+00> : vector<64xf32>
    %69 = vector.multi_reduction <add>, %68, %cst_44 [1] : vector<64x8xf32> to vector<64xf32>
    %70 = vector.shape_cast %69 : vector<64xf32> to vector<64x1xf32>
    %71 = arith.truncf %68 : vector<64x8xf32> to vector<64x8xbf16>
    %cst_45 = arith.constant dense<0.000000e+00> : vector<64x16xf32>
    %72 = tpu.matmul %71, %60, %cst_45 {dimension_numbers = #tpu.dot_dimension_numbers<[1], [0], [0], [1], [0, 0, 1, 1], [], []>} : vector<64x8xbf16>, vector<8x16xbf16>, vector<64x16xf32> -> vector<64x16xf32>
    %73 = tpu.reciprocal %70 {approx = true} : vector<64x1xf32> -> vector<64x1xf32>
    %74 = vector.broadcast %73 : vector<64x1xf32> to vector<64x16xf32>
    %75 = arith.mulf %72, %74 : vector<64x16xf32>
    %76 = arith.truncf %75 : vector<64x16xf32> to vector<64x16xbf16>
    %c0_46 = arith.constant 0 : index
    %c32_47 = arith.constant 32 : index
    %77 = vector.load %arg12[%c0_46, %c32_47] : memref<64x64xbf16, #tpu.memory_space<vmem>>, vector<64x16xbf16>
    tpu.vector_store %arg12[%c0_46, %c32_47], %76 {strides = array<i32>} : memref<64x64xbf16, #tpu.memory_space<vmem>>, vector<64x16xbf16>,
    %c0_48 = arith.constant 0 : index
    %c48 = arith.constant 48 : index
    %78 = vector.load %arg11[%c0_48, %c48] : memref<64x64xbf16, #tpu.memory_space<vmem>>, vector<64x16xbf16>
    %c0_49 = arith.constant 0 : index
    %c0_50 = arith.constant 0 : index
    %c48_51 = arith.constant 48 : index
    %79 = vector.load %arg4[%c0_49, %c0_50, %c48_51] : memref<1x8x128xbf16, #tpu.memory_space<vmem>>, vector<1x8x16xbf16>
    %80 = vector.shape_cast %79 : vector<1x8x16xbf16> to vector<8x16xbf16>
    %c0_52 = arith.constant 0 : index
    %c0_53 = arith.constant 0 : index
    %c112 = arith.constant 112 : index
    %81 = vector.load %arg4[%c0_52, %c0_53, %c112] : memref<1x8x128xbf16, #tpu.memory_space<vmem>>, vector<1x8x16xbf16>
    %82 = vector.shape_cast %81 : vector<1x8x16xbf16> to vector<8x16xbf16>
    %cst_54 = arith.constant dense<0.000000e+00> : vector<64x8xf32>
    %83 = tpu.matmul %78, %80, %cst_54 {dimension_numbers = #tpu.dot_dimension_numbers<[1], [1], [0], [0], [0, 0, 1, 0], [], []>} : vector<64x16xbf16>, vector<8x16xbf16>, vector<64x8xf32> -> vector<64x8xf32>
    %84 = vector.broadcast %11 : vector<1x8xf32> to vector<64x8xf32>
    %85 = arith.addf %83, %84 : vector<64x8xf32>
    %cst_55 = arith.constant dense<0xFF800000> : vector<64xf32>
    %86 = vector.multi_reduction <maximumf>, %85, %cst_55 [1] : vector<64x8xf32> to vector<64xf32>
    %87 = vector.shape_cast %86 : vector<64xf32> to vector<64x1xf32>
    %88 = vector.broadcast %87 : vector<64x1xf32> to vector<64x8xf32>
    %89 = arith.subf %85, %88 : vector<64x8xf32>
    %90 = math.exp %89 : vector<64x8xf32>
    %cst_56 = arith.constant dense<0.000000e+00> : vector<64xf32>
    %91 = vector.multi_reduction <add>, %90, %cst_56 [1] : vector<64x8xf32> to vector<64xf32>
    %92 = vector.shape_cast %91 : vector<64xf32> to vector<64x1xf32>
    %93 = arith.truncf %90 : vector<64x8xf32> to vector<64x8xbf16>
    %cst_57 = arith.constant dense<0.000000e+00> : vector<64x16xf32>
    %94 = tpu.matmul %93, %82, %cst_57 {dimension_numbers = #tpu.dot_dimension_numbers<[1], [0], [0], [1], [0, 0, 1, 1], [], []>} : vector<64x8xbf16>, vector<8x16xbf16>, vector<64x16xf32> -> vector<64x16xf32>
    %95 = tpu.reciprocal %92 {approx = true} : vector<64x1xf32> -> vector<64x1xf32>
    %96 = vector.broadcast %95 : vector<64x1xf32> to vector<64x16xf32>
    %97 = arith.mulf %94, %96 : vector<64x16xf32>
    %98 = arith.truncf %97 : vector<64x16xf32> to vector<64x16xbf16>
    %c0_58 = arith.constant 0 : index
    %c48_59 = arith.constant 48 : index
    %99 = vector.load %arg12[%c0_58, %c48_59] : memref<64x64xbf16, #tpu.memory_space<vmem>>, vector<64x16xbf16>
    tpu.vector_store %arg12[%c0_58, %c48_59], %98 {strides = array<i32>} : memref<64x64xbf16, #tpu.memory_space<vmem>>, vector<64x16xbf16>,
    %c0_60 = arith.constant 0 : index
    %c0_61 = arith.constant 0 : index
    %100 = vector.load %arg12[%c0_60, %c0_61] : memref<64x64xbf16, #tpu.memory_space<vmem>>, vector<64x64xbf16>
    %c0_62 = arith.constant 0 : index
    %c0_63 = arith.constant 0 : index
    %101 = vector.load %arg6[%c0_62, %c0_63] : memref<64x64xbf16, #tpu.memory_space<vmem>>, vector<64x64xbf16>
    %cst_64 = arith.constant dense<0.000000e+00> : vector<64x64xf32>
    %102 = tpu.matmul %100, %101, %cst_64 {dimension_numbers = #tpu.dot_dimension_numbers<[1], [0], [0], [1], [0, 0, 1, 1], [], []>} : vector<64x64xbf16>, vector<64x64xbf16>, vector<64x64xf32> -> vector<64x64xf32>
    %c0_65 = arith.constant 0 : index
    %c0_66 = arith.constant 0 : index
    %103 = vector.load %arg7[%c0_65, %c0_66] : memref<1x64xf32, #tpu.memory_space<vmem>>, vector<1x64xf32>
    %104 = vector.broadcast %103 : vector<1x64xf32> to vector<64x64xf32>
    %105 = arith.addf %102, %104 : vector<64x64xf32>
    %106 = arith.addf %105, %1 : vector<64x64xf32>
    %cst_67 = arith.constant dense<0.000000e+00> : vector<64xf32>
    %107 = vector.multi_reduction <add>, %106, %cst_67 [1] : vector<64x64xf32> to vector<64xf32>
    %108 = vector.shape_cast %107 : vector<64xf32> to vector<64x1xf32>
    %cst_68 = arith.constant 6.400000e+01 : f32
    %109 = vector.broadcast %cst_68 : f32 to vector<64x1xf32>
    %110 = arith.divf %108, %109 : vector<64x1xf32>
    %111 = vector.broadcast %110 : vector<64x1xf32> to vector<64x64xf32>
    %112 = arith.subf %106, %111 : vector<64x64xf32>
    %113 = arith.mulf %112, %112 : vector<64x64xf32>
    %cst_69 = arith.constant dense<0.000000e+00> : vector<64xf32>
    %114 = vector.multi_reduction <add>, %113, %cst_69 [1] : vector<64x64xf32> to vector<64xf32>
    %115 = vector.shape_cast %114 : vector<64xf32> to vector<64x1xf32>
    %cst_70 = arith.constant 6.400000e+01 : f32
    %116 = vector.broadcast %cst_70 : f32 to vector<64x1xf32>
    %117 = arith.divf %115, %116 : vector<64x1xf32>
    %118 = vector.broadcast %110 : vector<64x1xf32> to vector<64x64xf32>
    %119 = arith.subf %106, %118 : vector<64x64xf32>
    %cst_71 = arith.constant 9.99999996E-13 : f32
    %120 = vector.broadcast %cst_71 : f32 to vector<64x1xf32>
    %121 = arith.addf %117, %120 : vector<64x1xf32>
    %122 = math.rsqrt %121 : vector<64x1xf32>
    %123 = vector.broadcast %122 : vector<64x1xf32> to vector<64x64xf32>
    %124 = arith.mulf %119, %123 : vector<64x64xf32>
    %c0_72 = arith.constant 0 : index
    %c0_73 = arith.constant 0 : index
    %125 = vector.load %arg8[%c0_72, %c0_73] : memref<1x64xf32, #tpu.memory_space<vmem>>, vector<1x64xf32>
    %126 = vector.broadcast %125 : vector<1x64xf32> to vector<64x64xf32>
    %127 = arith.mulf %124, %126 : vector<64x64xf32>
    %c0_74 = arith.constant 0 : index
    %c0_75 = arith.constant 0 : index
    %128 = vector.load %arg9[%c0_74, %c0_75] : memref<1x64xf32, #tpu.memory_space<vmem>>, vector<1x64xf32>
    %129 = vector.broadcast %128 : vector<1x64xf32> to vector<64x64xf32>
    %130 = arith.addf %127, %129 : vector<64x64xf32>
    %c0_76 = arith.constant 0 : index
    %c0_77 = arith.constant 0 : index
    %c0_78 = arith.constant 0 : index
    %131 = vector.load %arg10[%c0_76, %c0_77, %c0_78] : memref<1x64x64xf32, #tpu.memory_space<vmem>>, vector<1x64x64xf32>
    %132 = vector.shape_cast %131 : vector<1x64x64xf32> to vector<64x64xf32>
    %133 = vector.shape_cast %130 : vector<64x64xf32> to vector<1x64x64xf32>
    tpu.vector_store %arg10[%c0_76, %c0_77, %c0_78], %133 {strides = array<i32>} : memref<1x64x64xf32, #tpu.memory_space<vmem>>, vector<1x64x64xf32>,
    return
  }
  func.func @transform_0(%arg0: i32) -> (i32, i32, i32) {
    %c0_i32 = arith.constant 0 : i32
    %c0_i32_0 = arith.constant 0 : i32
    %c0_i32_1 = arith.constant 0 : i32
    return %arg0, %c0_i32, %c0_i32_0 : i32, i32, i32
  }
  func.func @transform_1(%arg0: i32) -> (i32, i32) {
    %c0_i32 = arith.constant 0 : i32
    %c0_i32_0 = arith.constant 0 : i32
    %c0_i32_1 = arith.constant 0 : i32
    return %c0_i32, %c0_i32_0 : i32, i32
  }
  func.func @transform_2(%arg0: i32) -> (i32, i32) {
    %c0_i32 = arith.constant 0 : i32
    %c0_i32_0 = arith.constant 0 : i32
    %c0_i32_1 = arith.constant 0 : i32
    return %c0_i32, %c0_i32_0 : i32, i32
  }
  func.func @transform_3(%arg0: i32) -> (i32, i32, i32) {
    %c0_i32 = arith.constant 0 : i32
    %c0_i32_0 = arith.constant 0 : i32
    %c0_i32_1 = arith.constant 0 : i32
    return %arg0, %c0_i32, %c0_i32_0 : i32, i32, i32
  }
  func.func @transform_4(%arg0: i32) -> (i32, i32, i32) {
    %c0_i32 = arith.constant 0 : i32
    %c0_i32_0 = arith.constant 0 : i32
    %c0_i32_1 = arith.constant 0 : i32
    return %arg0, %c0_i32, %c0_i32_0 : i32, i32, i32
  }
  func.func @transform_5(%arg0: i32) -> (i32, i32) {
    %c0_i32 = arith.constant 0 : i32
    %c0_i32_0 = arith.constant 0 : i32
    %c0_i32_1 = arith.constant 0 : i32
    return %c0_i32, %c0_i32_0 : i32, i32
  }
  func.func @transform_6(%arg0: i32) -> (i32, i32) {
    %c0_i32 = arith.constant 0 : i32
    %c0_i32_0 = arith.constant 0 : i32
    %c0_i32_1 = arith.constant 0 : i32
    return %c0_i32, %c0_i32_0 : i32, i32
  }
  func.func @transform_7(%arg0: i32) -> (i32, i32) {
    %c0_i32 = arith.constant 0 : i32
    %c0_i32_0 = arith.constant 0 : i32
    %c0_i32_1 = arith.constant 0 : i32
    return %c0_i32, %c0_i32_0 : i32, i32
  }
  func.func @transform_8(%arg0: i32) -> (i32, i32) {
    %c0_i32 = arith.constant 0 : i32
    %c0_i32_0 = arith.constant 0 : i32
    %c0_i32_1 = arith.constant 0 : i32
    return %c0_i32, %c0_i32_0 : i32, i32
  }
  func.func @transform_9(%arg0: i32) -> (i32, i32, i32) {
    %c0_i32 = arith.constant 0 : i32
    %c0_i32_0 = arith.constant 0 : i32
    %c0_i32_1 = arith.constant 0 : i32
    return %arg0, %c0_i32, %c0_i32_0 : i32, i32, i32
  }
}

module attributes {stable_mosaic.version = 11 : i64} {
  func.func @_ffn_block_kernel(%arg0: i32, %arg1: memref<64x64xf32, #tpu.memory_space<vmem>>, %arg2: memref<64x128xbf16, #tpu.memory_space<vmem>>, %arg3: memref<1x128xf32, #tpu.memory_space<vmem>>, %arg4: memref<128x64xbf16, #tpu.memory_space<vmem>>, %arg5: memref<1x64xf32, #tpu.memory_space<vmem>>, %arg6: memref<1x64xf32, #tpu.memory_space<vmem>>, %arg7: memref<1x64xf32, #tpu.memory_space<vmem>>, %arg8: memref<64x64xf32, #tpu.memory_space<vmem>>, %arg9: memref<64x128xbf16, #tpu.memory_space<vmem>>) attributes {dimension_semantics = [#tpu.dimension_semantics<parallel>], iteration_bounds = array<i64: 2>, scalar_prefetch = 0 : i64, scratch_operands = 1 : i64, tpu.core_type = #tpu.core_type<tc>, window_params = [{transform_indices = @transform_0, window_bounds = array<i64: 64, 64>}, {pipeline_mode = #tpu.pipeline_mode<synchronous>, transform_indices = @transform_1, window_bounds = array<i64: 64, 128>}, {pipeline_mode = #tpu.pipeline_mode<synchronous>, transform_indices = @transform_2, window_bounds = array<i64: 1, 128>}, {pipeline_mode = #tpu.pipeline_mode<synchronous>, transform_indices = @transform_3, window_bounds = array<i64: 128, 64>}, {pipeline_mode = #tpu.pipeline_mode<synchronous>, transform_indices = @transform_4, window_bounds = array<i64: 1, 64>}, {pipeline_mode = #tpu.pipeline_mode<synchronous>, transform_indices = @transform_5, window_bounds = array<i64: 1, 64>}, {pipeline_mode = #tpu.pipeline_mode<synchronous>, transform_indices = @transform_6, window_bounds = array<i64: 1, 64>}, {transform_indices = @transform_7, window_bounds = array<i64: 64, 64>}]} {
    %c0 = arith.constant 0 : index
    %c0_0 = arith.constant 0 : index
    %0 = vector.load %arg1[%c0, %c0_0] : memref<64x64xf32, #tpu.memory_space<vmem>>, vector<64x64xf32>
    %1 = arith.truncf %0 : vector<64x64xf32> to vector<64x64xbf16>
    %c0_1 = arith.constant 0 : index
    %c0_2 = arith.constant 0 : index
    %2 = vector.load %arg2[%c0_1, %c0_2] : memref<64x128xbf16, #tpu.memory_space<vmem>>, vector<64x128xbf16>
    %cst = arith.constant dense<0.000000e+00> : vector<64x128xf32>
    %3 = tpu.matmul %1, %2, %cst {dimension_numbers = #tpu.dot_dimension_numbers<[1], [0], [0], [1], [0, 0, 1, 1], [], []>} : vector<64x64xbf16>, vector<64x128xbf16>, vector<64x128xf32> -> vector<64x128xf32>
    %c0_3 = arith.constant 0 : index
    %c0_4 = arith.constant 0 : index
    %4 = vector.load %arg3[%c0_3, %c0_4] : memref<1x128xf32, #tpu.memory_space<vmem>>, vector<1x128xf32>
    %5 = vector.broadcast %4 : vector<1x128xf32> to vector<64x128xf32>
    %6 = arith.addf %3, %5 : vector<64x128xf32>
    %7 = arith.mulf %6, %6 : vector<64x128xf32>
    %8 = arith.mulf %6, %7 : vector<64x128xf32>
    %cst_5 = arith.constant 4.471500e-02 : f32
    %9 = vector.broadcast %cst_5 : f32 to vector<64x128xf32>
    %10 = arith.mulf %9, %8 : vector<64x128xf32>
    %11 = arith.addf %6, %10 : vector<64x128xf32>
    %cst_6 = arith.constant 0.797884583 : f32
    %12 = vector.broadcast %cst_6 : f32 to vector<64x128xf32>
    %13 = arith.mulf %12, %11 : vector<64x128xf32>
    %14 = math.tanh %13 : vector<64x128xf32>
    %cst_7 = arith.constant 1.000000e+00 : f32
    %15 = vector.broadcast %cst_7 : f32 to vector<64x128xf32>
    %16 = arith.addf %15, %14 : vector<64x128xf32>
    %cst_8 = arith.constant 5.000000e-01 : f32
    %17 = vector.broadcast %cst_8 : f32 to vector<64x128xf32>
    %18 = arith.mulf %17, %16 : vector<64x128xf32>
    %19 = arith.mulf %6, %18 : vector<64x128xf32>
    %20 = arith.truncf %19 : vector<64x128xf32> to vector<64x128xbf16>
    %c0_9 = arith.constant 0 : index
    %c0_10 = arith.constant 0 : index
    %21 = vector.load %arg9[%c0_9, %c0_10] : memref<64x128xbf16, #tpu.memory_space<vmem>>, vector<64x128xbf16>
    tpu.vector_store %arg9[%c0_9, %c0_10], %20 {strides = array<i32>} : memref<64x128xbf16, #tpu.memory_space<vmem>>, vector<64x128xbf16>,
    %c0_11 = arith.constant 0 : index
    %c0_12 = arith.constant 0 : index
    %22 = vector.load %arg9[%c0_11, %c0_12] : memref<64x128xbf16, #tpu.memory_space<vmem>>, vector<64x128xbf16>
    %c0_13 = arith.constant 0 : index
    %c0_14 = arith.constant 0 : index
    %23 = vector.load %arg4[%c0_13, %c0_14] : memref<128x64xbf16, #tpu.memory_space<vmem>>, vector<128x64xbf16>
    %cst_15 = arith.constant dense<0.000000e+00> : vector<64x64xf32>
    %24 = tpu.matmul %22, %23, %cst_15 {dimension_numbers = #tpu.dot_dimension_numbers<[1], [0], [0], [1], [0, 0, 1, 1], [], []>} : vector<64x128xbf16>, vector<128x64xbf16>, vector<64x64xf32> -> vector<64x64xf32>
    %c0_16 = arith.constant 0 : index
    %c0_17 = arith.constant 0 : index
    %25 = vector.load %arg5[%c0_16, %c0_17] : memref<1x64xf32, #tpu.memory_space<vmem>>, vector<1x64xf32>
    %26 = vector.broadcast %25 : vector<1x64xf32> to vector<64x64xf32>
    %27 = arith.addf %24, %26 : vector<64x64xf32>
    %28 = arith.addf %27, %0 : vector<64x64xf32>
    %cst_18 = arith.constant dense<0.000000e+00> : vector<64xf32>
    %29 = vector.multi_reduction <add>, %28, %cst_18 [1] : vector<64x64xf32> to vector<64xf32>
    %30 = vector.shape_cast %29 : vector<64xf32> to vector<64x1xf32>
    %cst_19 = arith.constant 6.400000e+01 : f32
    %31 = vector.broadcast %cst_19 : f32 to vector<64x1xf32>
    %32 = arith.divf %30, %31 : vector<64x1xf32>
    %33 = vector.broadcast %32 : vector<64x1xf32> to vector<64x64xf32>
    %34 = arith.subf %28, %33 : vector<64x64xf32>
    %35 = arith.mulf %34, %34 : vector<64x64xf32>
    %cst_20 = arith.constant dense<0.000000e+00> : vector<64xf32>
    %36 = vector.multi_reduction <add>, %35, %cst_20 [1] : vector<64x64xf32> to vector<64xf32>
    %37 = vector.shape_cast %36 : vector<64xf32> to vector<64x1xf32>
    %cst_21 = arith.constant 6.400000e+01 : f32
    %38 = vector.broadcast %cst_21 : f32 to vector<64x1xf32>
    %39 = arith.divf %37, %38 : vector<64x1xf32>
    %40 = vector.broadcast %32 : vector<64x1xf32> to vector<64x64xf32>
    %41 = arith.subf %28, %40 : vector<64x64xf32>
    %cst_22 = arith.constant 9.99999996E-13 : f32
    %42 = vector.broadcast %cst_22 : f32 to vector<64x1xf32>
    %43 = arith.addf %39, %42 : vector<64x1xf32>
    %44 = math.rsqrt %43 : vector<64x1xf32>
    %45 = vector.broadcast %44 : vector<64x1xf32> to vector<64x64xf32>
    %46 = arith.mulf %41, %45 : vector<64x64xf32>
    %c0_23 = arith.constant 0 : index
    %c0_24 = arith.constant 0 : index
    %47 = vector.load %arg6[%c0_23, %c0_24] : memref<1x64xf32, #tpu.memory_space<vmem>>, vector<1x64xf32>
    %48 = vector.broadcast %47 : vector<1x64xf32> to vector<64x64xf32>
    %49 = arith.mulf %46, %48 : vector<64x64xf32>
    %c0_25 = arith.constant 0 : index
    %c0_26 = arith.constant 0 : index
    %50 = vector.load %arg7[%c0_25, %c0_26] : memref<1x64xf32, #tpu.memory_space<vmem>>, vector<1x64xf32>
    %51 = vector.broadcast %50 : vector<1x64xf32> to vector<64x64xf32>
    %52 = arith.addf %49, %51 : vector<64x64xf32>
    %c0_27 = arith.constant 0 : index
    %c0_28 = arith.constant 0 : index
    %53 = vector.load %arg8[%c0_27, %c0_28] : memref<64x64xf32, #tpu.memory_space<vmem>>, vector<64x64xf32>
    tpu.vector_store %arg8[%c0_27, %c0_28], %52 {strides = array<i32>} : memref<64x64xf32, #tpu.memory_space<vmem>>, vector<64x64xf32>,
    return
  }
  func.func @transform_0(%arg0: i32) -> (i32, i32) {
    %c0_i32 = arith.constant 0 : i32
    %c0_i32_0 = arith.constant 0 : i32
    return %arg0, %c0_i32 : i32, i32
  }
  func.func @transform_1(%arg0: i32) -> (i32, i32) {
    %c0_i32 = arith.constant 0 : i32
    %c0_i32_0 = arith.constant 0 : i32
    %c0_i32_1 = arith.constant 0 : i32
    return %c0_i32, %c0_i32_0 : i32, i32
  }
  func.func @transform_2(%arg0: i32) -> (i32, i32) {
    %c0_i32 = arith.constant 0 : i32
    %c0_i32_0 = arith.constant 0 : i32
    %c0_i32_1 = arith.constant 0 : i32
    return %c0_i32, %c0_i32_0 : i32, i32
  }
  func.func @transform_3(%arg0: i32) -> (i32, i32) {
    %c0_i32 = arith.constant 0 : i32
    %c0_i32_0 = arith.constant 0 : i32
    %c0_i32_1 = arith.constant 0 : i32
    return %c0_i32, %c0_i32_0 : i32, i32
  }
  func.func @transform_4(%arg0: i32) -> (i32, i32) {
    %c0_i32 = arith.constant 0 : i32
    %c0_i32_0 = arith.constant 0 : i32
    %c0_i32_1 = arith.constant 0 : i32
    return %c0_i32, %c0_i32_0 : i32, i32
  }
  func.func @transform_5(%arg0: i32) -> (i32, i32) {
    %c0_i32 = arith.constant 0 : i32
    %c0_i32_0 = arith.constant 0 : i32
    %c0_i32_1 = arith.constant 0 : i32
    return %c0_i32, %c0_i32_0 : i32, i32
  }
  func.func @transform_6(%arg0: i32) -> (i32, i32) {
    %c0_i32 = arith.constant 0 : i32
    %c0_i32_0 = arith.constant 0 : i32
    %c0_i32_1 = arith.constant 0 : i32
    return %c0_i32, %c0_i32_0 : i32, i32
  }
  func.func @transform_7(%arg0: i32) -> (i32, i32) {
    %c0_i32 = arith.constant 0 : i32
    %c0_i32_0 = arith.constant 0 : i32
    return %arg0, %c0_i32 : i32, i32
  }
}

module attributes {stable_mosaic.version = 11 : i64} {
  func.func @_self_block_kernel(%arg0: i32, %arg1: memref<1x64x64xf32, #tpu.memory_space<vmem>>, %arg2: memref<64x192xbf16, #tpu.memory_space<vmem>>, %arg3: memref<1x192xf32, #tpu.memory_space<vmem>>, %arg4: memref<64x64xbf16, #tpu.memory_space<vmem>>, %arg5: memref<1x64xf32, #tpu.memory_space<vmem>>, %arg6: memref<1x64xf32, #tpu.memory_space<vmem>>, %arg7: memref<1x64xf32, #tpu.memory_space<vmem>>, %arg8: memref<1x64x64xf32, #tpu.memory_space<vmem>>, %arg9: memref<64x192xbf16, #tpu.memory_space<vmem>>, %arg10: memref<64x64xbf16, #tpu.memory_space<vmem>>) attributes {dimension_semantics = [#tpu.dimension_semantics<parallel>], iteration_bounds = array<i64: 2>, scalar_prefetch = 0 : i64, scratch_operands = 2 : i64, tpu.core_type = #tpu.core_type<tc>, window_params = [{transform_indices = @transform_0, window_bounds = array<i64: 1, 64, 64>}, {pipeline_mode = #tpu.pipeline_mode<synchronous>, transform_indices = @transform_1, window_bounds = array<i64: 64, 192>}, {pipeline_mode = #tpu.pipeline_mode<synchronous>, transform_indices = @transform_2, window_bounds = array<i64: 1, 192>}, {pipeline_mode = #tpu.pipeline_mode<synchronous>, transform_indices = @transform_3, window_bounds = array<i64: 64, 64>}, {pipeline_mode = #tpu.pipeline_mode<synchronous>, transform_indices = @transform_4, window_bounds = array<i64: 1, 64>}, {pipeline_mode = #tpu.pipeline_mode<synchronous>, transform_indices = @transform_5, window_bounds = array<i64: 1, 64>}, {pipeline_mode = #tpu.pipeline_mode<synchronous>, transform_indices = @transform_6, window_bounds = array<i64: 1, 64>}, {transform_indices = @transform_7, window_bounds = array<i64: 1, 64, 64>}]} {
    %c0 = arith.constant 0 : index
    %c0_0 = arith.constant 0 : index
    %c0_1 = arith.constant 0 : index
    %0 = vector.load %arg1[%c0, %c0_0, %c0_1] : memref<1x64x64xf32, #tpu.memory_space<vmem>>, vector<1x64x64xf32>
    %1 = vector.shape_cast %0 : vector<1x64x64xf32> to vector<64x64xf32>
    %2 = arith.truncf %1 : vector<64x64xf32> to vector<64x64xbf16>
    %c0_2 = arith.constant 0 : index
    %c0_3 = arith.constant 0 : index
    %3 = vector.load %arg2[%c0_2, %c0_3] : memref<64x192xbf16, #tpu.memory_space<vmem>>, vector<64x192xbf16>
    %cst = arith.constant dense<0.000000e+00> : vector<64x192xf32>
    %4 = tpu.matmul %2, %3, %cst {dimension_numbers = #tpu.dot_dimension_numbers<[1], [0], [0], [1], [0, 0, 1, 1], [], []>} : vector<64x64xbf16>, vector<64x192xbf16>, vector<64x192xf32> -> vector<64x192xf32>
    %c0_4 = arith.constant 0 : index
    %c0_5 = arith.constant 0 : index
    %5 = vector.load %arg3[%c0_4, %c0_5] : memref<1x192xf32, #tpu.memory_space<vmem>>, vector<1x192xf32>
    %6 = vector.broadcast %5 : vector<1x192xf32> to vector<64x192xf32>
    %7 = arith.addf %4, %6 : vector<64x192xf32>
    %8 = arith.truncf %7 : vector<64x192xf32> to vector<64x192xbf16>
    %c0_6 = arith.constant 0 : index
    %c0_7 = arith.constant 0 : index
    %9 = vector.load %arg9[%c0_6, %c0_7] : memref<64x192xbf16, #tpu.memory_space<vmem>>, vector<64x192xbf16>
    tpu.vector_store %arg9[%c0_6, %c0_7], %8 {strides = array<i32>} : memref<64x192xbf16, #tpu.memory_space<vmem>>, vector<64x192xbf16>,
    %c0_8 = arith.constant 0 : index
    %c0_9 = arith.constant 0 : index
    %10 = vector.load %arg9[%c0_8, %c0_9] : memref<64x192xbf16, #tpu.memory_space<vmem>>, vector<64x16xbf16>
    %c0_10 = arith.constant 0 : index
    %c64 = arith.constant 64 : index
    %11 = vector.load %arg9[%c0_10, %c64] : memref<64x192xbf16, #tpu.memory_space<vmem>>, vector<64x16xbf16>
    %c0_11 = arith.constant 0 : index
    %c128 = arith.constant 128 : index
    %12 = vector.load %arg9[%c0_11, %c128] : memref<64x192xbf16, #tpu.memory_space<vmem>>, vector<64x16xbf16>
    %cst_12 = arith.constant dense<0.000000e+00> : vector<64x64xf32>
    %13 = tpu.matmul %10, %11, %cst_12 {dimension_numbers = #tpu.dot_dimension_numbers<[1], [1], [0], [0], [0, 0, 1, 0], [], []>} : vector<64x16xbf16>, vector<64x16xbf16>, vector<64x64xf32> -> vector<64x64xf32>
    %cst_13 = arith.constant dense<0xFF800000> : vector<64xf32>
    %14 = vector.multi_reduction <maximumf>, %13, %cst_13 [1] : vector<64x64xf32> to vector<64xf32>
    %15 = vector.shape_cast %14 : vector<64xf32> to vector<64x1xf32>
    %16 = vector.broadcast %15 : vector<64x1xf32> to vector<64x64xf32>
    %17 = arith.subf %13, %16 : vector<64x64xf32>
    %18 = math.exp %17 : vector<64x64xf32>
    %cst_14 = arith.constant dense<0.000000e+00> : vector<64xf32>
    %19 = vector.multi_reduction <add>, %18, %cst_14 [1] : vector<64x64xf32> to vector<64xf32>
    %20 = vector.shape_cast %19 : vector<64xf32> to vector<64x1xf32>
    %21 = arith.truncf %18 : vector<64x64xf32> to vector<64x64xbf16>
    %cst_15 = arith.constant dense<0.000000e+00> : vector<64x16xf32>
    %22 = tpu.matmul %21, %12, %cst_15 {dimension_numbers = #tpu.dot_dimension_numbers<[1], [0], [0], [1], [0, 0, 1, 1], [], []>} : vector<64x64xbf16>, vector<64x16xbf16>, vector<64x16xf32> -> vector<64x16xf32>
    %23 = tpu.reciprocal %20 {approx = true} : vector<64x1xf32> -> vector<64x1xf32>
    %24 = vector.broadcast %23 : vector<64x1xf32> to vector<64x16xf32>
    %25 = arith.mulf %22, %24 : vector<64x16xf32>
    %26 = arith.truncf %25 : vector<64x16xf32> to vector<64x16xbf16>
    %c0_16 = arith.constant 0 : index
    %c0_17 = arith.constant 0 : index
    %27 = vector.load %arg10[%c0_16, %c0_17] : memref<64x64xbf16, #tpu.memory_space<vmem>>, vector<64x16xbf16>
    tpu.vector_store %arg10[%c0_16, %c0_17], %26 {strides = array<i32>} : memref<64x64xbf16, #tpu.memory_space<vmem>>, vector<64x16xbf16>,
    %c0_18 = arith.constant 0 : index
    %c16 = arith.constant 16 : index
    %28 = vector.load %arg9[%c0_18, %c16] : memref<64x192xbf16, #tpu.memory_space<vmem>>, vector<64x16xbf16>
    %c0_19 = arith.constant 0 : index
    %c80 = arith.constant 80 : index
    %29 = vector.load %arg9[%c0_19, %c80] : memref<64x192xbf16, #tpu.memory_space<vmem>>, vector<64x16xbf16>
    %c0_20 = arith.constant 0 : index
    %c144 = arith.constant 144 : index
    %30 = vector.load %arg9[%c0_20, %c144] : memref<64x192xbf16, #tpu.memory_space<vmem>>, vector<64x16xbf16>
    %cst_21 = arith.constant dense<0.000000e+00> : vector<64x64xf32>
    %31 = tpu.matmul %28, %29, %cst_21 {dimension_numbers = #tpu.dot_dimension_numbers<[1], [1], [0], [0], [0, 0, 1, 0], [], []>} : vector<64x16xbf16>, vector<64x16xbf16>, vector<64x64xf32> -> vector<64x64xf32>
    %cst_22 = arith.constant dense<0xFF800000> : vector<64xf32>
    %32 = vector.multi_reduction <maximumf>, %31, %cst_22 [1] : vector<64x64xf32> to vector<64xf32>
    %33 = vector.shape_cast %32 : vector<64xf32> to vector<64x1xf32>
    %34 = vector.broadcast %33 : vector<64x1xf32> to vector<64x64xf32>
    %35 = arith.subf %31, %34 : vector<64x64xf32>
    %36 = math.exp %35 : vector<64x64xf32>
    %cst_23 = arith.constant dense<0.000000e+00> : vector<64xf32>
    %37 = vector.multi_reduction <add>, %36, %cst_23 [1] : vector<64x64xf32> to vector<64xf32>
    %38 = vector.shape_cast %37 : vector<64xf32> to vector<64x1xf32>
    %39 = arith.truncf %36 : vector<64x64xf32> to vector<64x64xbf16>
    %cst_24 = arith.constant dense<0.000000e+00> : vector<64x16xf32>
    %40 = tpu.matmul %39, %30, %cst_24 {dimension_numbers = #tpu.dot_dimension_numbers<[1], [0], [0], [1], [0, 0, 1, 1], [], []>} : vector<64x64xbf16>, vector<64x16xbf16>, vector<64x16xf32> -> vector<64x16xf32>
    %41 = tpu.reciprocal %38 {approx = true} : vector<64x1xf32> -> vector<64x1xf32>
    %42 = vector.broadcast %41 : vector<64x1xf32> to vector<64x16xf32>
    %43 = arith.mulf %40, %42 : vector<64x16xf32>
    %44 = arith.truncf %43 : vector<64x16xf32> to vector<64x16xbf16>
    %c0_25 = arith.constant 0 : index
    %c16_26 = arith.constant 16 : index
    %45 = vector.load %arg10[%c0_25, %c16_26] : memref<64x64xbf16, #tpu.memory_space<vmem>>, vector<64x16xbf16>
    tpu.vector_store %arg10[%c0_25, %c16_26], %44 {strides = array<i32>} : memref<64x64xbf16, #tpu.memory_space<vmem>>, vector<64x16xbf16>,
    %c0_27 = arith.constant 0 : index
    %c32 = arith.constant 32 : index
    %46 = vector.load %arg9[%c0_27, %c32] : memref<64x192xbf16, #tpu.memory_space<vmem>>, vector<64x16xbf16>
    %c0_28 = arith.constant 0 : index
    %c96 = arith.constant 96 : index
    %47 = vector.load %arg9[%c0_28, %c96] : memref<64x192xbf16, #tpu.memory_space<vmem>>, vector<64x16xbf16>
    %c0_29 = arith.constant 0 : index
    %c160 = arith.constant 160 : index
    %48 = vector.load %arg9[%c0_29, %c160] : memref<64x192xbf16, #tpu.memory_space<vmem>>, vector<64x16xbf16>
    %cst_30 = arith.constant dense<0.000000e+00> : vector<64x64xf32>
    %49 = tpu.matmul %46, %47, %cst_30 {dimension_numbers = #tpu.dot_dimension_numbers<[1], [1], [0], [0], [0, 0, 1, 0], [], []>} : vector<64x16xbf16>, vector<64x16xbf16>, vector<64x64xf32> -> vector<64x64xf32>
    %cst_31 = arith.constant dense<0xFF800000> : vector<64xf32>
    %50 = vector.multi_reduction <maximumf>, %49, %cst_31 [1] : vector<64x64xf32> to vector<64xf32>
    %51 = vector.shape_cast %50 : vector<64xf32> to vector<64x1xf32>
    %52 = vector.broadcast %51 : vector<64x1xf32> to vector<64x64xf32>
    %53 = arith.subf %49, %52 : vector<64x64xf32>
    %54 = math.exp %53 : vector<64x64xf32>
    %cst_32 = arith.constant dense<0.000000e+00> : vector<64xf32>
    %55 = vector.multi_reduction <add>, %54, %cst_32 [1] : vector<64x64xf32> to vector<64xf32>
    %56 = vector.shape_cast %55 : vector<64xf32> to vector<64x1xf32>
    %57 = arith.truncf %54 : vector<64x64xf32> to vector<64x64xbf16>
    %cst_33 = arith.constant dense<0.000000e+00> : vector<64x16xf32>
    %58 = tpu.matmul %57, %48, %cst_33 {dimension_numbers = #tpu.dot_dimension_numbers<[1], [0], [0], [1], [0, 0, 1, 1], [], []>} : vector<64x64xbf16>, vector<64x16xbf16>, vector<64x16xf32> -> vector<64x16xf32>
    %59 = tpu.reciprocal %56 {approx = true} : vector<64x1xf32> -> vector<64x1xf32>
    %60 = vector.broadcast %59 : vector<64x1xf32> to vector<64x16xf32>
    %61 = arith.mulf %58, %60 : vector<64x16xf32>
    %62 = arith.truncf %61 : vector<64x16xf32> to vector<64x16xbf16>
    %c0_34 = arith.constant 0 : index
    %c32_35 = arith.constant 32 : index
    %63 = vector.load %arg10[%c0_34, %c32_35] : memref<64x64xbf16, #tpu.memory_space<vmem>>, vector<64x16xbf16>
    tpu.vector_store %arg10[%c0_34, %c32_35], %62 {strides = array<i32>} : memref<64x64xbf16, #tpu.memory_space<vmem>>, vector<64x16xbf16>,
    %c0_36 = arith.constant 0 : index
    %c48 = arith.constant 48 : index
    %64 = vector.load %arg9[%c0_36, %c48] : memref<64x192xbf16, #tpu.memory_space<vmem>>, vector<64x16xbf16>
    %c0_37 = arith.constant 0 : index
    %c112 = arith.constant 112 : index
    %65 = vector.load %arg9[%c0_37, %c112] : memref<64x192xbf16, #tpu.memory_space<vmem>>, vector<64x16xbf16>
    %c0_38 = arith.constant 0 : index
    %c176 = arith.constant 176 : index
    %66 = vector.load %arg9[%c0_38, %c176] : memref<64x192xbf16, #tpu.memory_space<vmem>>, vector<64x16xbf16>
    %cst_39 = arith.constant dense<0.000000e+00> : vector<64x64xf32>
    %67 = tpu.matmul %64, %65, %cst_39 {dimension_numbers = #tpu.dot_dimension_numbers<[1], [1], [0], [0], [0, 0, 1, 0], [], []>} : vector<64x16xbf16>, vector<64x16xbf16>, vector<64x64xf32> -> vector<64x64xf32>
    %cst_40 = arith.constant dense<0xFF800000> : vector<64xf32>
    %68 = vector.multi_reduction <maximumf>, %67, %cst_40 [1] : vector<64x64xf32> to vector<64xf32>
    %69 = vector.shape_cast %68 : vector<64xf32> to vector<64x1xf32>
    %70 = vector.broadcast %69 : vector<64x1xf32> to vector<64x64xf32>
    %71 = arith.subf %67, %70 : vector<64x64xf32>
    %72 = math.exp %71 : vector<64x64xf32>
    %cst_41 = arith.constant dense<0.000000e+00> : vector<64xf32>
    %73 = vector.multi_reduction <add>, %72, %cst_41 [1] : vector<64x64xf32> to vector<64xf32>
    %74 = vector.shape_cast %73 : vector<64xf32> to vector<64x1xf32>
    %75 = arith.truncf %72 : vector<64x64xf32> to vector<64x64xbf16>
    %cst_42 = arith.constant dense<0.000000e+00> : vector<64x16xf32>
    %76 = tpu.matmul %75, %66, %cst_42 {dimension_numbers = #tpu.dot_dimension_numbers<[1], [0], [0], [1], [0, 0, 1, 1], [], []>} : vector<64x64xbf16>, vector<64x16xbf16>, vector<64x16xf32> -> vector<64x16xf32>
    %77 = tpu.reciprocal %74 {approx = true} : vector<64x1xf32> -> vector<64x1xf32>
    %78 = vector.broadcast %77 : vector<64x1xf32> to vector<64x16xf32>
    %79 = arith.mulf %76, %78 : vector<64x16xf32>
    %80 = arith.truncf %79 : vector<64x16xf32> to vector<64x16xbf16>
    %c0_43 = arith.constant 0 : index
    %c48_44 = arith.constant 48 : index
    %81 = vector.load %arg10[%c0_43, %c48_44] : memref<64x64xbf16, #tpu.memory_space<vmem>>, vector<64x16xbf16>
    tpu.vector_store %arg10[%c0_43, %c48_44], %80 {strides = array<i32>} : memref<64x64xbf16, #tpu.memory_space<vmem>>, vector<64x16xbf16>,
    %c0_45 = arith.constant 0 : index
    %c0_46 = arith.constant 0 : index
    %82 = vector.load %arg10[%c0_45, %c0_46] : memref<64x64xbf16, #tpu.memory_space<vmem>>, vector<64x64xbf16>
    %c0_47 = arith.constant 0 : index
    %c0_48 = arith.constant 0 : index
    %83 = vector.load %arg4[%c0_47, %c0_48] : memref<64x64xbf16, #tpu.memory_space<vmem>>, vector<64x64xbf16>
    %cst_49 = arith.constant dense<0.000000e+00> : vector<64x64xf32>
    %84 = tpu.matmul %82, %83, %cst_49 {dimension_numbers = #tpu.dot_dimension_numbers<[1], [0], [0], [1], [0, 0, 1, 1], [], []>} : vector<64x64xbf16>, vector<64x64xbf16>, vector<64x64xf32> -> vector<64x64xf32>
    %c0_50 = arith.constant 0 : index
    %c0_51 = arith.constant 0 : index
    %85 = vector.load %arg5[%c0_50, %c0_51] : memref<1x64xf32, #tpu.memory_space<vmem>>, vector<1x64xf32>
    %86 = vector.broadcast %85 : vector<1x64xf32> to vector<64x64xf32>
    %87 = arith.addf %84, %86 : vector<64x64xf32>
    %88 = arith.addf %87, %1 : vector<64x64xf32>
    %cst_52 = arith.constant dense<0.000000e+00> : vector<64xf32>
    %89 = vector.multi_reduction <add>, %88, %cst_52 [1] : vector<64x64xf32> to vector<64xf32>
    %90 = vector.shape_cast %89 : vector<64xf32> to vector<64x1xf32>
    %cst_53 = arith.constant 6.400000e+01 : f32
    %91 = vector.broadcast %cst_53 : f32 to vector<64x1xf32>
    %92 = arith.divf %90, %91 : vector<64x1xf32>
    %93 = vector.broadcast %92 : vector<64x1xf32> to vector<64x64xf32>
    %94 = arith.subf %88, %93 : vector<64x64xf32>
    %95 = arith.mulf %94, %94 : vector<64x64xf32>
    %cst_54 = arith.constant dense<0.000000e+00> : vector<64xf32>
    %96 = vector.multi_reduction <add>, %95, %cst_54 [1] : vector<64x64xf32> to vector<64xf32>
    %97 = vector.shape_cast %96 : vector<64xf32> to vector<64x1xf32>
    %cst_55 = arith.constant 6.400000e+01 : f32
    %98 = vector.broadcast %cst_55 : f32 to vector<64x1xf32>
    %99 = arith.divf %97, %98 : vector<64x1xf32>
    %100 = vector.broadcast %92 : vector<64x1xf32> to vector<64x64xf32>
    %101 = arith.subf %88, %100 : vector<64x64xf32>
    %cst_56 = arith.constant 9.99999996E-13 : f32
    %102 = vector.broadcast %cst_56 : f32 to vector<64x1xf32>
    %103 = arith.addf %99, %102 : vector<64x1xf32>
    %104 = math.rsqrt %103 : vector<64x1xf32>
    %105 = vector.broadcast %104 : vector<64x1xf32> to vector<64x64xf32>
    %106 = arith.mulf %101, %105 : vector<64x64xf32>
    %c0_57 = arith.constant 0 : index
    %c0_58 = arith.constant 0 : index
    %107 = vector.load %arg6[%c0_57, %c0_58] : memref<1x64xf32, #tpu.memory_space<vmem>>, vector<1x64xf32>
    %108 = vector.broadcast %107 : vector<1x64xf32> to vector<64x64xf32>
    %109 = arith.mulf %106, %108 : vector<64x64xf32>
    %c0_59 = arith.constant 0 : index
    %c0_60 = arith.constant 0 : index
    %110 = vector.load %arg7[%c0_59, %c0_60] : memref<1x64xf32, #tpu.memory_space<vmem>>, vector<1x64xf32>
    %111 = vector.broadcast %110 : vector<1x64xf32> to vector<64x64xf32>
    %112 = arith.addf %109, %111 : vector<64x64xf32>
    %c0_61 = arith.constant 0 : index
    %c0_62 = arith.constant 0 : index
    %c0_63 = arith.constant 0 : index
    %113 = vector.load %arg8[%c0_61, %c0_62, %c0_63] : memref<1x64x64xf32, #tpu.memory_space<vmem>>, vector<1x64x64xf32>
    %114 = vector.shape_cast %113 : vector<1x64x64xf32> to vector<64x64xf32>
    %115 = vector.shape_cast %112 : vector<64x64xf32> to vector<1x64x64xf32>
    tpu.vector_store %arg8[%c0_61, %c0_62, %c0_63], %115 {strides = array<i32>} : memref<1x64x64xf32, #tpu.memory_space<vmem>>, vector<1x64x64xf32>,
    return
  }
  func.func @transform_0(%arg0: i32) -> (i32, i32, i32) {
    %c0_i32 = arith.constant 0 : i32
    %c0_i32_0 = arith.constant 0 : i32
    %c0_i32_1 = arith.constant 0 : i32
    return %arg0, %c0_i32, %c0_i32_0 : i32, i32, i32
  }
  func.func @transform_1(%arg0: i32) -> (i32, i32) {
    %c0_i32 = arith.constant 0 : i32
    %c0_i32_0 = arith.constant 0 : i32
    %c0_i32_1 = arith.constant 0 : i32
    return %c0_i32, %c0_i32_0 : i32, i32
  }
  func.func @transform_2(%arg0: i32) -> (i32, i32) {
    %c0_i32 = arith.constant 0 : i32
    %c0_i32_0 = arith.constant 0 : i32
    %c0_i32_1 = arith.constant 0 : i32
    return %c0_i32, %c0_i32_0 : i32, i32
  }
  func.func @transform_3(%arg0: i32) -> (i32, i32) {
    %c0_i32 = arith.constant 0 : i32
    %c0_i32_0 = arith.constant 0 : i32
    %c0_i32_1 = arith.constant 0 : i32
    return %c0_i32, %c0_i32_0 : i32, i32
  }
  func.func @transform_4(%arg0: i32) -> (i32, i32) {
    %c0_i32 = arith.constant 0 : i32
    %c0_i32_0 = arith.constant 0 : i32
    %c0_i32_1 = arith.constant 0 : i32
    return %c0_i32, %c0_i32_0 : i32, i32
  }
  func.func @transform_5(%arg0: i32) -> (i32, i32) {
    %c0_i32 = arith.constant 0 : i32
    %c0_i32_0 = arith.constant 0 : i32
    %c0_i32_1 = arith.constant 0 : i32
    return %c0_i32, %c0_i32_0 : i32, i32
  }
  func.func @transform_6(%arg0: i32) -> (i32, i32) {
    %c0_i32 = arith.constant 0 : i32
    %c0_i32_0 = arith.constant 0 : i32
    %c0_i32_1 = arith.constant 0 : i32
    return %c0_i32, %c0_i32_0 : i32, i32
  }
  func.func @transform_7(%arg0: i32) -> (i32, i32, i32) {
    %c0_i32 = arith.constant 0 : i32
    %c0_i32_0 = arith.constant 0 : i32
    %c0_i32_1 = arith.constant 0 : i32
    return %arg0, %c0_i32, %c0_i32_0 : i32, i32, i32
  }
}

module attributes {stable_mosaic.version = 11 : i64} {
  func.func @_linear_kernel(%arg0: i32, %arg1: i32, %arg2: memref<64x64xbf16, #tpu.memory_space<vmem>>, %arg3: memref<64x128xbf16, #tpu.memory_space<vmem>>, %arg4: memref<1x128xf32, #tpu.memory_space<vmem>>, %arg5: memref<64x128xf32, #tpu.memory_space<vmem>>) attributes {dimension_semantics = [#tpu.dimension_semantics<parallel>, #tpu.dimension_semantics<parallel>], iteration_bounds = array<i64: 2, 1>, scalar_prefetch = 0 : i64, scratch_operands = 0 : i64, tpu.core_type = #tpu.core_type<tc>, window_params = [{transform_indices = @transform_0, window_bounds = array<i64: 64, 64>}, {transform_indices = @transform_1, window_bounds = array<i64: 64, 128>}, {transform_indices = @transform_2, window_bounds = array<i64: 1, 128>}, {transform_indices = @transform_3, window_bounds = array<i64: 64, 128>}]} {
    %c0 = arith.constant 0 : index
    %c0_0 = arith.constant 0 : index
    %0 = vector.load %arg2[%c0, %c0_0] : memref<64x64xbf16, #tpu.memory_space<vmem>>, vector<64x64xbf16>
    %c0_1 = arith.constant 0 : index
    %c0_2 = arith.constant 0 : index
    %1 = vector.load %arg3[%c0_1, %c0_2] : memref<64x128xbf16, #tpu.memory_space<vmem>>, vector<64x128xbf16>
    %cst = arith.constant dense<0.000000e+00> : vector<64x128xf32>
    %2 = tpu.matmul %0, %1, %cst {dimension_numbers = #tpu.dot_dimension_numbers<[1], [0], [0], [1], [0, 0, 1, 1], [], []>} : vector<64x64xbf16>, vector<64x128xbf16>, vector<64x128xf32> -> vector<64x128xf32>
    %c0_3 = arith.constant 0 : index
    %c0_4 = arith.constant 0 : index
    %3 = vector.load %arg4[%c0_3, %c0_4] : memref<1x128xf32, #tpu.memory_space<vmem>>, vector<1x128xf32>
    %4 = vector.broadcast %3 : vector<1x128xf32> to vector<64x128xf32>
    %5 = arith.addf %2, %4 : vector<64x128xf32>
    %c0_5 = arith.constant 0 : index
    %c0_6 = arith.constant 0 : index
    %6 = vector.load %arg5[%c0_5, %c0_6] : memref<64x128xf32, #tpu.memory_space<vmem>>, vector<64x128xf32>
    tpu.vector_store %arg5[%c0_5, %c0_6], %5 {strides = array<i32>} : memref<64x128xf32, #tpu.memory_space<vmem>>, vector<64x128xf32>,
    return
  }
  func.func @transform_0(%arg0: i32, %arg1: i32) -> (i32, i32) {
    %c0_i32 = arith.constant 0 : i32
    %c0_i32_0 = arith.constant 0 : i32
    return %arg0, %c0_i32 : i32, i32
  }
  func.func @transform_1(%arg0: i32, %arg1: i32) -> (i32, i32) {
    %c0_i32 = arith.constant 0 : i32
    %c0_i32_0 = arith.constant 0 : i32
    return %c0_i32, %arg1 : i32, i32
  }
  func.func @transform_2(%arg0: i32, %arg1: i32) -> (i32, i32) {
    %c0_i32 = arith.constant 0 : i32
    %c0_i32_0 = arith.constant 0 : i32
    return %c0_i32, %arg1 : i32, i32
  }
  func.func @transform_3(%arg0: i32, %arg1: i32) -> (i32, i32) {
    %c0_i32 = arith.constant 0 : i32
    return %arg0, %arg1 : i32, i32
  }
}

module attributes {stable_mosaic.version = 11 : i64} {
  func.func @_ln_kernel(%arg0: i32, %arg1: memref<64x128xf32, #tpu.memory_space<vmem>>, %arg2: memref<1x128xf32, #tpu.memory_space<vmem>>, %arg3: memref<1x128xf32, #tpu.memory_space<vmem>>, %arg4: memref<64x128xf32, #tpu.memory_space<vmem>>) attributes {dimension_semantics = [#tpu.dimension_semantics<parallel>], iteration_bounds = array<i64: 2>, scalar_prefetch = 0 : i64, scratch_operands = 0 : i64, tpu.core_type = #tpu.core_type<tc>, window_params = [{transform_indices = @transform_0, window_bounds = array<i64: 64, 128>}, {pipeline_mode = #tpu.pipeline_mode<synchronous>, transform_indices = @transform_1, window_bounds = array<i64: 1, 128>}, {pipeline_mode = #tpu.pipeline_mode<synchronous>, transform_indices = @transform_2, window_bounds = array<i64: 1, 128>}, {transform_indices = @transform_3, window_bounds = array<i64: 64, 128>}]} {
    %c0 = arith.constant 0 : index
    %c0_0 = arith.constant 0 : index
    %0 = vector.load %arg1[%c0, %c0_0] : memref<64x128xf32, #tpu.memory_space<vmem>>, vector<64x128xf32>
    %cst = arith.constant dense<0.000000e+00> : vector<64xf32>
    %1 = vector.multi_reduction <add>, %0, %cst [1] : vector<64x128xf32> to vector<64xf32>
    %2 = vector.shape_cast %1 : vector<64xf32> to vector<64x1xf32>
    %cst_1 = arith.constant 1.280000e+02 : f32
    %3 = vector.broadcast %cst_1 : f32 to vector<64x1xf32>
    %4 = arith.divf %2, %3 : vector<64x1xf32>
    %5 = vector.broadcast %4 : vector<64x1xf32> to vector<64x128xf32>
    %6 = arith.subf %0, %5 : vector<64x128xf32>
    %7 = arith.mulf %6, %6 : vector<64x128xf32>
    %cst_2 = arith.constant dense<0.000000e+00> : vector<64xf32>
    %8 = vector.multi_reduction <add>, %7, %cst_2 [1] : vector<64x128xf32> to vector<64xf32>
    %9 = vector.shape_cast %8 : vector<64xf32> to vector<64x1xf32>
    %cst_3 = arith.constant 1.280000e+02 : f32
    %10 = vector.broadcast %cst_3 : f32 to vector<64x1xf32>
    %11 = arith.divf %9, %10 : vector<64x1xf32>
    %12 = vector.broadcast %4 : vector<64x1xf32> to vector<64x128xf32>
    %13 = arith.subf %0, %12 : vector<64x128xf32>
    %cst_4 = arith.constant 9.99999974E-6 : f32
    %14 = vector.broadcast %cst_4 : f32 to vector<64x1xf32>
    %15 = arith.addf %11, %14 : vector<64x1xf32>
    %16 = math.rsqrt %15 : vector<64x1xf32>
    %17 = vector.broadcast %16 : vector<64x1xf32> to vector<64x128xf32>
    %18 = arith.mulf %13, %17 : vector<64x128xf32>
    %c0_5 = arith.constant 0 : index
    %c0_6 = arith.constant 0 : index
    %19 = vector.load %arg2[%c0_5, %c0_6] : memref<1x128xf32, #tpu.memory_space<vmem>>, vector<1x128xf32>
    %20 = vector.broadcast %19 : vector<1x128xf32> to vector<64x128xf32>
    %21 = arith.mulf %18, %20 : vector<64x128xf32>
    %c0_7 = arith.constant 0 : index
    %c0_8 = arith.constant 0 : index
    %22 = vector.load %arg3[%c0_7, %c0_8] : memref<1x128xf32, #tpu.memory_space<vmem>>, vector<1x128xf32>
    %23 = vector.broadcast %22 : vector<1x128xf32> to vector<64x128xf32>
    %24 = arith.addf %21, %23 : vector<64x128xf32>
    %c0_9 = arith.constant 0 : index
    %c0_10 = arith.constant 0 : index
    %25 = vector.load %arg4[%c0_9, %c0_10] : memref<64x128xf32, #tpu.memory_space<vmem>>, vector<64x128xf32>
    tpu.vector_store %arg4[%c0_9, %c0_10], %24 {strides = array<i32>} : memref<64x128xf32, #tpu.memory_space<vmem>>, vector<64x128xf32>,
    return
  }
  func.func @transform_0(%arg0: i32) -> (i32, i32) {
    %c0_i32 = arith.constant 0 : i32
    %c0_i32_0 = arith.constant 0 : i32
    return %arg0, %c0_i32 : i32, i32
  }
  func.func @transform_1(%arg0: i32) -> (i32, i32) {
    %c0_i32 = arith.constant 0 : i32
    %c0_i32_0 = arith.constant 0 : i32
    %c0_i32_1 = arith.constant 0 : i32
    return %c0_i32, %c0_i32_0 : i32, i32
  }
  func.func @transform_2(%arg0: i32) -> (i32, i32) {
    %c0_i32 = arith.constant 0 : i32
    %c0_i32_0 = arith.constant 0 : i32
    %c0_i32_1 = arith.constant 0 : i32
    return %c0_i32, %c0_i32_0 : i32, i32
  }
  func.func @transform_3(%arg0: i32) -> (i32, i32) {
    %c0_i32 = arith.constant 0 : i32
    %c0_i32_0 = arith.constant 0 : i32
    return %arg0, %c0_i32 : i32, i32
  }
}

</mosaic_0001>

<llo_original>
// kernel: encoder_projector_qformer.11
$region0: #{encoder_projector_qformer.11}
  #allocation0 [shape = 'u32[]', space=smem, size = 0x4, offset = 0x4, fixed_abs, tag = 'smem constant byte address 0x4 - core index']
  #allocation1 [shape = 'u32[144,128]{1,0:T(1,128)}', space=vmem, size = 0x12000, scoped, tag = 'internal scratch']
  %s0 = inlined_call_operand.vmem [shape: bf16[16,32], index: 0, kind: input, shape index: {}]
  %s1 = inlined_call_operand.vmem [shape: bf16[32,128], index: 1, kind: input, shape index: {}]
  %s2 = inlined_call_operand.vmem [shape: f32[1,128], index: 2, kind: input, shape index: {}]
  %s3 = inlined_call_operand.vmem [shape: bf16[16,128], index: 3, kind: output, shape index: {}]
  %s4 = sld [smem:[#allocation0]]
  $region45: #{encoder_projector_qformer.11} parent=0
    _
  %s6 = ssub.s32 1, %s4
  %s7 = scalar_select 0, %s6, %s4
  loop: start=0, step=1, limit=4
  $region2: #{encoder_projector_qformer.11} parent=0 // loop_pre_header
    _
  $region3: #{encoder_projector_qformer.11} parent=0 // loop_header
    %s9 = sphi 0, %s13
    %p10 = scmp.ge.s32.totalorder %s9, 4
    %s16 = sphi 0, %s28
    %s17 = sphi 0, %s24
    %s18 = sphi 0, %s16
    %s19 = sphi 0, %s17
    %s20 = sphi 0, %s18
    %s21 = sphi 0, %s19
    %s31 = sphi 0, %s33
    %s34 = sphi 0, %s31
    %s35 = sphi 0, %s34
    %s51 = sphi 0, %s35
    %s57 = sphi 0, %s59
    %s60 = sphi 0, %s57
    %s61 = sphi 0, %s60
    %s77 = sphi 0, %s61
    %s83 = sphi 0, %s85
    %s86 = sphi 0, %s83
    %s87 = sphi 0, %s86
    %s103 = sphi 0, %s87
    %s111 = sphi 0, %s113
    %s114 = sphi 0, %s111
    %s115 = sphi 0, %s114
    %s131 = sphi 0, %s115
  $region4: #{encoder_projector_qformer.11} parent=0 // loop_header_branch
    %12 = sbr.rel (%p10) target = $region8
  $region5: #{encoder_projector_qformer.11} parent=0 // loop_body
    %s14 = ssub.s32 %s9, 1
    %s15 = ssub.s32 %s9, 2
    %s22 = sadd.s32 1, %s17
    %p23 = scmp.ge.s32.totalorder %s22, 1
    %s24 = scalar_select %p23, 0, %s22
    %s25 = sadd.s32 1, %s16
    %s26 = scalar_select %p23, %s25, %s16
    %p27 = scmp.ge.s32.totalorder %s26, 2
    %s28 = scalar_select %p27, 0, %s26
    %s29 = ssub.s32 %s16, %s28
    %p30 = scmp.eq.s32.totalorder %s29, 0
    %s32 = sadd.s32 %s31, 1
    %s33 = scalar_select %p30, %s31, %s32
    %p36 = pneg %p30
    %p37 = scmp.eq.s32.totalorder %s9, 1
    %p38 = por %p36, %p37
    %p39 = scmp.ne.s32.totalorder %s31, %s34
    %p40 = scmp.eq.s32.totalorder %s9, 0
    %p41 = por %p39, %p40
    %p42 = scmp.ne.s32.totalorder %s31, %s34
    %p43 = scmp.eq.s32.totalorder %s14, 1
    %p44 = por %p42, %p43
    %p45 = scmp.ne.s32.totalorder %s34, %s35
    %p46 = scmp.eq.s32.totalorder %s14, 0
    %p47 = por %p45, %p46
    %p48 = scmp.ne.s32.totalorder %s34, %s35
    %p49 = scmp.eq.s32.totalorder %s15, 1
    %p50 = por %p48, %p49
    %p52 = scmp.ne.s32.totalorder %s35, %s51
    %p53 = scmp.eq.s32.totalorder %s15, 0
    %p54 = por %p52, %p53
    %s55 = ssub.s32 %s17, %s24
    %p56 = scmp.eq.s32.totalorder %s55, 0
    %s58 = sadd.s32 %s57, 1
    %s59 = scalar_select %p56, %s57, %s58
    %p62 = pneg %p56
    %p63 = scmp.eq.s32.totalorder %s9, 1
    %p64 = por %p62, %p63
    %p65 = scmp.ne.s32.totalorder %s57, %s60
    %p66 = scmp.eq.s32.totalorder %s9, 0
    %p67 = por %p65, %p66
    %p68 = scmp.ne.s32.totalorder %s57, %s60
    %p69 = scmp.eq.s32.totalorder %s14, 1
    %p70 = por %p68, %p69
    %p71 = scmp.ne.s32.totalorder %s60, %s61
    %p72 = scmp.eq.s32.totalorder %s14, 0
    %p73 = por %p71, %p72
    %p74 = scmp.ne.s32.totalorder %s60, %s61
    %p75 = scmp.eq.s32.totalorder %s15, 1
    %p76 = por %p74, %p75
    %p78 = scmp.ne.s32.totalorder %s61, %s77
    %p79 = scmp.eq.s32.totalorder %s15, 0
    %p80 = por %p78, %p79
    %s81 = ssub.s32 %s17, %s24
    %p82 = scmp.eq.s32.totalorder %s81, 0
    %s84 = sadd.s32 %s83, 1
    %s85 = scalar_select %p82, %s83, %s84
    %p88 = pneg %p82
    %p89 = scmp.eq.s32.totalorder %s9, 1
    %p90 = por %p88, %p89
    %p91 = scmp.ne.s32.totalorder %s83, %s86
    %p92 = scmp.eq.s32.totalorder %s9, 0
    %p93 = por %p91, %p92
    %p94 = scmp.ne.s32.totalorder %s83, %s86
    %p95 = scmp.eq.s32.totalorder %s14, 1
    %p96 = por %p94, %p95
    %p97 = scmp.ne.s32.totalorder %s86, %s87
    %p98 = scmp.eq.s32.totalorder %s14, 0
    %p99 = por %p97, %p98
    %p100 = scmp.ne.s32.totalorder %s86, %s87
    %p101 = scmp.eq.s32.totalorder %s15, 1
    %p102 = por %p100, %p101
    %p104 = scmp.ne.s32.totalorder %s87, %s103
    %p105 = scmp.eq.s32.totalorder %s15, 0
    %p106 = por %p104, %p105
    %s107 = ssub.s32 %s16, %s28
    %s108 = ssub.s32 %s17, %s24
    %s109 = sor.u32 %s107, %s108
    %p110 = scmp.eq.s32.totalorder %s109, 0
    %s112 = sadd.s32 %s111, 1
    %s113 = scalar_select %p110, %s111, %s112
    %p116 = pneg %p110
    %p117 = scmp.eq.s32.totalorder %s9, 1
    %p118 = por %p116, %p117
    %p119 = scmp.ne.s32.totalorder %s111, %s114
    %p120 = scmp.eq.s32.totalorder %s9, 0
    %p121 = por %p119, %p120
    %p122 = scmp.ne.s32.totalorder %s111, %s114
    %p123 = scmp.eq.s32.totalorder %s14, 1
    %p124 = por %p122, %p123
    %p125 = scmp.ne.s32.totalorder %s114, %s115
    %p126 = scmp.eq.s32.totalorder %s14, 0
    %p127 = por %p125, %p126
    %p128 = scmp.ne.s32.totalorder %s114, %s115
    %p129 = scmp.eq.s32.totalorder %s15, 1
    %p130 = por %p128, %p129
    %p132 = scmp.ne.s32.totalorder %s115, %s131
    %p133 = scmp.eq.s32.totalorder %s15, 0
    %p134 = por %p132, %p133
    %p135 = scmp.le.s32.totalorder 1, %s9
    %p136 = scmp.lt.s32.totalorder %s9, 3
    %p137 = pnand %p135, %p136
    %p138 = pneg %p137
    // Predicated region
    $region9: #{encoder_projector_qformer.11} parent=5 // pred_check
      _
    $region10: #{encoder_projector_qformer.11} parent=5 // pred_check_branch
      %140 = sbr.rel (%p137) target = $region12
    $region11: #{encoder_projector_qformer.11} parent=5 // pred_region
      %s141 = ssub.s32 %s9, 1
      // Predicated region
      $region13: #{encoder_projector_qformer.11} parent=11 // pred_check
        %p142 = pneg %p73
      $region14: #{encoder_projector_qformer.11} parent=11 // pred_check_branch
        %144 = sbr.rel (%p142) target = $region16
      $region15: #{encoder_projector_qformer.11} parent=11 // pred_region
        %p145 = scmp.lt.s32.totalorder %s19, 0
        %s146 = scalar_select %p145, %s19, 0
        %s147 = smul.addr %s146, 4
        %s148 = scalar_lea.vmem %s1, %s147
      $region16: #{encoder_projector_qformer.11} parent=11 // pred_fallthru
        _
      // Predicated region
      $region17: #{encoder_projector_qformer.11} parent=11 // pred_check
        %p149 = pneg %p99
      $region18: #{encoder_projector_qformer.11} parent=11 // pred_check_branch
        %151 = sbr.rel (%p149) target = $region20
      $region19: #{encoder_projector_qformer.11} parent=11 // pred_region
        %p152 = scmp.lt.s32.totalorder %s19, 0
        %s153 = scalar_select %p152, %s19, 0
        %s154 = scalar_lea.vmem %s2, %s153
      $region20: #{encoder_projector_qformer.11} parent=11 // pred_fallthru
        _
    $region12: #{encoder_projector_qformer.11} parent=5 // pred_fallthru
      _
    %p155 = scmp.lt.s32.totalorder %s9, 2
    // Predicated region
    $region21: #{encoder_projector_qformer.11} parent=5 // pred_check
      %p156 = pneg %p155
    $region22: #{encoder_projector_qformer.11} parent=5 // pred_check_branch
      %158 = sbr.rel (%p156) target = $region24
    $region23: #{encoder_projector_qformer.11} parent=5 // pred_region
      // Predicated region
      $region25: #{encoder_projector_qformer.11} parent=23 // pred_check
        %p159 = pneg %p41
      $region26: #{encoder_projector_qformer.11} parent=23 // pred_check_branch
        %161 = sbr.rel (%p159) target = $region28
      $region27: #{encoder_projector_qformer.11} parent=23 // pred_region
        %p162 = scmp.lt.s32.totalorder %s16, 1
        %s163 = scalar_select %p162, %s16, 1
        %s164 = smul.addr %s163, 4
        %s165 = scalar_lea.vmem %s0, %s164
      $region28: #{encoder_projector_qformer.11} parent=23 // pred_fallthru
        _
    $region24: #{encoder_projector_qformer.11} parent=5 // pred_fallthru
      _
    %p166 = scmp.le.s32.totalorder 1, %s9
    %p167 = scmp.lt.s32.totalorder %s9, 3
    %p168 = pnand %p166, %p167
    %p169 = pneg %p168
    // Predicated region
    $region29: #{encoder_projector_qformer.11} parent=5 // pred_check
      _
    $region30: #{encoder_projector_qformer.11} parent=5 // pred_check_branch
      %171 = sbr.rel (%p168) target = $region32
    $region31: #{encoder_projector_qformer.11} parent=5 // pred_region
      %s172 = ssub.s32 %s9, 1
      %p173 = scmp.lt.s32.totalorder %s18, 1
      %s174 = scalar_select %p173, %s18, 1
      %s175 = smul.addr %s174, 4
      %s176 = scalar_lea.vmem %s0, %s175
      %p177 = pneg %p47
      %p178 = pneg %p44
      %p179 = scmp.lt.s32.totalorder %s19, 0
      %s180 = scalar_select %p179, %s19, 0
      %s181 = smul.addr %s180, 4
      %s182 = scalar_lea.vmem %s1, %s181
      %p183 = pneg %p73
      %p184 = pneg %p70
      %p185 = scmp.lt.s32.totalorder %s19, 0
      %s186 = scalar_select %p185, %s19, 0
      %s187 = scalar_lea.vmem %s2, %s186
      %p188 = pneg %p99
      %p189 = pneg %p96
      %p190 = pneg %p127
      %p191 = pneg %p124
      %p192 = scmp.lt.s32.totalorder %s18, 1
      %s193 = scalar_select %p192, %s18, 1
      %p194 = scmp.lt.s32.totalorder %s19, 0
      %s195 = scalar_select %p194, %s19, 0
      %s196 = sadd.s32 %s195, %s193
      %s197 = smul.addr %s196, 4
      %s198 = scalar_lea.vmem %s3, %s197
      %p199 = scmp.lt.s32.totalorder %s18, 1
      %s200 = scalar_select %p199, %s18, 1
      %s201 = smul.addr %s200, 4
      %s202 = scalar_lea.vmem %s0, %s201
      %p203 = scmp.lt.s32.totalorder %s19, 0
      %s204 = scalar_select %p203, %s19, 0
      %s205 = smul.addr %s204, 4
      %s206 = scalar_lea.vmem %s1, %s205
      %p207 = scmp.lt.s32.totalorder %s19, 0
      %s208 = scalar_select %p207, %s19, 0
      %s209 = scalar_lea.vmem %s2, %s208
      %p210 = scmp.lt.s32.totalorder %s18, 1
      %s211 = scalar_select %p210, %s18, 1
      %p212 = scmp.lt.s32.totalorder %s19, 0
      %s213 = scalar_select %p212, %s19, 0
      %s214 = sadd.s32 %s213, %s211
      %s215 = smul.addr %s214, 4
      %s216 = scalar_lea.vmem %s3, %s215
      %v218 = vld [vmem:[%s202] sm:$0xf]
      %v219 = vld [vmem:[%s206] sm:$0xf]
      %v220 = vld [vmem:[%s206 + $0x4] sm:$0xf]
      %v221 = vld [vmem:[%s206 + $0x8] sm:$0xf]
      %v222 = vld [vmem:[%s206 + $0xc] sm:$0xf]
      %v223 = vld [vmem:[%s209] sm:$0x1]
      %v225 = vlaneseq
      %v226 = vshrl.u32 %v225, 7
      %v227 = vsub.s32 0, %v226
      %v228 = vrot.slane %v223, %v227
      %v234 = vunpack.c.l.b16 %v219
      %v235 = vunpack.c.l.b16 %v220
      %v236 = vunpack.c.l.b16 %v221
      %v237 = vunpack.c.l.b16 %v222
      %v238 = vpack.c.b16 %v235, %v234
      %v239 = vpack.c.b16 %v237, %v236
      %vm242 = vcmask 261120
      %v244 = vsel %vm242, %v218, 0
      %246 = vmatprep.subr.bf16.mxu0 0
      %247 = vmatpush1.bf16.msra.mxu0 %v238
      %248 = vmatprep.subr.bf16.mxu0 0
      %249 = vmatpush1.bf16.msra.mxu0 %v239
      %250 = vmatprep.subr.bf16.mxu0 0
      %251 = vmatpush1.bf16.msra.mxu0 0
      %252 = vmatprep.subr.bf16.mxu0 0
      %253 = vmatpush1.bf16.msra.mxu0 0
      %254 = vmatprep.subr.bf16.mxu0 0
      %255 = vmatpush1.bf16.msra.mxu0 0
      %256 = vmatprep.subr.bf16.mxu0 0
      %257 = vmatpush1.bf16.msra.mxu0 0
      %258 = vmatprep.subr.bf16.mxu0 0
      %259 = vmatpush1.bf16.msra.mxu0 0
      %260 = vmatprep.subr.bf16.mxu0 0
      %261 = vmatpush1.bf16.msra.mxu0 0
      %262 = vmatprep.subr.bf16.mxu0 0
      %263 = vmatpush1.bf16.msra.mxu0 0
      %264 = vmatprep.subr.bf16.mxu0 0
      %265 = vmatpush1.bf16.msra.mxu0 0
      %266 = vmatprep.subr.bf16.mxu0 0
      %267 = vmatpush1.bf16.msra.mxu0 0
      %268 = vmatprep.subr.bf16.mxu0 0
      %269 = vmatpush1.bf16.msra.mxu0 0
      %270 = vmatprep.subr.bf16.mxu0 0
      %271 = vmatpush1.bf16.msra.mxu0 0
      %272 = vmatprep.subr.bf16.mxu0 0
      %273 = vmatpush1.bf16.msra.mxu0 0
      %274 = vmatprep.subr.bf16.mxu0 0
      %275 = vmatpush1.bf16.msra.mxu0 0
      %276 = vmatprep.subr.bf16.mxu0 0
      %277 = vmatpush1.bf16.msra.mxu0 0
      %278 = vmatprep.mubr.bf16.mxu0 0
      %279 = vmatmul.mubr.bf16.gmra.mrb[0].mxu0 %v244
      %v280 = vpop.f32.mrb[0].mxu0
      %v281 = vadd.f32 %v228, %v280
      %v282 = vpop.f32.mrb[0].mxu0
      %v283 = vpop.f32.mrb[0].mxu0
      %v284 = vpop.f32.mrb[0].mxu0
      %285 = vdwg.mxu0
      %v286 = vpack.c.bf16 %v281, %v281
      %287 = vst [vmem:[%s216] sm:$0xf] %v286
      %p288 = scmp.lt.s32.totalorder %s18, 1
      %s289 = scalar_select %p288, %s18, 1
      %p290 = scmp.lt.s32.totalorder %s19, 0
      %s291 = scalar_select %p290, %s19, 0
      %s292 = sadd.s32 %s291, %s289
      %s293 = smul.addr %s292, 4
      %s294 = scalar_lea.vmem %s3, %s293
      // Predicated region
      $region33: #{encoder_projector_qformer.11} parent=31 // pred_check
        %p295 = pneg %p124
      $region34: #{encoder_projector_qformer.11} parent=31 // pred_check_branch
        %297 = sbr.rel (%p295) target = $region36
      $region35: #{encoder_projector_qformer.11} parent=31 // pred_region
        _
      $region36: #{encoder_projector_qformer.11} parent=31 // pred_fallthru
        _
    $region32: #{encoder_projector_qformer.11} parent=5 // pred_fallthru
      _
    %p298 = scmp.le.s32.totalorder 2, %s9
    // Predicated region
    $region37: #{encoder_projector_qformer.11} parent=5 // pred_check
      %p299 = pneg %p298
    $region38: #{encoder_projector_qformer.11} parent=5 // pred_check_branch
      %301 = sbr.rel (%p299) target = $region40
    $region39: #{encoder_projector_qformer.11} parent=5 // pred_region
      %s302 = ssub.s32 %s9, 2
      // Predicated region
      $region41: #{encoder_projector_qformer.11} parent=39 // pred_check
        %p303 = pneg %p130
      $region42: #{encoder_projector_qformer.11} parent=39 // pred_check_branch
        %305 = sbr.rel (%p303) target = $region44
      $region43: #{encoder_projector_qformer.11} parent=39 // pred_region
        %p306 = scmp.lt.s32.totalorder %s20, 1
        %s307 = scalar_select %p306, %s20, 1
        %p308 = scmp.lt.s32.totalorder %s21, 0
        %s309 = scalar_select %p308, %s21, 0
        %s310 = sadd.s32 %s309, %s307
        %s311 = smul.addr %s310, 4
        %s312 = scalar_lea.vmem %s3, %s311
      $region44: #{encoder_projector_qformer.11} parent=39 // pred_fallthru
        _
    $region40: #{encoder_projector_qformer.11} parent=5 // pred_fallthru
      _
  $region6: #{encoder_projector_qformer.11} parent=0 // loop_footer
    %s13 = sadd.s32 1, %s9
  $region7: #{encoder_projector_qformer.11} parent=0 // loop_footer_branch
    %8 = sbr.rel target = $region3
  $region8: #{encoder_projector_qformer.11} parent=0 // loop_exit
    _

// kernel: encoder_projector_qformer.9
$region0: #{encoder_projector_qformer.9}
  #allocation0 [shape = 'u32[]', space=smem, size = 0x4, offset = 0x4, fixed_abs, tag = 'smem constant byte address 0x4 - core index']
  #allocation1 [shape = 'u32[144,128]{1,0:T(1,128)}', space=vmem, size = 0x12000, scoped, tag = 'internal scratch']
  %s0 = inlined_call_operand.vmem [shape: f32[64,64], index: 0, kind: input, shape index: {}]
  %s1 = inlined_call_operand.vmem [shape: f32[1,64], index: 1, kind: input, shape index: {}]
  %s2 = inlined_call_operand.vmem [shape: f32[1,64], index: 2, kind: input, shape index: {}]
  %s3 = inlined_call_operand.vmem [shape: f32[64,64], index: 3, kind: output, shape index: {}]
  %s4 = sld [smem:[#allocation0]]
  $region45: #{encoder_projector_qformer.9} parent=0
    _
  %s6 = ssub.s32 1, %s4
  %s7 = scalar_select 0, %s6, %s4
  loop: start=0, step=1, limit=4
  $region2: #{encoder_projector_qformer.9} parent=0 // loop_pre_header
    _
  $region3: #{encoder_projector_qformer.9} parent=0 // loop_header
    %s9 = sphi 0, %s13
    %p10 = scmp.ge.s32.totalorder %s9, 4
    %s19 = sphi 0, %s21
    %s22 = sphi 0, %s19
    %s23 = sphi 0, %s22
    %s39 = sphi 0, %s23
    %s43 = sphi 0, %s43
    %s45 = sphi 0, %s43
    %s46 = sphi 0, %s45
    %s60 = sphi 0, %s46
    %s64 = sphi 0, %s64
    %s66 = sphi 0, %s64
    %s67 = sphi 0, %s66
    %s81 = sphi 0, %s67
    %s87 = sphi 0, %s89
    %s90 = sphi 0, %s87
    %s91 = sphi 0, %s90
    %s107 = sphi 0, %s91
  $region4: #{encoder_projector_qformer.9} parent=0 // loop_header_branch
    %12 = sbr.rel (%p10) target = $region8
  $region5: #{encoder_projector_qformer.9} parent=0 // loop_body
    %s14 = ssub.s32 %s9, 1
    %s15 = ssub.s32 %s9, 2
    %s16 = sadd.s32 %s9, 1
    %s17 = ssub.s32 %s9, %s16
    %p18 = scmp.eq.s32.totalorder %s17, 0
    %s20 = sadd.s32 %s19, 1
    %s21 = scalar_select %p18, %s19, %s20
    %p24 = pneg %p18
    %p25 = scmp.eq.s32.totalorder %s9, 1
    %p26 = por %p24, %p25
    %p27 = scmp.ne.s32.totalorder %s19, %s22
    %p28 = scmp.eq.s32.totalorder %s9, 0
    %p29 = por %p27, %p28
    %p30 = scmp.ne.s32.totalorder %s19, %s22
    %p31 = scmp.eq.s32.totalorder %s14, 1
    %p32 = por %p30, %p31
    %p33 = scmp.ne.s32.totalorder %s22, %s23
    %p34 = scmp.eq.s32.totalorder %s14, 0
    %p35 = por %p33, %p34
    %p36 = scmp.ne.s32.totalorder %s22, %s23
    %p37 = scmp.eq.s32.totalorder %s15, 1
    %p38 = por %p36, %p37
    %p40 = scmp.ne.s32.totalorder %s23, %s39
    %p41 = scmp.eq.s32.totalorder %s15, 0
    %p42 = por %p40, %p41
    %s44 = sadd.s32 %s43, 1
    %p47 = scmp.eq.s32.totalorder %s9, 1
    %p48 = scmp.ne.s32.totalorder %s43, %s45
    %p49 = scmp.eq.s32.totalorder %s9, 0
    %p50 = por %p48, %p49
    %p51 = scmp.ne.s32.totalorder %s43, %s45
    %p52 = scmp.eq.s32.totalorder %s14, 1
    %p53 = por %p51, %p52
    %p54 = scmp.ne.s32.totalorder %s45, %s46
    %p55 = scmp.eq.s32.totalorder %s14, 0
    %p56 = por %p54, %p55
    %p57 = scmp.ne.s32.totalorder %s45, %s46
    %p58 = scmp.eq.s32.totalorder %s15, 1
    %p59 = por %p57, %p58
    %p61 = scmp.ne.s32.totalorder %s46, %s60
    %p62 = scmp.eq.s32.totalorder %s15, 0
    %p63 = por %p61, %p62
    %s65 = sadd.s32 %s64, 1
    %p68 = scmp.eq.s32.totalorder %s9, 1
    %p69 = scmp.ne.s32.totalorder %s64, %s66
    %p70 = scmp.eq.s32.totalorder %s9, 0
    %p71 = por %p69, %p70
    %p72 = scmp.ne.s32.totalorder %s64, %s66
    %p73 = scmp.eq.s32.totalorder %s14, 1
    %p74 = por %p72, %p73
    %p75 = scmp.ne.s32.totalorder %s66, %s67
    %p76 = scmp.eq.s32.totalorder %s14, 0
    %p77 = por %p75, %p76
    %p78 = scmp.ne.s32.totalorder %s66, %s67
    %p79 = scmp.eq.s32.totalorder %s15, 1
    %p80 = por %p78, %p79
    %p82 = scmp.ne.s32.totalorder %s67, %s81
    %p83 = scmp.eq.s32.totalorder %s15, 0
    %p84 = por %p82, %p83
    %s85 = ssub.s32 %s9, %s16
    %p86 = scmp.eq.s32.totalorder %s85, 0
    %s88 = sadd.s32 %s87, 1
    %s89 = scalar_select %p86, %s87, %s88
    %p92 = pneg %p86
    %p93 = scmp.eq.s32.totalorder %s9, 1
    %p94 = por %p92, %p93
    %p95 = scmp.ne.s32.totalorder %s87, %s90
    %p96 = scmp.eq.s32.totalorder %s9, 0
    %p97 = por %p95, %p96
    %p98 = scmp.ne.s32.totalorder %s87, %s90
    %p99 = scmp.eq.s32.totalorder %s14, 1
    %p100 = por %p98, %p99
    %p101 = scmp.ne.s32.totalorder %s90, %s91
    %p102 = scmp.eq.s32.totalorder %s14, 0
    %p103 = por %p101, %p102
    %p104 = scmp.ne.s32.totalorder %s90, %s91
    %p105 = scmp.eq.s32.totalorder %s15, 1
    %p106 = por %p104, %p105
    %p108 = scmp.ne.s32.totalorder %s91, %s107
    %p109 = scmp.eq.s32.totalorder %s15, 0
    %p110 = por %p108, %p109
    %p111 = scmp.le.s32.totalorder 1, %s9
    %p112 = scmp.lt.s32.totalorder %s9, 3
    %p113 = pnand %p111, %p112
    %p114 = pneg %p113
    // Predicated region
    $region9: #{encoder_projector_qformer.9} parent=5 // pred_check
      _
    $region10: #{encoder_projector_qformer.9} parent=5 // pred_check_branch
      %116 = sbr.rel (%p113) target = $region12
    $region11: #{encoder_projector_qformer.9} parent=5 // pred_region
      %s117 = ssub.s32 %s9, 1
      // Predicated region
      $region13: #{encoder_projector_qformer.9} parent=11 // pred_check
        %p118 = pneg %p56
      $region14: #{encoder_projector_qformer.9} parent=11 // pred_check_branch
        %120 = sbr.rel (%p118) target = $region16
      $region15: #{encoder_projector_qformer.9} parent=11 // pred_region
        _
      $region16: #{encoder_projector_qformer.9} parent=11 // pred_fallthru
        _
      // Predicated region
      $region17: #{encoder_projector_qformer.9} parent=11 // pred_check
        %p121 = pneg %p77
      $region18: #{encoder_projector_qformer.9} parent=11 // pred_check_branch
        %123 = sbr.rel (%p121) target = $region20
      $region19: #{encoder_projector_qformer.9} parent=11 // pred_region
        _
      $region20: #{encoder_projector_qformer.9} parent=11 // pred_fallthru
        _
    $region12: #{encoder_projector_qformer.9} parent=5 // pred_fallthru
      _
    %p124 = scmp.lt.s32.totalorder %s9, 2
    // Predicated region
    $region21: #{encoder_projector_qformer.9} parent=5 // pred_check
      %p125 = pneg %p124
    $region22: #{encoder_projector_qformer.9} parent=5 // pred_check_branch
      %127 = sbr.rel (%p125) target = $region24
    $region23: #{encoder_projector_qformer.9} parent=5 // pred_region
      // Predicated region
      $region25: #{encoder_projector_qformer.9} parent=23 // pred_check
        %p128 = pneg %p29
      $region26: #{encoder_projector_qformer.9} parent=23 // pred_check_branch
        %130 = sbr.rel (%p128) target = $region28
      $region27: #{encoder_projector_qformer.9} parent=23 // pred_region
        %s131 = smul.u32 4, %s9
        %p132 = scmp.lt.s32.totalorder %s131, 7
        %s133 = scalar_select %p132, %s131, 7
        %s134 = smul.addr %s133, 8
        %s135 = scalar_lea.vmem %s0, %s134
        %s136 = smul.u32 4, %s9
      $region28: #{encoder_projector_qformer.9} parent=23 // pred_fallthru
        _
    $region24: #{encoder_projector_qformer.9} parent=5 // pred_fallthru
      _
    %p137 = scmp.le.s32.totalorder 1, %s9
    %p138 = scmp.lt.s32.totalorder %s9, 3
    %p139 = pnand %p137, %p138
    %p140 = pneg %p139
    // Predicated region
    $region29: #{encoder_projector_qformer.9} parent=5 // pred_check
      _
    $region30: #{encoder_projector_qformer.9} parent=5 // pred_check_branch
      %142 = sbr.rel (%p139) target = $region32
    $region31: #{encoder_projector_qformer.9} parent=5 // pred_region
      %s143 = ssub.s32 %s9, 1
      %s144 = smul.u32 4, %s14
      %p145 = scmp.lt.s32.totalorder %s144, 7
      %s146 = scalar_select %p145, %s144, 7
      %s147 = smul.addr %s146, 8
      %s148 = scalar_lea.vmem %s0, %s147
      %p149 = pneg %p35
      %p150 = pneg %p32
      %p151 = pneg %p56
      %p152 = pneg %p53
      %p153 = pneg %p77
      %p154 = pneg %p74
      %p155 = pneg %p103
      %p156 = pneg %p100
      %s157 = smul.u32 4, %s14
      %p158 = scmp.lt.s32.totalorder %s157, 7
      %s159 = scalar_select %p158, %s157, 7
      %s160 = smul.addr %s159, 8
      %s161 = scalar_lea.vmem %s3, %s160
      %s162 = smul.u32 4, %s14
      %p163 = scmp.lt.s32.totalorder %s162, 7
      %s164 = scalar_select %p163, %s162, 7
      %s165 = smul.addr %s164, 8
      %s166 = scalar_lea.vmem %s0, %s165
      %s167 = smul.u32 4, %s14
      %s168 = smul.u32 4, %s14
      %p169 = scmp.lt.s32.totalorder %s168, 7
      %s170 = scalar_select %p169, %s168, 7
      %s171 = smul.addr %s170, 8
      %s172 = scalar_lea.vmem %s3, %s171
      %s173 = smul.u32 4, %s14
      %v174 = vld [vmem:[%s166] sm:$0xff]
      %v175 = vld [vmem:[%s166 + $0x8] sm:$0xff]
      %v176 = vld [vmem:[%s166 + $0x10] sm:$0xff]
      %v177 = vld [vmem:[%s166 + $0x18] sm:$0xff]
      %vm178 = vcmask 523264
      %v179 = vsel %vm178, %v174, 0.0
      %180 = vadd.xlane.f32.xlu0 %v179
      %v181 = vpop.xlane.xlu0 %180
      %v182 = vsel %vm178, %v175, 0.0
      %183 = vadd.xlane.f32.xlu0 %v182
      %v184 = vpop.xlane.xlu0 %183
      %v185 = vsel %vm178, %v176, 0.0
      %186 = vadd.xlane.f32.xlu0 %v185
      %v187 = vpop.xlane.xlu0 %186
      %v188 = vsel %vm178, %v177, 0.0
      %189 = vadd.xlane.f32.xlu0 %v188
      %v190 = vpop.xlane.xlu0 %189
      %v191 = vrcp.pop 64.0
      %v192 = vmul.f32 %v181, %v191
      %v193 = vmul.f32 %v184, %v191
      %v194 = vmul.f32 %v187, %v191
      %v195 = vmul.f32 %v190, %v191
      %v196 = vsub.f32 %v174, %v192
      %v197 = vsub.f32 %v175, %v193
      %v198 = vsub.f32 %v176, %v194
      %v199 = vsub.f32 %v177, %v195
      %v200 = vmul.f32 %v196, %v196
      %v201 = vmul.f32 %v197, %v197
      %v202 = vmul.f32 %v198, %v198
      %v203 = vmul.f32 %v199, %v199
      %v204 = vsel %vm178, %v200, 0.0
      %205 = vadd.xlane.f32.xlu0 %v204
      %v206 = vpop.xlane.xlu0 %205
      %v207 = vsel %vm178, %v201, 0.0
      %208 = vadd.xlane.f32.xlu0 %v207
      %v209 = vpop.xlane.xlu0 %208
      %v210 = vsel %vm178, %v202, 0.0
      %211 = vadd.xlane.f32.xlu0 %v210
      %v212 = vpop.xlane.xlu0 %211
      %v213 = vsel %vm178, %v203, 0.0
      %214 = vadd.xlane.f32.xlu0 %v213
      %v215 = vpop.xlane.xlu0 %214
      %v216 = vmul.f32 %v206, %v191
      %v217 = vmul.f32 %v209, %v191
      %v218 = vmul.f32 %v212, %v191
      %v219 = vmul.f32 %v215, %v191
      %v220 = vadd.f32 %v216, 1e-12
      %v221 = vadd.f32 %v217, 1e-12
      %v222 = vadd.f32 %v218, 1e-12
      %v223 = vadd.f32 %v219, 1e-12
      %v224 = vrsqrt.pop %v220
      %v225 = vrsqrt.pop %v221
      %v226 = vrsqrt.pop %v222
      %v227 = vrsqrt.pop %v223
      %v228 = vmul.f32 %v196, %v224
      %v229 = vmul.f32 %v197, %v225
      %v230 = vmul.f32 %v198, %v226
      %v231 = vmul.f32 %v199, %v227
      %v232 = vld [vmem:[%s1] sm:$0x1]
      %v234 = vlaneseq
      %v235 = vshrl.u32 %v234, 7
      %v236 = vsub.s32 0, %v235
      %v237 = vrot.slane %v232, %v236
      %v239 = vmul.f32 %v228, %v237
      %v240 = vmul.f32 %v229, %v237
      %v241 = vmul.f32 %v230, %v237
      %v242 = vmul.f32 %v231, %v237
      %v243 = vld [vmem:[%s2] sm:$0x1]
      %v245 = vlaneseq
      %v246 = vshrl.u32 %v245, 7
      %v247 = vsub.s32 0, %v246
      %v248 = vrot.slane %v243, %v247
      %v250 = vadd.f32 %v239, %v248
      %v251 = vadd.f32 %v240, %v248
      %v252 = vadd.f32 %v241, %v248
      %v253 = vadd.f32 %v242, %v248
      %254 = vst.msk [vmem:[%s172] sm:$0xff] %vm178, %v250
      %255 = vst.msk [vmem:[%s172 + $0x8] sm:$0xff] %vm178, %v251
      %256 = vst.msk [vmem:[%s172 + $0x10] sm:$0xff] %vm178, %v252
      %257 = vst.msk [vmem:[%s172 + $0x18] sm:$0xff] %vm178, %v253
      %s258 = smul.u32 4, %s14
      %p259 = scmp.lt.s32.totalorder %s258, 7
      %s260 = scalar_select %p259, %s258, 7
      %s261 = smul.addr %s260, 8
      %s262 = scalar_lea.vmem %s3, %s261
      // Predicated region
      $region33: #{encoder_projector_qformer.9} parent=31 // pred_check
        %p263 = pneg %p100
      $region34: #{encoder_projector_qformer.9} parent=31 // pred_check_branch
        %265 = sbr.rel (%p263) target = $region36
      $region35: #{encoder_projector_qformer.9} parent=31 // pred_region
        %s266 = smul.u32 4, %s14
      $region36: #{encoder_projector_qformer.9} parent=31 // pred_fallthru
        _
    $region32: #{encoder_projector_qformer.9} parent=5 // pred_fallthru
      _
    %p267 = scmp.le.s32.totalorder 2, %s9
    // Predicated region
    $region37: #{encoder_projector_qformer.9} parent=5 // pred_check
      %p268 = pneg %p267
    $region38: #{encoder_projector_qformer.9} parent=5 // pred_check_branch
      %270 = sbr.rel (%p268) target = $region40
    $region39: #{encoder_projector_qformer.9} parent=5 // pred_region
      %s271 = ssub.s32 %s9, 2
      // Predicated region
      $region41: #{encoder_projector_qformer.9} parent=39 // pred_check
        %p272 = pneg %p106
      $region42: #{encoder_projector_qformer.9} parent=39 // pred_check_branch
        %274 = sbr.rel (%p272) target = $region44
      $region43: #{encoder_projector_qformer.9} parent=39 // pred_region
        %s275 = smul.u32 4, %s15
        %p276 = scmp.lt.s32.totalorder %s275, 7
        %s277 = scalar_select %p276, %s275, 7
        %s278 = smul.addr %s277, 8
        %s279 = scalar_lea.vmem %s3, %s278
      $region44: #{encoder_projector_qformer.9} parent=39 // pred_fallthru
        _
    $region40: #{encoder_projector_qformer.9} parent=5 // pred_fallthru
      _
  $region6: #{encoder_projector_qformer.9} parent=0 // loop_footer
    %s13 = sadd.s32 1, %s9
  $region7: #{encoder_projector_qformer.9} parent=0 // loop_footer_branch
    %8 = sbr.rel target = $region3
  $region8: #{encoder_projector_qformer.9} parent=0 // loop_exit
    _

// kernel: encoder_projector_qformer.13
$region0: #{encoder_projector_qformer.13}
  #allocation0 [shape = 'u32[]', space=smem, size = 0x4, offset = 0x4, fixed_abs, tag = 'smem constant byte address 0x4 - core index']
  #allocation1 [shape = 'u32[144,128]{1,0:T(1,128)}', space=vmem, size = 0x12000, scoped, tag = 'internal scratch']
  #allocation2 [shape = 'bf16[64,128]{1,0:T(16,128)(2,1)}', space=vmem, size = 0x4000, scoped, tag = 'scratch operand']
  %s0 = inlined_call_operand.vmem [shape: f32[128,64], index: 0, kind: input, shape index: {}]
  %s1 = inlined_call_operand.vmem [shape: bf16[64,128], index: 1, kind: input, shape index: {}]
  %s2 = inlined_call_operand.vmem [shape: f32[1,128], index: 2, kind: input, shape index: {}]
  %s3 = inlined_call_operand.vmem [shape: bf16[128,64], index: 3, kind: input, shape index: {}]
  %s4 = inlined_call_operand.vmem [shape: f32[1,64], index: 4, kind: input, shape index: {}]
  %s5 = inlined_call_operand.vmem [shape: f32[1,64], index: 5, kind: input, shape index: {}]
  %s6 = inlined_call_operand.vmem [shape: f32[1,64], index: 6, kind: input, shape index: {}]
  %s7 = inlined_call_operand.vmem [shape: f32[128,64], index: 7, kind: output, shape index: {}]
  %s8 = sld [smem:[#allocation0]]
  $region61: #{encoder_projector_qformer.13} parent=0
    _
  %s10 = ssub.s32 1, %s8
  %s11 = scalar_select 0, %s10, %s8
  loop: start=0, step=1, limit=4
  $region2: #{encoder_projector_qformer.13} parent=0 // loop_pre_header
    _
  $region3: #{encoder_projector_qformer.13} parent=0 // loop_header
    %s13 = sphi 0, %s17
    %p14 = scmp.ge.s32.totalorder %s13, 4
    %s23 = sphi 0, %s25
    %s26 = sphi 0, %s23
    %s27 = sphi 0, %s26
    %s43 = sphi 0, %s27
    %s47 = sphi 0, %s47
    %s49 = sphi 0, %s47
    %s50 = sphi 0, %s49
    %s64 = sphi 0, %s50
    %s68 = sphi 0, %s68
    %s70 = sphi 0, %s68
    %s71 = sphi 0, %s70
    %s85 = sphi 0, %s71
    %s89 = sphi 0, %s89
    %s91 = sphi 0, %s89
    %s92 = sphi 0, %s91
    %s106 = sphi 0, %s92
    %s110 = sphi 0, %s110
    %s112 = sphi 0, %s110
    %s113 = sphi 0, %s112
    %s127 = sphi 0, %s113
    %s131 = sphi 0, %s131
    %s133 = sphi 0, %s131
    %s134 = sphi 0, %s133
    %s148 = sphi 0, %s134
    %s152 = sphi 0, %s152
    %s154 = sphi 0, %s152
    %s155 = sphi 0, %s154
    %s169 = sphi 0, %s155
    %s175 = sphi 0, %s177
    %s178 = sphi 0, %s175
    %s179 = sphi 0, %s178
    %s195 = sphi 0, %s179
  $region4: #{encoder_projector_qformer.13} parent=0 // loop_header_branch
    %16 = sbr.rel (%p14) target = $region8
  $region5: #{encoder_projector_qformer.13} parent=0 // loop_body
    %s18 = ssub.s32 %s13, 1
    %s19 = ssub.s32 %s13, 2
    %s20 = sadd.s32 %s13, 1
    %s21 = ssub.s32 %s13, %s20
    %p22 = scmp.eq.s32.totalorder %s21, 0
    %s24 = sadd.s32 %s23, 1
    %s25 = scalar_select %p22, %s23, %s24
    %p28 = pneg %p22
    %p29 = scmp.eq.s32.totalorder %s13, 1
    %p30 = por %p28, %p29
    %p31 = scmp.ne.s32.totalorder %s23, %s26
    %p32 = scmp.eq.s32.totalorder %s13, 0
    %p33 = por %p31, %p32
    %p34 = scmp.ne.s32.totalorder %s23, %s26
    %p35 = scmp.eq.s32.totalorder %s18, 1
    %p36 = por %p34, %p35
    %p37 = scmp.ne.s32.totalorder %s26, %s27
    %p38 = scmp.eq.s32.totalorder %s18, 0
    %p39 = por %p37, %p38
    %p40 = scmp.ne.s32.totalorder %s26, %s27
    %p41 = scmp.eq.s32.totalorder %s19, 1
    %p42 = por %p40, %p41
    %p44 = scmp.ne.s32.totalorder %s27, %s43
    %p45 = scmp.eq.s32.totalorder %s19, 0
    %p46 = por %p44, %p45
    %s48 = sadd.s32 %s47, 1
    %p51 = scmp.eq.s32.totalorder %s13, 1
    %p52 = scmp.ne.s32.totalorder %s47, %s49
    %p53 = scmp.eq.s32.totalorder %s13, 0
    %p54 = por %p52, %p53
    %p55 = scmp.ne.s32.totalorder %s47, %s49
    %p56 = scmp.eq.s32.totalorder %s18, 1
    %p57 = por %p55, %p56
    %p58 = scmp.ne.s32.totalorder %s49, %s50
    %p59 = scmp.eq.s32.totalorder %s18, 0
    %p60 = por %p58, %p59
    %p61 = scmp.ne.s32.totalorder %s49, %s50
    %p62 = scmp.eq.s32.totalorder %s19, 1
    %p63 = por %p61, %p62
    %p65 = scmp.ne.s32.totalorder %s50, %s64
    %p66 = scmp.eq.s32.totalorder %s19, 0
    %p67 = por %p65, %p66
    %s69 = sadd.s32 %s68, 1
    %p72 = scmp.eq.s32.totalorder %s13, 1
    %p73 = scmp.ne.s32.totalorder %s68, %s70
    %p74 = scmp.eq.s32.totalorder %s13, 0
    %p75 = por %p73, %p74
    %p76 = scmp.ne.s32.totalorder %s68, %s70
    %p77 = scmp.eq.s32.totalorder %s18, 1
    %p78 = por %p76, %p77
    %p79 = scmp.ne.s32.totalorder %s70, %s71
    %p80 = scmp.eq.s32.totalorder %s18, 0
    %p81 = por %p79, %p80
    %p82 = scmp.ne.s32.totalorder %s70, %s71
    %p83 = scmp.eq.s32.totalorder %s19, 1
    %p84 = por %p82, %p83
    %p86 = scmp.ne.s32.totalorder %s71, %s85
    %p87 = scmp.eq.s32.totalorder %s19, 0
    %p88 = por %p86, %p87
    %s90 = sadd.s32 %s89, 1
    %p93 = scmp.eq.s32.totalorder %s13, 1
    %p94 = scmp.ne.s32.totalorder %s89, %s91
    %p95 = scmp.eq.s32.totalorder %s13, 0
    %p96 = por %p94, %p95
    %p97 = scmp.ne.s32.totalorder %s89, %s91
    %p98 = scmp.eq.s32.totalorder %s18, 1
    %p99 = por %p97, %p98
    %p100 = scmp.ne.s32.totalorder %s91, %s92
    %p101 = scmp.eq.s32.totalorder %s18, 0
    %p102 = por %p100, %p101
    %p103 = scmp.ne.s32.totalorder %s91, %s92
    %p104 = scmp.eq.s32.totalorder %s19, 1
    %p105 = por %p103, %p104
    %p107 = scmp.ne.s32.totalorder %s92, %s106
    %p108 = scmp.eq.s32.totalorder %s19, 0
    %p109 = por %p107, %p108
    %s111 = sadd.s32 %s110, 1
    %p114 = scmp.eq.s32.totalorder %s13, 1
    %p115 = scmp.ne.s32.totalorder %s110, %s112
    %p116 = scmp.eq.s32.totalorder %s13, 0
    %p117 = por %p115, %p116
    %p118 = scmp.ne.s32.totalorder %s110, %s112
    %p119 = scmp.eq.s32.totalorder %s18, 1
    %p120 = por %p118, %p119
    %p121 = scmp.ne.s32.totalorder %s112, %s113
    %p122 = scmp.eq.s32.totalorder %s18, 0
    %p123 = por %p121, %p122
    %p124 = scmp.ne.s32.totalorder %s112, %s113
    %p125 = scmp.eq.s32.totalorder %s19, 1
    %p126 = por %p124, %p125
    %p128 = scmp.ne.s32.totalorder %s113, %s127
    %p129 = scmp.eq.s32.totalorder %s19, 0
    %p130 = por %p128, %p129
    %s132 = sadd.s32 %s131, 1
    %p135 = scmp.eq.s32.totalorder %s13, 1
    %p136 = scmp.ne.s32.totalorder %s131, %s133
    %p137 = scmp.eq.s32.totalorder %s13, 0
    %p138 = por %p136, %p137
    %p139 = scmp.ne.s32.totalorder %s131, %s133
    %p140 = scmp.eq.s32.totalorder %s18, 1
    %p141 = por %p139, %p140
    %p142 = scmp.ne.s32.totalorder %s133, %s134
    %p143 = scmp.eq.s32.totalorder %s18, 0
    %p144 = por %p142, %p143
    %p145 = scmp.ne.s32.totalorder %s133, %s134
    %p146 = scmp.eq.s32.totalorder %s19, 1
    %p147 = por %p145, %p146
    %p149 = scmp.ne.s32.totalorder %s134, %s148
    %p150 = scmp.eq.s32.totalorder %s19, 0
    %p151 = por %p149, %p150
    %s153 = sadd.s32 %s152, 1
    %p156 = scmp.eq.s32.totalorder %s13, 1
    %p157 = scmp.ne.s32.totalorder %s152, %s154
    %p158 = scmp.eq.s32.totalorder %s13, 0
    %p159 = por %p157, %p158
    %p160 = scmp.ne.s32.totalorder %s152, %s154
    %p161 = scmp.eq.s32.totalorder %s18, 1
    %p162 = por %p160, %p161
    %p163 = scmp.ne.s32.totalorder %s154, %s155
    %p164 = scmp.eq.s32.totalorder %s18, 0
    %p165 = por %p163, %p164
    %p166 = scmp.ne.s32.totalorder %s154, %s155
    %p167 = scmp.eq.s32.totalorder %s19, 1
    %p168 = por %p166, %p167
    %p170 = scmp.ne.s32.totalorder %s155, %s169
    %p171 = scmp.eq.s32.totalorder %s19, 0
    %p172 = por %p170, %p171
    %s173 = ssub.s32 %s13, %s20
    %p174 = scmp.eq.s32.totalorder %s173, 0
    %s176 = sadd.s32 %s175, 1
    %s177 = scalar_select %p174, %s175, %s176
    %p180 = pneg %p174
    %p181 = scmp.eq.s32.totalorder %s13, 1
    %p182 = por %p180, %p181
    %p183 = scmp.ne.s32.totalorder %s175, %s178
    %p184 = scmp.eq.s32.totalorder %s13, 0
    %p185 = por %p183, %p184
    %p186 = scmp.ne.s32.totalorder %s175, %s178
    %p187 = scmp.eq.s32.totalorder %s18, 1
    %p188 = por %p186, %p187
    %p189 = scmp.ne.s32.totalorder %s178, %s179
    %p190 = scmp.eq.s32.totalorder %s18, 0
    %p191 = por %p189, %p190
    %p192 = scmp.ne.s32.totalorder %s178, %s179
    %p193 = scmp.eq.s32.totalorder %s19, 1
    %p194 = por %p192, %p193
    %p196 = scmp.ne.s32.totalorder %s179, %s195
    %p197 = scmp.eq.s32.totalorder %s19, 0
    %p198 = por %p196, %p197
    %p199 = scmp.le.s32.totalorder 1, %s13
    %p200 = scmp.lt.s32.totalorder %s13, 3
    %p201 = pnand %p199, %p200
    %p202 = pneg %p201
    // Predicated region
    $region9: #{encoder_projector_qformer.13} parent=5 // pred_check
      _
    $region10: #{encoder_projector_qformer.13} parent=5 // pred_check_branch
      %204 = sbr.rel (%p201) target = $region12
    $region11: #{encoder_projector_qformer.13} parent=5 // pred_region
      %s205 = ssub.s32 %s13, 1
      // Predicated region
      $region13: #{encoder_projector_qformer.13} parent=11 // pred_check
        %p206 = pneg %p60
      $region14: #{encoder_projector_qformer.13} parent=11 // pred_check_branch
        %208 = sbr.rel (%p206) target = $region16
      $region15: #{encoder_projector_qformer.13} parent=11 // pred_region
        _
      $region16: #{encoder_projector_qformer.13} parent=11 // pred_fallthru
        _
      // Predicated region
      $region17: #{encoder_projector_qformer.13} parent=11 // pred_check
        %p209 = pneg %p81
      $region18: #{encoder_projector_qformer.13} parent=11 // pred_check_branch
        %211 = sbr.rel (%p209) target = $region20
      $region19: #{encoder_projector_qformer.13} parent=11 // pred_region
        _
      $region20: #{encoder_projector_qformer.13} parent=11 // pred_fallthru
        _
      // Predicated region
      $region21: #{encoder_projector_qformer.13} parent=11 // pred_check
        %p212 = pneg %p102
      $region22: #{encoder_projector_qformer.13} parent=11 // pred_check_branch
        %214 = sbr.rel (%p212) target = $region24
      $region23: #{encoder_projector_qformer.13} parent=11 // pred_region
        _
      $region24: #{encoder_projector_qformer.13} parent=11 // pred_fallthru
        _
      // Predicated region
      $region25: #{encoder_projector_qformer.13} parent=11 // pred_check
        %p215 = pneg %p123
      $region26: #{encoder_projector_qformer.13} parent=11 // pred_check_branch
        %217 = sbr.rel (%p215) target = $region28
      $region27: #{encoder_projector_qformer.13} parent=11 // pred_region
        _
      $region28: #{encoder_projector_qformer.13} parent=11 // pred_fallthru
        _
      // Predicated region
      $region29: #{encoder_projector_qformer.13} parent=11 // pred_check
        %p218 = pneg %p144
      $region30: #{encoder_projector_qformer.13} parent=11 // pred_check_branch
        %220 = sbr.rel (%p218) target = $region32
      $region31: #{encoder_projector_qformer.13} parent=11 // pred_region
        _
      $region32: #{encoder_projector_qformer.13} parent=11 // pred_fallthru
        _
      // Predicated region
      $region33: #{encoder_projector_qformer.13} parent=11 // pred_check
        %p221 = pneg %p165
      $region34: #{encoder_projector_qformer.13} parent=11 // pred_check_branch
        %223 = sbr.rel (%p221) target = $region36
      $region35: #{encoder_projector_qformer.13} parent=11 // pred_region
        _
      $region36: #{encoder_projector_qformer.13} parent=11 // pred_fallthru
        _
    $region12: #{encoder_projector_qformer.13} parent=5 // pred_fallthru
      _
    %p224 = scmp.lt.s32.totalorder %s13, 2
    // Predicated region
    $region37: #{encoder_projector_qformer.13} parent=5 // pred_check
      %p225 = pneg %p224
    $region38: #{encoder_projector_qformer.13} parent=5 // pred_check_branch
      %227 = sbr.rel (%p225) target = $region40
    $region39: #{encoder_projector_qformer.13} parent=5 // pred_region
      // Predicated region
      $region41: #{encoder_projector_qformer.13} parent=39 // pred_check
        %p228 = pneg %p33
      $region42: #{encoder_projector_qformer.13} parent=39 // pred_check_branch
        %230 = sbr.rel (%p228) target = $region44
      $region43: #{encoder_projector_qformer.13} parent=39 // pred_region
        %s231 = smul.u32 8, %s13
        %p232 = scmp.lt.s32.totalorder %s231, 15
        %s233 = scalar_select %p232, %s231, 15
        %s234 = smul.addr %s233, 8
        %s235 = scalar_lea.vmem %s0, %s234
        %s236 = smul.u32 8, %s13
      $region44: #{encoder_projector_qformer.13} parent=39 // pred_fallthru
        _
    $region40: #{encoder_projector_qformer.13} parent=5 // pred_fallthru
      _
    %p237 = scmp.le.s32.totalorder 1, %s13
    %p238 = scmp.lt.s32.totalorder %s13, 3
    %p239 = pnand %p237, %p238
    %p240 = pneg %p239
    // Predicated region
    $region45: #{encoder_projector_qformer.13} parent=5 // pred_check
      _
    $region46: #{encoder_projector_qformer.13} parent=5 // pred_check_branch
      %242 = sbr.rel (%p239) target = $region48
    $region47: #{encoder_projector_qformer.13} parent=5 // pred_region
      %s243 = ssub.s32 %s13, 1
      %s244 = smul.u32 8, %s18
      %p245 = scmp.lt.s32.totalorder %s244, 15
      %s246 = scalar_select %p245, %s244, 15
      %s247 = smul.addr %s246, 8
      %s248 = scalar_lea.vmem %s0, %s247
      %p249 = pneg %p39
      %p250 = pneg %p36
      %p251 = pneg %p60
      %p252 = pneg %p57
      %p253 = pneg %p81
      %p254 = pneg %p78
      %p255 = pneg %p102
      %p256 = pneg %p99
      %p257 = pneg %p123
      %p258 = pneg %p120
      %p259 = pneg %p144
      %p260 = pneg %p141
      %p261 = pneg %p165
      %p262 = pneg %p162
      %p263 = pneg %p191
      %p264 = pneg %p188
      %s265 = smul.u32 8, %s18
      %p266 = scmp.lt.s32.totalorder %s265, 15
      %s267 = scalar_select %p266, %s265, 15
      %s268 = smul.addr %s267, 8
      %s269 = scalar_lea.vmem %s7, %s268
      %s270 = smul.u32 8, %s18
      %p271 = scmp.lt.s32.totalorder %s270, 15
      %s272 = scalar_select %p271, %s270, 15
      %s273 = smul.addr %s272, 8
      %s274 = scalar_lea.vmem %s0, %s273
      %s275 = smul.u32 8, %s18
      %s276 = smul.u32 8, %s18
      %p277 = scmp.lt.s32.totalorder %s276, 15
      %s278 = scalar_select %p277, %s276, 15
      %s279 = smul.addr %s278, 8
      %s280 = scalar_lea.vmem %s7, %s279
      %s281 = smul.u32 8, %s18
      %v283 = vld [vmem:[%s274] sm:$0xff]
      %v284 = vld [vmem:[%s274 + $0x8] sm:$0xff]
      %v285 = vld [vmem:[%s274 + $0x10] sm:$0xff]
      %v286 = vld [vmem:[%s274 + $0x18] sm:$0xff]
      %v287 = vld [vmem:[%s274 + $0x20] sm:$0xff]
      %v288 = vld [vmem:[%s274 + $0x28] sm:$0xff]
      %v289 = vld [vmem:[%s274 + $0x30] sm:$0xff]
      %v290 = vld [vmem:[%s274 + $0x38] sm:$0xff]
      %v291 = vpack.c.bf16 %v284, %v283
      %v292 = vpack.c.bf16 %v286, %v285
      %v293 = vpack.c.bf16 %v288, %v287
      %v294 = vpack.c.bf16 %v290, %v289
      %v295 = vld [vmem:[%s1] sm:$0xf]
      %v296 = vld [vmem:[%s1 + $0x4] sm:$0xf]
      %v297 = vld [vmem:[%s1 + $0x8] sm:$0xf]
      %v298 = vld [vmem:[%s1 + $0xc] sm:$0xf]
      %v299 = vld [vmem:[%s1 + $0x10] sm:$0xf]
      %v300 = vld [vmem:[%s1 + $0x14] sm:$0xf]
      %v301 = vld [vmem:[%s1 + $0x18] sm:$0xf]
      %v302 = vld [vmem:[%s1 + $0x1c] sm:$0xf]
      %v303 = vld [vmem:[%s2] sm:$0x1]
      %v305 = vlaneseq
      %v306 = vshrl.u32 %v305, 7
      %v307 = vsub.s32 0, %v306
      %v308 = vrot.slane %v303, %v307
      %v318 = vunpack.c.l.b16 %v295
      %v319 = vunpack.c.l.b16 %v296
      %v320 = vunpack.c.l.b16 %v297
      %v321 = vunpack.c.l.b16 %v298
      %v322 = vunpack.c.l.b16 %v299
      %v323 = vunpack.c.l.b16 %v300
      %v324 = vunpack.c.l.b16 %v301
      %v325 = vunpack.c.l.b16 %v302
      %v326 = vpack.c.b16 %v319, %v318
      %v327 = vpack.c.b16 %v321, %v320
      %v328 = vpack.c.b16 %v323, %v322
      %v329 = vpack.c.b16 %v325, %v324
      %vm334 = vcmask 523264
      %v336 = vsel %vm334, %v291, 0
      %v339 = vsel %vm334, %v292, 0
      %v342 = vsel %vm334, %v293, 0
      %v345 = vsel %vm334, %v294, 0
      %347 = vmatprep.subr.bf16.mxu0 0
      %348 = vmatpush1.bf16.msra.mxu0 %v326
      %349 = vmatprep.subr.bf16.mxu0 0
      %350 = vmatpush1.bf16.msra.mxu0 %v327
      %351 = vmatprep.subr.bf16.mxu0 0
      %352 = vmatpush1.bf16.msra.mxu0 %v328
      %353 = vmatprep.subr.bf16.mxu0 0
      %354 = vmatpush1.bf16.msra.mxu0 %v329
      %355 = vmatprep.subr.bf16.mxu0 0
      %356 = vmatpush1.bf16.msra.mxu0 0
      %357 = vmatprep.subr.bf16.mxu0 0
      %358 = vmatpush1.bf16.msra.mxu0 0
      %359 = vmatprep.subr.bf16.mxu0 0
      %360 = vmatpush1.bf16.msra.mxu0 0
      %361 = vmatprep.subr.bf16.mxu0 0
      %362 = vmatpush1.bf16.msra.mxu0 0
      %363 = vmatprep.subr.bf16.mxu0 0
      %364 = vmatpush1.bf16.msra.mxu0 0
      %365 = vmatprep.subr.bf16.mxu0 0
      %366 = vmatpush1.bf16.msra.mxu0 0
      %367 = vmatprep.subr.bf16.mxu0 0
      %368 = vmatpush1.bf16.msra.mxu0 0
      %369 = vmatprep.subr.bf16.mxu0 0
      %370 = vmatpush1.bf16.msra.mxu0 0
      %371 = vmatprep.subr.bf16.mxu0 0
      %372 = vmatpush1.bf16.msra.mxu0 0
      %373 = vmatprep.subr.bf16.mxu0 0
      %374 = vmatpush1.bf16.msra.mxu0 0
      %375 = vmatprep.subr.bf16.mxu0 0
      %376 = vmatpush1.bf16.msra.mxu0 0
      %377 = vmatprep.subr.bf16.mxu0 0
      %378 = vmatpush1.bf16.msra.mxu0 0
      %379 = vmatprep.mubr.bf16.mxu0 0
      %380 = vmatmul.mubr.bf16.gmra.mrb[0].mxu0 %v336
      %v381 = vpop.f32.mrb[0].mxu0
      %v382 = vadd.f32 %v308, %v381
      %v383 = vpop.f32.mrb[0].mxu0
      %v384 = vpop.f32.mrb[0].mxu0
      %v385 = vadd.f32 %v308, %v384
      %v386 = vpop.f32.mrb[0].mxu0
      %387 = vmatprep.mubr.bf16.mxu0 0
      %388 = vmatmul.mubr.bf16.gmra.mrb[0].mxu0 %v339
      %v389 = vpop.f32.mrb[0].mxu0
      %v390 = vadd.f32 %v308, %v389
      %v391 = vpop.f32.mrb[0].mxu0
      %v392 = vpop.f32.mrb[0].mxu0
      %v393 = vadd.f32 %v308, %v392
      %v394 = vpop.f32.mrb[0].mxu0
      %395 = vmatprep.mubr.bf16.mxu0 0
      %396 = vmatmul.mubr.bf16.gmra.mrb[0].mxu0 %v342
      %v397 = vpop.f32.mrb[0].mxu0
      %v398 = vadd.f32 %v308, %v397
      %v399 = vpop.f32.mrb[0].mxu0
      %v400 = vpop.f32.mrb[0].mxu0
      %v401 = vadd.f32 %v308, %v400
      %v402 = vpop.f32.mrb[0].mxu0
      %403 = vmatprep.mubr.bf16.mxu0 0
      %404 = vmatmul.mubr.bf16.gmra.mrb[0].mxu0 %v345
      %v405 = vpop.f32.mrb[0].mxu0
      %v406 = vadd.f32 %v308, %v405
      %v407 = vpop.f32.mrb[0].mxu0
      %v408 = vpop.f32.mrb[0].mxu0
      %v409 = vadd.f32 %v308, %v408
      %v410 = vpop.f32.mrb[0].mxu0
      %411 = vdwg.mxu0
      %v412 = vmul.f32 %v382, %v382
      %v413 = vmul.f32 %v385, %v385
      %v414 = vmul.f32 %v390, %v390
      %v415 = vmul.f32 %v393, %v393
      %v416 = vmul.f32 %v398, %v398
      %v417 = vmul.f32 %v401, %v401
      %v418 = vmul.f32 %v406, %v406
      %v419 = vmul.f32 %v409, %v409
      %v420 = vmul.f32 %v382, %v412
      %v421 = vmul.f32 %v385, %v413
      %v422 = vmul.f32 %v390, %v414
      %v423 = vmul.f32 %v393, %v415
      %v424 = vmul.f32 %v398, %v416
      %v425 = vmul.f32 %v401, %v417
      %v426 = vmul.f32 %v406, %v418
      %v427 = vmul.f32 %v409, %v419
      %v428 = vmul.f32 %v420, 0.044715
      %v429 = vmul.f32 %v421, 0.044715
      %v430 = vmul.f32 %v422, 0.044715
      %v431 = vmul.f32 %v423, 0.044715
      %v432 = vmul.f32 %v424, 0.044715
      %v433 = vmul.f32 %v425, 0.044715
      %v434 = vmul.f32 %v426, 0.044715
      %v435 = vmul.f32 %v427, 0.044715
      %v436 = vadd.f32 %v382, %v428
      %v437 = vadd.f32 %v385, %v429
      %v438 = vadd.f32 %v390, %v430
      %v439 = vadd.f32 %v393, %v431
      %v440 = vadd.f32 %v398, %v432
      %v441 = vadd.f32 %v401, %v433
      %v442 = vadd.f32 %v406, %v434
      %v443 = vadd.f32 %v409, %v435
      %v444 = vmul.f32 %v436, 0.7978846
      %v445 = vmul.f32 %v437, 0.7978846
      %v446 = vmul.f32 %v438, 0.7978846
      %v447 = vmul.f32 %v439, 0.7978846
      %v448 = vmul.f32 %v440, 0.7978846
      %v449 = vmul.f32 %v441, 0.7978846
      %v450 = vmul.f32 %v442, 0.7978846
      %v451 = vmul.f32 %v443, 0.7978846
      %v452 = vtanh.pop %v444
      %v453 = vtanh.pop %v445
      %v454 = vtanh.pop %v446
      %v455 = vtanh.pop %v447
      %v456 = vtanh.pop %v448
      %v457 = vtanh.pop %v449
      %v458 = vtanh.pop %v450
      %v459 = vtanh.pop %v451
      %v460 = vadd.f32 %v452, 1.0
      %v461 = vadd.f32 %v453, 1.0
      %v462 = vadd.f32 %v454, 1.0
      %v463 = vadd.f32 %v455, 1.0
      %v464 = vadd.f32 %v456, 1.0
      %v465 = vadd.f32 %v457, 1.0
      %v466 = vadd.f32 %v458, 1.0
      %v467 = vadd.f32 %v459, 1.0
      %v468 = vmul.f32 %v460, 0.5
      %v469 = vmul.f32 %v461, 0.5
      %v470 = vmul.f32 %v462, 0.5
      %v471 = vmul.f32 %v463, 0.5
      %v472 = vmul.f32 %v464, 0.5
      %v473 = vmul.f32 %v465, 0.5
      %v474 = vmul.f32 %v466, 0.5
      %v475 = vmul.f32 %v467, 0.5
      %v476 = vmul.f32 %v382, %v468
      %v477 = vmul.f32 %v385, %v469
      %v478 = vmul.f32 %v390, %v470
      %v479 = vmul.f32 %v393, %v471
      %v480 = vmul.f32 %v398, %v472
      %v481 = vmul.f32 %v401, %v473
      %v482 = vmul.f32 %v406, %v474
      %v483 = vmul.f32 %v409, %v475
      %v484 = vpack.c.bf16 %v477, %v476
      %v485 = vpack.c.bf16 %v479, %v478
      %v486 = vpack.c.bf16 %v481, %v480
      %v487 = vpack.c.bf16 %v483, %v482
      %488 = vst [vmem:[#allocation2] sm:$0xff] %v484
      %489 = vst [vmem:[#allocation2 + $0x8] sm:$0xff] %v485
      %490 = vst [vmem:[#allocation2 + $0x10] sm:$0xff] %v486
      %491 = vst [vmem:[#allocation2 + $0x18] sm:$0xff] %v487
      %v492 = vld [vmem:[#allocation2] sm:$0xff]
      %v493 = vld [vmem:[#allocation2 + $0x8] sm:$0xff]
      %v494 = vld [vmem:[#allocation2 + $0x10] sm:$0xff]
      %v495 = vld [vmem:[#allocation2 + $0x18] sm:$0xff]
      %v496 = vld [vmem:[%s3] sm:$0xf]
      %v497 = vld [vmem:[%s3 + $0x4] sm:$0xf]
      %v498 = vld [vmem:[%s3 + $0x8] sm:$0xf]
      %v499 = vld [vmem:[%s3 + $0xc] sm:$0xf]
      %v500 = vld [vmem:[%s3 + $0x10] sm:$0xf]
      %v501 = vld [vmem:[%s3 + $0x14] sm:$0xf]
      %v502 = vld [vmem:[%s3 + $0x18] sm:$0xf]
      %v503 = vld [vmem:[%s3 + $0x1c] sm:$0xf]
      %v504 = vld [vmem:[%s3 + $0x20] sm:$0xf]
      %v505 = vld [vmem:[%s3 + $0x24] sm:$0xf]
      %v506 = vld [vmem:[%s3 + $0x28] sm:$0xf]
      %v507 = vld [vmem:[%s3 + $0x2c] sm:$0xf]
      %v508 = vld [vmem:[%s3 + $0x30] sm:$0xf]
      %v509 = vld [vmem:[%s3 + $0x34] sm:$0xf]
      %v510 = vld [vmem:[%s3 + $0x38] sm:$0xf]
      %v511 = vld [vmem:[%s3 + $0x3c] sm:$0xf]
      %v512 = vld [vmem:[%s4] sm:$0x1]
      %v514 = vlaneseq
      %v515 = vshrl.u32 %v514, 7
      %v516 = vsub.s32 0, %v515
      %v517 = vrot.slane %v512, %v516
      %v535 = vunpack.c.l.b16 %v496
      %v536 = vunpack.c.l.b16 %v497
      %v537 = vunpack.c.l.b16 %v498
      %v538 = vunpack.c.l.b16 %v499
      %v539 = vunpack.c.l.b16 %v500
      %v540 = vunpack.c.l.b16 %v501
      %v541 = vunpack.c.l.b16 %v502
      %v542 = vunpack.c.l.b16 %v503
      %v543 = vunpack.c.l.b16 %v504
      %v544 = vunpack.c.l.b16 %v505
      %v545 = vunpack.c.l.b16 %v506
      %v546 = vunpack.c.l.b16 %v507
      %v547 = vunpack.c.l.b16 %v508
      %v548 = vunpack.c.l.b16 %v509
      %v549 = vunpack.c.l.b16 %v510
      %v550 = vunpack.c.l.b16 %v511
      %v551 = vpack.c.b16 %v536, %v535
      %v552 = vpack.c.b16 %v538, %v537
      %v553 = vpack.c.b16 %v540, %v539
      %v554 = vpack.c.b16 %v542, %v541
      %v555 = vpack.c.b16 %v544, %v543
      %v556 = vpack.c.b16 %v546, %v545
      %v557 = vpack.c.b16 %v548, %v547
      %v558 = vpack.c.b16 %v550, %v549
      %567 = vmatprep.subr.bf16.mxu0 0
      %568 = vmatpush1.bf16.msra.mxu0 %v551
      %569 = vmatprep.subr.bf16.mxu0 0
      %570 = vmatpush1.bf16.msra.mxu0 %v552
      %571 = vmatprep.subr.bf16.mxu0 0
      %572 = vmatpush1.bf16.msra.mxu0 %v553
      %573 = vmatprep.subr.bf16.mxu0 0
      %574 = vmatpush1.bf16.msra.mxu0 %v554
      %575 = vmatprep.subr.bf16.mxu0 0
      %576 = vmatpush1.bf16.msra.mxu0 %v555
      %577 = vmatprep.subr.bf16.mxu0 0
      %578 = vmatpush1.bf16.msra.mxu0 %v556
      %579 = vmatprep.subr.bf16.mxu0 0
      %580 = vmatpush1.bf16.msra.mxu0 %v557
      %581 = vmatprep.subr.bf16.mxu0 0
      %582 = vmatpush1.bf16.msra.mxu0 %v558
      %583 = vmatprep.subr.bf16.mxu0 0
      %584 = vmatpush1.bf16.msra.mxu0 0
      %585 = vmatprep.subr.bf16.mxu0 0
      %586 = vmatpush1.bf16.msra.mxu0 0
      %587 = vmatprep.subr.bf16.mxu0 0
      %588 = vmatpush1.bf16.msra.mxu0 0
      %589 = vmatprep.subr.bf16.mxu0 0
      %590 = vmatpush1.bf16.msra.mxu0 0
      %591 = vmatprep.subr.bf16.mxu0 0
      %592 = vmatpush1.bf16.msra.mxu0 0
      %593 = vmatprep.subr.bf16.mxu0 0
      %594 = vmatpush1.bf16.msra.mxu0 0
      %595 = vmatprep.subr.bf16.mxu0 0
      %596 = vmatpush1.bf16.msra.mxu0 0
      %597 = vmatprep.subr.bf16.mxu0 0
      %598 = vmatpush1.bf16.msra.mxu0 0
      %599 = vmatprep.mubr.bf16.mxu0 0
      %600 = vmatmul.mubr.bf16.gmra.mrb[0].mxu0 %v492
      %v601 = vpop.f32.mrb[0].mxu0
      %v602 = vadd.f32 %v517, %v601
      %v603 = vpop.f32.mrb[0].mxu0
      %v604 = vpop.f32.mrb[0].mxu0
      %v605 = vadd.f32 %v517, %v604
      %v606 = vpop.f32.mrb[0].mxu0
      %607 = vmatprep.mubr.bf16.mxu0 0
      %608 = vmatmul.mubr.bf16.gmra.mrb[0].mxu0 %v493
      %v609 = vpop.f32.mrb[0].mxu0
      %v610 = vadd.f32 %v517, %v609
      %v611 = vpop.f32.mrb[0].mxu0
      %v612 = vpop.f32.mrb[0].mxu0
      %v613 = vadd.f32 %v517, %v612
      %v614 = vpop.f32.mrb[0].mxu0
      %615 = vmatprep.mubr.bf16.mxu0 0
      %616 = vmatmul.mubr.bf16.gmra.mrb[0].mxu0 %v494
      %v617 = vpop.f32.mrb[0].mxu0
      %v618 = vadd.f32 %v517, %v617
      %v619 = vpop.f32.mrb[0].mxu0
      %v620 = vpop.f32.mrb[0].mxu0
      %v621 = vadd.f32 %v517, %v620
      %v622 = vpop.f32.mrb[0].mxu0
      %623 = vmatprep.mubr.bf16.mxu0 0
      %624 = vmatmul.mubr.bf16.gmra.mrb[0].mxu0 %v495
      %v625 = vpop.f32.mrb[0].mxu0
      %v626 = vadd.f32 %v517, %v625
      %v627 = vpop.f32.mrb[0].mxu0
      %v628 = vpop.f32.mrb[0].mxu0
      %v629 = vadd.f32 %v517, %v628
      %v630 = vpop.f32.mrb[0].mxu0
      %631 = vdwg.mxu0
      %v632 = vadd.f32 %v602, %v283
      %v633 = vadd.f32 %v605, %v284
      %v634 = vadd.f32 %v610, %v285
      %v635 = vadd.f32 %v613, %v286
      %v636 = vadd.f32 %v618, %v287
      %v637 = vadd.f32 %v621, %v288
      %v638 = vadd.f32 %v626, %v289
      %v639 = vadd.f32 %v629, %v290
      %v640 = vsel %vm334, %v632, 0.0
      %641 = vadd.xlane.f32.xlu0 %v640
      %v642 = vpop.xlane.xlu0 %641
      %v643 = vsel %vm334, %v633, 0.0
      %644 = vadd.xlane.f32.xlu0 %v643
      %v645 = vpop.xlane.xlu0 %644
      %v646 = vsel %vm334, %v634, 0.0
      %647 = vadd.xlane.f32.xlu0 %v646
      %v648 = vpop.xlane.xlu0 %647
      %v649 = vsel %vm334, %v635, 0.0
      %650 = vadd.xlane.f32.xlu0 %v649
      %v651 = vpop.xlane.xlu0 %650
      %v652 = vsel %vm334, %v636, 0.0
      %653 = vadd.xlane.f32.xlu0 %v652
      %v654 = vpop.xlane.xlu0 %653
      %v655 = vsel %vm334, %v637, 0.0
      %656 = vadd.xlane.f32.xlu0 %v655
      %v657 = vpop.xlane.xlu0 %656
      %v658 = vsel %vm334, %v638, 0.0
      %659 = vadd.xlane.f32.xlu0 %v658
      %v660 = vpop.xlane.xlu0 %659
      %v661 = vsel %vm334, %v639, 0.0
      %662 = vadd.xlane.f32.xlu0 %v661
      %v663 = vpop.xlane.xlu0 %662
      %v664 = vrcp.pop 64.0
      %v665 = vmul.f32 %v642, %v664
      %v666 = vmul.f32 %v645, %v664
      %v667 = vmul.f32 %v648, %v664
      %v668 = vmul.f32 %v651, %v664
      %v669 = vmul.f32 %v654, %v664
      %v670 = vmul.f32 %v657, %v664
      %v671 = vmul.f32 %v660, %v664
      %v672 = vmul.f32 %v663, %v664
      %v673 = vsub.f32 %v632, %v665
      %v674 = vsub.f32 %v633, %v666
      %v675 = vsub.f32 %v634, %v667
      %v676 = vsub.f32 %v635, %v668
      %v677 = vsub.f32 %v636, %v669
      %v678 = vsub.f32 %v637, %v670
      %v679 = vsub.f32 %v638, %v671
      %v680 = vsub.f32 %v639, %v672
      %v681 = vmul.f32 %v673, %v673
      %v682 = vmul.f32 %v674, %v674
      %v683 = vmul.f32 %v675, %v675
      %v684 = vmul.f32 %v676, %v676
      %v685 = vmul.f32 %v677, %v677
      %v686 = vmul.f32 %v678, %v678
      %v687 = vmul.f32 %v679, %v679
      %v688 = vmul.f32 %v680, %v680
      %v689 = vsel %vm334, %v681, 0.0
      %690 = vadd.xlane.f32.xlu0 %v689
      %v691 = vpop.xlane.xlu0 %690
      %v692 = vsel %vm334, %v682, 0.0
      %693 = vadd.xlane.f32.xlu0 %v692
      %v694 = vpop.xlane.xlu0 %693
      %v695 = vsel %vm334, %v683, 0.0
      %696 = vadd.xlane.f32.xlu0 %v695
      %v697 = vpop.xlane.xlu0 %696
      %v698 = vsel %vm334, %v684, 0.0
      %699 = vadd.xlane.f32.xlu0 %v698
      %v700 = vpop.xlane.xlu0 %699
      %v701 = vsel %vm334, %v685, 0.0
      %702 = vadd.xlane.f32.xlu0 %v701
      %v703 = vpop.xlane.xlu0 %702
      %v704 = vsel %vm334, %v686, 0.0
      %705 = vadd.xlane.f32.xlu0 %v704
      %v706 = vpop.xlane.xlu0 %705
      %v707 = vsel %vm334, %v687, 0.0
      %708 = vadd.xlane.f32.xlu0 %v707
      %v709 = vpop.xlane.xlu0 %708
      %v710 = vsel %vm334, %v688, 0.0
      %711 = vadd.xlane.f32.xlu0 %v710
      %v712 = vpop.xlane.xlu0 %711
      %v713 = vmul.f32 %v691, %v664
      %v714 = vmul.f32 %v694, %v664
      %v715 = vmul.f32 %v697, %v664
      %v716 = vmul.f32 %v700, %v664
      %v717 = vmul.f32 %v703, %v664
      %v718 = vmul.f32 %v706, %v664
      %v719 = vmul.f32 %v709, %v664
      %v720 = vmul.f32 %v712, %v664
      %v721 = vadd.f32 %v713, 1e-12
      %v722 = vadd.f32 %v714, 1e-12
      %v723 = vadd.f32 %v715, 1e-12
      %v724 = vadd.f32 %v716, 1e-12
      %v725 = vadd.f32 %v717, 1e-12
      %v726 = vadd.f32 %v718, 1e-12
      %v727 = vadd.f32 %v719, 1e-12
      %v728 = vadd.f32 %v720, 1e-12
      %v729 = vrsqrt.pop %v721
      %v730 = vrsqrt.pop %v722
      %v731 = vrsqrt.pop %v723
      %v732 = vrsqrt.pop %v724
      %v733 = vrsqrt.pop %v725
      %v734 = vrsqrt.pop %v726
      %v735 = vrsqrt.pop %v727
      %v736 = vrsqrt.pop %v728
      %v737 = vmul.f32 %v673, %v729
      %v738 = vmul.f32 %v674, %v730
      %v739 = vmul.f32 %v675, %v731
      %v740 = vmul.f32 %v676, %v732
      %v741 = vmul.f32 %v677, %v733
      %v742 = vmul.f32 %v678, %v734
      %v743 = vmul.f32 %v679, %v735
      %v744 = vmul.f32 %v680, %v736
      %v745 = vld [vmem:[%s5] sm:$0x1]
      %v747 = vlaneseq
      %v748 = vshrl.u32 %v747, 7
      %v749 = vsub.s32 0, %v748
      %v750 = vrot.slane %v745, %v749
      %v752 = vmul.f32 %v737, %v750
      %v753 = vmul.f32 %v738, %v750
      %v754 = vmul.f32 %v739, %v750
      %v755 = vmul.f32 %v740, %v750
      %v756 = vmul.f32 %v741, %v750
      %v757 = vmul.f32 %v742, %v750
      %v758 = vmul.f32 %v743, %v750
      %v759 = vmul.f32 %v744, %v750
      %v760 = vld [vmem:[%s6] sm:$0x1]
      %v762 = vlaneseq
      %v763 = vshrl.u32 %v762, 7
      %v764 = vsub.s32 0, %v763
      %v765 = vrot.slane %v760, %v764
      %v767 = vadd.f32 %v752, %v765
      %v768 = vadd.f32 %v753, %v765
      %v769 = vadd.f32 %v754, %v765
      %v770 = vadd.f32 %v755, %v765
      %v771 = vadd.f32 %v756, %v765
      %v772 = vadd.f32 %v757, %v765
      %v773 = vadd.f32 %v758, %v765
      %v774 = vadd.f32 %v759, %v765
      %775 = vst.msk [vmem:[%s280] sm:$0xff] %vm334, %v767
      %776 = vst.msk [vmem:[%s280 + $0x8] sm:$0xff] %vm334, %v768
      %777 = vst.msk [vmem:[%s280 + $0x10] sm:$0xff] %vm334, %v769
      %778 = vst.msk [vmem:[%s280 + $0x18] sm:$0xff] %vm334, %v770
      %779 = vst.msk [vmem:[%s280 + $0x20] sm:$0xff] %vm334, %v771
      %780 = vst.msk [vmem:[%s280 + $0x28] sm:$0xff] %vm334, %v772
      %781 = vst.msk [vmem:[%s280 + $0x30] sm:$0xff] %vm334, %v773
      %782 = vst.msk [vmem:[%s280 + $0x38] sm:$0xff] %vm334, %v774
      %s783 = smul.u32 8, %s18
      %p784 = scmp.lt.s32.totalorder %s783, 15
      %s785 = scalar_select %p784, %s783, 15
      %s786 = smul.addr %s785, 8
      %s787 = scalar_lea.vmem %s7, %s786
      // Predicated region
      $region49: #{encoder_projector_qformer.13} parent=47 // pred_check
        %p788 = pneg %p188
      $region50: #{encoder_projector_qformer.13} parent=47 // pred_check_branch
        %790 = sbr.rel (%p788) target = $region52
      $region51: #{encoder_projector_qformer.13} parent=47 // pred_region
        %s791 = smul.u32 8, %s18
      $region52: #{encoder_projector_qformer.13} parent=47 // pred_fallthru
        _
    $region48: #{encoder_projector_qformer.13} parent=5 // pred_fallthru
      _
    %p792 = scmp.le.s32.totalorder 2, %s13
    // Predicated region
    $region53: #{encoder_projector_qformer.13} parent=5 // pred_check
      %p793 = pneg %p792
    $region54: #{encoder_projector_qformer.13} parent=5 // pred_check_branch
      %795 = sbr.rel (%p793) target = $region56
    $region55: #{encoder_projector_qformer.13} parent=5 // pred_region
      %s796 = ssub.s32 %s13, 2
      // Predicated region
      $region57: #{encoder_projector_qformer.13} parent=55 // pred_check
        %p797 = pneg %p194
      $region58: #{encoder_projector_qformer.13} parent=55 // pred_check_branch
        %799 = sbr.rel (%p797) target = $region60
      $region59: #{encoder_projector_qformer.13} parent=55 // pred_region
        %s800 = smul.u32 8, %s19
        %p801 = scmp.lt.s32.totalorder %s800, 15
        %s802 = scalar_select %p801, %s800, 15
        %s803 = smul.addr %s802, 8
        %s804 = scalar_lea.vmem %s7, %s803
      $region60: #{encoder_projector_qformer.13} parent=55 // pred_fallthru
        _
    $region56: #{encoder_projector_qformer.13} parent=5 // pred_fallthru
      _
  $region6: #{encoder_projector_qformer.13} parent=0 // loop_footer
    %s17 = sadd.s32 1, %s13
  $region7: #{encoder_projector_qformer.13} parent=0 // loop_footer_branch
    %12 = sbr.rel target = $region3
  $region8: #{encoder_projector_qformer.13} parent=0 // loop_exit
    _

// kernel: encoder_projector_qformer.10
$region0: #{encoder_projector_qformer.10}
  #allocation0 [shape = 'u32[]', space=smem, size = 0x4, offset = 0x4, fixed_abs, tag = 'smem constant byte address 0x4 - core index']
  #allocation1 [shape = 'u32[144,128]{1,0:T(1,128)}', space=vmem, size = 0x12000, scoped, tag = 'internal scratch']
  #allocation2 [shape = 'bf16[64,192]{1,0:T(16,128)(2,1)}', space=vmem, size = 0x8000, scoped, tag = 'scratch operand']
  #allocation3 [shape = 'bf16[64,64]{1,0:T(16,128)(2,1)}', space=vmem, size = 0x4000, scoped, tag = 'scratch operand']
  %s0 = inlined_call_operand.vmem [shape: f32[1,64,64], index: 0, kind: input, shape index: {}]
  %s1 = inlined_call_operand.vmem [shape: bf16[64,192], index: 1, kind: input, shape index: {}]
  %s2 = inlined_call_operand.vmem [shape: f32[1,192], index: 2, kind: input, shape index: {}]
  %s3 = inlined_call_operand.vmem [shape: bf16[64,64], index: 3, kind: input, shape index: {}]
  %s4 = inlined_call_operand.vmem [shape: f32[1,64], index: 4, kind: input, shape index: {}]
  %s5 = inlined_call_operand.vmem [shape: f32[1,64], index: 5, kind: input, shape index: {}]
  %s6 = inlined_call_operand.vmem [shape: f32[1,64], index: 6, kind: input, shape index: {}]
  %s7 = inlined_call_operand.vmem [shape: f32[1,64,64], index: 7, kind: output, shape index: {}]
  %s8 = sld [smem:[#allocation0]]
  $region38: #{encoder_projector_qformer.10} parent=0
    _
  %s10 = ssub.s32 1, %s8
  %s11 = scalar_select 0, %s10, %s8
  // Predicated region
  $region2: #{encoder_projector_qformer.10} parent=0 // pred_check
    _
  $region3: #{encoder_projector_qformer.10} parent=0 // pred_check_branch
    %13 = sbr.rel (0) target = $region5
  $region4: #{encoder_projector_qformer.10} parent=0 // pred_region
    _
  $region5: #{encoder_projector_qformer.10} parent=0 // pred_fallthru
    _
  // Predicated region
  $region6: #{encoder_projector_qformer.10} parent=0 // pred_check
    _
  $region7: #{encoder_projector_qformer.10} parent=0 // pred_check_branch
    %15 = sbr.rel (0) target = $region9
  $region8: #{encoder_projector_qformer.10} parent=0 // pred_region
    _
  $region9: #{encoder_projector_qformer.10} parent=0 // pred_fallthru
    _
  // Predicated region
  $region10: #{encoder_projector_qformer.10} parent=0 // pred_check
    _
  $region11: #{encoder_projector_qformer.10} parent=0 // pred_check_branch
    %17 = sbr.rel (0) target = $region13
  $region12: #{encoder_projector_qformer.10} parent=0 // pred_region
    _
  $region13: #{encoder_projector_qformer.10} parent=0 // pred_fallthru
    _
  // Predicated region
  $region14: #{encoder_projector_qformer.10} parent=0 // pred_check
    _
  $region15: #{encoder_projector_qformer.10} parent=0 // pred_check_branch
    %19 = sbr.rel (0) target = $region17
  $region16: #{encoder_projector_qformer.10} parent=0 // pred_region
    _
  $region17: #{encoder_projector_qformer.10} parent=0 // pred_fallthru
    _
  // Predicated region
  $region18: #{encoder_projector_qformer.10} parent=0 // pred_check
    _
  $region19: #{encoder_projector_qformer.10} parent=0 // pred_check_branch
    %21 = sbr.rel (0) target = $region21
  $region20: #{encoder_projector_qformer.10} parent=0 // pred_region
    _
  $region21: #{encoder_projector_qformer.10} parent=0 // pred_fallthru
    _
  // Predicated region
  $region22: #{encoder_projector_qformer.10} parent=0 // pred_check
    _
  $region23: #{encoder_projector_qformer.10} parent=0 // pred_check_branch
    %23 = sbr.rel (0) target = $region25
  $region24: #{encoder_projector_qformer.10} parent=0 // pred_region
    _
  $region25: #{encoder_projector_qformer.10} parent=0 // pred_fallthru
    _
  // Predicated region
  $region26: #{encoder_projector_qformer.10} parent=0 // pred_check
    _
  $region27: #{encoder_projector_qformer.10} parent=0 // pred_check_branch
    %25 = sbr.rel (0) target = $region29
  $region28: #{encoder_projector_qformer.10} parent=0 // pred_region
    _
  $region29: #{encoder_projector_qformer.10} parent=0 // pred_fallthru
    _
  %v27 = vld [vmem:[%s0] sm:$0xff]
  %v28 = vld [vmem:[%s0 + $0x8] sm:$0xff]
  %v29 = vld [vmem:[%s0 + $0x10] sm:$0xff]
  %v30 = vld [vmem:[%s0 + $0x18] sm:$0xff]
  %v31 = vld [vmem:[%s0 + $0x20] sm:$0xff]
  %v32 = vld [vmem:[%s0 + $0x28] sm:$0xff]
  %v33 = vld [vmem:[%s0 + $0x30] sm:$0xff]
  %v34 = vld [vmem:[%s0 + $0x38] sm:$0xff]
  %v35 = vpack.c.bf16 %v28, %v27
  %v36 = vpack.c.bf16 %v30, %v29
  %v37 = vpack.c.bf16 %v32, %v31
  %v38 = vpack.c.bf16 %v34, %v33
  %v39 = vld [vmem:[%s1] sm:$0xff]
  %v40 = vld [vmem:[%s1 + $0x8] sm:$0xff]
  %v41 = vld [vmem:[%s1 + $0x10] sm:$0xff]
  %v42 = vld [vmem:[%s1 + $0x18] sm:$0xff]
  %v43 = vld [vmem:[%s1 + $0x20] sm:$0xff]
  %v44 = vld [vmem:[%s1 + $0x28] sm:$0xff]
  %v45 = vld [vmem:[%s1 + $0x30] sm:$0xff]
  %v46 = vld [vmem:[%s1 + $0x38] sm:$0xff]
  %v47 = vld [vmem:[%s2] sm:$0x3]
  %v49 = vlaneseq
  %v50 = vshrl.u32 %v49, 7
  %v51 = vsub.s32 0, %v50
  %v52 = vrot.slane %v47, %v51
  %v53 = vlaneseq
  %v54 = vshrl.u32 %v53, 7
  %v55 = vsub.s32 1, %v54
  %v56 = vrot.slane %v47, %v55
  %v67 = vunpack.c.l.b16 %v39
  %v68 = vunpack.c.h.b16 %v39
  %v69 = vunpack.c.l.b16 %v40
  %v70 = vunpack.c.h.b16 %v40
  %v71 = vunpack.c.l.b16 %v41
  %v72 = vunpack.c.h.b16 %v41
  %v73 = vunpack.c.l.b16 %v42
  %v74 = vunpack.c.h.b16 %v42
  %v75 = vunpack.c.l.b16 %v43
  %v76 = vunpack.c.h.b16 %v43
  %v77 = vunpack.c.l.b16 %v44
  %v78 = vunpack.c.h.b16 %v44
  %v79 = vunpack.c.l.b16 %v45
  %v80 = vunpack.c.h.b16 %v45
  %v81 = vunpack.c.l.b16 %v46
  %v82 = vunpack.c.h.b16 %v46
  %v83 = vpack.c.b16 %v69, %v67
  %v84 = vpack.c.b16 %v70, %v68
  %v85 = vpack.c.b16 %v73, %v71
  %v86 = vpack.c.b16 %v74, %v72
  %v87 = vpack.c.b16 %v77, %v75
  %v88 = vpack.c.b16 %v78, %v76
  %v89 = vpack.c.b16 %v81, %v79
  %v90 = vpack.c.b16 %v82, %v80
  %vm99 = vcmask 523264
  %v101 = vsel %vm99, %v35, 0
  %v104 = vsel %vm99, %v36, 0
  %v107 = vsel %vm99, %v37, 0
  %v110 = vsel %vm99, %v38, 0
  %112 = vmatprep.subr.bf16.mxu0 %v84
  %113 = vmatpush1.bf16.msra.mxu0 %v83
  %114 = vmatprep.subr.bf16.mxu0 %v86
  %115 = vmatpush1.bf16.msra.mxu0 %v85
  %116 = vmatprep.subr.bf16.mxu0 %v88
  %117 = vmatpush1.bf16.msra.mxu0 %v87
  %118 = vmatprep.subr.bf16.mxu0 %v90
  %119 = vmatpush1.bf16.msra.mxu0 %v89
  %120 = vmatprep.subr.bf16.mxu0 0
  %121 = vmatpush1.bf16.msra.mxu0 0
  %122 = vmatprep.subr.bf16.mxu0 0
  %123 = vmatpush1.bf16.msra.mxu0 0
  %124 = vmatprep.subr.bf16.mxu0 0
  %125 = vmatpush1.bf16.msra.mxu0 0
  %126 = vmatprep.subr.bf16.mxu0 0
  %127 = vmatpush1.bf16.msra.mxu0 0
  %128 = vmatprep.subr.bf16.mxu0 0
  %129 = vmatpush1.bf16.msra.mxu0 0
  %130 = vmatprep.subr.bf16.mxu0 0
  %131 = vmatpush1.bf16.msra.mxu0 0
  %132 = vmatprep.subr.bf16.mxu0 0
  %133 = vmatpush1.bf16.msra.mxu0 0
  %134 = vmatprep.subr.bf16.mxu0 0
  %135 = vmatpush1.bf16.msra.mxu0 0
  %136 = vmatprep.subr.bf16.mxu0 0
  %137 = vmatpush1.bf16.msra.mxu0 0
  %138 = vmatprep.subr.bf16.mxu0 0
  %139 = vmatpush1.bf16.msra.mxu0 0
  %140 = vmatprep.subr.bf16.mxu0 0
  %141 = vmatpush1.bf16.msra.mxu0 0
  %142 = vmatprep.subr.bf16.mxu0 0
  %143 = vmatpush1.bf16.msra.mxu0 0
  %144 = vmatprep.mubr.bf16.mxu0 0
  %145 = vmatmul.mubr.bf16.gmra.mrb[0].mxu0 %v101
  %v146 = vpop.f32.mrb[0].mxu0
  %v147 = vadd.f32 %v52, %v146
  %v148 = vpop.f32.mrb[0].mxu0
  %v149 = vadd.f32 %v56, %v148
  %v150 = vpop.f32.mrb[0].mxu0
  %v151 = vadd.f32 %v52, %v150
  %v152 = vpop.f32.mrb[0].mxu0
  %v153 = vadd.f32 %v56, %v152
  %154 = vmatprep.mubr.bf16.mxu0 0
  %155 = vmatmul.mubr.bf16.gmra.mrb[0].mxu0 %v104
  %v156 = vpop.f32.mrb[0].mxu0
  %v157 = vadd.f32 %v52, %v156
  %v158 = vpop.f32.mrb[0].mxu0
  %v159 = vadd.f32 %v56, %v158
  %v160 = vpop.f32.mrb[0].mxu0
  %v161 = vadd.f32 %v52, %v160
  %v162 = vpop.f32.mrb[0].mxu0
  %v163 = vadd.f32 %v56, %v162
  %164 = vmatprep.mubr.bf16.mxu0 0
  %165 = vmatmul.mubr.bf16.gmra.mrb[0].mxu0 %v107
  %v166 = vpop.f32.mrb[0].mxu0
  %v167 = vadd.f32 %v52, %v166
  %v168 = vpop.f32.mrb[0].mxu0
  %v169 = vadd.f32 %v56, %v168
  %v170 = vpop.f32.mrb[0].mxu0
  %v171 = vadd.f32 %v52, %v170
  %v172 = vpop.f32.mrb[0].mxu0
  %v173 = vadd.f32 %v56, %v172
  %174 = vmatprep.mubr.bf16.mxu0 0
  %175 = vmatmul.mubr.bf16.gmra.mrb[0].mxu0 %v110
  %v176 = vpop.f32.mrb[0].mxu0
  %v177 = vadd.f32 %v52, %v176
  %v178 = vpop.f32.mrb[0].mxu0
  %v179 = vadd.f32 %v56, %v178
  %v180 = vpop.f32.mrb[0].mxu0
  %v181 = vadd.f32 %v52, %v180
  %v182 = vpop.f32.mrb[0].mxu0
  %v183 = vadd.f32 %v56, %v182
  %184 = vdwg.mxu0
  %v185 = vpack.c.bf16 %v151, %v147
  %v186 = vpack.c.bf16 %v153, %v149
  %v187 = vpack.c.bf16 %v161, %v157
  %v188 = vpack.c.bf16 %v163, %v159
  %v189 = vpack.c.bf16 %v171, %v167
  %v190 = vpack.c.bf16 %v173, %v169
  %v191 = vpack.c.bf16 %v181, %v177
  %v192 = vpack.c.bf16 %v183, %v179
  %193 = vst [vmem:[#allocation2] sm:$0xff] %v185
  %194 = vst.msk [vmem:[#allocation2 + $0x8] sm:$0xff] %vm99, %v186
  %195 = vst [vmem:[#allocation2 + $0x10] sm:$0xff] %v187
  %196 = vst.msk [vmem:[#allocation2 + $0x18] sm:$0xff] %vm99, %v188
  %197 = vst [vmem:[#allocation2 + $0x20] sm:$0xff] %v189
  %198 = vst.msk [vmem:[#allocation2 + $0x28] sm:$0xff] %vm99, %v190
  %199 = vst [vmem:[#allocation2 + $0x30] sm:$0xff] %v191
  %200 = vst.msk [vmem:[#allocation2 + $0x38] sm:$0xff] %vm99, %v192
  %v201 = vld [vmem:[#allocation2] sm:$0xff]
  %v202 = vld [vmem:[#allocation2 + $0x10] sm:$0xff]
  %v203 = vld [vmem:[#allocation2 + $0x20] sm:$0xff]
  %v204 = vld [vmem:[#allocation2 + $0x30] sm:$0xff]
  %v205 = vld [vmem:[#allocation2 + $0x8] sm:$0xff]
  %v206 = vld [vmem:[#allocation2 + $0x18] sm:$0xff]
  %v207 = vld [vmem:[#allocation2 + $0x28] sm:$0xff]
  %v208 = vld [vmem:[#allocation2 + $0x38] sm:$0xff]
  %213 = vrot.lane.b32.xlu0 %v201, 64
  %v214 = vpop.permute.xlu0 %213
  %215 = vrot.lane.b32.xlu0 %v202, 64
  %v216 = vpop.permute.xlu0 %215
  %217 = vrot.lane.b32.xlu0 %v203, 64
  %v218 = vpop.permute.xlu0 %217
  %219 = vrot.lane.b32.xlu0 %v204, 64
  %v220 = vpop.permute.xlu0 %219
  %vm221 = vcmask 130048
  %v223 = vsel %vm221, %v201, 0
  %v226 = vsel %vm221, %v202, 0
  %v229 = vsel %vm221, %v203, 0
  %v232 = vsel %vm221, %v204, 0
  %v235 = vsel %vm221, %v214, 0
  %v238 = vsel %vm221, %v216, 0
  %v241 = vsel %vm221, %v218, 0
  %v244 = vsel %vm221, %v220, 0
  %246 = vmatprep.subr.bf16.mxu0 0
  %247 = vmatpush1.bf16.xpose.msra.mxu0 %v235
  %248 = vmatprep.subr.bf16.mxu0 0
  %249 = vmatpush1.bf16.xpose.msra.mxu0 %v238
  %250 = vmatprep.subr.bf16.mxu0 0
  %251 = vmatpush1.bf16.xpose.msra.mxu0 %v241
  %252 = vmatprep.subr.bf16.mxu0 0
  %253 = vmatpush1.bf16.xpose.msra.mxu0 %v244
  %254 = vmatprep.subr.bf16.mxu0 0
  %255 = vmatpush1.bf16.xpose.msra.mxu0 0
  %256 = vmatprep.subr.bf16.mxu0 0
  %257 = vmatpush1.bf16.xpose.msra.mxu0 0
  %258 = vmatprep.subr.bf16.mxu0 0
  %259 = vmatpush1.bf16.xpose.msra.mxu0 0
  %260 = vmatprep.subr.bf16.mxu0 0
  %261 = vmatpush1.bf16.xpose.msra.mxu0 0
  %262 = vmatprep.subr.bf16.mxu0 0
  %263 = vmatpush1.bf16.xpose.msra.mxu0 0
  %264 = vmatprep.subr.bf16.mxu0 0
  %265 = vmatpush1.bf16.xpose.msra.mxu0 0
  %266 = vmatprep.subr.bf16.mxu0 0
  %267 = vmatpush1.bf16.xpose.msra.mxu0 0
  %268 = vmatprep.subr.bf16.mxu0 0
  %269 = vmatpush1.bf16.xpose.msra.mxu0 0
  %270 = vmatprep.subr.bf16.mxu0 0
  %271 = vmatpush1.bf16.xpose.msra.mxu0 0
  %272 = vmatprep.subr.bf16.mxu0 0
  %273 = vmatpush1.bf16.xpose.msra.mxu0 0
  %274 = vmatprep.subr.bf16.mxu0 0
  %275 = vmatpush1.bf16.xpose.msra.mxu0 0
  %276 = vmatprep.subr.bf16.mxu0 0
  %277 = vmatpush1.bf16.xpose.msra.mxu0 0
  %278 = vmatprep.mubr.bf16.mxu0 0
  %279 = vmatmul.mubr.bf16.gmra.mrb[0].mxu0 %v223
  %v280 = vpop.f32.mrb[0].mxu0
  %v281 = vadd.f32 0.0, %v280
  %v282 = vpop.f32.mrb[0].mxu0
  %v283 = vpop.f32.mrb[0].mxu0
  %v284 = vadd.f32 0.0, %v283
  %v285 = vpop.f32.mrb[0].mxu0
  %286 = vmatprep.mubr.bf16.mxu0 0
  %287 = vmatmul.mubr.bf16.gmra.mrb[0].mxu0 %v226
  %v288 = vpop.f32.mrb[0].mxu0
  %v289 = vadd.f32 0.0, %v288
  %v290 = vpop.f32.mrb[0].mxu0
  %v291 = vpop.f32.mrb[0].mxu0
  %v292 = vadd.f32 0.0, %v291
  %v293 = vpop.f32.mrb[0].mxu0
  %294 = vmatprep.mubr.bf16.mxu0 0
  %295 = vmatmul.mubr.bf16.gmra.mrb[0].mxu0 %v229
  %v296 = vpop.f32.mrb[0].mxu0
  %v297 = vadd.f32 0.0, %v296
  %v298 = vpop.f32.mrb[0].mxu0
  %v299 = vpop.f32.mrb[0].mxu0
  %v300 = vadd.f32 0.0, %v299
  %v301 = vpop.f32.mrb[0].mxu0
  %302 = vmatprep.mubr.bf16.mxu0 0
  %303 = vmatmul.mubr.bf16.gmra.mrb[0].mxu0 %v232
  %v304 = vpop.f32.mrb[0].mxu0
  %v305 = vadd.f32 0.0, %v304
  %v306 = vpop.f32.mrb[0].mxu0
  %v307 = vpop.f32.mrb[0].mxu0
  %v308 = vadd.f32 0.0, %v307
  %v309 = vpop.f32.mrb[0].mxu0
  %310 = vdwg.mxu0
  %v311 = vsel %vm99, %v281, -inf
  %312 = vmax.xlane.f32.xlu0 %v311
  %v313 = vpop.xlane.xlu0 %312
  %v314 = vsel %vm99, %v284, -inf
  %315 = vmax.xlane.f32.xlu0 %v314
  %v316 = vpop.xlane.xlu0 %315
  %v317 = vsel %vm99, %v289, -inf
  %318 = vmax.xlane.f32.xlu0 %v317
  %v319 = vpop.xlane.xlu0 %318
  %v320 = vsel %vm99, %v292, -inf
  %321 = vmax.xlane.f32.xlu0 %v320
  %v322 = vpop.xlane.xlu0 %321
  %v323 = vsel %vm99, %v297, -inf
  %324 = vmax.xlane.f32.xlu0 %v323
  %v325 = vpop.xlane.xlu0 %324
  %v326 = vsel %vm99, %v300, -inf
  %327 = vmax.xlane.f32.xlu0 %v326
  %v328 = vpop.xlane.xlu0 %327
  %v329 = vsel %vm99, %v305, -inf
  %330 = vmax.xlane.f32.xlu0 %v329
  %v331 = vpop.xlane.xlu0 %330
  %v332 = vsel %vm99, %v308, -inf
  %333 = vmax.xlane.f32.xlu0 %v332
  %v334 = vpop.xlane.xlu0 %333
  %v335 = vsub.f32 %v281, %v313
  %v336 = vsub.f32 %v284, %v316
  %v337 = vsub.f32 %v289, %v319
  %v338 = vsub.f32 %v292, %v322
  %v339 = vsub.f32 %v297, %v325
  %v340 = vsub.f32 %v300, %v328
  %v341 = vsub.f32 %v305, %v331
  %v342 = vsub.f32 %v308, %v334
  %v343 = vmul.f32 %v335, 1.442695
  %v344 = vpow.pop %v343
  %v345 = vmul.f32 %v336, 1.442695
  %v346 = vpow.pop %v345
  %v347 = vmul.f32 %v337, 1.442695
  %v348 = vpow.pop %v347
  %v349 = vmul.f32 %v338, 1.442695
  %v350 = vpow.pop %v349
  %v351 = vmul.f32 %v339, 1.442695
  %v352 = vpow.pop %v351
  %v353 = vmul.f32 %v340, 1.442695
  %v354 = vpow.pop %v353
  %v355 = vmul.f32 %v341, 1.442695
  %v356 = vpow.pop %v355
  %v357 = vmul.f32 %v342, 1.442695
  %v358 = vpow.pop %v357
  %v359 = vsel %vm99, %v344, 0.0
  %360 = vadd.xlane.f32.xlu0 %v359
  %v361 = vpop.xlane.xlu0 %360
  %v362 = vsel %vm99, %v346, 0.0
  %363 = vadd.xlane.f32.xlu0 %v362
  %v364 = vpop.xlane.xlu0 %363
  %v365 = vsel %vm99, %v348, 0.0
  %366 = vadd.xlane.f32.xlu0 %v365
  %v367 = vpop.xlane.xlu0 %366
  %v368 = vsel %vm99, %v350, 0.0
  %369 = vadd.xlane.f32.xlu0 %v368
  %v370 = vpop.xlane.xlu0 %369
  %v371 = vsel %vm99, %v352, 0.0
  %372 = vadd.xlane.f32.xlu0 %v371
  %v373 = vpop.xlane.xlu0 %372
  %v374 = vsel %vm99, %v354, 0.0
  %375 = vadd.xlane.f32.xlu0 %v374
  %v376 = vpop.xlane.xlu0 %375
  %v377 = vsel %vm99, %v356, 0.0
  %378 = vadd.xlane.f32.xlu0 %v377
  %v379 = vpop.xlane.xlu0 %378
  %v380 = vsel %vm99, %v358, 0.0
  %381 = vadd.xlane.f32.xlu0 %v380
  %v382 = vpop.xlane.xlu0 %381
  %v383 = vpack.c.bf16 %v346, %v344
  %v384 = vpack.c.bf16 %v350, %v348
  %v385 = vpack.c.bf16 %v354, %v352
  %v386 = vpack.c.bf16 %v358, %v356
  %v388 = vsel %vm99, %v383, 0
  %v391 = vsel %vm99, %v384, 0
  %v394 = vsel %vm99, %v385, 0
  %v397 = vsel %vm99, %v386, 0
  %399 = vmatprep.subr.bf16.mxu0 0
  %400 = vmatpush1.bf16.msra.mxu0 %v205
  %401 = vmatprep.subr.bf16.mxu0 0
  %402 = vmatpush1.bf16.msra.mxu0 %v206
  %403 = vmatprep.subr.bf16.mxu0 0
  %404 = vmatpush1.bf16.msra.mxu0 %v207
  %405 = vmatprep.subr.bf16.mxu0 0
  %406 = vmatpush1.bf16.msra.mxu0 %v208
  %407 = vmatprep.subr.bf16.mxu0 0
  %408 = vmatpush1.bf16.msra.mxu0 0
  %409 = vmatprep.subr.bf16.mxu0 0
  %410 = vmatpush1.bf16.msra.mxu0 0
  %411 = vmatprep.subr.bf16.mxu0 0
  %412 = vmatpush1.bf16.msra.mxu0 0
  %413 = vmatprep.subr.bf16.mxu0 0
  %414 = vmatpush1.bf16.msra.mxu0 0
  %415 = vmatprep.subr.bf16.mxu0 0
  %416 = vmatpush1.bf16.msra.mxu0 0
  %417 = vmatprep.subr.bf16.mxu0 0
  %418 = vmatpush1.bf16.msra.mxu0 0
  %419 = vmatprep.subr.bf16.mxu0 0
  %420 = vmatpush1.bf16.msra.mxu0 0
  %421 = vmatprep.subr.bf16.mxu0 0
  %422 = vmatpush1.bf16.msra.mxu0 0
  %423 = vmatprep.subr.bf16.mxu0 0
  %424 = vmatpush1.bf16.msra.mxu0 0
  %425 = vmatprep.subr.bf16.mxu0 0
  %426 = vmatpush1.bf16.msra.mxu0 0
  %427 = vmatprep.subr.bf16.mxu0 0
  %428 = vmatpush1.bf16.msra.mxu0 0
  %429 = vmatprep.subr.bf16.mxu0 0
  %430 = vmatpush1.bf16.msra.mxu0 0
  %431 = vmatprep.mubr.bf16.mxu0 0
  %432 = vmatmul.mubr.bf16.gmra.mrb[0].mxu0 %v388
  %v433 = vpop.f32.mrb[0].mxu0
  %v434 = vadd.f32 0.0, %v433
  %v435 = vpop.f32.mrb[0].mxu0
  %v436 = vpop.f32.mrb[0].mxu0
  %v437 = vadd.f32 0.0, %v436
  %v438 = vpop.f32.mrb[0].mxu0
  %439 = vmatprep.mubr.bf16.mxu0 0
  %440 = vmatmul.mubr.bf16.gmra.mrb[0].mxu0 %v391
  %v441 = vpop.f32.mrb[0].mxu0
  %v442 = vadd.f32 0.0, %v441
  %v443 = vpop.f32.mrb[0].mxu0
  %v444 = vpop.f32.mrb[0].mxu0
  %v445 = vadd.f32 0.0, %v444
  %v446 = vpop.f32.mrb[0].mxu0
  %447 = vmatprep.mubr.bf16.mxu0 0
  %448 = vmatmul.mubr.bf16.gmra.mrb[0].mxu0 %v394
  %v449 = vpop.f32.mrb[0].mxu0
  %v450 = vadd.f32 0.0, %v449
  %v451 = vpop.f32.mrb[0].mxu0
  %v452 = vpop.f32.mrb[0].mxu0
  %v453 = vadd.f32 0.0, %v452
  %v454 = vpop.f32.mrb[0].mxu0
  %455 = vmatprep.mubr.bf16.mxu0 0
  %456 = vmatmul.mubr.bf16.gmra.mrb[0].mxu0 %v397
  %v457 = vpop.f32.mrb[0].mxu0
  %v458 = vadd.f32 0.0, %v457
  %v459 = vpop.f32.mrb[0].mxu0
  %v460 = vpop.f32.mrb[0].mxu0
  %v461 = vadd.f32 0.0, %v460
  %v462 = vpop.f32.mrb[0].mxu0
  %463 = vdwg.mxu0
  %v464 = vrcp.pop %v361
  %v465 = vrcp.pop %v364
  %v466 = vrcp.pop %v367
  %v467 = vrcp.pop %v370
  %v468 = vrcp.pop %v373
  %v469 = vrcp.pop %v376
  %v470 = vrcp.pop %v379
  %v471 = vrcp.pop %v382
  %v472 = vmul.f32 %v434, %v464
  %v473 = vmul.f32 %v437, %v465
  %v474 = vmul.f32 %v442, %v466
  %v475 = vmul.f32 %v445, %v467
  %v476 = vmul.f32 %v450, %v468
  %v477 = vmul.f32 %v453, %v469
  %v478 = vmul.f32 %v458, %v470
  %v479 = vmul.f32 %v461, %v471
  %v480 = vpack.c.bf16 %v473, %v472
  %v481 = vpack.c.bf16 %v475, %v474
  %v482 = vpack.c.bf16 %v477, %v476
  %v483 = vpack.c.bf16 %v479, %v478
  %484 = vst.msk [vmem:[#allocation3] sm:$0xff] %vm221, %v480
  %485 = vst.msk [vmem:[#allocation3 + $0x8] sm:$0xff] %vm221, %v481
  %486 = vst.msk [vmem:[#allocation3 + $0x10] sm:$0xff] %vm221, %v482
  %487 = vst.msk [vmem:[#allocation3 + $0x18] sm:$0xff] %vm221, %v483
  %v488 = vld [vmem:[#allocation2] sm:$0xff]
  %v489 = vld [vmem:[#allocation2 + $0x10] sm:$0xff]
  %v490 = vld [vmem:[#allocation2 + $0x20] sm:$0xff]
  %v491 = vld [vmem:[#allocation2 + $0x30] sm:$0xff]
  %v492 = vld [vmem:[#allocation2 + $0x8] sm:$0xff]
  %v493 = vld [vmem:[#allocation2 + $0x18] sm:$0xff]
  %v494 = vld [vmem:[#allocation2 + $0x28] sm:$0xff]
  %v495 = vld [vmem:[#allocation2 + $0x38] sm:$0xff]
  %500 = vrot.lane.b32.xlu0 %v488, 112
  %v501 = vpop.permute.xlu0 %500
  %502 = vrot.lane.b32.xlu0 %v489, 112
  %v503 = vpop.permute.xlu0 %502
  %504 = vrot.lane.b32.xlu0 %v490, 112
  %v505 = vpop.permute.xlu0 %504
  %506 = vrot.lane.b32.xlu0 %v491, 112
  %v507 = vpop.permute.xlu0 %506
  %508 = vrot.lane.b32.xlu0 %v488, 48
  %v509 = vpop.permute.xlu0 %508
  %510 = vrot.lane.b32.xlu0 %v489, 48
  %v511 = vpop.permute.xlu0 %510
  %512 = vrot.lane.b32.xlu0 %v490, 48
  %v513 = vpop.permute.xlu0 %512
  %514 = vrot.lane.b32.xlu0 %v491, 48
  %v515 = vpop.permute.xlu0 %514
  %v517 = vsel %vm221, %v501, 0
  %v520 = vsel %vm221, %v503, 0
  %v523 = vsel %vm221, %v505, 0
  %v526 = vsel %vm221, %v507, 0
  %v529 = vsel %vm221, %v509, 0
  %v532 = vsel %vm221, %v511, 0
  %v535 = vsel %vm221, %v513, 0
  %v538 = vsel %vm221, %v515, 0
  %540 = vmatprep.subr.bf16.mxu0 0
  %541 = vmatpush1.bf16.xpose.msra.mxu0 %v529
  %542 = vmatprep.subr.bf16.mxu0 0
  %543 = vmatpush1.bf16.xpose.msra.mxu0 %v532
  %544 = vmatprep.subr.bf16.mxu0 0
  %545 = vmatpush1.bf16.xpose.msra.mxu0 %v535
  %546 = vmatprep.subr.bf16.mxu0 0
  %547 = vmatpush1.bf16.xpose.msra.mxu0 %v538
  %548 = vmatprep.subr.bf16.mxu0 0
  %549 = vmatpush1.bf16.xpose.msra.mxu0 0
  %550 = vmatprep.subr.bf16.mxu0 0
  %551 = vmatpush1.bf16.xpose.msra.mxu0 0
  %552 = vmatprep.subr.bf16.mxu0 0
  %553 = vmatpush1.bf16.xpose.msra.mxu0 0
  %554 = vmatprep.subr.bf16.mxu0 0
  %555 = vmatpush1.bf16.xpose.msra.mxu0 0
  %556 = vmatprep.subr.bf16.mxu0 0
  %557 = vmatpush1.bf16.xpose.msra.mxu0 0
  %558 = vmatprep.subr.bf16.mxu0 0
  %559 = vmatpush1.bf16.xpose.msra.mxu0 0
  %560 = vmatprep.subr.bf16.mxu0 0
  %561 = vmatpush1.bf16.xpose.msra.mxu0 0
  %562 = vmatprep.subr.bf16.mxu0 0
  %563 = vmatpush1.bf16.xpose.msra.mxu0 0
  %564 = vmatprep.subr.bf16.mxu0 0
  %565 = vmatpush1.bf16.xpose.msra.mxu0 0
  %566 = vmatprep.subr.bf16.mxu0 0
  %567 = vmatpush1.bf16.xpose.msra.mxu0 0
  %568 = vmatprep.subr.bf16.mxu0 0
  %569 = vmatpush1.bf16.xpose.msra.mxu0 0
  %570 = vmatprep.subr.bf16.mxu0 0
  %571 = vmatpush1.bf16.xpose.msra.mxu0 0
  %572 = vmatprep.mubr.bf16.mxu0 0
  %573 = vmatmul.mubr.bf16.gmra.mrb[0].mxu0 %v517
  %v574 = vpop.f32.mrb[0].mxu0
  %v575 = vadd.f32 0.0, %v574
  %v576 = vpop.f32.mrb[0].mxu0
  %v577 = vpop.f32.mrb[0].mxu0
  %v578 = vadd.f32 0.0, %v577
  %v579 = vpop.f32.mrb[0].mxu0
  %580 = vmatprep.mubr.bf16.mxu0 0
  %581 = vmatmul.mubr.bf16.gmra.mrb[0].mxu0 %v520
  %v582 = vpop.f32.mrb[0].mxu0
  %v583 = vadd.f32 0.0, %v582
  %v584 = vpop.f32.mrb[0].mxu0
  %v585 = vpop.f32.mrb[0].mxu0
  %v586 = vadd.f32 0.0, %v585
  %v587 = vpop.f32.mrb[0].mxu0
  %588 = vmatprep.mubr.bf16.mxu0 0
  %589 = vmatmul.mubr.bf16.gmra.mrb[0].mxu0 %v523
  %v590 = vpop.f32.mrb[0].mxu0
  %v591 = vadd.f32 0.0, %v590
  %v592 = vpop.f32.mrb[0].mxu0
  %v593 = vpop.f32.mrb[0].mxu0
  %v594 = vadd.f32 0.0, %v593
  %v595 = vpop.f32.mrb[0].mxu0
  %596 = vmatprep.mubr.bf16.mxu0 0
  %597 = vmatmul.mubr.bf16.gmra.mrb[0].mxu0 %v526
  %v598 = vpop.f32.mrb[0].mxu0
  %v599 = vadd.f32 0.0, %v598
  %v600 = vpop.f32.mrb[0].mxu0
  %v601 = vpop.f32.mrb[0].mxu0
  %v602 = vadd.f32 0.0, %v601
  %v603 = vpop.f32.mrb[0].mxu0
  %604 = vdwg.mxu0
  %v605 = vsel %vm99, %v575, -inf
  %606 = vmax.xlane.f32.xlu0 %v605
  %v607 = vpop.xlane.xlu0 %606
  %v608 = vsel %vm99, %v578, -inf
  %609 = vmax.xlane.f32.xlu0 %v608
  %v610 = vpop.xlane.xlu0 %609
  %v611 = vsel %vm99, %v583, -inf
  %612 = vmax.xlane.f32.xlu0 %v611
  %v613 = vpop.xlane.xlu0 %612
  %v614 = vsel %vm99, %v586, -inf
  %615 = vmax.xlane.f32.xlu0 %v614
  %v616 = vpop.xlane.xlu0 %615
  %v617 = vsel %vm99, %v591, -inf
  %618 = vmax.xlane.f32.xlu0 %v617
  %v619 = vpop.xlane.xlu0 %618
  %v620 = vsel %vm99, %v594, -inf
  %621 = vmax.xlane.f32.xlu0 %v620
  %v622 = vpop.xlane.xlu0 %621
  %v623 = vsel %vm99, %v599, -inf
  %624 = vmax.xlane.f32.xlu0 %v623
  %v625 = vpop.xlane.xlu0 %624
  %v626 = vsel %vm99, %v602, -inf
  %627 = vmax.xlane.f32.xlu0 %v626
  %v628 = vpop.xlane.xlu0 %627
  %v629 = vsub.f32 %v575, %v607
  %v630 = vsub.f32 %v578, %v610
  %v631 = vsub.f32 %v583, %v613
  %v632 = vsub.f32 %v586, %v616
  %v633 = vsub.f32 %v591, %v619
  %v634 = vsub.f32 %v594, %v622
  %v635 = vsub.f32 %v599, %v625
  %v636 = vsub.f32 %v602, %v628
  %v637 = vmul.f32 %v629, 1.442695
  %v638 = vpow.pop %v637
  %v639 = vmul.f32 %v630, 1.442695
  %v640 = vpow.pop %v639
  %v641 = vmul.f32 %v631, 1.442695
  %v642 = vpow.pop %v641
  %v643 = vmul.f32 %v632, 1.442695
  %v644 = vpow.pop %v643
  %v645 = vmul.f32 %v633, 1.442695
  %v646 = vpow.pop %v645
  %v647 = vmul.f32 %v634, 1.442695
  %v648 = vpow.pop %v647
  %v649 = vmul.f32 %v635, 1.442695
  %v650 = vpow.pop %v649
  %v651 = vmul.f32 %v636, 1.442695
  %v652 = vpow.pop %v651
  %v653 = vsel %vm99, %v638, 0.0
  %654 = vadd.xlane.f32.xlu0 %v653
  %v655 = vpop.xlane.xlu0 %654
  %v656 = vsel %vm99, %v640, 0.0
  %657 = vadd.xlane.f32.xlu0 %v656
  %v658 = vpop.xlane.xlu0 %657
  %v659 = vsel %vm99, %v642, 0.0
  %660 = vadd.xlane.f32.xlu0 %v659
  %v661 = vpop.xlane.xlu0 %660
  %v662 = vsel %vm99, %v644, 0.0
  %663 = vadd.xlane.f32.xlu0 %v662
  %v664 = vpop.xlane.xlu0 %663
  %v665 = vsel %vm99, %v646, 0.0
  %666 = vadd.xlane.f32.xlu0 %v665
  %v667 = vpop.xlane.xlu0 %666
  %v668 = vsel %vm99, %v648, 0.0
  %669 = vadd.xlane.f32.xlu0 %v668
  %v670 = vpop.xlane.xlu0 %669
  %v671 = vsel %vm99, %v650, 0.0
  %672 = vadd.xlane.f32.xlu0 %v671
  %v673 = vpop.xlane.xlu0 %672
  %v674 = vsel %vm99, %v652, 0.0
  %675 = vadd.xlane.f32.xlu0 %v674
  %v676 = vpop.xlane.xlu0 %675
  %v677 = vpack.c.bf16 %v640, %v638
  %v678 = vpack.c.bf16 %v644, %v642
  %v679 = vpack.c.bf16 %v648, %v646
  %v680 = vpack.c.bf16 %v652, %v650
  %685 = vrot.lane.b32.xlu0 %v492, 112
  %v686 = vpop.permute.xlu0 %685
  %687 = vrot.lane.b32.xlu0 %v493, 112
  %v688 = vpop.permute.xlu0 %687
  %689 = vrot.lane.b32.xlu0 %v494, 112
  %v690 = vpop.permute.xlu0 %689
  %691 = vrot.lane.b32.xlu0 %v495, 112
  %v692 = vpop.permute.xlu0 %691
  %v698 = vsel %vm99, %v677, 0
  %v701 = vsel %vm99, %v678, 0
  %v704 = vsel %vm99, %v679, 0
  %v707 = vsel %vm99, %v680, 0
  %709 = vmatprep.subr.bf16.mxu0 0
  %710 = vmatpush1.bf16.msra.mxu0 %v686
  %711 = vmatprep.subr.bf16.mxu0 0
  %712 = vmatpush1.bf16.msra.mxu0 %v688
  %713 = vmatprep.subr.bf16.mxu0 0
  %714 = vmatpush1.bf16.msra.mxu0 %v690
  %715 = vmatprep.subr.bf16.mxu0 0
  %716 = vmatpush1.bf16.msra.mxu0 %v692
  %717 = vmatprep.subr.bf16.mxu0 0
  %718 = vmatpush1.bf16.msra.mxu0 0
  %719 = vmatprep.subr.bf16.mxu0 0
  %720 = vmatpush1.bf16.msra.mxu0 0
  %721 = vmatprep.subr.bf16.mxu0 0
  %722 = vmatpush1.bf16.msra.mxu0 0
  %723 = vmatprep.subr.bf16.mxu0 0
  %724 = vmatpush1.bf16.msra.mxu0 0
  %725 = vmatprep.subr.bf16.mxu0 0
  %726 = vmatpush1.bf16.msra.mxu0 0
  %727 = vmatprep.subr.bf16.mxu0 0
  %728 = vmatpush1.bf16.msra.mxu0 0
  %729 = vmatprep.subr.bf16.mxu0 0
  %730 = vmatpush1.bf16.msra.mxu0 0
  %731 = vmatprep.subr.bf16.mxu0 0
  %732 = vmatpush1.bf16.msra.mxu0 0
  %733 = vmatprep.subr.bf16.mxu0 0
  %734 = vmatpush1.bf16.msra.mxu0 0
  %735 = vmatprep.subr.bf16.mxu0 0
  %736 = vmatpush1.bf16.msra.mxu0 0
  %737 = vmatprep.subr.bf16.mxu0 0
  %738 = vmatpush1.bf16.msra.mxu0 0
  %739 = vmatprep.subr.bf16.mxu0 0
  %740 = vmatpush1.bf16.msra.mxu0 0
  %741 = vmatprep.mubr.bf16.mxu0 0
  %742 = vmatmul.mubr.bf16.gmra.mrb[0].mxu0 %v698
  %v743 = vpop.f32.mrb[0].mxu0
  %v744 = vadd.f32 0.0, %v743
  %v745 = vpop.f32.mrb[0].mxu0
  %v746 = vpop.f32.mrb[0].mxu0
  %v747 = vadd.f32 0.0, %v746
  %v748 = vpop.f32.mrb[0].mxu0
  %749 = vmatprep.mubr.bf16.mxu0 0
  %750 = vmatmul.mubr.bf16.gmra.mrb[0].mxu0 %v701
  %v751 = vpop.f32.mrb[0].mxu0
  %v752 = vadd.f32 0.0, %v751
  %v753 = vpop.f32.mrb[0].mxu0
  %v754 = vpop.f32.mrb[0].mxu0
  %v755 = vadd.f32 0.0, %v754
  %v756 = vpop.f32.mrb[0].mxu0
  %757 = vmatprep.mubr.bf16.mxu0 0
  %758 = vmatmul.mubr.bf16.gmra.mrb[0].mxu0 %v704
  %v759 = vpop.f32.mrb[0].mxu0
  %v760 = vadd.f32 0.0, %v759
  %v761 = vpop.f32.mrb[0].mxu0
  %v762 = vpop.f32.mrb[0].mxu0
  %v763 = vadd.f32 0.0, %v762
  %v764 = vpop.f32.mrb[0].mxu0
  %765 = vmatprep.mubr.bf16.mxu0 0
  %766 = vmatmul.mubr.bf16.gmra.mrb[0].mxu0 %v707
  %v767 = vpop.f32.mrb[0].mxu0
  %v768 = vadd.f32 0.0, %v767
  %v769 = vpop.f32.mrb[0].mxu0
  %v770 = vpop.f32.mrb[0].mxu0
  %v771 = vadd.f32 0.0, %v770
  %v772 = vpop.f32.mrb[0].mxu0
  %773 = vdwg.mxu0
  %v774 = vrcp.pop %v655
  %v775 = vrcp.pop %v658
  %v776 = vrcp.pop %v661
  %v777 = vrcp.pop %v664
  %v778 = vrcp.pop %v667
  %v779 = vrcp.pop %v670
  %v780 = vrcp.pop %v673
  %v781 = vrcp.pop %v676
  %v782 = vmul.f32 %v744, %v774
  %v783 = vmul.f32 %v747, %v775
  %v784 = vmul.f32 %v752, %v776
  %v785 = vmul.f32 %v755, %v777
  %v786 = vmul.f32 %v760, %v778
  %v787 = vmul.f32 %v763, %v779
  %v788 = vmul.f32 %v768, %v780
  %v789 = vmul.f32 %v771, %v781
  %v790 = vpack.c.bf16 %v783, %v782
  %v791 = vpack.c.bf16 %v785, %v784
  %v792 = vpack.c.bf16 %v787, %v786
  %v793 = vpack.c.bf16 %v789, %v788
  %798 = vrot.lane.b32.xlu0 %v790, 16
  %v799 = vpop.permute.xlu0 %798
  %800 = vrot.lane.b32.xlu0 %v791, 16
  %v801 = vpop.permute.xlu0 %800
  %802 = vrot.lane.b32.xlu0 %v792, 16
  %v803 = vpop.permute.xlu0 %802
  %804 = vrot.lane.b32.xlu0 %v793, 16
  %v805 = vpop.permute.xlu0 %804
  %vm810 = vcmask 261248
  %811 = vst.msk [vmem:[#allocation3] sm:$0xff] %vm810, %v799
  %812 = vst.msk [vmem:[#allocation3 + $0x8] sm:$0xff] %vm810, %v801
  %813 = vst.msk [vmem:[#allocation3 + $0x10] sm:$0xff] %vm810, %v803
  %814 = vst.msk [vmem:[#allocation3 + $0x18] sm:$0xff] %vm810, %v805
  %v815 = vld [vmem:[#allocation2] sm:$0xff]
  %v816 = vld [vmem:[#allocation2 + $0x10] sm:$0xff]
  %v817 = vld [vmem:[#allocation2 + $0x20] sm:$0xff]
  %v818 = vld [vmem:[#allocation2 + $0x30] sm:$0xff]
  %v819 = vld [vmem:[#allocation2 + $0x8] sm:$0xff]
  %v820 = vld [vmem:[#allocation2 + $0x18] sm:$0xff]
  %v821 = vld [vmem:[#allocation2 + $0x28] sm:$0xff]
  %v822 = vld [vmem:[#allocation2 + $0x38] sm:$0xff]
  %827 = vrot.lane.b32.xlu0 %v815, 96
  %v828 = vpop.permute.xlu0 %827
  %829 = vrot.lane.b32.xlu0 %v816, 96
  %v830 = vpop.permute.xlu0 %829
  %831 = vrot.lane.b32.xlu0 %v817, 96
  %v832 = vpop.permute.xlu0 %831
  %833 = vrot.lane.b32.xlu0 %v818, 96
  %v834 = vpop.permute.xlu0 %833
  %835 = vrot.lane.b32.xlu0 %v815, 32
  %v836 = vpop.permute.xlu0 %835
  %837 = vrot.lane.b32.xlu0 %v816, 32
  %v838 = vpop.permute.xlu0 %837
  %839 = vrot.lane.b32.xlu0 %v817, 32
  %v840 = vpop.permute.xlu0 %839
  %841 = vrot.lane.b32.xlu0 %v818, 32
  %v842 = vpop.permute.xlu0 %841
  %v844 = vsel %vm221, %v828, 0
  %v847 = vsel %vm221, %v830, 0
  %v850 = vsel %vm221, %v832, 0
  %v853 = vsel %vm221, %v834, 0
  %v856 = vsel %vm221, %v836, 0
  %v859 = vsel %vm221, %v838, 0
  %v862 = vsel %vm221, %v840, 0
  %v865 = vsel %vm221, %v842, 0
  %867 = vmatprep.subr.bf16.mxu0 0
  %868 = vmatpush1.bf16.xpose.msra.mxu0 %v856
  %869 = vmatprep.subr.bf16.mxu0 0
  %870 = vmatpush1.bf16.xpose.msra.mxu0 %v859
  %871 = vmatprep.subr.bf16.mxu0 0
  %872 = vmatpush1.bf16.xpose.msra.mxu0 %v862
  %873 = vmatprep.subr.bf16.mxu0 0
  %874 = vmatpush1.bf16.xpose.msra.mxu0 %v865
  %875 = vmatprep.subr.bf16.mxu0 0
  %876 = vmatpush1.bf16.xpose.msra.mxu0 0
  %877 = vmatprep.subr.bf16.mxu0 0
  %878 = vmatpush1.bf16.xpose.msra.mxu0 0
  %879 = vmatprep.subr.bf16.mxu0 0
  %880 = vmatpush1.bf16.xpose.msra.mxu0 0
  %881 = vmatprep.subr.bf16.mxu0 0
  %882 = vmatpush1.bf16.xpose.msra.mxu0 0
  %883 = vmatprep.subr.bf16.mxu0 0
  %884 = vmatpush1.bf16.xpose.msra.mxu0 0
  %885 = vmatprep.subr.bf16.mxu0 0
  %886 = vmatpush1.bf16.xpose.msra.mxu0 0
  %887 = vmatprep.subr.bf16.mxu0 0
  %888 = vmatpush1.bf16.xpose.msra.mxu0 0
  %889 = vmatprep.subr.bf16.mxu0 0
  %890 = vmatpush1.bf16.xpose.msra.mxu0 0
  %891 = vmatprep.subr.bf16.mxu0 0
  %892 = vmatpush1.bf16.xpose.msra.mxu0 0
  %893 = vmatprep.subr.bf16.mxu0 0
  %894 = vmatpush1.bf16.xpose.msra.mxu0 0
  %895 = vmatprep.subr.bf16.mxu0 0
  %896 = vmatpush1.bf16.xpose.msra.mxu0 0
  %897 = vmatprep.subr.bf16.mxu0 0
  %898 = vmatpush1.bf16.xpose.msra.mxu0 0
  %899 = vmatprep.mubr.bf16.mxu0 0
  %900 = vmatmul.mubr.bf16.gmra.mrb[0].mxu0 %v844
  %v901 = vpop.f32.mrb[0].mxu0
  %v902 = vadd.f32 0.0, %v901
  %v903 = vpop.f32.mrb[0].mxu0
  %v904 = vpop.f32.mrb[0].mxu0
  %v905 = vadd.f32 0.0, %v904
  %v906 = vpop.f32.mrb[0].mxu0
  %907 = vmatprep.mubr.bf16.mxu0 0
  %908 = vmatmul.mubr.bf16.gmra.mrb[0].mxu0 %v847
  %v909 = vpop.f32.mrb[0].mxu0
  %v910 = vadd.f32 0.0, %v909
  %v911 = vpop.f32.mrb[0].mxu0
  %v912 = vpop.f32.mrb[0].mxu0
  %v913 = vadd.f32 0.0, %v912
  %v914 = vpop.f32.mrb[0].mxu0
  %915 = vmatprep.mubr.bf16.mxu0 0
  %916 = vmatmul.mubr.bf16.gmra.mrb[0].mxu0 %v850
  %v917 = vpop.f32.mrb[0].mxu0
  %v918 = vadd.f32 0.0, %v917
  %v919 = vpop.f32.mrb[0].mxu0
  %v920 = vpop.f32.mrb[0].mxu0
  %v921 = vadd.f32 0.0, %v920
  %v922 = vpop.f32.mrb[0].mxu0
  %923 = vmatprep.mubr.bf16.mxu0 0
  %924 = vmatmul.mubr.bf16.gmra.mrb[0].mxu0 %v853
  %v925 = vpop.f32.mrb[0].mxu0
  %v926 = vadd.f32 0.0, %v925
  %v927 = vpop.f32.mrb[0].mxu0
  %v928 = vpop.f32.mrb[0].mxu0
  %v929 = vadd.f32 0.0, %v928
  %v930 = vpop.f32.mrb[0].mxu0
  %931 = vdwg.mxu0
  %v932 = vsel %vm99, %v902, -inf
  %933 = vmax.xlane.f32.xlu0 %v932
  %v934 = vpop.xlane.xlu0 %933
  %v935 = vsel %vm99, %v905, -inf
  %936 = vmax.xlane.f32.xlu0 %v935
  %v937 = vpop.xlane.xlu0 %936
  %v938 = vsel %vm99, %v910, -inf
  %939 = vmax.xlane.f32.xlu0 %v938
  %v940 = vpop.xlane.xlu0 %939
  %v941 = vsel %vm99, %v913, -inf
  %942 = vmax.xlane.f32.xlu0 %v941
  %v943 = vpop.xlane.xlu0 %942
  %v944 = vsel %vm99, %v918, -inf
  %945 = vmax.xlane.f32.xlu0 %v944
  %v946 = vpop.xlane.xlu0 %945
  %v947 = vsel %vm99, %v921, -inf
  %948 = vmax.xlane.f32.xlu0 %v947
  %v949 = vpop.xlane.xlu0 %948
  %v950 = vsel %vm99, %v926, -inf
  %951 = vmax.xlane.f32.xlu0 %v950
  %v952 = vpop.xlane.xlu0 %951
  %v953 = vsel %vm99, %v929, -inf
  %954 = vmax.xlane.f32.xlu0 %v953
  %v955 = vpop.xlane.xlu0 %954
  %v956 = vsub.f32 %v902, %v934
  %v957 = vsub.f32 %v905, %v937
  %v958 = vsub.f32 %v910, %v940
  %v959 = vsub.f32 %v913, %v943
  %v960 = vsub.f32 %v918, %v946
  %v961 = vsub.f32 %v921, %v949
  %v962 = vsub.f32 %v926, %v952
  %v963 = vsub.f32 %v929, %v955
  %v964 = vmul.f32 %v956, 1.442695
  %v965 = vpow.pop %v964
  %v966 = vmul.f32 %v957, 1.442695
  %v967 = vpow.pop %v966
  %v968 = vmul.f32 %v958, 1.442695
  %v969 = vpow.pop %v968
  %v970 = vmul.f32 %v959, 1.442695
  %v971 = vpow.pop %v970
  %v972 = vmul.f32 %v960, 1.442695
  %v973 = vpow.pop %v972
  %v974 = vmul.f32 %v961, 1.442695
  %v975 = vpow.pop %v974
  %v976 = vmul.f32 %v962, 1.442695
  %v977 = vpow.pop %v976
  %v978 = vmul.f32 %v963, 1.442695
  %v979 = vpow.pop %v978
  %v980 = vsel %vm99, %v965, 0.0
  %981 = vadd.xlane.f32.xlu0 %v980
  %v982 = vpop.xlane.xlu0 %981
  %v983 = vsel %vm99, %v967, 0.0
  %984 = vadd.xlane.f32.xlu0 %v983
  %v985 = vpop.xlane.xlu0 %984
  %v986 = vsel %vm99, %v969, 0.0
  %987 = vadd.xlane.f32.xlu0 %v986
  %v988 = vpop.xlane.xlu0 %987
  %v989 = vsel %vm99, %v971, 0.0
  %990 = vadd.xlane.f32.xlu0 %v989
  %v991 = vpop.xlane.xlu0 %990
  %v992 = vsel %vm99, %v973, 0.0
  %993 = vadd.xlane.f32.xlu0 %v992
  %v994 = vpop.xlane.xlu0 %993
  %v995 = vsel %vm99, %v975, 0.0
  %996 = vadd.xlane.f32.xlu0 %v995
  %v997 = vpop.xlane.xlu0 %996
  %v998 = vsel %vm99, %v977, 0.0
  %999 = vadd.xlane.f32.xlu0 %v998
  %v1000 = vpop.xlane.xlu0 %999
  %v1001 = vsel %vm99, %v979, 0.0
  %1002 = vadd.xlane.f32.xlu0 %v1001
  %v1003 = vpop.xlane.xlu0 %1002
  %v1004 = vpack.c.bf16 %v967, %v965
  %v1005 = vpack.c.bf16 %v971, %v969
  %v1006 = vpack.c.bf16 %v975, %v973
  %v1007 = vpack.c.bf16 %v979, %v977
  %1012 = vrot.lane.b32.xlu0 %v819, 96
  %v1013 = vpop.permute.xlu0 %1012
  %1014 = vrot.lane.b32.xlu0 %v820, 96
  %v1015 = vpop.permute.xlu0 %1014
  %1016 = vrot.lane.b32.xlu0 %v821, 96
  %v1017 = vpop.permute.xlu0 %1016
  %1018 = vrot.lane.b32.xlu0 %v822, 96
  %v1019 = vpop.permute.xlu0 %1018
  %v1025 = vsel %vm99, %v1004, 0
  %v1028 = vsel %vm99, %v1005, 0
  %v1031 = vsel %vm99, %v1006, 0
  %v1034 = vsel %vm99, %v1007, 0
  %1036 = vmatprep.subr.bf16.mxu0 0
  %1037 = vmatpush1.bf16.msra.mxu0 %v1013
  %1038 = vmatprep.subr.bf16.mxu0 0
  %1039 = vmatpush1.bf16.msra.mxu0 %v1015
  %1040 = vmatprep.subr.bf16.mxu0 0
  %1041 = vmatpush1.bf16.msra.mxu0 %v1017
  %1042 = vmatprep.subr.bf16.mxu0 0
  %1043 = vmatpush1.bf16.msra.mxu0 %v1019
  %1044 = vmatprep.subr.bf16.mxu0 0
  %1045 = vmatpush1.bf16.msra.mxu0 0
  %1046 = vmatprep.subr.bf16.mxu0 0
  %1047 = vmatpush1.bf16.msra.mxu0 0
  %1048 = vmatprep.subr.bf16.mxu0 0
  %1049 = vmatpush1.bf16.msra.mxu0 0
  %1050 = vmatprep.subr.bf16.mxu0 0
  %1051 = vmatpush1.bf16.msra.mxu0 0
  %1052 = vmatprep.subr.bf16.mxu0 0
  %1053 = vmatpush1.bf16.msra.mxu0 0
  %1054 = vmatprep.subr.bf16.mxu0 0
  %1055 = vmatpush1.bf16.msra.mxu0 0
  %1056 = vmatprep.subr.bf16.mxu0 0
  %1057 = vmatpush1.bf16.msra.mxu0 0
  %1058 = vmatprep.subr.bf16.mxu0 0
  %1059 = vmatpush1.bf16.msra.mxu0 0
  %1060 = vmatprep.subr.bf16.mxu0 0
  %1061 = vmatpush1.bf16.msra.mxu0 0
  %1062 = vmatprep.subr.bf16.mxu0 0
  %1063 = vmatpush1.bf16.msra.mxu0 0
  %1064 = vmatprep.subr.bf16.mxu0 0
  %1065 = vmatpush1.bf16.msra.mxu0 0
  %1066 = vmatprep.subr.bf16.mxu0 0
  %1067 = vmatpush1.bf16.msra.mxu0 0
  %1068 = vmatprep.mubr.bf16.mxu0 0
  %1069 = vmatmul.mubr.bf16.gmra.mrb[0].mxu0 %v1025
  %v1070 = vpop.f32.mrb[0].mxu0
  %v1071 = vadd.f32 0.0, %v1070
  %v1072 = vpop.f32.mrb[0].mxu0
  %v1073 = vpop.f32.mrb[0].mxu0
  %v1074 = vadd.f32 0.0, %v1073
  %v1075 = vpop.f32.mrb[0].mxu0
  %1076 = vmatprep.mubr.bf16.mxu0 0
  %1077 = vmatmul.mubr.bf16.gmra.mrb[0].mxu0 %v1028
  %v1078 = vpop.f32.mrb[0].mxu0
  %v1079 = vadd.f32 0.0, %v1078
  %v1080 = vpop.f32.mrb[0].mxu0
  %v1081 = vpop.f32.mrb[0].mxu0
  %v1082 = vadd.f32 0.0, %v1081
  %v1083 = vpop.f32.mrb[0].mxu0
  %1084 = vmatprep.mubr.bf16.mxu0 0
  %1085 = vmatmul.mubr.bf16.gmra.mrb[0].mxu0 %v1031
  %v1086 = vpop.f32.mrb[0].mxu0
  %v1087 = vadd.f32 0.0, %v1086
  %v1088 = vpop.f32.mrb[0].mxu0
  %v1089 = vpop.f32.mrb[0].mxu0
  %v1090 = vadd.f32 0.0, %v1089
  %v1091 = vpop.f32.mrb[0].mxu0
  %1092 = vmatprep.mubr.bf16.mxu0 0
  %1093 = vmatmul.mubr.bf16.gmra.mrb[0].mxu0 %v1034
  %v1094 = vpop.f32.mrb[0].mxu0
  %v1095 = vadd.f32 0.0, %v1094
  %v1096 = vpop.f32.mrb[0].mxu0
  %v1097 = vpop.f32.mrb[0].mxu0
  %v1098 = vadd.f32 0.0, %v1097
  %v1099 = vpop.f32.mrb[0].mxu0
  %1100 = vdwg.mxu0
  %v1101 = vrcp.pop %v982
  %v1102 = vrcp.pop %v985
  %v1103 = vrcp.pop %v988
  %v1104 = vrcp.pop %v991
  %v1105 = vrcp.pop %v994
  %v1106 = vrcp.pop %v997
  %v1107 = vrcp.pop %v1000
  %v1108 = vrcp.pop %v1003
  %v1109 = vmul.f32 %v1071, %v1101
  %v1110 = vmul.f32 %v1074, %v1102
  %v1111 = vmul.f32 %v1079, %v1103
  %v1112 = vmul.f32 %v1082, %v1104
  %v1113 = vmul.f32 %v1087, %v1105
  %v1114 = vmul.f32 %v1090, %v1106
  %v1115 = vmul.f32 %v1095, %v1107
  %v1116 = vmul.f32 %v1098, %v1108
  %v1117 = vpack.c.bf16 %v1110, %v1109
  %v1118 = vpack.c.bf16 %v1112, %v1111
  %v1119 = vpack.c.bf16 %v1114, %v1113
  %v1120 = vpack.c.bf16 %v1116, %v1115
  %1125 = vrot.lane.b32.xlu0 %v1117, 32
  %v1126 = vpop.permute.xlu0 %1125
  %1127 = vrot.lane.b32.xlu0 %v1118, 32
  %v1128 = vpop.permute.xlu0 %1127
  %1129 = vrot.lane.b32.xlu0 %v1119, 32
  %v1130 = vpop.permute.xlu0 %1129
  %1131 = vrot.lane.b32.xlu0 %v1120, 32
  %v1132 = vpop.permute.xlu0 %1131
  %vm1137 = vcmask 392448
  %1138 = vst.msk [vmem:[#allocation3] sm:$0xff] %vm1137, %v1126
  %1139 = vst.msk [vmem:[#allocation3 + $0x8] sm:$0xff] %vm1137, %v1128
  %1140 = vst.msk [vmem:[#allocation3 + $0x10] sm:$0xff] %vm1137, %v1130
  %1141 = vst.msk [vmem:[#allocation3 + $0x18] sm:$0xff] %vm1137, %v1132
  %v1142 = vld [vmem:[#allocation2] sm:$0xff]
  %v1143 = vld [vmem:[#allocation2 + $0x10] sm:$0xff]
  %v1144 = vld [vmem:[#allocation2 + $0x20] sm:$0xff]
  %v1145 = vld [vmem:[#allocation2 + $0x30] sm:$0xff]
  %v1146 = vld [vmem:[#allocation2 + $0x8] sm:$0xff]
  %v1147 = vld [vmem:[#allocation2 + $0x18] sm:$0xff]
  %v1148 = vld [vmem:[#allocation2 + $0x28] sm:$0xff]
  %v1149 = vld [vmem:[#allocation2 + $0x38] sm:$0xff]
  %1154 = vrot.lane.b32.xlu0 %v1142, 80
  %v1155 = vpop.permute.xlu0 %1154
  %1156 = vrot.lane.b32.xlu0 %v1143, 80
  %v1157 = vpop.permute.xlu0 %1156
  %1158 = vrot.lane.b32.xlu0 %v1144, 80
  %v1159 = vpop.permute.xlu0 %1158
  %1160 = vrot.lane.b32.xlu0 %v1145, 80
  %v1161 = vpop.permute.xlu0 %1160
  %1162 = vrot.lane.b32.xlu0 %v1142, 16
  %v1163 = vpop.permute.xlu0 %1162
  %1164 = vrot.lane.b32.xlu0 %v1143, 16
  %v1165 = vpop.permute.xlu0 %1164
  %1166 = vrot.lane.b32.xlu0 %v1144, 16
  %v1167 = vpop.permute.xlu0 %1166
  %1168 = vrot.lane.b32.xlu0 %v1145, 16
  %v1169 = vpop.permute.xlu0 %1168
  %v1171 = vsel %vm221, %v1155, 0
  %v1174 = vsel %vm221, %v1157, 0
  %v1177 = vsel %vm221, %v1159, 0
  %v1180 = vsel %vm221, %v1161, 0
  %v1183 = vsel %vm221, %v1163, 0
  %v1186 = vsel %vm221, %v1165, 0
  %v1189 = vsel %vm221, %v1167, 0
  %v1192 = vsel %vm221, %v1169, 0
  %1194 = vmatprep.subr.bf16.mxu0 0
  %1195 = vmatpush1.bf16.xpose.msra.mxu0 %v1183
  %1196 = vmatprep.subr.bf16.mxu0 0
  %1197 = vmatpush1.bf16.xpose.msra.mxu0 %v1186
  %1198 = vmatprep.subr.bf16.mxu0 0
  %1199 = vmatpush1.bf16.xpose.msra.mxu0 %v1189
  %1200 = vmatprep.subr.bf16.mxu0 0
  %1201 = vmatpush1.bf16.xpose.msra.mxu0 %v1192
  %1202 = vmatprep.subr.bf16.mxu0 0
  %1203 = vmatpush1.bf16.xpose.msra.mxu0 0
  %1204 = vmatprep.subr.bf16.mxu0 0
  %1205 = vmatpush1.bf16.xpose.msra.mxu0 0
  %1206 = vmatprep.subr.bf16.mxu0 0
  %1207 = vmatpush1.bf16.xpose.msra.mxu0 0
  %1208 = vmatprep.subr.bf16.mxu0 0
  %1209 = vmatpush1.bf16.xpose.msra.mxu0 0
  %1210 = vmatprep.subr.bf16.mxu0 0
  %1211 = vmatpush1.bf16.xpose.msra.mxu0 0
  %1212 = vmatprep.subr.bf16.mxu0 0
  %1213 = vmatpush1.bf16.xpose.msra.mxu0 0
  %1214 = vmatprep.subr.bf16.mxu0 0
  %1215 = vmatpush1.bf16.xpose.msra.mxu0 0
  %1216 = vmatprep.subr.bf16.mxu0 0
  %1217 = vmatpush1.bf16.xpose.msra.mxu0 0
  %1218 = vmatprep.subr.bf16.mxu0 0
  %1219 = vmatpush1.bf16.xpose.msra.mxu0 0
  %1220 = vmatprep.subr.bf16.mxu0 0
  %1221 = vmatpush1.bf16.xpose.msra.mxu0 0
  %1222 = vmatprep.subr.bf16.mxu0 0
  %1223 = vmatpush1.bf16.xpose.msra.mxu0 0
  %1224 = vmatprep.subr.bf16.mxu0 0
  %1225 = vmatpush1.bf16.xpose.msra.mxu0 0
  %1226 = vmatprep.mubr.bf16.mxu0 0
  %1227 = vmatmul.mubr.bf16.gmra.mrb[0].mxu0 %v1171
  %v1228 = vpop.f32.mrb[0].mxu0
  %v1229 = vadd.f32 0.0, %v1228
  %v1230 = vpop.f32.mrb[0].mxu0
  %v1231 = vpop.f32.mrb[0].mxu0
  %v1232 = vadd.f32 0.0, %v1231
  %v1233 = vpop.f32.mrb[0].mxu0
  %1234 = vmatprep.mubr.bf16.mxu0 0
  %1235 = vmatmul.mubr.bf16.gmra.mrb[0].mxu0 %v1174
  %v1236 = vpop.f32.mrb[0].mxu0
  %v1237 = vadd.f32 0.0, %v1236
  %v1238 = vpop.f32.mrb[0].mxu0
  %v1239 = vpop.f32.mrb[0].mxu0
  %v1240 = vadd.f32 0.0, %v1239
  %v1241 = vpop.f32.mrb[0].mxu0
  %1242 = vmatprep.mubr.bf16.mxu0 0
  %1243 = vmatmul.mubr.bf16.gmra.mrb[0].mxu0 %v1177
  %v1244 = vpop.f32.mrb[0].mxu0
  %v1245 = vadd.f32 0.0, %v1244
  %v1246 = vpop.f32.mrb[0].mxu0
  %v1247 = vpop.f32.mrb[0].mxu0
  %v1248 = vadd.f32 0.0, %v1247
  %v1249 = vpop.f32.mrb[0].mxu0
  %1250 = vmatprep.mubr.bf16.mxu0 0
  %1251 = vmatmul.mubr.bf16.gmra.mrb[0].mxu0 %v1180
  %v1252 = vpop.f32.mrb[0].mxu0
  %v1253 = vadd.f32 0.0, %v1252
  %v1254 = vpop.f32.mrb[0].mxu0
  %v1255 = vpop.f32.mrb[0].mxu0
  %v1256 = vadd.f32 0.0, %v1255
  %v1257 = vpop.f32.mrb[0].mxu0
  %1258 = vdwg.mxu0
  %v1259 = vsel %vm99, %v1229, -inf
  %1260 = vmax.xlane.f32.xlu0 %v1259
  %v1261 = vpop.xlane.xlu0 %1260
  %v1262 = vsel %vm99, %v1232, -inf
  %1263 = vmax.xlane.f32.xlu0 %v1262
  %v1264 = vpop.xlane.xlu0 %1263
  %v1265 = vsel %vm99, %v1237, -inf
  %1266 = vmax.xlane.f32.xlu0 %v1265
  %v1267 = vpop.xlane.xlu0 %1266
  %v1268 = vsel %vm99, %v1240, -inf
  %1269 = vmax.xlane.f32.xlu0 %v1268
  %v1270 = vpop.xlane.xlu0 %1269
  %v1271 = vsel %vm99, %v1245, -inf
  %1272 = vmax.xlane.f32.xlu0 %v1271
  %v1273 = vpop.xlane.xlu0 %1272
  %v1274 = vsel %vm99, %v1248, -inf
  %1275 = vmax.xlane.f32.xlu0 %v1274
  %v1276 = vpop.xlane.xlu0 %1275
  %v1277 = vsel %vm99, %v1253, -inf
  %1278 = vmax.xlane.f32.xlu0 %v1277
  %v1279 = vpop.xlane.xlu0 %1278
  %v1280 = vsel %vm99, %v1256, -inf
  %1281 = vmax.xlane.f32.xlu0 %v1280
  %v1282 = vpop.xlane.xlu0 %1281
  %v1283 = vsub.f32 %v1229, %v1261
  %v1284 = vsub.f32 %v1232, %v1264
  %v1285 = vsub.f32 %v1237, %v1267
  %v1286 = vsub.f32 %v1240, %v1270
  %v1287 = vsub.f32 %v1245, %v1273
  %v1288 = vsub.f32 %v1248, %v1276
  %v1289 = vsub.f32 %v1253, %v1279
  %v1290 = vsub.f32 %v1256, %v1282
  %v1291 = vmul.f32 %v1283, 1.442695
  %v1292 = vpow.pop %v1291
  %v1293 = vmul.f32 %v1284, 1.442695
  %v1294 = vpow.pop %v1293
  %v1295 = vmul.f32 %v1285, 1.442695
  %v1296 = vpow.pop %v1295
  %v1297 = vmul.f32 %v1286, 1.442695
  %v1298 = vpow.pop %v1297
  %v1299 = vmul.f32 %v1287, 1.442695
  %v1300 = vpow.pop %v1299
  %v1301 = vmul.f32 %v1288, 1.442695
  %v1302 = vpow.pop %v1301
  %v1303 = vmul.f32 %v1289, 1.442695
  %v1304 = vpow.pop %v1303
  %v1305 = vmul.f32 %v1290, 1.442695
  %v1306 = vpow.pop %v1305
  %v1307 = vsel %vm99, %v1292, 0.0
  %1308 = vadd.xlane.f32.xlu0 %v1307
  %v1309 = vpop.xlane.xlu0 %1308
  %v1310 = vsel %vm99, %v1294, 0.0
  %1311 = vadd.xlane.f32.xlu0 %v1310
  %v1312 = vpop.xlane.xlu0 %1311
  %v1313 = vsel %vm99, %v1296, 0.0
  %1314 = vadd.xlane.f32.xlu0 %v1313
  %v1315 = vpop.xlane.xlu0 %1314
  %v1316 = vsel %vm99, %v1298, 0.0
  %1317 = vadd.xlane.f32.xlu0 %v1316
  %v1318 = vpop.xlane.xlu0 %1317
  %v1319 = vsel %vm99, %v1300, 0.0
  %1320 = vadd.xlane.f32.xlu0 %v1319
  %v1321 = vpop.xlane.xlu0 %1320
  %v1322 = vsel %vm99, %v1302, 0.0
  %1323 = vadd.xlane.f32.xlu0 %v1322
  %v1324 = vpop.xlane.xlu0 %1323
  %v1325 = vsel %vm99, %v1304, 0.0
  %1326 = vadd.xlane.f32.xlu0 %v1325
  %v1327 = vpop.xlane.xlu0 %1326
  %v1328 = vsel %vm99, %v1306, 0.0
  %1329 = vadd.xlane.f32.xlu0 %v1328
  %v1330 = vpop.xlane.xlu0 %1329
  %v1331 = vpack.c.bf16 %v1294, %v1292
  %v1332 = vpack.c.bf16 %v1298, %v1296
  %v1333 = vpack.c.bf16 %v1302, %v1300
  %v1334 = vpack.c.bf16 %v1306, %v1304
  %1339 = vrot.lane.b32.xlu0 %v1146, 80
  %v1340 = vpop.permute.xlu0 %1339
  %1341 = vrot.lane.b32.xlu0 %v1147, 80
  %v1342 = vpop.permute.xlu0 %1341
  %1343 = vrot.lane.b32.xlu0 %v1148, 80
  %v1344 = vpop.permute.xlu0 %1343
  %1345 = vrot.lane.b32.xlu0 %v1149, 80
  %v1346 = vpop.permute.xlu0 %1345
  %v1352 = vsel %vm99, %v1331, 0
  %v1355 = vsel %vm99, %v1332, 0
  %v1358 = vsel %vm99, %v1333, 0
  %v1361 = vsel %vm99, %v1334, 0
  %1363 = vmatprep.subr.bf16.mxu0 0
  %1364 = vmatpush1.bf16.msra.mxu0 %v1340
  %1365 = vmatprep.subr.bf16.mxu0 0
  %1366 = vmatpush1.bf16.msra.mxu0 %v1342
  %1367 = vmatprep.subr.bf16.mxu0 0
  %1368 = vmatpush1.bf16.msra.mxu0 %v1344
  %1369 = vmatprep.subr.bf16.mxu0 0
  %1370 = vmatpush1.bf16.msra.mxu0 %v1346
  %1371 = vmatprep.subr.bf16.mxu0 0
  %1372 = vmatpush1.bf16.msra.mxu0 0
  %1373 = vmatprep.subr.bf16.mxu0 0
  %1374 = vmatpush1.bf16.msra.mxu0 0
  %1375 = vmatprep.subr.bf16.mxu0 0
  %1376 = vmatpush1.bf16.msra.mxu0 0
  %1377 = vmatprep.subr.bf16.mxu0 0
  %1378 = vmatpush1.bf16.msra.mxu0 0
  %1379 = vmatprep.subr.bf16.mxu0 0
  %1380 = vmatpush1.bf16.msra.mxu0 0
  %1381 = vmatprep.subr.bf16.mxu0 0
  %1382 = vmatpush1.bf16.msra.mxu0 0
  %1383 = vmatprep.subr.bf16.mxu0 0
  %1384 = vmatpush1.bf16.msra.mxu0 0
  %1385 = vmatprep.subr.bf16.mxu0 0
  %1386 = vmatpush1.bf16.msra.mxu0 0
  %1387 = vmatprep.subr.bf16.mxu0 0
  %1388 = vmatpush1.bf16.msra.mxu0 0
  %1389 = vmatprep.subr.bf16.mxu0 0
  %1390 = vmatpush1.bf16.msra.mxu0 0
  %1391 = vmatprep.subr.bf16.mxu0 0
  %1392 = vmatpush1.bf16.msra.mxu0 0
  %1393 = vmatprep.subr.bf16.mxu0 0
  %1394 = vmatpush1.bf16.msra.mxu0 0
  %1395 = vmatprep.mubr.bf16.mxu0 0
  %1396 = vmatmul.mubr.bf16.gmra.mrb[0].mxu0 %v1352
  %v1397 = vpop.f32.mrb[0].mxu0
  %v1398 = vadd.f32 0.0, %v1397
  %v1399 = vpop.f32.mrb[0].mxu0
  %v1400 = vpop.f32.mrb[0].mxu0
  %v1401 = vadd.f32 0.0, %v1400
  %v1402 = vpop.f32.mrb[0].mxu0
  %1403 = vmatprep.mubr.bf16.mxu0 0
  %1404 = vmatmul.mubr.bf16.gmra.mrb[0].mxu0 %v1355
  %v1405 = vpop.f32.mrb[0].mxu0
  %v1406 = vadd.f32 0.0, %v1405
  %v1407 = vpop.f32.mrb[0].mxu0
  %v1408 = vpop.f32.mrb[0].mxu0
  %v1409 = vadd.f32 0.0, %v1408
  %v1410 = vpop.f32.mrb[0].mxu0
  %1411 = vmatprep.mubr.bf16.mxu0 0
  %1412 = vmatmul.mubr.bf16.gmra.mrb[0].mxu0 %v1358
  %v1413 = vpop.f32.mrb[0].mxu0
  %v1414 = vadd.f32 0.0, %v1413
  %v1415 = vpop.f32.mrb[0].mxu0
  %v1416 = vpop.f32.mrb[0].mxu0
  %v1417 = vadd.f32 0.0, %v1416
  %v1418 = vpop.f32.mrb[0].mxu0
  %1419 = vmatprep.mubr.bf16.mxu0 0
  %1420 = vmatmul.mubr.bf16.gmra.mrb[0].mxu0 %v1361
  %v1421 = vpop.f32.mrb[0].mxu0
  %v1422 = vadd.f32 0.0, %v1421
  %v1423 = vpop.f32.mrb[0].mxu0
  %v1424 = vpop.f32.mrb[0].mxu0
  %v1425 = vadd.f32 0.0, %v1424
  %v1426 = vpop.f32.mrb[0].mxu0
  %1427 = vdwg.mxu0
  %v1428 = vrcp.pop %v1309
  %v1429 = vrcp.pop %v1312
  %v1430 = vrcp.pop %v1315
  %v1431 = vrcp.pop %v1318
  %v1432 = vrcp.pop %v1321
  %v1433 = vrcp.pop %v1324
  %v1434 = vrcp.pop %v1327
  %v1435 = vrcp.pop %v1330
  %v1436 = vmul.f32 %v1398, %v1428
  %v1437 = vmul.f32 %v1401, %v1429
  %v1438 = vmul.f32 %v1406, %v1430
  %v1439 = vmul.f32 %v1409, %v1431
  %v1440 = vmul.f32 %v1414, %v1432
  %v1441 = vmul.f32 %v1417, %v1433
  %v1442 = vmul.f32 %v1422, %v1434
  %v1443 = vmul.f32 %v1425, %v1435
  %v1444 = vpack.c.bf16 %v1437, %v1436
  %v1445 = vpack.c.bf16 %v1439, %v1438
  %v1446 = vpack.c.bf16 %v1441, %v1440
  %v1447 = vpack.c.bf16 %v1443, %v1442
  %1452 = vrot.lane.b32.xlu0 %v1444, 48
  %v1453 = vpop.permute.xlu0 %1452
  %1454 = vrot.lane.b32.xlu0 %v1445, 48
  %v1455 = vpop.permute.xlu0 %1454
  %1456 = vrot.lane.b32.xlu0 %v1446, 48
  %v1457 = vpop.permute.xlu0 %1456
  %1458 = vrot.lane.b32.xlu0 %v1447, 48
  %v1459 = vpop.permute.xlu0 %1458
  %vm1464 = vcmask 523648
  %1465 = vst.msk [vmem:[#allocation3] sm:$0xff] %vm1464, %v1453
  %1466 = vst.msk [vmem:[#allocation3 + $0x8] sm:$0xff] %vm1464, %v1455
  %1467 = vst.msk [vmem:[#allocation3 + $0x10] sm:$0xff] %vm1464, %v1457
  %1468 = vst.msk [vmem:[#allocation3 + $0x18] sm:$0xff] %vm1464, %v1459
  %v1469 = vld [vmem:[#allocation3] sm:$0xff]
  %v1470 = vld [vmem:[#allocation3 + $0x8] sm:$0xff]
  %v1471 = vld [vmem:[#allocation3 + $0x10] sm:$0xff]
  %v1472 = vld [vmem:[#allocation3 + $0x18] sm:$0xff]
  %v1473 = vld [vmem:[%s3] sm:$0xf]
  %v1474 = vld [vmem:[%s3 + $0x4] sm:$0xf]
  %v1475 = vld [vmem:[%s3 + $0x8] sm:$0xf]
  %v1476 = vld [vmem:[%s3 + $0xc] sm:$0xf]
  %v1477 = vld [vmem:[%s3 + $0x10] sm:$0xf]
  %v1478 = vld [vmem:[%s3 + $0x14] sm:$0xf]
  %v1479 = vld [vmem:[%s3 + $0x18] sm:$0xf]
  %v1480 = vld [vmem:[%s3 + $0x1c] sm:$0xf]
  %v1481 = vld [vmem:[%s4] sm:$0x1]
  %v1483 = vlaneseq
  %v1484 = vshrl.u32 %v1483, 7
  %v1485 = vsub.s32 0, %v1484
  %v1486 = vrot.slane %v1481, %v1485
  %v1496 = vunpack.c.l.b16 %v1473
  %v1497 = vunpack.c.l.b16 %v1474
  %v1498 = vunpack.c.l.b16 %v1475
  %v1499 = vunpack.c.l.b16 %v1476
  %v1500 = vunpack.c.l.b16 %v1477
  %v1501 = vunpack.c.l.b16 %v1478
  %v1502 = vunpack.c.l.b16 %v1479
  %v1503 = vunpack.c.l.b16 %v1480
  %v1504 = vpack.c.b16 %v1497, %v1496
  %v1505 = vpack.c.b16 %v1499, %v1498
  %v1506 = vpack.c.b16 %v1501, %v1500
  %v1507 = vpack.c.b16 %v1503, %v1502
  %v1513 = vsel %vm99, %v1469, 0
  %v1516 = vsel %vm99, %v1470, 0
  %v1519 = vsel %vm99, %v1471, 0
  %v1522 = vsel %vm99, %v1472, 0
  %1524 = vmatprep.subr.bf16.mxu0 0
  %1525 = vmatpush1.bf16.msra.mxu0 %v1504
  %1526 = vmatprep.subr.bf16.mxu0 0
  %1527 = vmatpush1.bf16.msra.mxu0 %v1505
  %1528 = vmatprep.subr.bf16.mxu0 0
  %1529 = vmatpush1.bf16.msra.mxu0 %v1506
  %1530 = vmatprep.subr.bf16.mxu0 0
  %1531 = vmatpush1.bf16.msra.mxu0 %v1507
  %1532 = vmatprep.subr.bf16.mxu0 0
  %1533 = vmatpush1.bf16.msra.mxu0 0
  %1534 = vmatprep.subr.bf16.mxu0 0
  %1535 = vmatpush1.bf16.msra.mxu0 0
  %1536 = vmatprep.subr.bf16.mxu0 0
  %1537 = vmatpush1.bf16.msra.mxu0 0
  %1538 = vmatprep.subr.bf16.mxu0 0
  %1539 = vmatpush1.bf16.msra.mxu0 0
  %1540 = vmatprep.subr.bf16.mxu0 0
  %1541 = vmatpush1.bf16.msra.mxu0 0
  %1542 = vmatprep.subr.bf16.mxu0 0
  %1543 = vmatpush1.bf16.msra.mxu0 0
  %1544 = vmatprep.subr.bf16.mxu0 0
  %1545 = vmatpush1.bf16.msra.mxu0 0
  %1546 = vmatprep.subr.bf16.mxu0 0
  %1547 = vmatpush1.bf16.msra.mxu0 0
  %1548 = vmatprep.subr.bf16.mxu0 0
  %1549 = vmatpush1.bf16.msra.mxu0 0
  %1550 = vmatprep.subr.bf16.mxu0 0
  %1551 = vmatpush1.bf16.msra.mxu0 0
  %1552 = vmatprep.subr.bf16.mxu0 0
  %1553 = vmatpush1.bf16.msra.mxu0 0
  %1554 = vmatprep.subr.bf16.mxu0 0
  %1555 = vmatpush1.bf16.msra.mxu0 0
  %1556 = vmatprep.mubr.bf16.mxu0 0
  %1557 = vmatmul.mubr.bf16.gmra.mrb[0].mxu0 %v1513
  %v1558 = vpop.f32.mrb[0].mxu0
  %v1559 = vadd.f32 %v1486, %v1558
  %v1560 = vpop.f32.mrb[0].mxu0
  %v1561 = vpop.f32.mrb[0].mxu0
  %v1562 = vadd.f32 %v1486, %v1561
  %v1563 = vpop.f32.mrb[0].mxu0
  %1564 = vmatprep.mubr.bf16.mxu0 0
  %1565 = vmatmul.mubr.bf16.gmra.mrb[0].mxu0 %v1516
  %v1566 = vpop.f32.mrb[0].mxu0
  %v1567 = vadd.f32 %v1486, %v1566
  %v1568 = vpop.f32.mrb[0].mxu0
  %v1569 = vpop.f32.mrb[0].mxu0
  %v1570 = vadd.f32 %v1486, %v1569
  %v1571 = vpop.f32.mrb[0].mxu0
  %1572 = vmatprep.mubr.bf16.mxu0 0
  %1573 = vmatmul.mubr.bf16.gmra.mrb[0].mxu0 %v1519
  %v1574 = vpop.f32.mrb[0].mxu0
  %v1575 = vadd.f32 %v1486, %v1574
  %v1576 = vpop.f32.mrb[0].mxu0
  %v1577 = vpop.f32.mrb[0].mxu0
  %v1578 = vadd.f32 %v1486, %v1577
  %v1579 = vpop.f32.mrb[0].mxu0
  %1580 = vmatprep.mubr.bf16.mxu0 0
  %1581 = vmatmul.mubr.bf16.gmra.mrb[0].mxu0 %v1522
  %v1582 = vpop.f32.mrb[0].mxu0
  %v1583 = vadd.f32 %v1486, %v1582
  %v1584 = vpop.f32.mrb[0].mxu0
  %v1585 = vpop.f32.mrb[0].mxu0
  %v1586 = vadd.f32 %v1486, %v1585
  %v1587 = vpop.f32.mrb[0].mxu0
  %1588 = vdwg.mxu0
  %v1589 = vadd.f32 %v1559, %v27
  %v1590 = vadd.f32 %v1562, %v28
  %v1591 = vadd.f32 %v1567, %v29
  %v1592 = vadd.f32 %v1570, %v30
  %v1593 = vadd.f32 %v1575, %v31
  %v1594 = vadd.f32 %v1578, %v32
  %v1595 = vadd.f32 %v1583, %v33
  %v1596 = vadd.f32 %v1586, %v34
  %v1597 = vsel %vm99, %v1589, 0.0
  %1598 = vadd.xlane.f32.xlu0 %v1597
  %v1599 = vpop.xlane.xlu0 %1598
  %v1600 = vsel %vm99, %v1590, 0.0
  %1601 = vadd.xlane.f32.xlu0 %v1600
  %v1602 = vpop.xlane.xlu0 %1601
  %v1603 = vsel %vm99, %v1591, 0.0
  %1604 = vadd.xlane.f32.xlu0 %v1603
  %v1605 = vpop.xlane.xlu0 %1604
  %v1606 = vsel %vm99, %v1592, 0.0
  %1607 = vadd.xlane.f32.xlu0 %v1606
  %v1608 = vpop.xlane.xlu0 %1607
  %v1609 = vsel %vm99, %v1593, 0.0
  %1610 = vadd.xlane.f32.xlu0 %v1609
  %v1611 = vpop.xlane.xlu0 %1610
  %v1612 = vsel %vm99, %v1594, 0.0
  %1613 = vadd.xlane.f32.xlu0 %v1612
  %v1614 = vpop.xlane.xlu0 %1613
  %v1615 = vsel %vm99, %v1595, 0.0
  %1616 = vadd.xlane.f32.xlu0 %v1615
  %v1617 = vpop.xlane.xlu0 %1616
  %v1618 = vsel %vm99, %v1596, 0.0
  %1619 = vadd.xlane.f32.xlu0 %v1618
  %v1620 = vpop.xlane.xlu0 %1619
  %v1621 = vrcp.pop 64.0
  %v1622 = vmul.f32 %v1599, %v1621
  %v1623 = vmul.f32 %v1602, %v1621
  %v1624 = vmul.f32 %v1605, %v1621
  %v1625 = vmul.f32 %v1608, %v1621
  %v1626 = vmul.f32 %v1611, %v1621
  %v1627 = vmul.f32 %v1614, %v1621
  %v1628 = vmul.f32 %v1617, %v1621
  %v1629 = vmul.f32 %v1620, %v1621
  %v1630 = vsub.f32 %v1589, %v1622
  %v1631 = vsub.f32 %v1590, %v1623
  %v1632 = vsub.f32 %v1591, %v1624
  %v1633 = vsub.f32 %v1592, %v1625
  %v1634 = vsub.f32 %v1593, %v1626
  %v1635 = vsub.f32 %v1594, %v1627
  %v1636 = vsub.f32 %v1595, %v1628
  %v1637 = vsub.f32 %v1596, %v1629
  %v1638 = vmul.f32 %v1630, %v1630
  %v1639 = vmul.f32 %v1631, %v1631
  %v1640 = vmul.f32 %v1632, %v1632
  %v1641 = vmul.f32 %v1633, %v1633
  %v1642 = vmul.f32 %v1634, %v1634
  %v1643 = vmul.f32 %v1635, %v1635
  %v1644 = vmul.f32 %v1636, %v1636
  %v1645 = vmul.f32 %v1637, %v1637
  %v1646 = vsel %vm99, %v1638, 0.0
  %1647 = vadd.xlane.f32.xlu0 %v1646
  %v1648 = vpop.xlane.xlu0 %1647
  %v1649 = vsel %vm99, %v1639, 0.0
  %1650 = vadd.xlane.f32.xlu0 %v1649
  %v1651 = vpop.xlane.xlu0 %1650
  %v1652 = vsel %vm99, %v1640, 0.0
  %1653 = vadd.xlane.f32.xlu0 %v1652
  %v1654 = vpop.xlane.xlu0 %1653
  %v1655 = vsel %vm99, %v1641, 0.0
  %1656 = vadd.xlane.f32.xlu0 %v1655
  %v1657 = vpop.xlane.xlu0 %1656
  %v1658 = vsel %vm99, %v1642, 0.0
  %1659 = vadd.xlane.f32.xlu0 %v1658
  %v1660 = vpop.xlane.xlu0 %1659
  %v1661 = vsel %vm99, %v1643, 0.0
  %1662 = vadd.xlane.f32.xlu0 %v1661
  %v1663 = vpop.xlane.xlu0 %1662
  %v1664 = vsel %vm99, %v1644, 0.0
  %1665 = vadd.xlane.f32.xlu0 %v1664
  %v1666 = vpop.xlane.xlu0 %1665
  %v1667 = vsel %vm99, %v1645, 0.0
  %1668 = vadd.xlane.f32.xlu0 %v1667
  %v1669 = vpop.xlane.xlu0 %1668
  %v1670 = vmul.f32 %v1648, %v1621
  %v1671 = vmul.f32 %v1651, %v1621
  %v1672 = vmul.f32 %v1654, %v1621
  %v1673 = vmul.f32 %v1657, %v1621
  %v1674 = vmul.f32 %v1660, %v1621
  %v1675 = vmul.f32 %v1663, %v1621
  %v1676 = vmul.f32 %v1666, %v1621
  %v1677 = vmul.f32 %v1669, %v1621
  %v1678 = vadd.f32 %v1670, 1e-12
  %v1679 = vadd.f32 %v1671, 1e-12
  %v1680 = vadd.f32 %v1672, 1e-12
  %v1681 = vadd.f32 %v1673, 1e-12
  %v1682 = vadd.f32 %v1674, 1e-12
  %v1683 = vadd.f32 %v1675, 1e-12
  %v1684 = vadd.f32 %v1676, 1e-12
  %v1685 = vadd.f32 %v1677, 1e-12
  %v1686 = vrsqrt.pop %v1678
  %v1687 = vrsqrt.pop %v1679
  %v1688 = vrsqrt.pop %v1680
  %v1689 = vrsqrt.pop %v1681
  %v1690 = vrsqrt.pop %v1682
  %v1691 = vrsqrt.pop %v1683
  %v1692 = vrsqrt.pop %v1684
  %v1693 = vrsqrt.pop %v1685
  %v1694 = vmul.f32 %v1630, %v1686
  %v1695 = vmul.f32 %v1631, %v1687
  %v1696 = vmul.f32 %v1632, %v1688
  %v1697 = vmul.f32 %v1633, %v1689
  %v1698 = vmul.f32 %v1634, %v1690
  %v1699 = vmul.f32 %v1635, %v1691
  %v1700 = vmul.f32 %v1636, %v1692
  %v1701 = vmul.f32 %v1637, %v1693
  %v1702 = vld [vmem:[%s5] sm:$0x1]
  %v1704 = vlaneseq
  %v1705 = vshrl.u32 %v1704, 7
  %v1706 = vsub.s32 0, %v1705
  %v1707 = vrot.slane %v1702, %v1706
  %v1709 = vmul.f32 %v1694, %v1707
  %v1710 = vmul.f32 %v1695, %v1707
  %v1711 = vmul.f32 %v1696, %v1707
  %v1712 = vmul.f32 %v1697, %v1707
  %v1713 = vmul.f32 %v1698, %v1707
  %v1714 = vmul.f32 %v1699, %v1707
  %v1715 = vmul.f32 %v1700, %v1707
  %v1716 = vmul.f32 %v1701, %v1707
  %v1717 = vld [vmem:[%s6] sm:$0x1]
  %v1719 = vlaneseq
  %v1720 = vshrl.u32 %v1719, 7
  %v1721 = vsub.s32 0, %v1720
  %v1722 = vrot.slane %v1717, %v1721
  %v1724 = vadd.f32 %v1709, %v1722
  %v1725 = vadd.f32 %v1710, %v1722
  %v1726 = vadd.f32 %v1711, %v1722
  %v1727 = vadd.f32 %v1712, %v1722
  %v1728 = vadd.f32 %v1713, %v1722
  %v1729 = vadd.f32 %v1714, %v1722
  %v1730 = vadd.f32 %v1715, %v1722
  %v1731 = vadd.f32 %v1716, %v1722
  %1732 = vst.msk [vmem:[%s7] sm:$0xff] %vm99, %v1724
  %1733 = vst.msk [vmem:[%s7 + $0x8] sm:$0xff] %vm99, %v1725
  %1734 = vst.msk [vmem:[%s7 + $0x10] sm:$0xff] %vm99, %v1726
  %1735 = vst.msk [vmem:[%s7 + $0x18] sm:$0xff] %vm99, %v1727
  %1736 = vst.msk [vmem:[%s7 + $0x20] sm:$0xff] %vm99, %v1728
  %1737 = vst.msk [vmem:[%s7 + $0x28] sm:$0xff] %vm99, %v1729
  %1738 = vst.msk [vmem:[%s7 + $0x30] sm:$0xff] %vm99, %v1730
  %1739 = vst.msk [vmem:[%s7 + $0x38] sm:$0xff] %vm99, %v1731
  // Predicated region
  $region30: #{encoder_projector_qformer.10} parent=0 // pred_check
    _
  $region31: #{encoder_projector_qformer.10} parent=0 // pred_check_branch
    %1741 = sbr.rel (0) target = $region33
  $region32: #{encoder_projector_qformer.10} parent=0 // pred_region
    _
  $region33: #{encoder_projector_qformer.10} parent=0 // pred_fallthru
    _
  // Predicated region
  $region34: #{encoder_projector_qformer.10} parent=0 // pred_check
    _
  $region35: #{encoder_projector_qformer.10} parent=0 // pred_check_branch
    %1743 = sbr.rel (0) target = $region37
  $region36: #{encoder_projector_qformer.10} parent=0 // pred_region
    _
  $region37: #{encoder_projector_qformer.10} parent=0 // pred_fallthru
    _

// kernel: encoder_projector_qformer.12
$region0: #{encoder_projector_qformer.12}
  #allocation0 [shape = 'u32[]', space=smem, size = 0x4, offset = 0x4, fixed_abs, tag = 'smem constant byte address 0x4 - core index']
  #allocation1 [shape = 'u32[144,128]{1,0:T(1,128)}', space=vmem, size = 0x12000, scoped, tag = 'internal scratch']
  #allocation2 [shape = 'bf16[64,64]{1,0:T(16,128)(2,1)}', space=vmem, size = 0x4000, scoped, tag = 'scratch operand']
  #allocation3 [shape = 'bf16[64,64]{1,0:T(16,128)(2,1)}', space=vmem, size = 0x4000, scoped, tag = 'scratch operand']
  %s0 = inlined_call_operand.vmem [shape: f32[2,64,64], index: 0, kind: input, shape index: {}]
  %s1 = inlined_call_operand.vmem [shape: bf16[64,64], index: 1, kind: input, shape index: {}]
  %s2 = inlined_call_operand.vmem [shape: f32[1,64], index: 2, kind: input, shape index: {}]
  %s3 = inlined_call_operand.vmem [shape: bf16[2,8,128], index: 3, kind: input, shape index: {}]
  %s4 = inlined_call_operand.vmem [shape: f32[2,1,8], index: 4, kind: input, shape index: {}]
  %s5 = inlined_call_operand.vmem [shape: bf16[64,64], index: 5, kind: input, shape index: {}]
  %s6 = inlined_call_operand.vmem [shape: f32[1,64], index: 6, kind: input, shape index: {}]
  %s7 = inlined_call_operand.vmem [shape: f32[1,64], index: 7, kind: input, shape index: {}]
  %s8 = inlined_call_operand.vmem [shape: f32[1,64], index: 8, kind: input, shape index: {}]
  %s9 = inlined_call_operand.vmem [shape: f32[2,64,64], index: 9, kind: output, shape index: {}]
  %s10 = sld [smem:[#allocation0]]
  $region69: #{encoder_projector_qformer.12} parent=0
    _
  %s12 = ssub.s32 1, %s10
  %s13 = scalar_select 0, %s12, %s10
  loop: start=0, step=1, limit=4
  $region2: #{encoder_projector_qformer.12} parent=0 // loop_pre_header
    _
  $region3: #{encoder_projector_qformer.12} parent=0 // loop_header
    %s15 = sphi 0, %s19
    %p16 = scmp.ge.s32.totalorder %s15, 4
    %s25 = sphi 0, %s27
    %s28 = sphi 0, %s25
    %s29 = sphi 0, %s28
    %s45 = sphi 0, %s29
    %s49 = sphi 0, %s49
    %s51 = sphi 0, %s49
    %s52 = sphi 0, %s51
    %s66 = sphi 0, %s52
    %s70 = sphi 0, %s70
    %s72 = sphi 0, %s70
    %s73 = sphi 0, %s72
    %s87 = sphi 0, %s73
    %s93 = sphi 0, %s95
    %s96 = sphi 0, %s93
    %s97 = sphi 0, %s96
    %s113 = sphi 0, %s97
    %s119 = sphi 0, %s121
    %s122 = sphi 0, %s119
    %s123 = sphi 0, %s122
    %s139 = sphi 0, %s123
    %s143 = sphi 0, %s143
    %s145 = sphi 0, %s143
    %s146 = sphi 0, %s145
    %s160 = sphi 0, %s146
    %s164 = sphi 0, %s164
    %s166 = sphi 0, %s164
    %s167 = sphi 0, %s166
    %s181 = sphi 0, %s167
    %s185 = sphi 0, %s185
    %s187 = sphi 0, %s185
    %s188 = sphi 0, %s187
    %s202 = sphi 0, %s188
    %s206 = sphi 0, %s206
    %s208 = sphi 0, %s206
    %s209 = sphi 0, %s208
    %s223 = sphi 0, %s209
    %s229 = sphi 0, %s231
    %s232 = sphi 0, %s229
    %s233 = sphi 0, %s232
    %s249 = sphi 0, %s233
  $region4: #{encoder_projector_qformer.12} parent=0 // loop_header_branch
    %18 = sbr.rel (%p16) target = $region8
  $region5: #{encoder_projector_qformer.12} parent=0 // loop_body
    %s20 = ssub.s32 %s15, 1
    %s21 = ssub.s32 %s15, 2
    %s22 = sadd.s32 %s15, 1
    %s23 = ssub.s32 %s15, %s22
    %p24 = scmp.eq.s32.totalorder %s23, 0
    %s26 = sadd.s32 %s25, 1
    %s27 = scalar_select %p24, %s25, %s26
    %p30 = pneg %p24
    %p31 = scmp.eq.s32.totalorder %s15, 1
    %p32 = por %p30, %p31
    %p33 = scmp.ne.s32.totalorder %s25, %s28
    %p34 = scmp.eq.s32.totalorder %s15, 0
    %p35 = por %p33, %p34
    %p36 = scmp.ne.s32.totalorder %s25, %s28
    %p37 = scmp.eq.s32.totalorder %s20, 1
    %p38 = por %p36, %p37
    %p39 = scmp.ne.s32.totalorder %s28, %s29
    %p40 = scmp.eq.s32.totalorder %s20, 0
    %p41 = por %p39, %p40
    %p42 = scmp.ne.s32.totalorder %s28, %s29
    %p43 = scmp.eq.s32.totalorder %s21, 1
    %p44 = por %p42, %p43
    %p46 = scmp.ne.s32.totalorder %s29, %s45
    %p47 = scmp.eq.s32.totalorder %s21, 0
    %p48 = por %p46, %p47
    %s50 = sadd.s32 %s49, 1
    %p53 = scmp.eq.s32.totalorder %s15, 1
    %p54 = scmp.ne.s32.totalorder %s49, %s51
    %p55 = scmp.eq.s32.totalorder %s15, 0
    %p56 = por %p54, %p55
    %p57 = scmp.ne.s32.totalorder %s49, %s51
    %p58 = scmp.eq.s32.totalorder %s20, 1
    %p59 = por %p57, %p58
    %p60 = scmp.ne.s32.totalorder %s51, %s52
    %p61 = scmp.eq.s32.totalorder %s20, 0
    %p62 = por %p60, %p61
    %p63 = scmp.ne.s32.totalorder %s51, %s52
    %p64 = scmp.eq.s32.totalorder %s21, 1
    %p65 = por %p63, %p64
    %p67 = scmp.ne.s32.totalorder %s52, %s66
    %p68 = scmp.eq.s32.totalorder %s21, 0
    %p69 = por %p67, %p68
    %s71 = sadd.s32 %s70, 1
    %p74 = scmp.eq.s32.totalorder %s15, 1
    %p75 = scmp.ne.s32.totalorder %s70, %s72
    %p76 = scmp.eq.s32.totalorder %s15, 0
    %p77 = por %p75, %p76
    %p78 = scmp.ne.s32.totalorder %s70, %s72
    %p79 = scmp.eq.s32.totalorder %s20, 1
    %p80 = por %p78, %p79
    %p81 = scmp.ne.s32.totalorder %s72, %s73
    %p82 = scmp.eq.s32.totalorder %s20, 0
    %p83 = por %p81, %p82
    %p84 = scmp.ne.s32.totalorder %s72, %s73
    %p85 = scmp.eq.s32.totalorder %s21, 1
    %p86 = por %p84, %p85
    %p88 = scmp.ne.s32.totalorder %s73, %s87
    %p89 = scmp.eq.s32.totalorder %s21, 0
    %p90 = por %p88, %p89
    %s91 = ssub.s32 %s15, %s22
    %p92 = scmp.eq.s32.totalorder %s91, 0
    %s94 = sadd.s32 %s93, 1
    %s95 = scalar_select %p92, %s93, %s94
    %p98 = pneg %p92
    %p99 = scmp.eq.s32.totalorder %s15, 1
    %p100 = por %p98, %p99
    %p101 = scmp.ne.s32.totalorder %s93, %s96
    %p102 = scmp.eq.s32.totalorder %s15, 0
    %p103 = por %p101, %p102
    %p104 = scmp.ne.s32.totalorder %s93, %s96
    %p105 = scmp.eq.s32.totalorder %s20, 1
    %p106 = por %p104, %p105
    %p107 = scmp.ne.s32.totalorder %s96, %s97
    %p108 = scmp.eq.s32.totalorder %s20, 0
    %p109 = por %p107, %p108
    %p110 = scmp.ne.s32.totalorder %s96, %s97
    %p111 = scmp.eq.s32.totalorder %s21, 1
    %p112 = por %p110, %p111
    %p114 = scmp.ne.s32.totalorder %s97, %s113
    %p115 = scmp.eq.s32.totalorder %s21, 0
    %p116 = por %p114, %p115
    %s117 = ssub.s32 %s15, %s22
    %p118 = scmp.eq.s32.totalorder %s117, 0
    %s120 = sadd.s32 %s119, 1
    %s121 = scalar_select %p118, %s119, %s120
    %p124 = pneg %p118
    %p125 = scmp.eq.s32.totalorder %s15, 1
    %p126 = por %p124, %p125
    %p127 = scmp.ne.s32.totalorder %s119, %s122
    %p128 = scmp.eq.s32.totalorder %s15, 0
    %p129 = por %p127, %p128
    %p130 = scmp.ne.s32.totalorder %s119, %s122
    %p131 = scmp.eq.s32.totalorder %s20, 1
    %p132 = por %p130, %p131
    %p133 = scmp.ne.s32.totalorder %s122, %s123
    %p134 = scmp.eq.s32.totalorder %s20, 0
    %p135 = por %p133, %p134
    %p136 = scmp.ne.s32.totalorder %s122, %s123
    %p137 = scmp.eq.s32.totalorder %s21, 1
    %p138 = por %p136, %p137
    %p140 = scmp.ne.s32.totalorder %s123, %s139
    %p141 = scmp.eq.s32.totalorder %s21, 0
    %p142 = por %p140, %p141
    %s144 = sadd.s32 %s143, 1
    %p147 = scmp.eq.s32.totalorder %s15, 1
    %p148 = scmp.ne.s32.totalorder %s143, %s145
    %p149 = scmp.eq.s32.totalorder %s15, 0
    %p150 = por %p148, %p149
    %p151 = scmp.ne.s32.totalorder %s143, %s145
    %p152 = scmp.eq.s32.totalorder %s20, 1
    %p153 = por %p151, %p152
    %p154 = scmp.ne.s32.totalorder %s145, %s146
    %p155 = scmp.eq.s32.totalorder %s20, 0
    %p156 = por %p154, %p155
    %p157 = scmp.ne.s32.totalorder %s145, %s146
    %p158 = scmp.eq.s32.totalorder %s21, 1
    %p159 = por %p157, %p158
    %p161 = scmp.ne.s32.totalorder %s146, %s160
    %p162 = scmp.eq.s32.totalorder %s21, 0
    %p163 = por %p161, %p162
    %s165 = sadd.s32 %s164, 1
    %p168 = scmp.eq.s32.totalorder %s15, 1
    %p169 = scmp.ne.s32.totalorder %s164, %s166
    %p170 = scmp.eq.s32.totalorder %s15, 0
    %p171 = por %p169, %p170
    %p172 = scmp.ne.s32.totalorder %s164, %s166
    %p173 = scmp.eq.s32.totalorder %s20, 1
    %p174 = por %p172, %p173
    %p175 = scmp.ne.s32.totalorder %s166, %s167
    %p176 = scmp.eq.s32.totalorder %s20, 0
    %p177 = por %p175, %p176
    %p178 = scmp.ne.s32.totalorder %s166, %s167
    %p179 = scmp.eq.s32.totalorder %s21, 1
    %p180 = por %p178, %p179
    %p182 = scmp.ne.s32.totalorder %s167, %s181
    %p183 = scmp.eq.s32.totalorder %s21, 0
    %p184 = por %p182, %p183
    %s186 = sadd.s32 %s185, 1
    %p189 = scmp.eq.s32.totalorder %s15, 1
    %p190 = scmp.ne.s32.totalorder %s185, %s187
    %p191 = scmp.eq.s32.totalorder %s15, 0
    %p192 = por %p190, %p191
    %p193 = scmp.ne.s32.totalorder %s185, %s187
    %p194 = scmp.eq.s32.totalorder %s20, 1
    %p195 = por %p193, %p194
    %p196 = scmp.ne.s32.totalorder %s187, %s188
    %p197 = scmp.eq.s32.totalorder %s20, 0
    %p198 = por %p196, %p197
    %p199 = scmp.ne.s32.totalorder %s187, %s188
    %p200 = scmp.eq.s32.totalorder %s21, 1
    %p201 = por %p199, %p200
    %p203 = scmp.ne.s32.totalorder %s188, %s202
    %p204 = scmp.eq.s32.totalorder %s21, 0
    %p205 = por %p203, %p204
    %s207 = sadd.s32 %s206, 1
    %p210 = scmp.eq.s32.totalorder %s15, 1
    %p211 = scmp.ne.s32.totalorder %s206, %s208
    %p212 = scmp.eq.s32.totalorder %s15, 0
    %p213 = por %p211, %p212
    %p214 = scmp.ne.s32.totalorder %s206, %s208
    %p215 = scmp.eq.s32.totalorder %s20, 1
    %p216 = por %p214, %p215
    %p217 = scmp.ne.s32.totalorder %s208, %s209
    %p218 = scmp.eq.s32.totalorder %s20, 0
    %p219 = por %p217, %p218
    %p220 = scmp.ne.s32.totalorder %s208, %s209
    %p221 = scmp.eq.s32.totalorder %s21, 1
    %p222 = por %p220, %p221
    %p224 = scmp.ne.s32.totalorder %s209, %s223
    %p225 = scmp.eq.s32.totalorder %s21, 0
    %p226 = por %p224, %p225
    %s227 = ssub.s32 %s15, %s22
    %p228 = scmp.eq.s32.totalorder %s227, 0
    %s230 = sadd.s32 %s229, 1
    %s231 = scalar_select %p228, %s229, %s230
    %p234 = pneg %p228
    %p235 = scmp.eq.s32.totalorder %s15, 1
    %p236 = por %p234, %p235
    %p237 = scmp.ne.s32.totalorder %s229, %s232
    %p238 = scmp.eq.s32.totalorder %s15, 0
    %p239 = por %p237, %p238
    %p240 = scmp.ne.s32.totalorder %s229, %s232
    %p241 = scmp.eq.s32.totalorder %s20, 1
    %p242 = por %p240, %p241
    %p243 = scmp.ne.s32.totalorder %s232, %s233
    %p244 = scmp.eq.s32.totalorder %s20, 0
    %p245 = por %p243, %p244
    %p246 = scmp.ne.s32.totalorder %s232, %s233
    %p247 = scmp.eq.s32.totalorder %s21, 1
    %p248 = por %p246, %p247
    %p250 = scmp.ne.s32.totalorder %s233, %s249
    %p251 = scmp.eq.s32.totalorder %s21, 0
    %p252 = por %p250, %p251
    %p253 = scmp.le.s32.totalorder 1, %s15
    %p254 = scmp.lt.s32.totalorder %s15, 3
    %p255 = pnand %p253, %p254
    %p256 = pneg %p255
    // Predicated region
    $region9: #{encoder_projector_qformer.12} parent=5 // pred_check
      _
    $region10: #{encoder_projector_qformer.12} parent=5 // pred_check_branch
      %258 = sbr.rel (%p255) target = $region12
    $region11: #{encoder_projector_qformer.12} parent=5 // pred_region
      %s259 = ssub.s32 %s15, 1
      // Predicated region
      $region13: #{encoder_projector_qformer.12} parent=11 // pred_check
        %p260 = pneg %p62
      $region14: #{encoder_projector_qformer.12} parent=11 // pred_check_branch
        %262 = sbr.rel (%p260) target = $region16
      $region15: #{encoder_projector_qformer.12} parent=11 // pred_region
        _
      $region16: #{encoder_projector_qformer.12} parent=11 // pred_fallthru
        _
      // Predicated region
      $region17: #{encoder_projector_qformer.12} parent=11 // pred_check
        %p263 = pneg %p83
      $region18: #{encoder_projector_qformer.12} parent=11 // pred_check_branch
        %265 = sbr.rel (%p263) target = $region20
      $region19: #{encoder_projector_qformer.12} parent=11 // pred_region
        _
      $region20: #{encoder_projector_qformer.12} parent=11 // pred_fallthru
        _
      // Predicated region
      $region21: #{encoder_projector_qformer.12} parent=11 // pred_check
        %p266 = pneg %p156
      $region22: #{encoder_projector_qformer.12} parent=11 // pred_check_branch
        %268 = sbr.rel (%p266) target = $region24
      $region23: #{encoder_projector_qformer.12} parent=11 // pred_region
        _
      $region24: #{encoder_projector_qformer.12} parent=11 // pred_fallthru
        _
      // Predicated region
      $region25: #{encoder_projector_qformer.12} parent=11 // pred_check
        %p269 = pneg %p177
      $region26: #{encoder_projector_qformer.12} parent=11 // pred_check_branch
        %271 = sbr.rel (%p269) target = $region28
      $region27: #{encoder_projector_qformer.12} parent=11 // pred_region
        _
      $region28: #{encoder_projector_qformer.12} parent=11 // pred_fallthru
        _
      // Predicated region
      $region29: #{encoder_projector_qformer.12} parent=11 // pred_check
        %p272 = pneg %p198
      $region30: #{encoder_projector_qformer.12} parent=11 // pred_check_branch
        %274 = sbr.rel (%p272) target = $region32
      $region31: #{encoder_projector_qformer.12} parent=11 // pred_region
        _
      $region32: #{encoder_projector_qformer.12} parent=11 // pred_fallthru
        _
      // Predicated region
      $region33: #{encoder_projector_qformer.12} parent=11 // pred_check
        %p275 = pneg %p219
      $region34: #{encoder_projector_qformer.12} parent=11 // pred_check_branch
        %277 = sbr.rel (%p275) target = $region36
      $region35: #{encoder_projector_qformer.12} parent=11 // pred_region
        _
      $region36: #{encoder_projector_qformer.12} parent=11 // pred_fallthru
        _
    $region12: #{encoder_projector_qformer.12} parent=5 // pred_fallthru
      _
    %p278 = scmp.lt.s32.totalorder %s15, 2
    // Predicated region
    $region37: #{encoder_projector_qformer.12} parent=5 // pred_check
      %p279 = pneg %p278
    $region38: #{encoder_projector_qformer.12} parent=5 // pred_check_branch
      %281 = sbr.rel (%p279) target = $region40
    $region39: #{encoder_projector_qformer.12} parent=5 // pred_region
      // Predicated region
      $region41: #{encoder_projector_qformer.12} parent=39 // pred_check
        %p282 = pneg %p35
      $region42: #{encoder_projector_qformer.12} parent=39 // pred_check_branch
        %284 = sbr.rel (%p282) target = $region44
      $region43: #{encoder_projector_qformer.12} parent=39 // pred_region
        %p285 = scmp.lt.s32.totalorder %s15, 1
        %s286 = scalar_select %p285, %s15, 1
        %s287 = smul.addr %s286, 8
        %s288 = smul.addr %s287, 8
        %s289 = scalar_lea.vmem %s0, %s288
      $region44: #{encoder_projector_qformer.12} parent=39 // pred_fallthru
        _
      // Predicated region
      $region45: #{encoder_projector_qformer.12} parent=39 // pred_check
        %p290 = pneg %p103
      $region46: #{encoder_projector_qformer.12} parent=39 // pred_check_branch
        %292 = sbr.rel (%p290) target = $region48
      $region47: #{encoder_projector_qformer.12} parent=39 // pred_region
        %p293 = scmp.lt.s32.totalorder %s15, 1
        %s294 = scalar_select %p293, %s15, 1
        %s295 = smul.addr %s294, 4
        %s296 = scalar_lea.vmem %s3, %s295
      $region48: #{encoder_projector_qformer.12} parent=39 // pred_fallthru
        _
      // Predicated region
      $region49: #{encoder_projector_qformer.12} parent=39 // pred_check
        %p297 = pneg %p129
      $region50: #{encoder_projector_qformer.12} parent=39 // pred_check_branch
        %299 = sbr.rel (%p297) target = $region52
      $region51: #{encoder_projector_qformer.12} parent=39 // pred_region
        %p300 = scmp.lt.s32.totalorder %s15, 1
        %s301 = scalar_select %p300, %s15, 1
        %s302 = scalar_lea.vmem %s4, %s301
      $region52: #{encoder_projector_qformer.12} parent=39 // pred_fallthru
        _
    $region40: #{encoder_projector_qformer.12} parent=5 // pred_fallthru
      _
    %p303 = scmp.le.s32.totalorder 1, %s15
    %p304 = scmp.lt.s32.totalorder %s15, 3
    %p305 = pnand %p303, %p304
    %p306 = pneg %p305
    // Predicated region
    $region53: #{encoder_projector_qformer.12} parent=5 // pred_check
      _
    $region54: #{encoder_projector_qformer.12} parent=5 // pred_check_branch
      %308 = sbr.rel (%p305) target = $region56
    $region55: #{encoder_projector_qformer.12} parent=5 // pred_region
      %s309 = ssub.s32 %s15, 1
      %p310 = scmp.lt.s32.totalorder %s20, 1
      %s311 = scalar_select %p310, %s20, 1
      %s312 = smul.addr %s311, 8
      %s313 = smul.addr %s312, 8
      %s314 = scalar_lea.vmem %s0, %s313
      %p315 = pneg %p41
      %p316 = pneg %p38
      %p317 = pneg %p62
      %p318 = pneg %p59
      %p319 = pneg %p83
      %p320 = pneg %p80
      %p321 = scmp.lt.s32.totalorder %s20, 1
      %s322 = scalar_select %p321, %s20, 1
      %s323 = smul.addr %s322, 4
      %s324 = scalar_lea.vmem %s3, %s323
      %p325 = pneg %p109
      %p326 = pneg %p106
      %p327 = scmp.lt.s32.totalorder %s20, 1
      %s328 = scalar_select %p327, %s20, 1
      %s329 = scalar_lea.vmem %s4, %s328
      %p330 = pneg %p135
      %p331 = pneg %p132
      %p332 = pneg %p156
      %p333 = pneg %p153
      %p334 = pneg %p177
      %p335 = pneg %p174
      %p336 = pneg %p198
      %p337 = pneg %p195
      %p338 = pneg %p219
      %p339 = pneg %p216
      %p340 = pneg %p245
      %p341 = pneg %p242
      %p342 = scmp.lt.s32.totalorder %s20, 1
      %s343 = scalar_select %p342, %s20, 1
      %s344 = smul.addr %s343, 8
      %s345 = smul.addr %s344, 8
      %s346 = scalar_lea.vmem %s9, %s345
      %p347 = scmp.lt.s32.totalorder %s20, 1
      %s348 = scalar_select %p347, %s20, 1
      %s349 = smul.addr %s348, 8
      %s350 = smul.addr %s349, 8
      %s351 = scalar_lea.vmem %s0, %s350
      %p352 = scmp.lt.s32.totalorder %s20, 1
      %s353 = scalar_select %p352, %s20, 1
      %s354 = smul.addr %s353, 4
      %s355 = scalar_lea.vmem %s3, %s354
      %p356 = scmp.lt.s32.totalorder %s20, 1
      %s357 = scalar_select %p356, %s20, 1
      %s358 = scalar_lea.vmem %s4, %s357
      %p359 = scmp.lt.s32.totalorder %s20, 1
      %s360 = scalar_select %p359, %s20, 1
      %s361 = smul.addr %s360, 8
      %s362 = smul.addr %s361, 8
      %s363 = scalar_lea.vmem %s9, %s362
      %v365 = vld [vmem:[%s351] sm:$0xff]
      %v366 = vld [vmem:[%s351 + $0x8] sm:$0xff]
      %v367 = vld [vmem:[%s351 + $0x10] sm:$0xff]
      %v368 = vld [vmem:[%s351 + $0x18] sm:$0xff]
      %v369 = vld [vmem:[%s351 + $0x20] sm:$0xff]
      %v370 = vld [vmem:[%s351 + $0x28] sm:$0xff]
      %v371 = vld [vmem:[%s351 + $0x30] sm:$0xff]
      %v372 = vld [vmem:[%s351 + $0x38] sm:$0xff]
      %v373 = vpack.c.bf16 %v366, %v365
      %v374 = vpack.c.bf16 %v368, %v367
      %v375 = vpack.c.bf16 %v370, %v369
      %v376 = vpack.c.bf16 %v372, %v371
      %v377 = vld [vmem:[%s1] sm:$0xf]
      %v378 = vld [vmem:[%s1 + $0x4] sm:$0xf]
      %v379 = vld [vmem:[%s1 + $0x8] sm:$0xf]
      %v380 = vld [vmem:[%s1 + $0xc] sm:$0xf]
      %v381 = vld [vmem:[%s1 + $0x10] sm:$0xf]
      %v382 = vld [vmem:[%s1 + $0x14] sm:$0xf]
      %v383 = vld [vmem:[%s1 + $0x18] sm:$0xf]
      %v384 = vld [vmem:[%s1 + $0x1c] sm:$0xf]
      %v385 = vld [vmem:[%s2] sm:$0x1]
      %v387 = vlaneseq
      %v388 = vshrl.u32 %v387, 7
      %v389 = vsub.s32 0, %v388
      %v390 = vrot.slane %v385, %v389
      %v400 = vunpack.c.l.b16 %v377
      %v401 = vunpack.c.l.b16 %v378
      %v402 = vunpack.c.l.b16 %v379
      %v403 = vunpack.c.l.b16 %v380
      %v404 = vunpack.c.l.b16 %v381
      %v405 = vunpack.c.l.b16 %v382
      %v406 = vunpack.c.l.b16 %v383
      %v407 = vunpack.c.l.b16 %v384
      %v408 = vpack.c.b16 %v401, %v400
      %v409 = vpack.c.b16 %v403, %v402
      %v410 = vpack.c.b16 %v405, %v404
      %v411 = vpack.c.b16 %v407, %v406
      %vm416 = vcmask 523264
      %v418 = vsel %vm416, %v373, 0
      %v421 = vsel %vm416, %v374, 0
      %v424 = vsel %vm416, %v375, 0
      %v427 = vsel %vm416, %v376, 0
      %429 = vmatprep.subr.bf16.mxu0 0
      %430 = vmatpush1.bf16.msra.mxu0 %v408
      %431 = vmatprep.subr.bf16.mxu0 0
      %432 = vmatpush1.bf16.msra.mxu0 %v409
      %433 = vmatprep.subr.bf16.mxu0 0
      %434 = vmatpush1.bf16.msra.mxu0 %v410
      %435 = vmatprep.subr.bf16.mxu0 0
      %436 = vmatpush1.bf16.msra.mxu0 %v411
      %437 = vmatprep.subr.bf16.mxu0 0
      %438 = vmatpush1.bf16.msra.mxu0 0
      %439 = vmatprep.subr.bf16.mxu0 0
      %440 = vmatpush1.bf16.msra.mxu0 0
      %441 = vmatprep.subr.bf16.mxu0 0
      %442 = vmatpush1.bf16.msra.mxu0 0
      %443 = vmatprep.subr.bf16.mxu0 0
      %444 = vmatpush1.bf16.msra.mxu0 0
      %445 = vmatprep.subr.bf16.mxu0 0
      %446 = vmatpush1.bf16.msra.mxu0 0
      %447 = vmatprep.subr.bf16.mxu0 0
      %448 = vmatpush1.bf16.msra.mxu0 0
      %449 = vmatprep.subr.bf16.mxu0 0
      %450 = vmatpush1.bf16.msra.mxu0 0
      %451 = vmatprep.subr.bf16.mxu0 0
      %452 = vmatpush1.bf16.msra.mxu0 0
      %453 = vmatprep.subr.bf16.mxu0 0
      %454 = vmatpush1.bf16.msra.mxu0 0
      %455 = vmatprep.subr.bf16.mxu0 0
      %456 = vmatpush1.bf16.msra.mxu0 0
      %457 = vmatprep.subr.bf16.mxu0 0
      %458 = vmatpush1.bf16.msra.mxu0 0
      %459 = vmatprep.subr.bf16.mxu0 0
      %460 = vmatpush1.bf16.msra.mxu0 0
      %461 = vmatprep.mubr.bf16.mxu0 0
      %462 = vmatmul.mubr.bf16.gmra.mrb[0].mxu0 %v418
      %v463 = vpop.f32.mrb[0].mxu0
      %v464 = vadd.f32 %v390, %v463
      %v465 = vpop.f32.mrb[0].mxu0
      %v466 = vpop.f32.mrb[0].mxu0
      %v467 = vadd.f32 %v390, %v466
      %v468 = vpop.f32.mrb[0].mxu0
      %469 = vmatprep.mubr.bf16.mxu0 0
      %470 = vmatmul.mubr.bf16.gmra.mrb[0].mxu0 %v421
      %v471 = vpop.f32.mrb[0].mxu0
      %v472 = vadd.f32 %v390, %v471
      %v473 = vpop.f32.mrb[0].mxu0
      %v474 = vpop.f32.mrb[0].mxu0
      %v475 = vadd.f32 %v390, %v474
      %v476 = vpop.f32.mrb[0].mxu0
      %477 = vmatprep.mubr.bf16.mxu0 0
      %478 = vmatmul.mubr.bf16.gmra.mrb[0].mxu0 %v424
      %v479 = vpop.f32.mrb[0].mxu0
      %v480 = vadd.f32 %v390, %v479
      %v481 = vpop.f32.mrb[0].mxu0
      %v482 = vpop.f32.mrb[0].mxu0
      %v483 = vadd.f32 %v390, %v482
      %v484 = vpop.f32.mrb[0].mxu0
      %485 = vmatprep.mubr.bf16.mxu0 0
      %486 = vmatmul.mubr.bf16.gmra.mrb[0].mxu0 %v427
      %v487 = vpop.f32.mrb[0].mxu0
      %v488 = vadd.f32 %v390, %v487
      %v489 = vpop.f32.mrb[0].mxu0
      %v490 = vpop.f32.mrb[0].mxu0
      %v491 = vadd.f32 %v390, %v490
      %v492 = vpop.f32.mrb[0].mxu0
      %493 = vdwg.mxu0
      %v494 = vpack.c.bf16 %v467, %v464
      %v495 = vpack.c.bf16 %v475, %v472
      %v496 = vpack.c.bf16 %v483, %v480
      %v497 = vpack.c.bf16 %v491, %v488
      %498 = vst.msk [vmem:[#allocation2] sm:$0xff] %vm416, %v494
      %499 = vst.msk [vmem:[#allocation2 + $0x8] sm:$0xff] %vm416, %v495
      %500 = vst.msk [vmem:[#allocation2 + $0x10] sm:$0xff] %vm416, %v496
      %501 = vst.msk [vmem:[#allocation2 + $0x18] sm:$0xff] %vm416, %v497
      %v502 = vld [vmem:[%s358] sm:$0x1]
      %v503 = vld [vmem:[#allocation2] sm:$0xff]
      %v504 = vld [vmem:[#allocation2 + $0x8] sm:$0xff]
      %v505 = vld [vmem:[#allocation2 + $0x10] sm:$0xff]
      %v506 = vld [vmem:[#allocation2 + $0x18] sm:$0xff]
      %v507 = vld [vmem:[%s355] sm:$0xf]
      %v509 = vlaneseq
      %v510 = vshrl.u32 %v509, 7
      %v511 = vsub.s32 0, %v510
      %v512 = vrot.slane %v502, %v511
      %vm514 = vcmask 130048
      %v516 = vsel %vm514, %v503, 0
      %v519 = vsel %vm514, %v504, 0
      %v522 = vsel %vm514, %v505, 0
      %v525 = vsel %vm514, %v506, 0
      %v528 = vsel %vm514, %v507, 0
      %530 = vmatprep.subr.bf16.mxu0 0
      %531 = vmatpush1.bf16.xpose.msra.mxu0 %v528
      %532 = vmatprep.subr.bf16.mxu0 0
      %533 = vmatpush1.bf16.xpose.msra.mxu0 0
      %534 = vmatprep.subr.bf16.mxu0 0
      %535 = vmatpush1.bf16.xpose.msra.mxu0 0
      %536 = vmatprep.subr.bf16.mxu0 0
      %537 = vmatpush1.bf16.xpose.msra.mxu0 0
      %538 = vmatprep.subr.bf16.mxu0 0
      %539 = vmatpush1.bf16.xpose.msra.mxu0 0
      %540 = vmatprep.subr.bf16.mxu0 0
      %541 = vmatpush1.bf16.xpose.msra.mxu0 0
      %542 = vmatprep.subr.bf16.mxu0 0
      %543 = vmatpush1.bf16.xpose.msra.mxu0 0
      %544 = vmatprep.subr.bf16.mxu0 0
      %545 = vmatpush1.bf16.xpose.msra.mxu0 0
      %546 = vmatprep.subr.bf16.mxu0 0
      %547 = vmatpush1.bf16.xpose.msra.mxu0 0
      %548 = vmatprep.subr.bf16.mxu0 0
      %549 = vmatpush1.bf16.xpose.msra.mxu0 0
      %550 = vmatprep.subr.bf16.mxu0 0
      %551 = vmatpush1.bf16.xpose.msra.mxu0 0
      %552 = vmatprep.subr.bf16.mxu0 0
      %553 = vmatpush1.bf16.xpose.msra.mxu0 0
      %554 = vmatprep.subr.bf16.mxu0 0
      %555 = vmatpush1.bf16.xpose.msra.mxu0 0
      %556 = vmatprep.subr.bf16.mxu0 0
      %557 = vmatpush1.bf16.xpose.msra.mxu0 0
      %558 = vmatprep.subr.bf16.mxu0 0
      %559 = vmatpush1.bf16.xpose.msra.mxu0 0
      %560 = vmatprep.subr.bf16.mxu0 0
      %561 = vmatpush1.bf16.xpose.msra.mxu0 0
      %562 = vmatprep.mubr.bf16.mxu0 0
      %563 = vmatmul.mubr.bf16.gmra.mrb[0].mxu0 %v516
      %v564 = vpop.f32.mrb[0].mxu0
      %v565 = vadd.f32 %v512, %v564
      %v566 = vpop.f32.mrb[0].mxu0
      %v567 = vpop.f32.mrb[0].mxu0
      %v568 = vadd.f32 %v512, %v567
      %v569 = vpop.f32.mrb[0].mxu0
      %570 = vmatprep.mubr.bf16.mxu0 0
      %571 = vmatmul.mubr.bf16.gmra.mrb[0].mxu0 %v519
      %v572 = vpop.f32.mrb[0].mxu0
      %v573 = vadd.f32 %v512, %v572
      %v574 = vpop.f32.mrb[0].mxu0
      %v575 = vpop.f32.mrb[0].mxu0
      %v576 = vadd.f32 %v512, %v575
      %v577 = vpop.f32.mrb[0].mxu0
      %578 = vmatprep.mubr.bf16.mxu0 0
      %579 = vmatmul.mubr.bf16.gmra.mrb[0].mxu0 %v522
      %v580 = vpop.f32.mrb[0].mxu0
      %v581 = vadd.f32 %v512, %v580
      %v582 = vpop.f32.mrb[0].mxu0
      %v583 = vpop.f32.mrb[0].mxu0
      %v584 = vadd.f32 %v512, %v583
      %v585 = vpop.f32.mrb[0].mxu0
      %586 = vmatprep.mubr.bf16.mxu0 0
      %587 = vmatmul.mubr.bf16.gmra.mrb[0].mxu0 %v525
      %v588 = vpop.f32.mrb[0].mxu0
      %v589 = vadd.f32 %v512, %v588
      %v590 = vpop.f32.mrb[0].mxu0
      %v591 = vpop.f32.mrb[0].mxu0
      %v592 = vadd.f32 %v512, %v591
      %v593 = vpop.f32.mrb[0].mxu0
      %594 = vdwg.mxu0
      %vm595 = vcmask 64512
      %v596 = vsel %vm595, %v565, -inf
      %597 = vmax.xlane.f32.xlu0 %v596
      %v598 = vpop.xlane.xlu0 %597
      %v599 = vsel %vm595, %v568, -inf
      %600 = vmax.xlane.f32.xlu0 %v599
      %v601 = vpop.xlane.xlu0 %600
      %v602 = vsel %vm595, %v573, -inf
      %603 = vmax.xlane.f32.xlu0 %v602
      %v604 = vpop.xlane.xlu0 %603
      %v605 = vsel %vm595, %v576, -inf
      %606 = vmax.xlane.f32.xlu0 %v605
      %v607 = vpop.xlane.xlu0 %606
      %v608 = vsel %vm595, %v581, -inf
      %609 = vmax.xlane.f32.xlu0 %v608
      %v610 = vpop.xlane.xlu0 %609
      %v611 = vsel %vm595, %v584, -inf
      %612 = vmax.xlane.f32.xlu0 %v611
      %v613 = vpop.xlane.xlu0 %612
      %v614 = vsel %vm595, %v589, -inf
      %615 = vmax.xlane.f32.xlu0 %v614
      %v616 = vpop.xlane.xlu0 %615
      %v617 = vsel %vm595, %v592, -inf
      %618 = vmax.xlane.f32.xlu0 %v617
      %v619 = vpop.xlane.xlu0 %618
      %v620 = vsub.f32 %v565, %v598
      %v621 = vsub.f32 %v568, %v601
      %v622 = vsub.f32 %v573, %v604
      %v623 = vsub.f32 %v576, %v607
      %v624 = vsub.f32 %v581, %v610
      %v625 = vsub.f32 %v584, %v613
      %v626 = vsub.f32 %v589, %v616
      %v627 = vsub.f32 %v592, %v619
      %v628 = vmul.f32 %v620, 1.442695
      %v629 = vpow.pop %v628
      %v630 = vmul.f32 %v621, 1.442695
      %v631 = vpow.pop %v630
      %v632 = vmul.f32 %v622, 1.442695
      %v633 = vpow.pop %v632
      %v634 = vmul.f32 %v623, 1.442695
      %v635 = vpow.pop %v634
      %v636 = vmul.f32 %v624, 1.442695
      %v637 = vpow.pop %v636
      %v638 = vmul.f32 %v625, 1.442695
      %v639 = vpow.pop %v638
      %v640 = vmul.f32 %v626, 1.442695
      %v641 = vpow.pop %v640
      %v642 = vmul.f32 %v627, 1.442695
      %v643 = vpow.pop %v642
      %v644 = vsel %vm595, %v629, 0.0
      %645 = vadd.xlane.f32.xlu0 %v644
      %v646 = vpop.xlane.xlu0 %645
      %v647 = vsel %vm595, %v631, 0.0
      %648 = vadd.xlane.f32.xlu0 %v647
      %v649 = vpop.xlane.xlu0 %648
      %v650 = vsel %vm595, %v633, 0.0
      %651 = vadd.xlane.f32.xlu0 %v650
      %v652 = vpop.xlane.xlu0 %651
      %v653 = vsel %vm595, %v635, 0.0
      %654 = vadd.xlane.f32.xlu0 %v653
      %v655 = vpop.xlane.xlu0 %654
      %v656 = vsel %vm595, %v637, 0.0
      %657 = vadd.xlane.f32.xlu0 %v656
      %v658 = vpop.xlane.xlu0 %657
      %v659 = vsel %vm595, %v639, 0.0
      %660 = vadd.xlane.f32.xlu0 %v659
      %v661 = vpop.xlane.xlu0 %660
      %v662 = vsel %vm595, %v641, 0.0
      %663 = vadd.xlane.f32.xlu0 %v662
      %v664 = vpop.xlane.xlu0 %663
      %v665 = vsel %vm595, %v643, 0.0
      %666 = vadd.xlane.f32.xlu0 %v665
      %v667 = vpop.xlane.xlu0 %666
      %v668 = vpack.c.bf16 %v631, %v629
      %v669 = vpack.c.bf16 %v635, %v633
      %v670 = vpack.c.bf16 %v639, %v637
      %v671 = vpack.c.bf16 %v643, %v641
      %v673 = vunpack.c.l.b16 %v507
      %v674 = vpack.c.b16 %v673, %v673
      %675 = vrot.lane.b32.xlu0 %v674, 64
      %v676 = vpop.permute.xlu0 %675
      %v678 = vsel %vm595, %v668, 0
      %v681 = vsel %vm595, %v669, 0
      %v684 = vsel %vm595, %v670, 0
      %v687 = vsel %vm595, %v671, 0
      %vm689 = vcmask 1043456
      %v691 = vsel %vm689, %v676, 0
      %693 = vmatprep.subr.bf16.mxu0 0
      %694 = vmatpush1.bf16.msra.mxu0 %v691
      %695 = vmatprep.subr.bf16.mxu0 0
      %696 = vmatpush1.bf16.msra.mxu0 0
      %697 = vmatprep.subr.bf16.mxu0 0
      %698 = vmatpush1.bf16.msra.mxu0 0
      %699 = vmatprep.subr.bf16.mxu0 0
      %700 = vmatpush1.bf16.msra.mxu0 0
      %701 = vmatprep.subr.bf16.mxu0 0
      %702 = vmatpush1.bf16.msra.mxu0 0
      %703 = vmatprep.subr.bf16.mxu0 0
      %704 = vmatpush1.bf16.msra.mxu0 0
      %705 = vmatprep.subr.bf16.mxu0 0
      %706 = vmatpush1.bf16.msra.mxu0 0
      %707 = vmatprep.subr.bf16.mxu0 0
      %708 = vmatpush1.bf16.msra.mxu0 0
      %709 = vmatprep.subr.bf16.mxu0 0
      %710 = vmatpush1.bf16.msra.mxu0 0
      %711 = vmatprep.subr.bf16.mxu0 0
      %712 = vmatpush1.bf16.msra.mxu0 0
      %713 = vmatprep.subr.bf16.mxu0 0
      %714 = vmatpush1.bf16.msra.mxu0 0
      %715 = vmatprep.subr.bf16.mxu0 0
      %716 = vmatpush1.bf16.msra.mxu0 0
      %717 = vmatprep.subr.bf16.mxu0 0
      %718 = vmatpush1.bf16.msra.mxu0 0
      %719 = vmatprep.subr.bf16.mxu0 0
      %720 = vmatpush1.bf16.msra.mxu0 0
      %721 = vmatprep.subr.bf16.mxu0 0
      %722 = vmatpush1.bf16.msra.mxu0 0
      %723 = vmatprep.subr.bf16.mxu0 0
      %724 = vmatpush1.bf16.msra.mxu0 0
      %725 = vmatprep.mubr.bf16.mxu0 0
      %726 = vmatmul.mubr.bf16.gmra.mrb[0].mxu0 %v678
      %v727 = vpop.f32.mrb[0].mxu0
      %v728 = vadd.f32 0.0, %v727
      %v729 = vpop.f32.mrb[0].mxu0
      %v730 = vpop.f32.mrb[0].mxu0
      %v731 = vadd.f32 0.0, %v730
      %v732 = vpop.f32.mrb[0].mxu0
      %733 = vmatprep.mubr.bf16.mxu0 0
      %734 = vmatmul.mubr.bf16.gmra.mrb[0].mxu0 %v681
      %v735 = vpop.f32.mrb[0].mxu0
      %v736 = vadd.f32 0.0, %v735
      %v737 = vpop.f32.mrb[0].mxu0
      %v738 = vpop.f32.mrb[0].mxu0
      %v739 = vadd.f32 0.0, %v738
      %v740 = vpop.f32.mrb[0].mxu0
      %741 = vmatprep.mubr.bf16.mxu0 0
      %742 = vmatmul.mubr.bf16.gmra.mrb[0].mxu0 %v684
      %v743 = vpop.f32.mrb[0].mxu0
      %v744 = vadd.f32 0.0, %v743
      %v745 = vpop.f32.mrb[0].mxu0
      %v746 = vpop.f32.mrb[0].mxu0
      %v747 = vadd.f32 0.0, %v746
      %v748 = vpop.f32.mrb[0].mxu0
      %749 = vmatprep.mubr.bf16.mxu0 0
      %750 = vmatmul.mubr.bf16.gmra.mrb[0].mxu0 %v687
      %v751 = vpop.f32.mrb[0].mxu0
      %v752 = vadd.f32 0.0, %v751
      %v753 = vpop.f32.mrb[0].mxu0
      %v754 = vpop.f32.mrb[0].mxu0
      %v755 = vadd.f32 0.0, %v754
      %v756 = vpop.f32.mrb[0].mxu0
      %757 = vdwg.mxu0
      %v758 = vrcp.pop %v646
      %v759 = vrcp.pop %v649
      %v760 = vrcp.pop %v652
      %v761 = vrcp.pop %v655
      %v762 = vrcp.pop %v658
      %v763 = vrcp.pop %v661
      %v764 = vrcp.pop %v664
      %v765 = vrcp.pop %v667
      %v766 = vmul.f32 %v728, %v758
      %v767 = vmul.f32 %v731, %v759
      %v768 = vmul.f32 %v736, %v760
      %v769 = vmul.f32 %v739, %v761
      %v770 = vmul.f32 %v744, %v762
      %v771 = vmul.f32 %v747, %v763
      %v772 = vmul.f32 %v752, %v764
      %v773 = vmul.f32 %v755, %v765
      %v774 = vpack.c.bf16 %v767, %v766
      %v775 = vpack.c.bf16 %v769, %v768
      %v776 = vpack.c.bf16 %v771, %v770
      %v777 = vpack.c.bf16 %v773, %v772
      %778 = vst.msk [vmem:[#allocation3] sm:$0xff] %vm514, %v774
      %779 = vst.msk [vmem:[#allocation3 + $0x8] sm:$0xff] %vm514, %v775
      %780 = vst.msk [vmem:[#allocation3 + $0x10] sm:$0xff] %vm514, %v776
      %781 = vst.msk [vmem:[#allocation3 + $0x18] sm:$0xff] %vm514, %v777
      %v782 = vld [vmem:[#allocation2] sm:$0xff]
      %v783 = vld [vmem:[#allocation2 + $0x8] sm:$0xff]
      %v784 = vld [vmem:[#allocation2 + $0x10] sm:$0xff]
      %v785 = vld [vmem:[#allocation2 + $0x18] sm:$0xff]
      %v786 = vld [vmem:[%s355] sm:$0xf]
      %791 = vrot.lane.b32.xlu0 %v782, 112
      %v792 = vpop.permute.xlu0 %791
      %793 = vrot.lane.b32.xlu0 %v783, 112
      %v794 = vpop.permute.xlu0 %793
      %795 = vrot.lane.b32.xlu0 %v784, 112
      %v796 = vpop.permute.xlu0 %795
      %797 = vrot.lane.b32.xlu0 %v785, 112
      %v798 = vpop.permute.xlu0 %797
      %v800 = vunpack.c.l.b16 %v786
      %v801 = vpack.c.b16 %v800, %v800
      %802 = vrot.lane.b32.xlu0 %v801, 112
      %v803 = vpop.permute.xlu0 %802
      %v805 = vsel %vm514, %v792, 0
      %v808 = vsel %vm514, %v794, 0
      %v811 = vsel %vm514, %v796, 0
      %v814 = vsel %vm514, %v798, 0
      %v817 = vsel %vm514, %v803, 0
      %819 = vmatprep.subr.bf16.mxu0 0
      %820 = vmatpush1.bf16.xpose.msra.mxu0 %v817
      %821 = vmatprep.subr.bf16.mxu0 0
      %822 = vmatpush1.bf16.xpose.msra.mxu0 0
      %823 = vmatprep.subr.bf16.mxu0 0
      %824 = vmatpush1.bf16.xpose.msra.mxu0 0
      %825 = vmatprep.subr.bf16.mxu0 0
      %826 = vmatpush1.bf16.xpose.msra.mxu0 0
      %827 = vmatprep.subr.bf16.mxu0 0
      %828 = vmatpush1.bf16.xpose.msra.mxu0 0
      %829 = vmatprep.subr.bf16.mxu0 0
      %830 = vmatpush1.bf16.xpose.msra.mxu0 0
      %831 = vmatprep.subr.bf16.mxu0 0
      %832 = vmatpush1.bf16.xpose.msra.mxu0 0
      %833 = vmatprep.subr.bf16.mxu0 0
      %834 = vmatpush1.bf16.xpose.msra.mxu0 0
      %835 = vmatprep.subr.bf16.mxu0 0
      %836 = vmatpush1.bf16.xpose.msra.mxu0 0
      %837 = vmatprep.subr.bf16.mxu0 0
      %838 = vmatpush1.bf16.xpose.msra.mxu0 0
      %839 = vmatprep.subr.bf16.mxu0 0
      %840 = vmatpush1.bf16.xpose.msra.mxu0 0
      %841 = vmatprep.subr.bf16.mxu0 0
      %842 = vmatpush1.bf16.xpose.msra.mxu0 0
      %843 = vmatprep.subr.bf16.mxu0 0
      %844 = vmatpush1.bf16.xpose.msra.mxu0 0
      %845 = vmatprep.subr.bf16.mxu0 0
      %846 = vmatpush1.bf16.xpose.msra.mxu0 0
      %847 = vmatprep.subr.bf16.mxu0 0
      %848 = vmatpush1.bf16.xpose.msra.mxu0 0
      %849 = vmatprep.subr.bf16.mxu0 0
      %850 = vmatpush1.bf16.xpose.msra.mxu0 0
      %851 = vmatprep.mubr.bf16.mxu0 0
      %852 = vmatmul.mubr.bf16.gmra.mrb[0].mxu0 %v805
      %v853 = vpop.f32.mrb[0].mxu0
      %v854 = vadd.f32 %v512, %v853
      %v855 = vpop.f32.mrb[0].mxu0
      %v856 = vpop.f32.mrb[0].mxu0
      %v857 = vadd.f32 %v512, %v856
      %v858 = vpop.f32.mrb[0].mxu0
      %859 = vmatprep.mubr.bf16.mxu0 0
      %860 = vmatmul.mubr.bf16.gmra.mrb[0].mxu0 %v808
      %v861 = vpop.f32.mrb[0].mxu0
      %v862 = vadd.f32 %v512, %v861
      %v863 = vpop.f32.mrb[0].mxu0
      %v864 = vpop.f32.mrb[0].mxu0
      %v865 = vadd.f32 %v512, %v864
      %v866 = vpop.f32.mrb[0].mxu0
      %867 = vmatprep.mubr.bf16.mxu0 0
      %868 = vmatmul.mubr.bf16.gmra.mrb[0].mxu0 %v811
      %v869 = vpop.f32.mrb[0].mxu0
      %v870 = vadd.f32 %v512, %v869
      %v871 = vpop.f32.mrb[0].mxu0
      %v872 = vpop.f32.mrb[0].mxu0
      %v873 = vadd.f32 %v512, %v872
      %v874 = vpop.f32.mrb[0].mxu0
      %875 = vmatprep.mubr.bf16.mxu0 0
      %876 = vmatmul.mubr.bf16.gmra.mrb[0].mxu0 %v814
      %v877 = vpop.f32.mrb[0].mxu0
      %v878 = vadd.f32 %v512, %v877
      %v879 = vpop.f32.mrb[0].mxu0
      %v880 = vpop.f32.mrb[0].mxu0
      %v881 = vadd.f32 %v512, %v880
      %v882 = vpop.f32.mrb[0].mxu0
      %883 = vdwg.mxu0
      %v884 = vsel %vm595, %v854, -inf
      %885 = vmax.xlane.f32.xlu0 %v884
      %v886 = vpop.xlane.xlu0 %885
      %v887 = vsel %vm595, %v857, -inf
      %888 = vmax.xlane.f32.xlu0 %v887
      %v889 = vpop.xlane.xlu0 %888
      %v890 = vsel %vm595, %v862, -inf
      %891 = vmax.xlane.f32.xlu0 %v890
      %v892 = vpop.xlane.xlu0 %891
      %v893 = vsel %vm595, %v865, -inf
      %894 = vmax.xlane.f32.xlu0 %v893
      %v895 = vpop.xlane.xlu0 %894
      %v896 = vsel %vm595, %v870, -inf
      %897 = vmax.xlane.f32.xlu0 %v896
      %v898 = vpop.xlane.xlu0 %897
      %v899 = vsel %vm595, %v873, -inf
      %900 = vmax.xlane.f32.xlu0 %v899
      %v901 = vpop.xlane.xlu0 %900
      %v902 = vsel %vm595, %v878, -inf
      %903 = vmax.xlane.f32.xlu0 %v902
      %v904 = vpop.xlane.xlu0 %903
      %v905 = vsel %vm595, %v881, -inf
      %906 = vmax.xlane.f32.xlu0 %v905
      %v907 = vpop.xlane.xlu0 %906
      %v908 = vsub.f32 %v854, %v886
      %v909 = vsub.f32 %v857, %v889
      %v910 = vsub.f32 %v862, %v892
      %v911 = vsub.f32 %v865, %v895
      %v912 = vsub.f32 %v870, %v898
      %v913 = vsub.f32 %v873, %v901
      %v914 = vsub.f32 %v878, %v904
      %v915 = vsub.f32 %v881, %v907
      %v916 = vmul.f32 %v908, 1.442695
      %v917 = vpow.pop %v916
      %v918 = vmul.f32 %v909, 1.442695
      %v919 = vpow.pop %v918
      %v920 = vmul.f32 %v910, 1.442695
      %v921 = vpow.pop %v920
      %v922 = vmul.f32 %v911, 1.442695
      %v923 = vpow.pop %v922
      %v924 = vmul.f32 %v912, 1.442695
      %v925 = vpow.pop %v924
      %v926 = vmul.f32 %v913, 1.442695
      %v927 = vpow.pop %v926
      %v928 = vmul.f32 %v914, 1.442695
      %v929 = vpow.pop %v928
      %v930 = vmul.f32 %v915, 1.442695
      %v931 = vpow.pop %v930
      %v932 = vsel %vm595, %v917, 0.0
      %933 = vadd.xlane.f32.xlu0 %v932
      %v934 = vpop.xlane.xlu0 %933
      %v935 = vsel %vm595, %v919, 0.0
      %936 = vadd.xlane.f32.xlu0 %v935
      %v937 = vpop.xlane.xlu0 %936
      %v938 = vsel %vm595, %v921, 0.0
      %939 = vadd.xlane.f32.xlu0 %v938
      %v940 = vpop.xlane.xlu0 %939
      %v941 = vsel %vm595, %v923, 0.0
      %942 = vadd.xlane.f32.xlu0 %v941
      %v943 = vpop.xlane.xlu0 %942
      %v944 = vsel %vm595, %v925, 0.0
      %945 = vadd.xlane.f32.xlu0 %v944
      %v946 = vpop.xlane.xlu0 %945
      %v947 = vsel %vm595, %v927, 0.0
      %948 = vadd.xlane.f32.xlu0 %v947
      %v949 = vpop.xlane.xlu0 %948
      %v950 = vsel %vm595, %v929, 0.0
      %951 = vadd.xlane.f32.xlu0 %v950
      %v952 = vpop.xlane.xlu0 %951
      %v953 = vsel %vm595, %v931, 0.0
      %954 = vadd.xlane.f32.xlu0 %v953
      %v955 = vpop.xlane.xlu0 %954
      %v956 = vpack.c.bf16 %v919, %v917
      %v957 = vpack.c.bf16 %v923, %v921
      %v958 = vpack.c.bf16 %v927, %v925
      %v959 = vpack.c.bf16 %v931, %v929
      %960 = vrot.lane.b32.xlu0 %v801, 48
      %v961 = vpop.permute.xlu0 %960
      %v963 = vsel %vm595, %v956, 0
      %v966 = vsel %vm595, %v957, 0
      %v969 = vsel %vm595, %v958, 0
      %v972 = vsel %vm595, %v959, 0
      %v975 = vsel %vm689, %v961, 0
      %977 = vmatprep.subr.bf16.mxu0 0
      %978 = vmatpush1.bf16.msra.mxu0 %v975
      %979 = vmatprep.subr.bf16.mxu0 0
      %980 = vmatpush1.bf16.msra.mxu0 0
      %981 = vmatprep.subr.bf16.mxu0 0
      %982 = vmatpush1.bf16.msra.mxu0 0
      %983 = vmatprep.subr.bf16.mxu0 0
      %984 = vmatpush1.bf16.msra.mxu0 0
      %985 = vmatprep.subr.bf16.mxu0 0
      %986 = vmatpush1.bf16.msra.mxu0 0
      %987 = vmatprep.subr.bf16.mxu0 0
      %988 = vmatpush1.bf16.msra.mxu0 0
      %989 = vmatprep.subr.bf16.mxu0 0
      %990 = vmatpush1.bf16.msra.mxu0 0
      %991 = vmatprep.subr.bf16.mxu0 0
      %992 = vmatpush1.bf16.msra.mxu0 0
      %993 = vmatprep.subr.bf16.mxu0 0
      %994 = vmatpush1.bf16.msra.mxu0 0
      %995 = vmatprep.subr.bf16.mxu0 0
      %996 = vmatpush1.bf16.msra.mxu0 0
      %997 = vmatprep.subr.bf16.mxu0 0
      %998 = vmatpush1.bf16.msra.mxu0 0
      %999 = vmatprep.subr.bf16.mxu0 0
      %1000 = vmatpush1.bf16.msra.mxu0 0
      %1001 = vmatprep.subr.bf16.mxu0 0
      %1002 = vmatpush1.bf16.msra.mxu0 0
      %1003 = vmatprep.subr.bf16.mxu0 0
      %1004 = vmatpush1.bf16.msra.mxu0 0
      %1005 = vmatprep.subr.bf16.mxu0 0
      %1006 = vmatpush1.bf16.msra.mxu0 0
      %1007 = vmatprep.subr.bf16.mxu0 0
      %1008 = vmatpush1.bf16.msra.mxu0 0
      %1009 = vmatprep.mubr.bf16.mxu0 0
      %1010 = vmatmul.mubr.bf16.gmra.mrb[0].mxu0 %v963
      %v1011 = vpop.f32.mrb[0].mxu0
      %v1012 = vadd.f32 0.0, %v1011
      %v1013 = vpop.f32.mrb[0].mxu0
      %v1014 = vpop.f32.mrb[0].mxu0
      %v1015 = vadd.f32 0.0, %v1014
      %v1016 = vpop.f32.mrb[0].mxu0
      %1017 = vmatprep.mubr.bf16.mxu0 0
      %1018 = vmatmul.mubr.bf16.gmra.mrb[0].mxu0 %v966
      %v1019 = vpop.f32.mrb[0].mxu0
      %v1020 = vadd.f32 0.0, %v1019
      %v1021 = vpop.f32.mrb[0].mxu0
      %v1022 = vpop.f32.mrb[0].mxu0
      %v1023 = vadd.f32 0.0, %v1022
      %v1024 = vpop.f32.mrb[0].mxu0
      %1025 = vmatprep.mubr.bf16.mxu0 0
      %1026 = vmatmul.mubr.bf16.gmra.mrb[0].mxu0 %v969
      %v1027 = vpop.f32.mrb[0].mxu0
      %v1028 = vadd.f32 0.0, %v1027
      %v1029 = vpop.f32.mrb[0].mxu0
      %v1030 = vpop.f32.mrb[0].mxu0
      %v1031 = vadd.f32 0.0, %v1030
      %v1032 = vpop.f32.mrb[0].mxu0
      %1033 = vmatprep.mubr.bf16.mxu0 0
      %1034 = vmatmul.mubr.bf16.gmra.mrb[0].mxu0 %v972
      %v1035 = vpop.f32.mrb[0].mxu0
      %v1036 = vadd.f32 0.0, %v1035
      %v1037 = vpop.f32.mrb[0].mxu0
      %v1038 = vpop.f32.mrb[0].mxu0
      %v1039 = vadd.f32 0.0, %v1038
      %v1040 = vpop.f32.mrb[0].mxu0
      %1041 = vdwg.mxu0
      %v1042 = vrcp.pop %v934
      %v1043 = vrcp.pop %v937
      %v1044 = vrcp.pop %v940
      %v1045 = vrcp.pop %v943
      %v1046 = vrcp.pop %v946
      %v1047 = vrcp.pop %v949
      %v1048 = vrcp.pop %v952
      %v1049 = vrcp.pop %v955
      %v1050 = vmul.f32 %v1012, %v1042
      %v1051 = vmul.f32 %v1015, %v1043
      %v1052 = vmul.f32 %v1020, %v1044
      %v1053 = vmul.f32 %v1023, %v1045
      %v1054 = vmul.f32 %v1028, %v1046
      %v1055 = vmul.f32 %v1031, %v1047
      %v1056 = vmul.f32 %v1036, %v1048
      %v1057 = vmul.f32 %v1039, %v1049
      %v1058 = vpack.c.bf16 %v1051, %v1050
      %v1059 = vpack.c.bf16 %v1053, %v1052
      %v1060 = vpack.c.bf16 %v1055, %v1054
      %v1061 = vpack.c.bf16 %v1057, %v1056
      %1066 = vrot.lane.b32.xlu0 %v1058, 16
      %v1067 = vpop.permute.xlu0 %1066
      %1068 = vrot.lane.b32.xlu0 %v1059, 16
      %v1069 = vpop.permute.xlu0 %1068
      %1070 = vrot.lane.b32.xlu0 %v1060, 16
      %v1071 = vpop.permute.xlu0 %1070
      %1072 = vrot.lane.b32.xlu0 %v1061, 16
      %v1073 = vpop.permute.xlu0 %1072
      %vm1078 = vcmask 261248
      %1079 = vst.msk [vmem:[#allocation3] sm:$0xff] %vm1078, %v1067
      %1080 = vst.msk [vmem:[#allocation3 + $0x8] sm:$0xff] %vm1078, %v1069
      %1081 = vst.msk [vmem:[#allocation3 + $0x10] sm:$0xff] %vm1078, %v1071
      %1082 = vst.msk [vmem:[#allocation3 + $0x18] sm:$0xff] %vm1078, %v1073
      %v1083 = vld [vmem:[#allocation2] sm:$0xff]
      %v1084 = vld [vmem:[#allocation2 + $0x8] sm:$0xff]
      %v1085 = vld [vmem:[#allocation2 + $0x10] sm:$0xff]
      %v1086 = vld [vmem:[#allocation2 + $0x18] sm:$0xff]
      %v1087 = vld [vmem:[%s355] sm:$0xf]
      %1092 = vrot.lane.b32.xlu0 %v1083, 96
      %v1093 = vpop.permute.xlu0 %1092
      %1094 = vrot.lane.b32.xlu0 %v1084, 96
      %v1095 = vpop.permute.xlu0 %1094
      %1096 = vrot.lane.b32.xlu0 %v1085, 96
      %v1097 = vpop.permute.xlu0 %1096
      %1098 = vrot.lane.b32.xlu0 %v1086, 96
      %v1099 = vpop.permute.xlu0 %1098
      %v1101 = vunpack.c.l.b16 %v1087
      %v1102 = vpack.c.b16 %v1101, %v1101
      %1103 = vrot.lane.b32.xlu0 %v1102, 96
      %v1104 = vpop.permute.xlu0 %1103
      %v1106 = vsel %vm514, %v1093, 0
      %v1109 = vsel %vm514, %v1095, 0
      %v1112 = vsel %vm514, %v1097, 0
      %v1115 = vsel %vm514, %v1099, 0
      %v1118 = vsel %vm514, %v1104, 0
      %1120 = vmatprep.subr.bf16.mxu0 0
      %1121 = vmatpush1.bf16.xpose.msra.mxu0 %v1118
      %1122 = vmatprep.subr.bf16.mxu0 0
      %1123 = vmatpush1.bf16.xpose.msra.mxu0 0
      %1124 = vmatprep.subr.bf16.mxu0 0
      %1125 = vmatpush1.bf16.xpose.msra.mxu0 0
      %1126 = vmatprep.subr.bf16.mxu0 0
      %1127 = vmatpush1.bf16.xpose.msra.mxu0 0
      %1128 = vmatprep.subr.bf16.mxu0 0
      %1129 = vmatpush1.bf16.xpose.msra.mxu0 0
      %1130 = vmatprep.subr.bf16.mxu0 0
      %1131 = vmatpush1.bf16.xpose.msra.mxu0 0
      %1132 = vmatprep.subr.bf16.mxu0 0
      %1133 = vmatpush1.bf16.xpose.msra.mxu0 0
      %1134 = vmatprep.subr.bf16.mxu0 0
      %1135 = vmatpush1.bf16.xpose.msra.mxu0 0
      %1136 = vmatprep.subr.bf16.mxu0 0
      %1137 = vmatpush1.bf16.xpose.msra.mxu0 0
      %1138 = vmatprep.subr.bf16.mxu0 0
      %1139 = vmatpush1.bf16.xpose.msra.mxu0 0
      %1140 = vmatprep.subr.bf16.mxu0 0
      %1141 = vmatpush1.bf16.xpose.msra.mxu0 0
      %1142 = vmatprep.subr.bf16.mxu0 0
      %1143 = vmatpush1.bf16.xpose.msra.mxu0 0
      %1144 = vmatprep.subr.bf16.mxu0 0
      %1145 = vmatpush1.bf16.xpose.msra.mxu0 0
      %1146 = vmatprep.subr.bf16.mxu0 0
      %1147 = vmatpush1.bf16.xpose.msra.mxu0 0
      %1148 = vmatprep.subr.bf16.mxu0 0
      %1149 = vmatpush1.bf16.xpose.msra.mxu0 0
      %1150 = vmatprep.subr.bf16.mxu0 0
      %1151 = vmatpush1.bf16.xpose.msra.mxu0 0
      %1152 = vmatprep.mubr.bf16.mxu0 0
      %1153 = vmatmul.mubr.bf16.gmra.mrb[0].mxu0 %v1106
      %v1154 = vpop.f32.mrb[0].mxu0
      %v1155 = vadd.f32 %v512, %v1154
      %v1156 = vpop.f32.mrb[0].mxu0
      %v1157 = vpop.f32.mrb[0].mxu0
      %v1158 = vadd.f32 %v512, %v1157
      %v1159 = vpop.f32.mrb[0].mxu0
      %1160 = vmatprep.mubr.bf16.mxu0 0
      %1161 = vmatmul.mubr.bf16.gmra.mrb[0].mxu0 %v1109
      %v1162 = vpop.f32.mrb[0].mxu0
      %v1163 = vadd.f32 %v512, %v1162
      %v1164 = vpop.f32.mrb[0].mxu0
      %v1165 = vpop.f32.mrb[0].mxu0
      %v1166 = vadd.f32 %v512, %v1165
      %v1167 = vpop.f32.mrb[0].mxu0
      %1168 = vmatprep.mubr.bf16.mxu0 0
      %1169 = vmatmul.mubr.bf16.gmra.mrb[0].mxu0 %v1112
      %v1170 = vpop.f32.mrb[0].mxu0
      %v1171 = vadd.f32 %v512, %v1170
      %v1172 = vpop.f32.mrb[0].mxu0
      %v1173 = vpop.f32.mrb[0].mxu0
      %v1174 = vadd.f32 %v512, %v1173
      %v1175 = vpop.f32.mrb[0].mxu0
      %1176 = vmatprep.mubr.bf16.mxu0 0
      %1177 = vmatmul.mubr.bf16.gmra.mrb[0].mxu0 %v1115
      %v1178 = vpop.f32.mrb[0].mxu0
      %v1179 = vadd.f32 %v512, %v1178
      %v1180 = vpop.f32.mrb[0].mxu0
      %v1181 = vpop.f32.mrb[0].mxu0
      %v1182 = vadd.f32 %v512, %v1181
      %v1183 = vpop.f32.mrb[0].mxu0
      %1184 = vdwg.mxu0
      %v1185 = vsel %vm595, %v1155, -inf
      %1186 = vmax.xlane.f32.xlu0 %v1185
      %v1187 = vpop.xlane.xlu0 %1186
      %v1188 = vsel %vm595, %v1158, -inf
      %1189 = vmax.xlane.f32.xlu0 %v1188
      %v1190 = vpop.xlane.xlu0 %1189
      %v1191 = vsel %vm595, %v1163, -inf
      %1192 = vmax.xlane.f32.xlu0 %v1191
      %v1193 = vpop.xlane.xlu0 %1192
      %v1194 = vsel %vm595, %v1166, -inf
      %1195 = vmax.xlane.f32.xlu0 %v1194
      %v1196 = vpop.xlane.xlu0 %1195
      %v1197 = vsel %vm595, %v1171, -inf
      %1198 = vmax.xlane.f32.xlu0 %v1197
      %v1199 = vpop.xlane.xlu0 %1198
      %v1200 = vsel %vm595, %v1174, -inf
      %1201 = vmax.xlane.f32.xlu0 %v1200
      %v1202 = vpop.xlane.xlu0 %1201
      %v1203 = vsel %vm595, %v1179, -inf
      %1204 = vmax.xlane.f32.xlu0 %v1203
      %v1205 = vpop.xlane.xlu0 %1204
      %v1206 = vsel %vm595, %v1182, -inf
      %1207 = vmax.xlane.f32.xlu0 %v1206
      %v1208 = vpop.xlane.xlu0 %1207
      %v1209 = vsub.f32 %v1155, %v1187
      %v1210 = vsub.f32 %v1158, %v1190
      %v1211 = vsub.f32 %v1163, %v1193
      %v1212 = vsub.f32 %v1166, %v1196
      %v1213 = vsub.f32 %v1171, %v1199
      %v1214 = vsub.f32 %v1174, %v1202
      %v1215 = vsub.f32 %v1179, %v1205
      %v1216 = vsub.f32 %v1182, %v1208
      %v1217 = vmul.f32 %v1209, 1.442695
      %v1218 = vpow.pop %v1217
      %v1219 = vmul.f32 %v1210, 1.442695
      %v1220 = vpow.pop %v1219
      %v1221 = vmul.f32 %v1211, 1.442695
      %v1222 = vpow.pop %v1221
      %v1223 = vmul.f32 %v1212, 1.442695
      %v1224 = vpow.pop %v1223
      %v1225 = vmul.f32 %v1213, 1.442695
      %v1226 = vpow.pop %v1225
      %v1227 = vmul.f32 %v1214, 1.442695
      %v1228 = vpow.pop %v1227
      %v1229 = vmul.f32 %v1215, 1.442695
      %v1230 = vpow.pop %v1229
      %v1231 = vmul.f32 %v1216, 1.442695
      %v1232 = vpow.pop %v1231
      %v1233 = vsel %vm595, %v1218, 0.0
      %1234 = vadd.xlane.f32.xlu0 %v1233
      %v1235 = vpop.xlane.xlu0 %1234
      %v1236 = vsel %vm595, %v1220, 0.0
      %1237 = vadd.xlane.f32.xlu0 %v1236
      %v1238 = vpop.xlane.xlu0 %1237
      %v1239 = vsel %vm595, %v1222, 0.0
      %1240 = vadd.xlane.f32.xlu0 %v1239
      %v1241 = vpop.xlane.xlu0 %1240
      %v1242 = vsel %vm595, %v1224, 0.0
      %1243 = vadd.xlane.f32.xlu0 %v1242
      %v1244 = vpop.xlane.xlu0 %1243
      %v1245 = vsel %vm595, %v1226, 0.0
      %1246 = vadd.xlane.f32.xlu0 %v1245
      %v1247 = vpop.xlane.xlu0 %1246
      %v1248 = vsel %vm595, %v1228, 0.0
      %1249 = vadd.xlane.f32.xlu0 %v1248
      %v1250 = vpop.xlane.xlu0 %1249
      %v1251 = vsel %vm595, %v1230, 0.0
      %1252 = vadd.xlane.f32.xlu0 %v1251
      %v1253 = vpop.xlane.xlu0 %1252
      %v1254 = vsel %vm595, %v1232, 0.0
      %1255 = vadd.xlane.f32.xlu0 %v1254
      %v1256 = vpop.xlane.xlu0 %1255
      %v1257 = vpack.c.bf16 %v1220, %v1218
      %v1258 = vpack.c.bf16 %v1224, %v1222
      %v1259 = vpack.c.bf16 %v1228, %v1226
      %v1260 = vpack.c.bf16 %v1232, %v1230
      %1261 = vrot.lane.b32.xlu0 %v1102, 32
      %v1262 = vpop.permute.xlu0 %1261
      %v1264 = vsel %vm595, %v1257, 0
      %v1267 = vsel %vm595, %v1258, 0
      %v1270 = vsel %vm595, %v1259, 0
      %v1273 = vsel %vm595, %v1260, 0
      %v1276 = vsel %vm689, %v1262, 0
      %1278 = vmatprep.subr.bf16.mxu0 0
      %1279 = vmatpush1.bf16.msra.mxu0 %v1276
      %1280 = vmatprep.subr.bf16.mxu0 0
      %1281 = vmatpush1.bf16.msra.mxu0 0
      %1282 = vmatprep.subr.bf16.mxu0 0
      %1283 = vmatpush1.bf16.msra.mxu0 0
      %1284 = vmatprep.subr.bf16.mxu0 0
      %1285 = vmatpush1.bf16.msra.mxu0 0
      %1286 = vmatprep.subr.bf16.mxu0 0
      %1287 = vmatpush1.bf16.msra.mxu0 0
      %1288 = vmatprep.subr.bf16.mxu0 0
      %1289 = vmatpush1.bf16.msra.mxu0 0
      %1290 = vmatprep.subr.bf16.mxu0 0
      %1291 = vmatpush1.bf16.msra.mxu0 0
      %1292 = vmatprep.subr.bf16.mxu0 0
      %1293 = vmatpush1.bf16.msra.mxu0 0
      %1294 = vmatprep.subr.bf16.mxu0 0
      %1295 = vmatpush1.bf16.msra.mxu0 0
      %1296 = vmatprep.subr.bf16.mxu0 0
      %1297 = vmatpush1.bf16.msra.mxu0 0
      %1298 = vmatprep.subr.bf16.mxu0 0
      %1299 = vmatpush1.bf16.msra.mxu0 0
      %1300 = vmatprep.subr.bf16.mxu0 0
      %1301 = vmatpush1.bf16.msra.mxu0 0
      %1302 = vmatprep.subr.bf16.mxu0 0
      %1303 = vmatpush1.bf16.msra.mxu0 0
      %1304 = vmatprep.subr.bf16.mxu0 0
      %1305 = vmatpush1.bf16.msra.mxu0 0
      %1306 = vmatprep.subr.bf16.mxu0 0
      %1307 = vmatpush1.bf16.msra.mxu0 0
      %1308 = vmatprep.subr.bf16.mxu0 0
      %1309 = vmatpush1.bf16.msra.mxu0 0
      %1310 = vmatprep.mubr.bf16.mxu0 0
      %1311 = vmatmul.mubr.bf16.gmra.mrb[0].mxu0 %v1264
      %v1312 = vpop.f32.mrb[0].mxu0
      %v1313 = vadd.f32 0.0, %v1312
      %v1314 = vpop.f32.mrb[0].mxu0
      %v1315 = vpop.f32.mrb[0].mxu0
      %v1316 = vadd.f32 0.0, %v1315
      %v1317 = vpop.f32.mrb[0].mxu0
      %1318 = vmatprep.mubr.bf16.mxu0 0
      %1319 = vmatmul.mubr.bf16.gmra.mrb[0].mxu0 %v1267
      %v1320 = vpop.f32.mrb[0].mxu0
      %v1321 = vadd.f32 0.0, %v1320
      %v1322 = vpop.f32.mrb[0].mxu0
      %v1323 = vpop.f32.mrb[0].mxu0
      %v1324 = vadd.f32 0.0, %v1323
      %v1325 = vpop.f32.mrb[0].mxu0
      %1326 = vmatprep.mubr.bf16.mxu0 0
      %1327 = vmatmul.mubr.bf16.gmra.mrb[0].mxu0 %v1270
      %v1328 = vpop.f32.mrb[0].mxu0
      %v1329 = vadd.f32 0.0, %v1328
      %v1330 = vpop.f32.mrb[0].mxu0
      %v1331 = vpop.f32.mrb[0].mxu0
      %v1332 = vadd.f32 0.0, %v1331
      %v1333 = vpop.f32.mrb[0].mxu0
      %1334 = vmatprep.mubr.bf16.mxu0 0
      %1335 = vmatmul.mubr.bf16.gmra.mrb[0].mxu0 %v1273
      %v1336 = vpop.f32.mrb[0].mxu0
      %v1337 = vadd.f32 0.0, %v1336
      %v1338 = vpop.f32.mrb[0].mxu0
      %v1339 = vpop.f32.mrb[0].mxu0
      %v1340 = vadd.f32 0.0, %v1339
      %v1341 = vpop.f32.mrb[0].mxu0
      %1342 = vdwg.mxu0
      %v1343 = vrcp.pop %v1235
      %v1344 = vrcp.pop %v1238
      %v1345 = vrcp.pop %v1241
      %v1346 = vrcp.pop %v1244
      %v1347 = vrcp.pop %v1247
      %v1348 = vrcp.pop %v1250
      %v1349 = vrcp.pop %v1253
      %v1350 = vrcp.pop %v1256
      %v1351 = vmul.f32 %v1313, %v1343
      %v1352 = vmul.f32 %v1316, %v1344
      %v1353 = vmul.f32 %v1321, %v1345
      %v1354 = vmul.f32 %v1324, %v1346
      %v1355 = vmul.f32 %v1329, %v1347
      %v1356 = vmul.f32 %v1332, %v1348
      %v1357 = vmul.f32 %v1337, %v1349
      %v1358 = vmul.f32 %v1340, %v1350
      %v1359 = vpack.c.bf16 %v1352, %v1351
      %v1360 = vpack.c.bf16 %v1354, %v1353
      %v1361 = vpack.c.bf16 %v1356, %v1355
      %v1362 = vpack.c.bf16 %v1358, %v1357
      %1367 = vrot.lane.b32.xlu0 %v1359, 32
      %v1368 = vpop.permute.xlu0 %1367
      %1369 = vrot.lane.b32.xlu0 %v1360, 32
      %v1370 = vpop.permute.xlu0 %1369
      %1371 = vrot.lane.b32.xlu0 %v1361, 32
      %v1372 = vpop.permute.xlu0 %1371
      %1373 = vrot.lane.b32.xlu0 %v1362, 32
      %v1374 = vpop.permute.xlu0 %1373
      %vm1379 = vcmask 392448
      %1380 = vst.msk [vmem:[#allocation3] sm:$0xff] %vm1379, %v1368
      %1381 = vst.msk [vmem:[#allocation3 + $0x8] sm:$0xff] %vm1379, %v1370
      %1382 = vst.msk [vmem:[#allocation3 + $0x10] sm:$0xff] %vm1379, %v1372
      %1383 = vst.msk [vmem:[#allocation3 + $0x18] sm:$0xff] %vm1379, %v1374
      %v1384 = vld [vmem:[#allocation2] sm:$0xff]
      %v1385 = vld [vmem:[#allocation2 + $0x8] sm:$0xff]
      %v1386 = vld [vmem:[#allocation2 + $0x10] sm:$0xff]
      %v1387 = vld [vmem:[#allocation2 + $0x18] sm:$0xff]
      %v1388 = vld [vmem:[%s355] sm:$0xf]
      %1393 = vrot.lane.b32.xlu0 %v1384, 80
      %v1394 = vpop.permute.xlu0 %1393
      %1395 = vrot.lane.b32.xlu0 %v1385, 80
      %v1396 = vpop.permute.xlu0 %1395
      %1397 = vrot.lane.b32.xlu0 %v1386, 80
      %v1398 = vpop.permute.xlu0 %1397
      %1399 = vrot.lane.b32.xlu0 %v1387, 80
      %v1400 = vpop.permute.xlu0 %1399
      %v1402 = vunpack.c.l.b16 %v1388
      %v1403 = vpack.c.b16 %v1402, %v1402
      %1404 = vrot.lane.b32.xlu0 %v1403, 80
      %v1405 = vpop.permute.xlu0 %1404
      %v1407 = vsel %vm514, %v1394, 0
      %v1410 = vsel %vm514, %v1396, 0
      %v1413 = vsel %vm514, %v1398, 0
      %v1416 = vsel %vm514, %v1400, 0
      %v1419 = vsel %vm514, %v1405, 0
      %1421 = vmatprep.subr.bf16.mxu0 0
      %1422 = vmatpush1.bf16.xpose.msra.mxu0 %v1419
      %1423 = vmatprep.subr.bf16.mxu0 0
      %1424 = vmatpush1.bf16.xpose.msra.mxu0 0
      %1425 = vmatprep.subr.bf16.mxu0 0
      %1426 = vmatpush1.bf16.xpose.msra.mxu0 0
      %1427 = vmatprep.subr.bf16.mxu0 0
      %1428 = vmatpush1.bf16.xpose.msra.mxu0 0
      %1429 = vmatprep.subr.bf16.mxu0 0
      %1430 = vmatpush1.bf16.xpose.msra.mxu0 0
      %1431 = vmatprep.subr.bf16.mxu0 0
      %1432 = vmatpush1.bf16.xpose.msra.mxu0 0
      %1433 = vmatprep.subr.bf16.mxu0 0
      %1434 = vmatpush1.bf16.xpose.msra.mxu0 0
      %1435 = vmatprep.subr.bf16.mxu0 0
      %1436 = vmatpush1.bf16.xpose.msra.mxu0 0
      %1437 = vmatprep.subr.bf16.mxu0 0
      %1438 = vmatpush1.bf16.xpose.msra.mxu0 0
      %1439 = vmatprep.subr.bf16.mxu0 0
      %1440 = vmatpush1.bf16.xpose.msra.mxu0 0
      %1441 = vmatprep.subr.bf16.mxu0 0
      %1442 = vmatpush1.bf16.xpose.msra.mxu0 0
      %1443 = vmatprep.subr.bf16.mxu0 0
      %1444 = vmatpush1.bf16.xpose.msra.mxu0 0
      %1445 = vmatprep.subr.bf16.mxu0 0
      %1446 = vmatpush1.bf16.xpose.msra.mxu0 0
      %1447 = vmatprep.subr.bf16.mxu0 0
      %1448 = vmatpush1.bf16.xpose.msra.mxu0 0
      %1449 = vmatprep.subr.bf16.mxu0 0
      %1450 = vmatpush1.bf16.xpose.msra.mxu0 0
      %1451 = vmatprep.subr.bf16.mxu0 0
      %1452 = vmatpush1.bf16.xpose.msra.mxu0 0
      %1453 = vmatprep.mubr.bf16.mxu0 0
      %1454 = vmatmul.mubr.bf16.gmra.mrb[0].mxu0 %v1407
      %v1455 = vpop.f32.mrb[0].mxu0
      %v1456 = vadd.f32 %v512, %v1455
      %v1457 = vpop.f32.mrb[0].mxu0
      %v1458 = vpop.f32.mrb[0].mxu0
      %v1459 = vadd.f32 %v512, %v1458
      %v1460 = vpop.f32.mrb[0].mxu0
      %1461 = vmatprep.mubr.bf16.mxu0 0
      %1462 = vmatmul.mubr.bf16.gmra.mrb[0].mxu0 %v1410
      %v1463 = vpop.f32.mrb[0].mxu0
      %v1464 = vadd.f32 %v512, %v1463
      %v1465 = vpop.f32.mrb[0].mxu0
      %v1466 = vpop.f32.mrb[0].mxu0
      %v1467 = vadd.f32 %v512, %v1466
      %v1468 = vpop.f32.mrb[0].mxu0
      %1469 = vmatprep.mubr.bf16.mxu0 0
      %1470 = vmatmul.mubr.bf16.gmra.mrb[0].mxu0 %v1413
      %v1471 = vpop.f32.mrb[0].mxu0
      %v1472 = vadd.f32 %v512, %v1471
      %v1473 = vpop.f32.mrb[0].mxu0
      %v1474 = vpop.f32.mrb[0].mxu0
      %v1475 = vadd.f32 %v512, %v1474
      %v1476 = vpop.f32.mrb[0].mxu0
      %1477 = vmatprep.mubr.bf16.mxu0 0
      %1478 = vmatmul.mubr.bf16.gmra.mrb[0].mxu0 %v1416
      %v1479 = vpop.f32.mrb[0].mxu0
      %v1480 = vadd.f32 %v512, %v1479
      %v1481 = vpop.f32.mrb[0].mxu0
      %v1482 = vpop.f32.mrb[0].mxu0
      %v1483 = vadd.f32 %v512, %v1482
      %v1484 = vpop.f32.mrb[0].mxu0
      %1485 = vdwg.mxu0
      %v1486 = vsel %vm595, %v1456, -inf
      %1487 = vmax.xlane.f32.xlu0 %v1486
      %v1488 = vpop.xlane.xlu0 %1487
      %v1489 = vsel %vm595, %v1459, -inf
      %1490 = vmax.xlane.f32.xlu0 %v1489
      %v1491 = vpop.xlane.xlu0 %1490
      %v1492 = vsel %vm595, %v1464, -inf
      %1493 = vmax.xlane.f32.xlu0 %v1492
      %v1494 = vpop.xlane.xlu0 %1493
      %v1495 = vsel %vm595, %v1467, -inf
      %1496 = vmax.xlane.f32.xlu0 %v1495
      %v1497 = vpop.xlane.xlu0 %1496
      %v1498 = vsel %vm595, %v1472, -inf
      %1499 = vmax.xlane.f32.xlu0 %v1498
      %v1500 = vpop.xlane.xlu0 %1499
      %v1501 = vsel %vm595, %v1475, -inf
      %1502 = vmax.xlane.f32.xlu0 %v1501
      %v1503 = vpop.xlane.xlu0 %1502
      %v1504 = vsel %vm595, %v1480, -inf
      %1505 = vmax.xlane.f32.xlu0 %v1504
      %v1506 = vpop.xlane.xlu0 %1505
      %v1507 = vsel %vm595, %v1483, -inf
      %1508 = vmax.xlane.f32.xlu0 %v1507
      %v1509 = vpop.xlane.xlu0 %1508
      %v1510 = vsub.f32 %v1456, %v1488
      %v1511 = vsub.f32 %v1459, %v1491
      %v1512 = vsub.f32 %v1464, %v1494
      %v1513 = vsub.f32 %v1467, %v1497
      %v1514 = vsub.f32 %v1472, %v1500
      %v1515 = vsub.f32 %v1475, %v1503
      %v1516 = vsub.f32 %v1480, %v1506
      %v1517 = vsub.f32 %v1483, %v1509
      %v1518 = vmul.f32 %v1510, 1.442695
      %v1519 = vpow.pop %v1518
      %v1520 = vmul.f32 %v1511, 1.442695
      %v1521 = vpow.pop %v1520
      %v1522 = vmul.f32 %v1512, 1.442695
      %v1523 = vpow.pop %v1522
      %v1524 = vmul.f32 %v1513, 1.442695
      %v1525 = vpow.pop %v1524
      %v1526 = vmul.f32 %v1514, 1.442695
      %v1527 = vpow.pop %v1526
      %v1528 = vmul.f32 %v1515, 1.442695
      %v1529 = vpow.pop %v1528
      %v1530 = vmul.f32 %v1516, 1.442695
      %v1531 = vpow.pop %v1530
      %v1532 = vmul.f32 %v1517, 1.442695
      %v1533 = vpow.pop %v1532
      %v1534 = vsel %vm595, %v1519, 0.0
      %1535 = vadd.xlane.f32.xlu0 %v1534
      %v1536 = vpop.xlane.xlu0 %1535
      %v1537 = vsel %vm595, %v1521, 0.0
      %1538 = vadd.xlane.f32.xlu0 %v1537
      %v1539 = vpop.xlane.xlu0 %1538
      %v1540 = vsel %vm595, %v1523, 0.0
      %1541 = vadd.xlane.f32.xlu0 %v1540
      %v1542 = vpop.xlane.xlu0 %1541
      %v1543 = vsel %vm595, %v1525, 0.0
      %1544 = vadd.xlane.f32.xlu0 %v1543
      %v1545 = vpop.xlane.xlu0 %1544
      %v1546 = vsel %vm595, %v1527, 0.0
      %1547 = vadd.xlane.f32.xlu0 %v1546
      %v1548 = vpop.xlane.xlu0 %1547
      %v1549 = vsel %vm595, %v1529, 0.0
      %1550 = vadd.xlane.f32.xlu0 %v1549
      %v1551 = vpop.xlane.xlu0 %1550
      %v1552 = vsel %vm595, %v1531, 0.0
      %1553 = vadd.xlane.f32.xlu0 %v1552
      %v1554 = vpop.xlane.xlu0 %1553
      %v1555 = vsel %vm595, %v1533, 0.0
      %1556 = vadd.xlane.f32.xlu0 %v1555
      %v1557 = vpop.xlane.xlu0 %1556
      %v1558 = vpack.c.bf16 %v1521, %v1519
      %v1559 = vpack.c.bf16 %v1525, %v1523
      %v1560 = vpack.c.bf16 %v1529, %v1527
      %v1561 = vpack.c.bf16 %v1533, %v1531
      %1562 = vrot.lane.b32.xlu0 %v1403, 16
      %v1563 = vpop.permute.xlu0 %1562
      %v1565 = vsel %vm595, %v1558, 0
      %v1568 = vsel %vm595, %v1559, 0
      %v1571 = vsel %vm595, %v1560, 0
      %v1574 = vsel %vm595, %v1561, 0
      %v1577 = vsel %vm689, %v1563, 0
      %1579 = vmatprep.subr.bf16.mxu0 0
      %1580 = vmatpush1.bf16.msra.mxu0 %v1577
      %1581 = vmatprep.subr.bf16.mxu0 0
      %1582 = vmatpush1.bf16.msra.mxu0 0
      %1583 = vmatprep.subr.bf16.mxu0 0
      %1584 = vmatpush1.bf16.msra.mxu0 0
      %1585 = vmatprep.subr.bf16.mxu0 0
      %1586 = vmatpush1.bf16.msra.mxu0 0
      %1587 = vmatprep.subr.bf16.mxu0 0
      %1588 = vmatpush1.bf16.msra.mxu0 0
      %1589 = vmatprep.subr.bf16.mxu0 0
      %1590 = vmatpush1.bf16.msra.mxu0 0
      %1591 = vmatprep.subr.bf16.mxu0 0
      %1592 = vmatpush1.bf16.msra.mxu0 0
      %1593 = vmatprep.subr.bf16.mxu0 0
      %1594 = vmatpush1.bf16.msra.mxu0 0
      %1595 = vmatprep.subr.bf16.mxu0 0
      %1596 = vmatpush1.bf16.msra.mxu0 0
      %1597 = vmatprep.subr.bf16.mxu0 0
      %1598 = vmatpush1.bf16.msra.mxu0 0
      %1599 = vmatprep.subr.bf16.mxu0 0
      %1600 = vmatpush1.bf16.msra.mxu0 0
      %1601 = vmatprep.subr.bf16.mxu0 0
      %1602 = vmatpush1.bf16.msra.mxu0 0
      %1603 = vmatprep.subr.bf16.mxu0 0
      %1604 = vmatpush1.bf16.msra.mxu0 0
      %1605 = vmatprep.subr.bf16.mxu0 0
      %1606 = vmatpush1.bf16.msra.mxu0 0
      %1607 = vmatprep.subr.bf16.mxu0 0
      %1608 = vmatpush1.bf16.msra.mxu0 0
      %1609 = vmatprep.subr.bf16.mxu0 0
      %1610 = vmatpush1.bf16.msra.mxu0 0
      %1611 = vmatprep.mubr.bf16.mxu0 0
      %1612 = vmatmul.mubr.bf16.gmra.mrb[0].mxu0 %v1565
      %v1613 = vpop.f32.mrb[0].mxu0
      %v1614 = vadd.f32 0.0, %v1613
      %v1615 = vpop.f32.mrb[0].mxu0
      %v1616 = vpop.f32.mrb[0].mxu0
      %v1617 = vadd.f32 0.0, %v1616
      %v1618 = vpop.f32.mrb[0].mxu0
      %1619 = vmatprep.mubr.bf16.mxu0 0
      %1620 = vmatmul.mubr.bf16.gmra.mrb[0].mxu0 %v1568
      %v1621 = vpop.f32.mrb[0].mxu0
      %v1622 = vadd.f32 0.0, %v1621
      %v1623 = vpop.f32.mrb[0].mxu0
      %v1624 = vpop.f32.mrb[0].mxu0
      %v1625 = vadd.f32 0.0, %v1624
      %v1626 = vpop.f32.mrb[0].mxu0
      %1627 = vmatprep.mubr.bf16.mxu0 0
      %1628 = vmatmul.mubr.bf16.gmra.mrb[0].mxu0 %v1571
      %v1629 = vpop.f32.mrb[0].mxu0
      %v1630 = vadd.f32 0.0, %v1629
      %v1631 = vpop.f32.mrb[0].mxu0
      %v1632 = vpop.f32.mrb[0].mxu0
      %v1633 = vadd.f32 0.0, %v1632
      %v1634 = vpop.f32.mrb[0].mxu0
      %1635 = vmatprep.mubr.bf16.mxu0 0
      %1636 = vmatmul.mubr.bf16.gmra.mrb[0].mxu0 %v1574
      %v1637 = vpop.f32.mrb[0].mxu0
      %v1638 = vadd.f32 0.0, %v1637
      %v1639 = vpop.f32.mrb[0].mxu0
      %v1640 = vpop.f32.mrb[0].mxu0
      %v1641 = vadd.f32 0.0, %v1640
      %v1642 = vpop.f32.mrb[0].mxu0
      %1643 = vdwg.mxu0
      %v1644 = vrcp.pop %v1536
      %v1645 = vrcp.pop %v1539
      %v1646 = vrcp.pop %v1542
      %v1647 = vrcp.pop %v1545
      %v1648 = vrcp.pop %v1548
      %v1649 = vrcp.pop %v1551
      %v1650 = vrcp.pop %v1554
      %v1651 = vrcp.pop %v1557
      %v1652 = vmul.f32 %v1614, %v1644
      %v1653 = vmul.f32 %v1617, %v1645
      %v1654 = vmul.f32 %v1622, %v1646
      %v1655 = vmul.f32 %v1625, %v1647
      %v1656 = vmul.f32 %v1630, %v1648
      %v1657 = vmul.f32 %v1633, %v1649
      %v1658 = vmul.f32 %v1638, %v1650
      %v1659 = vmul.f32 %v1641, %v1651
      %v1660 = vpack.c.bf16 %v1653, %v1652
      %v1661 = vpack.c.bf16 %v1655, %v1654
      %v1662 = vpack.c.bf16 %v1657, %v1656
      %v1663 = vpack.c.bf16 %v1659, %v1658
      %1668 = vrot.lane.b32.xlu0 %v1660, 48
      %v1669 = vpop.permute.xlu0 %1668
      %1670 = vrot.lane.b32.xlu0 %v1661, 48
      %v1671 = vpop.permute.xlu0 %1670
      %1672 = vrot.lane.b32.xlu0 %v1662, 48
      %v1673 = vpop.permute.xlu0 %1672
      %1674 = vrot.lane.b32.xlu0 %v1663, 48
      %v1675 = vpop.permute.xlu0 %1674
      %vm1680 = vcmask 523648
      %1681 = vst.msk [vmem:[#allocation3] sm:$0xff] %vm1680, %v1669
      %1682 = vst.msk [vmem:[#allocation3 + $0x8] sm:$0xff] %vm1680, %v1671
      %1683 = vst.msk [vmem:[#allocation3 + $0x10] sm:$0xff] %vm1680, %v1673
      %1684 = vst.msk [vmem:[#allocation3 + $0x18] sm:$0xff] %vm1680, %v1675
      %v1685 = vld [vmem:[#allocation3] sm:$0xff]
      %v1686 = vld [vmem:[#allocation3 + $0x8] sm:$0xff]
      %v1687 = vld [vmem:[#allocation3 + $0x10] sm:$0xff]
      %v1688 = vld [vmem:[#allocation3 + $0x18] sm:$0xff]
      %v1689 = vld [vmem:[%s5] sm:$0xf]
      %v1690 = vld [vmem:[%s5 + $0x4] sm:$0xf]
      %v1691 = vld [vmem:[%s5 + $0x8] sm:$0xf]
      %v1692 = vld [vmem:[%s5 + $0xc] sm:$0xf]
      %v1693 = vld [vmem:[%s5 + $0x10] sm:$0xf]
      %v1694 = vld [vmem:[%s5 + $0x14] sm:$0xf]
      %v1695 = vld [vmem:[%s5 + $0x18] sm:$0xf]
      %v1696 = vld [vmem:[%s5 + $0x1c] sm:$0xf]
      %v1697 = vld [vmem:[%s6] sm:$0x1]
      %v1699 = vlaneseq
      %v1700 = vshrl.u32 %v1699, 7
      %v1701 = vsub.s32 0, %v1700
      %v1702 = vrot.slane %v1697, %v1701
      %v1712 = vunpack.c.l.b16 %v1689
      %v1713 = vunpack.c.l.b16 %v1690
      %v1714 = vunpack.c.l.b16 %v1691
      %v1715 = vunpack.c.l.b16 %v1692
      %v1716 = vunpack.c.l.b16 %v1693
      %v1717 = vunpack.c.l.b16 %v1694
      %v1718 = vunpack.c.l.b16 %v1695
      %v1719 = vunpack.c.l.b16 %v1696
      %v1720 = vpack.c.b16 %v1713, %v1712
      %v1721 = vpack.c.b16 %v1715, %v1714
      %v1722 = vpack.c.b16 %v1717, %v1716
      %v1723 = vpack.c.b16 %v1719, %v1718
      %v1729 = vsel %vm416, %v1685, 0
      %v1732 = vsel %vm416, %v1686, 0
      %v1735 = vsel %vm416, %v1687, 0
      %v1738 = vsel %vm416, %v1688, 0
      %1740 = vmatprep.subr.bf16.mxu0 0
      %1741 = vmatpush1.bf16.msra.mxu0 %v1720
      %1742 = vmatprep.subr.bf16.mxu0 0
      %1743 = vmatpush1.bf16.msra.mxu0 %v1721
      %1744 = vmatprep.subr.bf16.mxu0 0
      %1745 = vmatpush1.bf16.msra.mxu0 %v1722
      %1746 = vmatprep.subr.bf16.mxu0 0
      %1747 = vmatpush1.bf16.msra.mxu0 %v1723
      %1748 = vmatprep.subr.bf16.mxu0 0
      %1749 = vmatpush1.bf16.msra.mxu0 0
      %1750 = vmatprep.subr.bf16.mxu0 0
      %1751 = vmatpush1.bf16.msra.mxu0 0
      %1752 = vmatprep.subr.bf16.mxu0 0
      %1753 = vmatpush1.bf16.msra.mxu0 0
      %1754 = vmatprep.subr.bf16.mxu0 0
      %1755 = vmatpush1.bf16.msra.mxu0 0
      %1756 = vmatprep.subr.bf16.mxu0 0
      %1757 = vmatpush1.bf16.msra.mxu0 0
      %1758 = vmatprep.subr.bf16.mxu0 0
      %1759 = vmatpush1.bf16.msra.mxu0 0
      %1760 = vmatprep.subr.bf16.mxu0 0
      %1761 = vmatpush1.bf16.msra.mxu0 0
      %1762 = vmatprep.subr.bf16.mxu0 0
      %1763 = vmatpush1.bf16.msra.mxu0 0
      %1764 = vmatprep.subr.bf16.mxu0 0
      %1765 = vmatpush1.bf16.msra.mxu0 0
      %1766 = vmatprep.subr.bf16.mxu0 0
      %1767 = vmatpush1.bf16.msra.mxu0 0
      %1768 = vmatprep.subr.bf16.mxu0 0
      %1769 = vmatpush1.bf16.msra.mxu0 0
      %1770 = vmatprep.subr.bf16.mxu0 0
      %1771 = vmatpush1.bf16.msra.mxu0 0
      %1772 = vmatprep.mubr.bf16.mxu0 0
      %1773 = vmatmul.mubr.bf16.gmra.mrb[0].mxu0 %v1729
      %v1774 = vpop.f32.mrb[0].mxu0
      %v1775 = vadd.f32 %v1702, %v1774
      %v1776 = vpop.f32.mrb[0].mxu0
      %v1777 = vpop.f32.mrb[0].mxu0
      %v1778 = vadd.f32 %v1702, %v1777
      %v1779 = vpop.f32.mrb[0].mxu0
      %1780 = vmatprep.mubr.bf16.mxu0 0
      %1781 = vmatmul.mubr.bf16.gmra.mrb[0].mxu0 %v1732
      %v1782 = vpop.f32.mrb[0].mxu0
      %v1783 = vadd.f32 %v1702, %v1782
      %v1784 = vpop.f32.mrb[0].mxu0
      %v1785 = vpop.f32.mrb[0].mxu0
      %v1786 = vadd.f32 %v1702, %v1785
      %v1787 = vpop.f32.mrb[0].mxu0
      %1788 = vmatprep.mubr.bf16.mxu0 0
      %1789 = vmatmul.mubr.bf16.gmra.mrb[0].mxu0 %v1735
      %v1790 = vpop.f32.mrb[0].mxu0
      %v1791 = vadd.f32 %v1702, %v1790
      %v1792 = vpop.f32.mrb[0].mxu0
      %v1793 = vpop.f32.mrb[0].mxu0
      %v1794 = vadd.f32 %v1702, %v1793
      %v1795 = vpop.f32.mrb[0].mxu0
      %1796 = vmatprep.mubr.bf16.mxu0 0
      %1797 = vmatmul.mubr.bf16.gmra.mrb[0].mxu0 %v1738
      %v1798 = vpop.f32.mrb[0].mxu0
      %v1799 = vadd.f32 %v1702, %v1798
      %v1800 = vpop.f32.mrb[0].mxu0
      %v1801 = vpop.f32.mrb[0].mxu0
      %v1802 = vadd.f32 %v1702, %v1801
      %v1803 = vpop.f32.mrb[0].mxu0
      %1804 = vdwg.mxu0
      %v1805 = vadd.f32 %v1775, %v365
      %v1806 = vadd.f32 %v1778, %v366
      %v1807 = vadd.f32 %v1783, %v367
      %v1808 = vadd.f32 %v1786, %v368
      %v1809 = vadd.f32 %v1791, %v369
      %v1810 = vadd.f32 %v1794, %v370
      %v1811 = vadd.f32 %v1799, %v371
      %v1812 = vadd.f32 %v1802, %v372
      %v1813 = vsel %vm416, %v1805, 0.0
      %1814 = vadd.xlane.f32.xlu0 %v1813
      %v1815 = vpop.xlane.xlu0 %1814
      %v1816 = vsel %vm416, %v1806, 0.0
      %1817 = vadd.xlane.f32.xlu0 %v1816
      %v1818 = vpop.xlane.xlu0 %1817
      %v1819 = vsel %vm416, %v1807, 0.0
      %1820 = vadd.xlane.f32.xlu0 %v1819
      %v1821 = vpop.xlane.xlu0 %1820
      %v1822 = vsel %vm416, %v1808, 0.0
      %1823 = vadd.xlane.f32.xlu0 %v1822
      %v1824 = vpop.xlane.xlu0 %1823
      %v1825 = vsel %vm416, %v1809, 0.0
      %1826 = vadd.xlane.f32.xlu0 %v1825
      %v1827 = vpop.xlane.xlu0 %1826
      %v1828 = vsel %vm416, %v1810, 0.0
      %1829 = vadd.xlane.f32.xlu0 %v1828
      %v1830 = vpop.xlane.xlu0 %1829
      %v1831 = vsel %vm416, %v1811, 0.0
      %1832 = vadd.xlane.f32.xlu0 %v1831
      %v1833 = vpop.xlane.xlu0 %1832
      %v1834 = vsel %vm416, %v1812, 0.0
      %1835 = vadd.xlane.f32.xlu0 %v1834
      %v1836 = vpop.xlane.xlu0 %1835
      %v1837 = vrcp.pop 64.0
      %v1838 = vmul.f32 %v1815, %v1837
      %v1839 = vmul.f32 %v1818, %v1837
      %v1840 = vmul.f32 %v1821, %v1837
      %v1841 = vmul.f32 %v1824, %v1837
      %v1842 = vmul.f32 %v1827, %v1837
      %v1843 = vmul.f32 %v1830, %v1837
      %v1844 = vmul.f32 %v1833, %v1837
      %v1845 = vmul.f32 %v1836, %v1837
      %v1846 = vsub.f32 %v1805, %v1838
      %v1847 = vsub.f32 %v1806, %v1839
      %v1848 = vsub.f32 %v1807, %v1840
      %v1849 = vsub.f32 %v1808, %v1841
      %v1850 = vsub.f32 %v1809, %v1842
      %v1851 = vsub.f32 %v1810, %v1843
      %v1852 = vsub.f32 %v1811, %v1844
      %v1853 = vsub.f32 %v1812, %v1845
      %v1854 = vmul.f32 %v1846, %v1846
      %v1855 = vmul.f32 %v1847, %v1847
      %v1856 = vmul.f32 %v1848, %v1848
      %v1857 = vmul.f32 %v1849, %v1849
      %v1858 = vmul.f32 %v1850, %v1850
      %v1859 = vmul.f32 %v1851, %v1851
      %v1860 = vmul.f32 %v1852, %v1852
      %v1861 = vmul.f32 %v1853, %v1853
      %v1862 = vsel %vm416, %v1854, 0.0
      %1863 = vadd.xlane.f32.xlu0 %v1862
      %v1864 = vpop.xlane.xlu0 %1863
      %v1865 = vsel %vm416, %v1855, 0.0
      %1866 = vadd.xlane.f32.xlu0 %v1865
      %v1867 = vpop.xlane.xlu0 %1866
      %v1868 = vsel %vm416, %v1856, 0.0
      %1869 = vadd.xlane.f32.xlu0 %v1868
      %v1870 = vpop.xlane.xlu0 %1869
      %v1871 = vsel %vm416, %v1857, 0.0
      %1872 = vadd.xlane.f32.xlu0 %v1871
      %v1873 = vpop.xlane.xlu0 %1872
      %v1874 = vsel %vm416, %v1858, 0.0
      %1875 = vadd.xlane.f32.xlu0 %v1874
      %v1876 = vpop.xlane.xlu0 %1875
      %v1877 = vsel %vm416, %v1859, 0.0
      %1878 = vadd.xlane.f32.xlu0 %v1877
      %v1879 = vpop.xlane.xlu0 %1878
      %v1880 = vsel %vm416, %v1860, 0.0
      %1881 = vadd.xlane.f32.xlu0 %v1880
      %v1882 = vpop.xlane.xlu0 %1881
      %v1883 = vsel %vm416, %v1861, 0.0
      %1884 = vadd.xlane.f32.xlu0 %v1883
      %v1885 = vpop.xlane.xlu0 %1884
      %v1886 = vmul.f32 %v1864, %v1837
      %v1887 = vmul.f32 %v1867, %v1837
      %v1888 = vmul.f32 %v1870, %v1837
      %v1889 = vmul.f32 %v1873, %v1837
      %v1890 = vmul.f32 %v1876, %v1837
      %v1891 = vmul.f32 %v1879, %v1837
      %v1892 = vmul.f32 %v1882, %v1837
      %v1893 = vmul.f32 %v1885, %v1837
      %v1894 = vadd.f32 %v1886, 1e-12
      %v1895 = vadd.f32 %v1887, 1e-12
      %v1896 = vadd.f32 %v1888, 1e-12
      %v1897 = vadd.f32 %v1889, 1e-12
      %v1898 = vadd.f32 %v1890, 1e-12
      %v1899 = vadd.f32 %v1891, 1e-12
      %v1900 = vadd.f32 %v1892, 1e-12
      %v1901 = vadd.f32 %v1893, 1e-12
      %v1902 = vrsqrt.pop %v1894
      %v1903 = vrsqrt.pop %v1895
      %v1904 = vrsqrt.pop %v1896
      %v1905 = vrsqrt.pop %v1897
      %v1906 = vrsqrt.pop %v1898
      %v1907 = vrsqrt.pop %v1899
      %v1908 = vrsqrt.pop %v1900
      %v1909 = vrsqrt.pop %v1901
      %v1910 = vmul.f32 %v1846, %v1902
      %v1911 = vmul.f32 %v1847, %v1903
      %v1912 = vmul.f32 %v1848, %v1904
      %v1913 = vmul.f32 %v1849, %v1905
      %v1914 = vmul.f32 %v1850, %v1906
      %v1915 = vmul.f32 %v1851, %v1907
      %v1916 = vmul.f32 %v1852, %v1908
      %v1917 = vmul.f32 %v1853, %v1909
      %v1918 = vld [vmem:[%s7] sm:$0x1]
      %v1920 = vlaneseq
      %v1921 = vshrl.u32 %v1920, 7
      %v1922 = vsub.s32 0, %v1921
      %v1923 = vrot.slane %v1918, %v1922
      %v1925 = vmul.f32 %v1910, %v1923
      %v1926 = vmul.f32 %v1911, %v1923
      %v1927 = vmul.f32 %v1912, %v1923
      %v1928 = vmul.f32 %v1913, %v1923
      %v1929 = vmul.f32 %v1914, %v1923
      %v1930 = vmul.f32 %v1915, %v1923
      %v1931 = vmul.f32 %v1916, %v1923
      %v1932 = vmul.f32 %v1917, %v1923
      %v1933 = vld [vmem:[%s8] sm:$0x1]
      %v1935 = vlaneseq
      %v1936 = vshrl.u32 %v1935, 7
      %v1937 = vsub.s32 0, %v1936
      %v1938 = vrot.slane %v1933, %v1937
      %v1940 = vadd.f32 %v1925, %v1938
      %v1941 = vadd.f32 %v1926, %v1938
      %v1942 = vadd.f32 %v1927, %v1938
      %v1943 = vadd.f32 %v1928, %v1938
      %v1944 = vadd.f32 %v1929, %v1938
      %v1945 = vadd.f32 %v1930, %v1938
      %v1946 = vadd.f32 %v1931, %v1938
      %v1947 = vadd.f32 %v1932, %v1938
      %1948 = vst.msk [vmem:[%s363] sm:$0xff] %vm416, %v1940
      %1949 = vst.msk [vmem:[%s363 + $0x8] sm:$0xff] %vm416, %v1941
      %1950 = vst.msk [vmem:[%s363 + $0x10] sm:$0xff] %vm416, %v1942
      %1951 = vst.msk [vmem:[%s363 + $0x18] sm:$0xff] %vm416, %v1943
      %1952 = vst.msk [vmem:[%s363 + $0x20] sm:$0xff] %vm416, %v1944
      %1953 = vst.msk [vmem:[%s363 + $0x28] sm:$0xff] %vm416, %v1945
      %1954 = vst.msk [vmem:[%s363 + $0x30] sm:$0xff] %vm416, %v1946
      %1955 = vst.msk [vmem:[%s363 + $0x38] sm:$0xff] %vm416, %v1947
      %p1956 = scmp.lt.s32.totalorder %s20, 1
      %s1957 = scalar_select %p1956, %s20, 1
      %s1958 = smul.addr %s1957, 8
      %s1959 = smul.addr %s1958, 8
      %s1960 = scalar_lea.vmem %s9, %s1959
      // Predicated region
      $region57: #{encoder_projector_qformer.12} parent=55 // pred_check
        %p1961 = pneg %p242
      $region58: #{encoder_projector_qformer.12} parent=55 // pred_check_branch
        %1963 = sbr.rel (%p1961) target = $region60
      $region59: #{encoder_projector_qformer.12} parent=55 // pred_region
        _
      $region60: #{encoder_projector_qformer.12} parent=55 // pred_fallthru
        _
    $region56: #{encoder_projector_qformer.12} parent=5 // pred_fallthru
      _
    %p1964 = scmp.le.s32.totalorder 2, %s15
    // Predicated region
    $region61: #{encoder_projector_qformer.12} parent=5 // pred_check
      %p1965 = pneg %p1964
    $region62: #{encoder_projector_qformer.12} parent=5 // pred_check_branch
      %1967 = sbr.rel (%p1965) target = $region64
    $region63: #{encoder_projector_qformer.12} parent=5 // pred_region
      %s1968 = ssub.s32 %s15, 2
      // Predicated region
      $region65: #{encoder_projector_qformer.12} parent=63 // pred_check
        %p1969 = pneg %p248
      $region66: #{encoder_projector_qformer.12} parent=63 // pred_check_branch
        %1971 = sbr.rel (%p1969) target = $region68
      $region67: #{encoder_projector_qformer.12} parent=63 // pred_region
        %p1972 = scmp.lt.s32.totalorder %s21, 1
        %s1973 = scalar_select %p1972, %s21, 1
        %s1974 = smul.addr %s1973, 8
        %s1975 = smul.addr %s1974, 8
        %s1976 = scalar_lea.vmem %s9, %s1975
      $region68: #{encoder_projector_qformer.12} parent=63 // pred_fallthru
        _
    $region64: #{encoder_projector_qformer.12} parent=5 // pred_fallthru
      _
  $region6: #{encoder_projector_qformer.12} parent=0 // loop_footer
    %s19 = sadd.s32 1, %s15
  $region7: #{encoder_projector_qformer.12} parent=0 // loop_footer_branch
    %14 = sbr.rel target = $region3
  $region8: #{encoder_projector_qformer.12} parent=0 // loop_exit
    _

// kernel: encoder_projector_qformer.16
$region0: #{encoder_projector_qformer.16}
  #allocation0 [shape = 'u32[]', space=smem, size = 0x4, offset = 0x4, fixed_abs, tag = 'smem constant byte address 0x4 - core index']
  #allocation1 [shape = 'u32[144,128]{1,0:T(1,128)}', space=vmem, size = 0x12000, scoped, tag = 'internal scratch']
  %s0 = inlined_call_operand.vmem [shape: bf16[128,64], index: 0, kind: input, shape index: {}]
  %s1 = inlined_call_operand.vmem [shape: bf16[64,128], index: 1, kind: input, shape index: {}]
  %s2 = inlined_call_operand.vmem [shape: f32[1,128], index: 2, kind: input, shape index: {}]
  %s3 = inlined_call_operand.vmem [shape: f32[128,128], index: 3, kind: output, shape index: {}]
  %s4 = sld [smem:[#allocation0]]
  $region45: #{encoder_projector_qformer.16} parent=0
    _
  %s6 = ssub.s32 1, %s4
  %s7 = scalar_select 0, %s6, %s4
  loop: start=0, step=1, limit=4
  $region2: #{encoder_projector_qformer.16} parent=0 // loop_pre_header
    _
  $region3: #{encoder_projector_qformer.16} parent=0 // loop_header
    %s9 = sphi 0, %s13
    %p10 = scmp.ge.s32.totalorder %s9, 4
    %s16 = sphi 0, %s28
    %s17 = sphi 0, %s24
    %s18 = sphi 0, %s16
    %s19 = sphi 0, %s17
    %s20 = sphi 0, %s18
    %s21 = sphi 0, %s19
    %s31 = sphi 0, %s33
    %s34 = sphi 0, %s31
    %s35 = sphi 0, %s34
    %s51 = sphi 0, %s35
    %s57 = sphi 0, %s59
    %s60 = sphi 0, %s57
    %s61 = sphi 0, %s60
    %s77 = sphi 0, %s61
    %s83 = sphi 0, %s85
    %s86 = sphi 0, %s83
    %s87 = sphi 0, %s86
    %s103 = sphi 0, %s87
    %s111 = sphi 0, %s113
    %s114 = sphi 0, %s111
    %s115 = sphi 0, %s114
    %s131 = sphi 0, %s115
  $region4: #{encoder_projector_qformer.16} parent=0 // loop_header_branch
    %12 = sbr.rel (%p10) target = $region8
  $region5: #{encoder_projector_qformer.16} parent=0 // loop_body
    %s14 = ssub.s32 %s9, 1
    %s15 = ssub.s32 %s9, 2
    %s22 = sadd.s32 1, %s17
    %p23 = scmp.ge.s32.totalorder %s22, 1
    %s24 = scalar_select %p23, 0, %s22
    %s25 = sadd.s32 1, %s16
    %s26 = scalar_select %p23, %s25, %s16
    %p27 = scmp.ge.s32.totalorder %s26, 2
    %s28 = scalar_select %p27, 0, %s26
    %s29 = ssub.s32 %s16, %s28
    %p30 = scmp.eq.s32.totalorder %s29, 0
    %s32 = sadd.s32 %s31, 1
    %s33 = scalar_select %p30, %s31, %s32
    %p36 = pneg %p30
    %p37 = scmp.eq.s32.totalorder %s9, 1
    %p38 = por %p36, %p37
    %p39 = scmp.ne.s32.totalorder %s31, %s34
    %p40 = scmp.eq.s32.totalorder %s9, 0
    %p41 = por %p39, %p40
    %p42 = scmp.ne.s32.totalorder %s31, %s34
    %p43 = scmp.eq.s32.totalorder %s14, 1
    %p44 = por %p42, %p43
    %p45 = scmp.ne.s32.totalorder %s34, %s35
    %p46 = scmp.eq.s32.totalorder %s14, 0
    %p47 = por %p45, %p46
    %p48 = scmp.ne.s32.totalorder %s34, %s35
    %p49 = scmp.eq.s32.totalorder %s15, 1
    %p50 = por %p48, %p49
    %p52 = scmp.ne.s32.totalorder %s35, %s51
    %p53 = scmp.eq.s32.totalorder %s15, 0
    %p54 = por %p52, %p53
    %s55 = ssub.s32 %s17, %s24
    %p56 = scmp.eq.s32.totalorder %s55, 0
    %s58 = sadd.s32 %s57, 1
    %s59 = scalar_select %p56, %s57, %s58
    %p62 = pneg %p56
    %p63 = scmp.eq.s32.totalorder %s9, 1
    %p64 = por %p62, %p63
    %p65 = scmp.ne.s32.totalorder %s57, %s60
    %p66 = scmp.eq.s32.totalorder %s9, 0
    %p67 = por %p65, %p66
    %p68 = scmp.ne.s32.totalorder %s57, %s60
    %p69 = scmp.eq.s32.totalorder %s14, 1
    %p70 = por %p68, %p69
    %p71 = scmp.ne.s32.totalorder %s60, %s61
    %p72 = scmp.eq.s32.totalorder %s14, 0
    %p73 = por %p71, %p72
    %p74 = scmp.ne.s32.totalorder %s60, %s61
    %p75 = scmp.eq.s32.totalorder %s15, 1
    %p76 = por %p74, %p75
    %p78 = scmp.ne.s32.totalorder %s61, %s77
    %p79 = scmp.eq.s32.totalorder %s15, 0
    %p80 = por %p78, %p79
    %s81 = ssub.s32 %s17, %s24
    %p82 = scmp.eq.s32.totalorder %s81, 0
    %s84 = sadd.s32 %s83, 1
    %s85 = scalar_select %p82, %s83, %s84
    %p88 = pneg %p82
    %p89 = scmp.eq.s32.totalorder %s9, 1
    %p90 = por %p88, %p89
    %p91 = scmp.ne.s32.totalorder %s83, %s86
    %p92 = scmp.eq.s32.totalorder %s9, 0
    %p93 = por %p91, %p92
    %p94 = scmp.ne.s32.totalorder %s83, %s86
    %p95 = scmp.eq.s32.totalorder %s14, 1
    %p96 = por %p94, %p95
    %p97 = scmp.ne.s32.totalorder %s86, %s87
    %p98 = scmp.eq.s32.totalorder %s14, 0
    %p99 = por %p97, %p98
    %p100 = scmp.ne.s32.totalorder %s86, %s87
    %p101 = scmp.eq.s32.totalorder %s15, 1
    %p102 = por %p100, %p101
    %p104 = scmp.ne.s32.totalorder %s87, %s103
    %p105 = scmp.eq.s32.totalorder %s15, 0
    %p106 = por %p104, %p105
    %s107 = ssub.s32 %s16, %s28
    %s108 = ssub.s32 %s17, %s24
    %s109 = sor.u32 %s107, %s108
    %p110 = scmp.eq.s32.totalorder %s109, 0
    %s112 = sadd.s32 %s111, 1
    %s113 = scalar_select %p110, %s111, %s112
    %p116 = pneg %p110
    %p117 = scmp.eq.s32.totalorder %s9, 1
    %p118 = por %p116, %p117
    %p119 = scmp.ne.s32.totalorder %s111, %s114
    %p120 = scmp.eq.s32.totalorder %s9, 0
    %p121 = por %p119, %p120
    %p122 = scmp.ne.s32.totalorder %s111, %s114
    %p123 = scmp.eq.s32.totalorder %s14, 1
    %p124 = por %p122, %p123
    %p125 = scmp.ne.s32.totalorder %s114, %s115
    %p126 = scmp.eq.s32.totalorder %s14, 0
    %p127 = por %p125, %p126
    %p128 = scmp.ne.s32.totalorder %s114, %s115
    %p129 = scmp.eq.s32.totalorder %s15, 1
    %p130 = por %p128, %p129
    %p132 = scmp.ne.s32.totalorder %s115, %s131
    %p133 = scmp.eq.s32.totalorder %s15, 0
    %p134 = por %p132, %p133
    %p135 = scmp.le.s32.totalorder 1, %s9
    %p136 = scmp.lt.s32.totalorder %s9, 3
    %p137 = pnand %p135, %p136
    %p138 = pneg %p137
    // Predicated region
    $region9: #{encoder_projector_qformer.16} parent=5 // pred_check
      _
    $region10: #{encoder_projector_qformer.16} parent=5 // pred_check_branch
      %140 = sbr.rel (%p137) target = $region12
    $region11: #{encoder_projector_qformer.16} parent=5 // pred_region
      %s141 = ssub.s32 %s9, 1
      // Predicated region
      $region13: #{encoder_projector_qformer.16} parent=11 // pred_check
        %p142 = pneg %p73
      $region14: #{encoder_projector_qformer.16} parent=11 // pred_check_branch
        %144 = sbr.rel (%p142) target = $region16
      $region15: #{encoder_projector_qformer.16} parent=11 // pred_region
        %p145 = scmp.lt.s32.totalorder %s19, 0
        %s146 = scalar_select %p145, %s19, 0
        %s147 = smul.addr %s146, 4
        %s148 = scalar_lea.vmem %s1, %s147
      $region16: #{encoder_projector_qformer.16} parent=11 // pred_fallthru
        _
      // Predicated region
      $region17: #{encoder_projector_qformer.16} parent=11 // pred_check
        %p149 = pneg %p99
      $region18: #{encoder_projector_qformer.16} parent=11 // pred_check_branch
        %151 = sbr.rel (%p149) target = $region20
      $region19: #{encoder_projector_qformer.16} parent=11 // pred_region
        %p152 = scmp.lt.s32.totalorder %s19, 0
        %s153 = scalar_select %p152, %s19, 0
        %s154 = scalar_lea.vmem %s2, %s153
      $region20: #{encoder_projector_qformer.16} parent=11 // pred_fallthru
        _
    $region12: #{encoder_projector_qformer.16} parent=5 // pred_fallthru
      _
    %p155 = scmp.lt.s32.totalorder %s9, 2
    // Predicated region
    $region21: #{encoder_projector_qformer.16} parent=5 // pred_check
      %p156 = pneg %p155
    $region22: #{encoder_projector_qformer.16} parent=5 // pred_check_branch
      %158 = sbr.rel (%p156) target = $region24
    $region23: #{encoder_projector_qformer.16} parent=5 // pred_region
      // Predicated region
      $region25: #{encoder_projector_qformer.16} parent=23 // pred_check
        %p159 = pneg %p41
      $region26: #{encoder_projector_qformer.16} parent=23 // pred_check_branch
        %161 = sbr.rel (%p159) target = $region28
      $region27: #{encoder_projector_qformer.16} parent=23 // pred_region
        %s162 = smul.u32 8, %s16
        %p163 = scmp.lt.s32.totalorder %s162, 15
        %s164 = scalar_select %p163, %s162, 15
        %s165 = smul.addr %s164, 4
        %s166 = scalar_lea.vmem %s0, %s165
        %s167 = smul.u32 8, %s16
      $region28: #{encoder_projector_qformer.16} parent=23 // pred_fallthru
        _
    $region24: #{encoder_projector_qformer.16} parent=5 // pred_fallthru
      _
    %p168 = scmp.le.s32.totalorder 1, %s9
    %p169 = scmp.lt.s32.totalorder %s9, 3
    %p170 = pnand %p168, %p169
    %p171 = pneg %p170
    // Predicated region
    $region29: #{encoder_projector_qformer.16} parent=5 // pred_check
      _
    $region30: #{encoder_projector_qformer.16} parent=5 // pred_check_branch
      %173 = sbr.rel (%p170) target = $region32
    $region31: #{encoder_projector_qformer.16} parent=5 // pred_region
      %s174 = ssub.s32 %s9, 1
      %s175 = smul.u32 8, %s18
      %p176 = scmp.lt.s32.totalorder %s175, 15
      %s177 = scalar_select %p176, %s175, 15
      %s178 = smul.addr %s177, 4
      %s179 = scalar_lea.vmem %s0, %s178
      %p180 = pneg %p47
      %p181 = pneg %p44
      %p182 = scmp.lt.s32.totalorder %s19, 0
      %s183 = scalar_select %p182, %s19, 0
      %s184 = smul.addr %s183, 4
      %s185 = scalar_lea.vmem %s1, %s184
      %p186 = pneg %p73
      %p187 = pneg %p70
      %p188 = scmp.lt.s32.totalorder %s19, 0
      %s189 = scalar_select %p188, %s19, 0
      %s190 = scalar_lea.vmem %s2, %s189
      %p191 = pneg %p99
      %p192 = pneg %p96
      %p193 = pneg %p127
      %p194 = pneg %p124
      %s195 = smul.u32 8, %s18
      %p196 = scmp.lt.s32.totalorder %s195, 15
      %s197 = scalar_select %p196, %s195, 15
      %p198 = scmp.lt.s32.totalorder %s19, 0
      %s199 = scalar_select %p198, %s19, 0
      %s200 = sadd.s32 %s199, %s197
      %s201 = smul.addr %s200, 8
      %s202 = scalar_lea.vmem %s3, %s201
      %s203 = smul.u32 8, %s18
      %p204 = scmp.lt.s32.totalorder %s203, 15
      %s205 = scalar_select %p204, %s203, 15
      %s206 = smul.addr %s205, 4
      %s207 = scalar_lea.vmem %s0, %s206
      %s208 = smul.u32 8, %s18
      %p209 = scmp.lt.s32.totalorder %s19, 0
      %s210 = scalar_select %p209, %s19, 0
      %s211 = smul.addr %s210, 4
      %s212 = scalar_lea.vmem %s1, %s211
      %p213 = scmp.lt.s32.totalorder %s19, 0
      %s214 = scalar_select %p213, %s19, 0
      %s215 = scalar_lea.vmem %s2, %s214
      %s216 = smul.u32 8, %s18
      %p217 = scmp.lt.s32.totalorder %s216, 15
      %s218 = scalar_select %p217, %s216, 15
      %p219 = scmp.lt.s32.totalorder %s19, 0
      %s220 = scalar_select %p219, %s19, 0
      %s221 = sadd.s32 %s220, %s218
      %s222 = smul.addr %s221, 8
      %s223 = scalar_lea.vmem %s3, %s222
      %s224 = smul.u32 8, %s18
      %v226 = vld [vmem:[%s207] sm:$0xf]
      %v227 = vld [vmem:[%s207 + $0x4] sm:$0xf]
      %v228 = vld [vmem:[%s207 + $0x8] sm:$0xf]
      %v229 = vld [vmem:[%s207 + $0xc] sm:$0xf]
      %v230 = vld [vmem:[%s207 + $0x10] sm:$0xf]
      %v231 = vld [vmem:[%s207 + $0x14] sm:$0xf]
      %v232 = vld [vmem:[%s207 + $0x18] sm:$0xf]
      %v233 = vld [vmem:[%s207 + $0x1c] sm:$0xf]
      %v234 = vld [vmem:[%s212] sm:$0xf]
      %v235 = vld [vmem:[%s212 + $0x4] sm:$0xf]
      %v236 = vld [vmem:[%s212 + $0x8] sm:$0xf]
      %v237 = vld [vmem:[%s212 + $0xc] sm:$0xf]
      %v238 = vld [vmem:[%s212 + $0x10] sm:$0xf]
      %v239 = vld [vmem:[%s212 + $0x14] sm:$0xf]
      %v240 = vld [vmem:[%s212 + $0x18] sm:$0xf]
      %v241 = vld [vmem:[%s212 + $0x1c] sm:$0xf]
      %v242 = vld [vmem:[%s215] sm:$0x1]
      %v244 = vlaneseq
      %v245 = vshrl.u32 %v244, 7
      %v246 = vsub.s32 0, %v245
      %v247 = vrot.slane %v242, %v246
      %v257 = vunpack.c.l.b16 %v226
      %v258 = vunpack.c.l.b16 %v227
      %v259 = vunpack.c.l.b16 %v228
      %v260 = vunpack.c.l.b16 %v229
      %v261 = vunpack.c.l.b16 %v230
      %v262 = vunpack.c.l.b16 %v231
      %v263 = vunpack.c.l.b16 %v232
      %v264 = vunpack.c.l.b16 %v233
      %v265 = vpack.c.b16 %v258, %v257
      %v266 = vpack.c.b16 %v260, %v259
      %v267 = vpack.c.b16 %v262, %v261
      %v268 = vpack.c.b16 %v264, %v263
      %v277 = vunpack.c.l.b16 %v234
      %v278 = vunpack.c.l.b16 %v235
      %v279 = vunpack.c.l.b16 %v236
      %v280 = vunpack.c.l.b16 %v237
      %v281 = vunpack.c.l.b16 %v238
      %v282 = vunpack.c.l.b16 %v239
      %v283 = vunpack.c.l.b16 %v240
      %v284 = vunpack.c.l.b16 %v241
      %v285 = vpack.c.b16 %v278, %v277
      %v286 = vpack.c.b16 %v280, %v279
      %v287 = vpack.c.b16 %v282, %v281
      %v288 = vpack.c.b16 %v284, %v283
      %vm293 = vcmask 523264
      %v295 = vsel %vm293, %v265, 0
      %v298 = vsel %vm293, %v266, 0
      %v301 = vsel %vm293, %v267, 0
      %v304 = vsel %vm293, %v268, 0
      %306 = vmatprep.subr.bf16.mxu0 0
      %307 = vmatpush1.bf16.msra.mxu0 %v285
      %308 = vmatprep.subr.bf16.mxu0 0
      %309 = vmatpush1.bf16.msra.mxu0 %v286
      %310 = vmatprep.subr.bf16.mxu0 0
      %311 = vmatpush1.bf16.msra.mxu0 %v287
      %312 = vmatprep.subr.bf16.mxu0 0
      %313 = vmatpush1.bf16.msra.mxu0 %v288
      %314 = vmatprep.subr.bf16.mxu0 0
      %315 = vmatpush1.bf16.msra.mxu0 0
      %316 = vmatprep.subr.bf16.mxu0 0
      %317 = vmatpush1.bf16.msra.mxu0 0
      %318 = vmatprep.subr.bf16.mxu0 0
      %319 = vmatpush1.bf16.msra.mxu0 0
      %320 = vmatprep.subr.bf16.mxu0 0
      %321 = vmatpush1.bf16.msra.mxu0 0
      %322 = vmatprep.subr.bf16.mxu0 0
      %323 = vmatpush1.bf16.msra.mxu0 0
      %324 = vmatprep.subr.bf16.mxu0 0
      %325 = vmatpush1.bf16.msra.mxu0 0
      %326 = vmatprep.subr.bf16.mxu0 0
      %327 = vmatpush1.bf16.msra.mxu0 0
      %328 = vmatprep.subr.bf16.mxu0 0
      %329 = vmatpush1.bf16.msra.mxu0 0
      %330 = vmatprep.subr.bf16.mxu0 0
      %331 = vmatpush1.bf16.msra.mxu0 0
      %332 = vmatprep.subr.bf16.mxu0 0
      %333 = vmatpush1.bf16.msra.mxu0 0
      %334 = vmatprep.subr.bf16.mxu0 0
      %335 = vmatpush1.bf16.msra.mxu0 0
      %336 = vmatprep.subr.bf16.mxu0 0
      %337 = vmatpush1.bf16.msra.mxu0 0
      %338 = vmatprep.mubr.bf16.mxu0 0
      %339 = vmatmul.mubr.bf16.gmra.mrb[0].mxu0 %v295
      %v340 = vpop.f32.mrb[0].mxu0
      %v341 = vadd.f32 %v247, %v340
      %v342 = vpop.f32.mrb[0].mxu0
      %v343 = vpop.f32.mrb[0].mxu0
      %v344 = vadd.f32 %v247, %v343
      %v345 = vpop.f32.mrb[0].mxu0
      %346 = vmatprep.mubr.bf16.mxu0 0
      %347 = vmatmul.mubr.bf16.gmra.mrb[0].mxu0 %v298
      %v348 = vpop.f32.mrb[0].mxu0
      %v349 = vadd.f32 %v247, %v348
      %v350 = vpop.f32.mrb[0].mxu0
      %v351 = vpop.f32.mrb[0].mxu0
      %v352 = vadd.f32 %v247, %v351
      %v353 = vpop.f32.mrb[0].mxu0
      %354 = vmatprep.mubr.bf16.mxu0 0
      %355 = vmatmul.mubr.bf16.gmra.mrb[0].mxu0 %v301
      %v356 = vpop.f32.mrb[0].mxu0
      %v357 = vadd.f32 %v247, %v356
      %v358 = vpop.f32.mrb[0].mxu0
      %v359 = vpop.f32.mrb[0].mxu0
      %v360 = vadd.f32 %v247, %v359
      %v361 = vpop.f32.mrb[0].mxu0
      %362 = vmatprep.mubr.bf16.mxu0 0
      %363 = vmatmul.mubr.bf16.gmra.mrb[0].mxu0 %v304
      %v364 = vpop.f32.mrb[0].mxu0
      %v365 = vadd.f32 %v247, %v364
      %v366 = vpop.f32.mrb[0].mxu0
      %v367 = vpop.f32.mrb[0].mxu0
      %v368 = vadd.f32 %v247, %v367
      %v369 = vpop.f32.mrb[0].mxu0
      %370 = vdwg.mxu0
      %371 = vst [vmem:[%s223] sm:$0xff] %v341
      %372 = vst [vmem:[%s223 + $0x8] sm:$0xff] %v344
      %373 = vst [vmem:[%s223 + $0x10] sm:$0xff] %v349
      %374 = vst [vmem:[%s223 + $0x18] sm:$0xff] %v352
      %375 = vst [vmem:[%s223 + $0x20] sm:$0xff] %v357
      %376 = vst [vmem:[%s223 + $0x28] sm:$0xff] %v360
      %377 = vst [vmem:[%s223 + $0x30] sm:$0xff] %v365
      %378 = vst [vmem:[%s223 + $0x38] sm:$0xff] %v368
      %s379 = smul.u32 8, %s18
      %p380 = scmp.lt.s32.totalorder %s379, 15
      %s381 = scalar_select %p380, %s379, 15
      %p382 = scmp.lt.s32.totalorder %s19, 0
      %s383 = scalar_select %p382, %s19, 0
      %s384 = sadd.s32 %s383, %s381
      %s385 = smul.addr %s384, 8
      %s386 = scalar_lea.vmem %s3, %s385
      // Predicated region
      $region33: #{encoder_projector_qformer.16} parent=31 // pred_check
        %p387 = pneg %p124
      $region34: #{encoder_projector_qformer.16} parent=31 // pred_check_branch
        %389 = sbr.rel (%p387) target = $region36
      $region35: #{encoder_projector_qformer.16} parent=31 // pred_region
        %s390 = smul.u32 8, %s18
      $region36: #{encoder_projector_qformer.16} parent=31 // pred_fallthru
        _
    $region32: #{encoder_projector_qformer.16} parent=5 // pred_fallthru
      _
    %p391 = scmp.le.s32.totalorder 2, %s9
    // Predicated region
    $region37: #{encoder_projector_qformer.16} parent=5 // pred_check
      %p392 = pneg %p391
    $region38: #{encoder_projector_qformer.16} parent=5 // pred_check_branch
      %394 = sbr.rel (%p392) target = $region40
    $region39: #{encoder_projector_qformer.16} parent=5 // pred_region
      %s395 = ssub.s32 %s9, 2
      // Predicated region
      $region41: #{encoder_projector_qformer.16} parent=39 // pred_check
        %p396 = pneg %p130
      $region42: #{encoder_projector_qformer.16} parent=39 // pred_check_branch
        %398 = sbr.rel (%p396) target = $region44
      $region43: #{encoder_projector_qformer.16} parent=39 // pred_region
        %s399 = smul.u32 8, %s20
        %p400 = scmp.lt.s32.totalorder %s399, 15
        %s401 = scalar_select %p400, %s399, 15
        %p402 = scmp.lt.s32.totalorder %s21, 0
        %s403 = scalar_select %p402, %s21, 0
        %s404 = sadd.s32 %s403, %s401
        %s405 = smul.addr %s404, 8
        %s406 = scalar_lea.vmem %s3, %s405
      $region44: #{encoder_projector_qformer.16} parent=39 // pred_fallthru
        _
    $region40: #{encoder_projector_qformer.16} parent=5 // pred_fallthru
      _
  $region6: #{encoder_projector_qformer.16} parent=0 // loop_footer
    %s13 = sadd.s32 1, %s9
  $region7: #{encoder_projector_qformer.16} parent=0 // loop_footer_branch
    %8 = sbr.rel target = $region3
  $region8: #{encoder_projector_qformer.16} parent=0 // loop_exit
    _

// kernel: encoder_projector_qformer.14
$region0: #{encoder_projector_qformer.14}
  #allocation0 [shape = 'u32[]', space=smem, size = 0x4, offset = 0x4, fixed_abs, tag = 'smem constant byte address 0x4 - core index']
  #allocation1 [shape = 'u32[144,128]{1,0:T(1,128)}', space=vmem, size = 0x12000, scoped, tag = 'internal scratch']
  #allocation2 [shape = 'bf16[64,192]{1,0:T(16,128)(2,1)}', space=vmem, size = 0x8000, scoped, tag = 'scratch operand']
  #allocation3 [shape = 'bf16[64,64]{1,0:T(16,128)(2,1)}', space=vmem, size = 0x4000, scoped, tag = 'scratch operand']
  %s0 = inlined_call_operand.vmem [shape: f32[2,64,64], index: 0, kind: input, shape index: {}]
  %s1 = inlined_call_operand.vmem [shape: bf16[64,192], index: 1, kind: input, shape index: {}]
  %s2 = inlined_call_operand.vmem [shape: f32[1,192], index: 2, kind: input, shape index: {}]
  %s3 = inlined_call_operand.vmem [shape: bf16[64,64], index: 3, kind: input, shape index: {}]
  %s4 = inlined_call_operand.vmem [shape: f32[1,64], index: 4, kind: input, shape index: {}]
  %s5 = inlined_call_operand.vmem [shape: f32[1,64], index: 5, kind: input, shape index: {}]
  %s6 = inlined_call_operand.vmem [shape: f32[1,64], index: 6, kind: input, shape index: {}]
  %s7 = inlined_call_operand.vmem [shape: f32[2,64,64], index: 7, kind: output, shape index: {}]
  %s8 = sld [smem:[#allocation0]]
  $region61: #{encoder_projector_qformer.14} parent=0
    _
  %s10 = ssub.s32 1, %s8
  %s11 = scalar_select 0, %s10, %s8
  loop: start=0, step=1, limit=4
  $region2: #{encoder_projector_qformer.14} parent=0 // loop_pre_header
    _
  $region3: #{encoder_projector_qformer.14} parent=0 // loop_header
    %s13 = sphi 0, %s17
    %p14 = scmp.ge.s32.totalorder %s13, 4
    %s23 = sphi 0, %s25
    %s26 = sphi 0, %s23
    %s27 = sphi 0, %s26
    %s43 = sphi 0, %s27
    %s47 = sphi 0, %s47
    %s49 = sphi 0, %s47
    %s50 = sphi 0, %s49
    %s64 = sphi 0, %s50
    %s68 = sphi 0, %s68
    %s70 = sphi 0, %s68
    %s71 = sphi 0, %s70
    %s85 = sphi 0, %s71
    %s89 = sphi 0, %s89
    %s91 = sphi 0, %s89
    %s92 = sphi 0, %s91
    %s106 = sphi 0, %s92
    %s110 = sphi 0, %s110
    %s112 = sphi 0, %s110
    %s113 = sphi 0, %s112
    %s127 = sphi 0, %s113
    %s131 = sphi 0, %s131
    %s133 = sphi 0, %s131
    %s134 = sphi 0, %s133
    %s148 = sphi 0, %s134
    %s152 = sphi 0, %s152
    %s154 = sphi 0, %s152
    %s155 = sphi 0, %s154
    %s169 = sphi 0, %s155
    %s175 = sphi 0, %s177
    %s178 = sphi 0, %s175
    %s179 = sphi 0, %s178
    %s195 = sphi 0, %s179
  $region4: #{encoder_projector_qformer.14} parent=0 // loop_header_branch
    %16 = sbr.rel (%p14) target = $region8
  $region5: #{encoder_projector_qformer.14} parent=0 // loop_body
    %s18 = ssub.s32 %s13, 1
    %s19 = ssub.s32 %s13, 2
    %s20 = sadd.s32 %s13, 1
    %s21 = ssub.s32 %s13, %s20
    %p22 = scmp.eq.s32.totalorder %s21, 0
    %s24 = sadd.s32 %s23, 1
    %s25 = scalar_select %p22, %s23, %s24
    %p28 = pneg %p22
    %p29 = scmp.eq.s32.totalorder %s13, 1
    %p30 = por %p28, %p29
    %p31 = scmp.ne.s32.totalorder %s23, %s26
    %p32 = scmp.eq.s32.totalorder %s13, 0
    %p33 = por %p31, %p32
    %p34 = scmp.ne.s32.totalorder %s23, %s26
    %p35 = scmp.eq.s32.totalorder %s18, 1
    %p36 = por %p34, %p35
    %p37 = scmp.ne.s32.totalorder %s26, %s27
    %p38 = scmp.eq.s32.totalorder %s18, 0
    %p39 = por %p37, %p38
    %p40 = scmp.ne.s32.totalorder %s26, %s27
    %p41 = scmp.eq.s32.totalorder %s19, 1
    %p42 = por %p40, %p41
    %p44 = scmp.ne.s32.totalorder %s27, %s43
    %p45 = scmp.eq.s32.totalorder %s19, 0
    %p46 = por %p44, %p45
    %s48 = sadd.s32 %s47, 1
    %p51 = scmp.eq.s32.totalorder %s13, 1
    %p52 = scmp.ne.s32.totalorder %s47, %s49
    %p53 = scmp.eq.s32.totalorder %s13, 0
    %p54 = por %p52, %p53
    %p55 = scmp.ne.s32.totalorder %s47, %s49
    %p56 = scmp.eq.s32.totalorder %s18, 1
    %p57 = por %p55, %p56
    %p58 = scmp.ne.s32.totalorder %s49, %s50
    %p59 = scmp.eq.s32.totalorder %s18, 0
    %p60 = por %p58, %p59
    %p61 = scmp.ne.s32.totalorder %s49, %s50
    %p62 = scmp.eq.s32.totalorder %s19, 1
    %p63 = por %p61, %p62
    %p65 = scmp.ne.s32.totalorder %s50, %s64
    %p66 = scmp.eq.s32.totalorder %s19, 0
    %p67 = por %p65, %p66
    %s69 = sadd.s32 %s68, 1
    %p72 = scmp.eq.s32.totalorder %s13, 1
    %p73 = scmp.ne.s32.totalorder %s68, %s70
    %p74 = scmp.eq.s32.totalorder %s13, 0
    %p75 = por %p73, %p74
    %p76 = scmp.ne.s32.totalorder %s68, %s70
    %p77 = scmp.eq.s32.totalorder %s18, 1
    %p78 = por %p76, %p77
    %p79 = scmp.ne.s32.totalorder %s70, %s71
    %p80 = scmp.eq.s32.totalorder %s18, 0
    %p81 = por %p79, %p80
    %p82 = scmp.ne.s32.totalorder %s70, %s71
    %p83 = scmp.eq.s32.totalorder %s19, 1
    %p84 = por %p82, %p83
    %p86 = scmp.ne.s32.totalorder %s71, %s85
    %p87 = scmp.eq.s32.totalorder %s19, 0
    %p88 = por %p86, %p87
    %s90 = sadd.s32 %s89, 1
    %p93 = scmp.eq.s32.totalorder %s13, 1
    %p94 = scmp.ne.s32.totalorder %s89, %s91
    %p95 = scmp.eq.s32.totalorder %s13, 0
    %p96 = por %p94, %p95
    %p97 = scmp.ne.s32.totalorder %s89, %s91
    %p98 = scmp.eq.s32.totalorder %s18, 1
    %p99 = por %p97, %p98
    %p100 = scmp.ne.s32.totalorder %s91, %s92
    %p101 = scmp.eq.s32.totalorder %s18, 0
    %p102 = por %p100, %p101
    %p103 = scmp.ne.s32.totalorder %s91, %s92
    %p104 = scmp.eq.s32.totalorder %s19, 1
    %p105 = por %p103, %p104
    %p107 = scmp.ne.s32.totalorder %s92, %s106
    %p108 = scmp.eq.s32.totalorder %s19, 0
    %p109 = por %p107, %p108
    %s111 = sadd.s32 %s110, 1
    %p114 = scmp.eq.s32.totalorder %s13, 1
    %p115 = scmp.ne.s32.totalorder %s110, %s112
    %p116 = scmp.eq.s32.totalorder %s13, 0
    %p117 = por %p115, %p116
    %p118 = scmp.ne.s32.totalorder %s110, %s112
    %p119 = scmp.eq.s32.totalorder %s18, 1
    %p120 = por %p118, %p119
    %p121 = scmp.ne.s32.totalorder %s112, %s113
    %p122 = scmp.eq.s32.totalorder %s18, 0
    %p123 = por %p121, %p122
    %p124 = scmp.ne.s32.totalorder %s112, %s113
    %p125 = scmp.eq.s32.totalorder %s19, 1
    %p126 = por %p124, %p125
    %p128 = scmp.ne.s32.totalorder %s113, %s127
    %p129 = scmp.eq.s32.totalorder %s19, 0
    %p130 = por %p128, %p129
    %s132 = sadd.s32 %s131, 1
    %p135 = scmp.eq.s32.totalorder %s13, 1
    %p136 = scmp.ne.s32.totalorder %s131, %s133
    %p137 = scmp.eq.s32.totalorder %s13, 0
    %p138 = por %p136, %p137
    %p139 = scmp.ne.s32.totalorder %s131, %s133
    %p140 = scmp.eq.s32.totalorder %s18, 1
    %p141 = por %p139, %p140
    %p142 = scmp.ne.s32.totalorder %s133, %s134
    %p143 = scmp.eq.s32.totalorder %s18, 0
    %p144 = por %p142, %p143
    %p145 = scmp.ne.s32.totalorder %s133, %s134
    %p146 = scmp.eq.s32.totalorder %s19, 1
    %p147 = por %p145, %p146
    %p149 = scmp.ne.s32.totalorder %s134, %s148
    %p150 = scmp.eq.s32.totalorder %s19, 0
    %p151 = por %p149, %p150
    %s153 = sadd.s32 %s152, 1
    %p156 = scmp.eq.s32.totalorder %s13, 1
    %p157 = scmp.ne.s32.totalorder %s152, %s154
    %p158 = scmp.eq.s32.totalorder %s13, 0
    %p159 = por %p157, %p158
    %p160 = scmp.ne.s32.totalorder %s152, %s154
    %p161 = scmp.eq.s32.totalorder %s18, 1
    %p162 = por %p160, %p161
    %p163 = scmp.ne.s32.totalorder %s154, %s155
    %p164 = scmp.eq.s32.totalorder %s18, 0
    %p165 = por %p163, %p164
    %p166 = scmp.ne.s32.totalorder %s154, %s155
    %p167 = scmp.eq.s32.totalorder %s19, 1
    %p168 = por %p166, %p167
    %p170 = scmp.ne.s32.totalorder %s155, %s169
    %p171 = scmp.eq.s32.totalorder %s19, 0
    %p172 = por %p170, %p171
    %s173 = ssub.s32 %s13, %s20
    %p174 = scmp.eq.s32.totalorder %s173, 0
    %s176 = sadd.s32 %s175, 1
    %s177 = scalar_select %p174, %s175, %s176
    %p180 = pneg %p174
    %p181 = scmp.eq.s32.totalorder %s13, 1
    %p182 = por %p180, %p181
    %p183 = scmp.ne.s32.totalorder %s175, %s178
    %p184 = scmp.eq.s32.totalorder %s13, 0
    %p185 = por %p183, %p184
    %p186 = scmp.ne.s32.totalorder %s175, %s178
    %p187 = scmp.eq.s32.totalorder %s18, 1
    %p188 = por %p186, %p187
    %p189 = scmp.ne.s32.totalorder %s178, %s179
    %p190 = scmp.eq.s32.totalorder %s18, 0
    %p191 = por %p189, %p190
    %p192 = scmp.ne.s32.totalorder %s178, %s179
    %p193 = scmp.eq.s32.totalorder %s19, 1
    %p194 = por %p192, %p193
    %p196 = scmp.ne.s32.totalorder %s179, %s195
    %p197 = scmp.eq.s32.totalorder %s19, 0
    %p198 = por %p196, %p197
    %p199 = scmp.le.s32.totalorder 1, %s13
    %p200 = scmp.lt.s32.totalorder %s13, 3
    %p201 = pnand %p199, %p200
    %p202 = pneg %p201
    // Predicated region
    $region9: #{encoder_projector_qformer.14} parent=5 // pred_check
      _
    $region10: #{encoder_projector_qformer.14} parent=5 // pred_check_branch
      %204 = sbr.rel (%p201) target = $region12
    $region11: #{encoder_projector_qformer.14} parent=5 // pred_region
      %s205 = ssub.s32 %s13, 1
      // Predicated region
      $region13: #{encoder_projector_qformer.14} parent=11 // pred_check
        %p206 = pneg %p60
      $region14: #{encoder_projector_qformer.14} parent=11 // pred_check_branch
        %208 = sbr.rel (%p206) target = $region16
      $region15: #{encoder_projector_qformer.14} parent=11 // pred_region
        _
      $region16: #{encoder_projector_qformer.14} parent=11 // pred_fallthru
        _
      // Predicated region
      $region17: #{encoder_projector_qformer.14} parent=11 // pred_check
        %p209 = pneg %p81
      $region18: #{encoder_projector_qformer.14} parent=11 // pred_check_branch
        %211 = sbr.rel (%p209) target = $region20
      $region19: #{encoder_projector_qformer.14} parent=11 // pred_region
        _
      $region20: #{encoder_projector_qformer.14} parent=11 // pred_fallthru
        _
      // Predicated region
      $region21: #{encoder_projector_qformer.14} parent=11 // pred_check
        %p212 = pneg %p102
      $region22: #{encoder_projector_qformer.14} parent=11 // pred_check_branch
        %214 = sbr.rel (%p212) target = $region24
      $region23: #{encoder_projector_qformer.14} parent=11 // pred_region
        _
      $region24: #{encoder_projector_qformer.14} parent=11 // pred_fallthru
        _
      // Predicated region
      $region25: #{encoder_projector_qformer.14} parent=11 // pred_check
        %p215 = pneg %p123
      $region26: #{encoder_projector_qformer.14} parent=11 // pred_check_branch
        %217 = sbr.rel (%p215) target = $region28
      $region27: #{encoder_projector_qformer.14} parent=11 // pred_region
        _
      $region28: #{encoder_projector_qformer.14} parent=11 // pred_fallthru
        _
      // Predicated region
      $region29: #{encoder_projector_qformer.14} parent=11 // pred_check
        %p218 = pneg %p144
      $region30: #{encoder_projector_qformer.14} parent=11 // pred_check_branch
        %220 = sbr.rel (%p218) target = $region32
      $region31: #{encoder_projector_qformer.14} parent=11 // pred_region
        _
      $region32: #{encoder_projector_qformer.14} parent=11 // pred_fallthru
        _
      // Predicated region
      $region33: #{encoder_projector_qformer.14} parent=11 // pred_check
        %p221 = pneg %p165
      $region34: #{encoder_projector_qformer.14} parent=11 // pred_check_branch
        %223 = sbr.rel (%p221) target = $region36
      $region35: #{encoder_projector_qformer.14} parent=11 // pred_region
        _
      $region36: #{encoder_projector_qformer.14} parent=11 // pred_fallthru
        _
    $region12: #{encoder_projector_qformer.14} parent=5 // pred_fallthru
      _
    %p224 = scmp.lt.s32.totalorder %s13, 2
    // Predicated region
    $region37: #{encoder_projector_qformer.14} parent=5 // pred_check
      %p225 = pneg %p224
    $region38: #{encoder_projector_qformer.14} parent=5 // pred_check_branch
      %227 = sbr.rel (%p225) target = $region40
    $region39: #{encoder_projector_qformer.14} parent=5 // pred_region
      // Predicated region
      $region41: #{encoder_projector_qformer.14} parent=39 // pred_check
        %p228 = pneg %p33
      $region42: #{encoder_projector_qformer.14} parent=39 // pred_check_branch
        %230 = sbr.rel (%p228) target = $region44
      $region43: #{encoder_projector_qformer.14} parent=39 // pred_region
        %p231 = scmp.lt.s32.totalorder %s13, 1
        %s232 = scalar_select %p231, %s13, 1
        %s233 = smul.addr %s232, 8
        %s234 = smul.addr %s233, 8
        %s235 = scalar_lea.vmem %s0, %s234
      $region44: #{encoder_projector_qformer.14} parent=39 // pred_fallthru
        _
    $region40: #{encoder_projector_qformer.14} parent=5 // pred_fallthru
      _
    %p236 = scmp.le.s32.totalorder 1, %s13
    %p237 = scmp.lt.s32.totalorder %s13, 3
    %p238 = pnand %p236, %p237
    %p239 = pneg %p238
    // Predicated region
    $region45: #{encoder_projector_qformer.14} parent=5 // pred_check
      _
    $region46: #{encoder_projector_qformer.14} parent=5 // pred_check_branch
      %241 = sbr.rel (%p238) target = $region48
    $region47: #{encoder_projector_qformer.14} parent=5 // pred_region
      %s242 = ssub.s32 %s13, 1
      %p243 = scmp.lt.s32.totalorder %s18, 1
      %s244 = scalar_select %p243, %s18, 1
      %s245 = smul.addr %s244, 8
      %s246 = smul.addr %s245, 8
      %s247 = scalar_lea.vmem %s0, %s246
      %p248 = pneg %p39
      %p249 = pneg %p36
      %p250 = pneg %p60
      %p251 = pneg %p57
      %p252 = pneg %p81
      %p253 = pneg %p78
      %p254 = pneg %p102
      %p255 = pneg %p99
      %p256 = pneg %p123
      %p257 = pneg %p120
      %p258 = pneg %p144
      %p259 = pneg %p141
      %p260 = pneg %p165
      %p261 = pneg %p162
      %p262 = pneg %p191
      %p263 = pneg %p188
      %p264 = scmp.lt.s32.totalorder %s18, 1
      %s265 = scalar_select %p264, %s18, 1
      %s266 = smul.addr %s265, 8
      %s267 = smul.addr %s266, 8
      %s268 = scalar_lea.vmem %s7, %s267
      %p269 = scmp.lt.s32.totalorder %s18, 1
      %s270 = scalar_select %p269, %s18, 1
      %s271 = smul.addr %s270, 8
      %s272 = smul.addr %s271, 8
      %s273 = scalar_lea.vmem %s0, %s272
      %p274 = scmp.lt.s32.totalorder %s18, 1
      %s275 = scalar_select %p274, %s18, 1
      %s276 = smul.addr %s275, 8
      %s277 = smul.addr %s276, 8
      %s278 = scalar_lea.vmem %s7, %s277
      %v280 = vld [vmem:[%s273] sm:$0xff]
      %v281 = vld [vmem:[%s273 + $0x8] sm:$0xff]
      %v282 = vld [vmem:[%s273 + $0x10] sm:$0xff]
      %v283 = vld [vmem:[%s273 + $0x18] sm:$0xff]
      %v284 = vld [vmem:[%s273 + $0x20] sm:$0xff]
      %v285 = vld [vmem:[%s273 + $0x28] sm:$0xff]
      %v286 = vld [vmem:[%s273 + $0x30] sm:$0xff]
      %v287 = vld [vmem:[%s273 + $0x38] sm:$0xff]
      %v288 = vpack.c.bf16 %v281, %v280
      %v289 = vpack.c.bf16 %v283, %v282
      %v290 = vpack.c.bf16 %v285, %v284
      %v291 = vpack.c.bf16 %v287, %v286
      %v292 = vld [vmem:[%s1] sm:$0xff]
      %v293 = vld [vmem:[%s1 + $0x8] sm:$0xff]
      %v294 = vld [vmem:[%s1 + $0x10] sm:$0xff]
      %v295 = vld [vmem:[%s1 + $0x18] sm:$0xff]
      %v296 = vld [vmem:[%s1 + $0x20] sm:$0xff]
      %v297 = vld [vmem:[%s1 + $0x28] sm:$0xff]
      %v298 = vld [vmem:[%s1 + $0x30] sm:$0xff]
      %v299 = vld [vmem:[%s1 + $0x38] sm:$0xff]
      %v300 = vld [vmem:[%s2] sm:$0x3]
      %v302 = vlaneseq
      %v303 = vshrl.u32 %v302, 7
      %v304 = vsub.s32 0, %v303
      %v305 = vrot.slane %v300, %v304
      %v306 = vlaneseq
      %v307 = vshrl.u32 %v306, 7
      %v308 = vsub.s32 1, %v307
      %v309 = vrot.slane %v300, %v308
      %v320 = vunpack.c.l.b16 %v292
      %v321 = vunpack.c.h.b16 %v292
      %v322 = vunpack.c.l.b16 %v293
      %v323 = vunpack.c.h.b16 %v293
      %v324 = vunpack.c.l.b16 %v294
      %v325 = vunpack.c.h.b16 %v294
      %v326 = vunpack.c.l.b16 %v295
      %v327 = vunpack.c.h.b16 %v295
      %v328 = vunpack.c.l.b16 %v296
      %v329 = vunpack.c.h.b16 %v296
      %v330 = vunpack.c.l.b16 %v297
      %v331 = vunpack.c.h.b16 %v297
      %v332 = vunpack.c.l.b16 %v298
      %v333 = vunpack.c.h.b16 %v298
      %v334 = vunpack.c.l.b16 %v299
      %v335 = vunpack.c.h.b16 %v299
      %v336 = vpack.c.b16 %v322, %v320
      %v337 = vpack.c.b16 %v323, %v321
      %v338 = vpack.c.b16 %v326, %v324
      %v339 = vpack.c.b16 %v327, %v325
      %v340 = vpack.c.b16 %v330, %v328
      %v341 = vpack.c.b16 %v331, %v329
      %v342 = vpack.c.b16 %v334, %v332
      %v343 = vpack.c.b16 %v335, %v333
      %vm352 = vcmask 523264
      %v354 = vsel %vm352, %v288, 0
      %v357 = vsel %vm352, %v289, 0
      %v360 = vsel %vm352, %v290, 0
      %v363 = vsel %vm352, %v291, 0
      %365 = vmatprep.subr.bf16.mxu0 %v337
      %366 = vmatpush1.bf16.msra.mxu0 %v336
      %367 = vmatprep.subr.bf16.mxu0 %v339
      %368 = vmatpush1.bf16.msra.mxu0 %v338
      %369 = vmatprep.subr.bf16.mxu0 %v341
      %370 = vmatpush1.bf16.msra.mxu0 %v340
      %371 = vmatprep.subr.bf16.mxu0 %v343
      %372 = vmatpush1.bf16.msra.mxu0 %v342
      %373 = vmatprep.subr.bf16.mxu0 0
      %374 = vmatpush1.bf16.msra.mxu0 0
      %375 = vmatprep.subr.bf16.mxu0 0
      %376 = vmatpush1.bf16.msra.mxu0 0
      %377 = vmatprep.subr.bf16.mxu0 0
      %378 = vmatpush1.bf16.msra.mxu0 0
      %379 = vmatprep.subr.bf16.mxu0 0
      %380 = vmatpush1.bf16.msra.mxu0 0
      %381 = vmatprep.subr.bf16.mxu0 0
      %382 = vmatpush1.bf16.msra.mxu0 0
      %383 = vmatprep.subr.bf16.mxu0 0
      %384 = vmatpush1.bf16.msra.mxu0 0
      %385 = vmatprep.subr.bf16.mxu0 0
      %386 = vmatpush1.bf16.msra.mxu0 0
      %387 = vmatprep.subr.bf16.mxu0 0
      %388 = vmatpush1.bf16.msra.mxu0 0
      %389 = vmatprep.subr.bf16.mxu0 0
      %390 = vmatpush1.bf16.msra.mxu0 0
      %391 = vmatprep.subr.bf16.mxu0 0
      %392 = vmatpush1.bf16.msra.mxu0 0
      %393 = vmatprep.subr.bf16.mxu0 0
      %394 = vmatpush1.bf16.msra.mxu0 0
      %395 = vmatprep.subr.bf16.mxu0 0
      %396 = vmatpush1.bf16.msra.mxu0 0
      %397 = vmatprep.mubr.bf16.mxu0 0
      %398 = vmatmul.mubr.bf16.gmra.mrb[0].mxu0 %v354
      %v399 = vpop.f32.mrb[0].mxu0
      %v400 = vadd.f32 %v305, %v399
      %v401 = vpop.f32.mrb[0].mxu0
      %v402 = vadd.f32 %v309, %v401
      %v403 = vpop.f32.mrb[0].mxu0
      %v404 = vadd.f32 %v305, %v403
      %v405 = vpop.f32.mrb[0].mxu0
      %v406 = vadd.f32 %v309, %v405
      %407 = vmatprep.mubr.bf16.mxu0 0
      %408 = vmatmul.mubr.bf16.gmra.mrb[0].mxu0 %v357
      %v409 = vpop.f32.mrb[0].mxu0
      %v410 = vadd.f32 %v305, %v409
      %v411 = vpop.f32.mrb[0].mxu0
      %v412 = vadd.f32 %v309, %v411
      %v413 = vpop.f32.mrb[0].mxu0
      %v414 = vadd.f32 %v305, %v413
      %v415 = vpop.f32.mrb[0].mxu0
      %v416 = vadd.f32 %v309, %v415
      %417 = vmatprep.mubr.bf16.mxu0 0
      %418 = vmatmul.mubr.bf16.gmra.mrb[0].mxu0 %v360
      %v419 = vpop.f32.mrb[0].mxu0
      %v420 = vadd.f32 %v305, %v419
      %v421 = vpop.f32.mrb[0].mxu0
      %v422 = vadd.f32 %v309, %v421
      %v423 = vpop.f32.mrb[0].mxu0
      %v424 = vadd.f32 %v305, %v423
      %v425 = vpop.f32.mrb[0].mxu0
      %v426 = vadd.f32 %v309, %v425
      %427 = vmatprep.mubr.bf16.mxu0 0
      %428 = vmatmul.mubr.bf16.gmra.mrb[0].mxu0 %v363
      %v429 = vpop.f32.mrb[0].mxu0
      %v430 = vadd.f32 %v305, %v429
      %v431 = vpop.f32.mrb[0].mxu0
      %v432 = vadd.f32 %v309, %v431
      %v433 = vpop.f32.mrb[0].mxu0
      %v434 = vadd.f32 %v305, %v433
      %v435 = vpop.f32.mrb[0].mxu0
      %v436 = vadd.f32 %v309, %v435
      %437 = vdwg.mxu0
      %v438 = vpack.c.bf16 %v404, %v400
      %v439 = vpack.c.bf16 %v406, %v402
      %v440 = vpack.c.bf16 %v414, %v410
      %v441 = vpack.c.bf16 %v416, %v412
      %v442 = vpack.c.bf16 %v424, %v420
      %v443 = vpack.c.bf16 %v426, %v422
      %v444 = vpack.c.bf16 %v434, %v430
      %v445 = vpack.c.bf16 %v436, %v432
      %446 = vst [vmem:[#allocation2] sm:$0xff] %v438
      %447 = vst.msk [vmem:[#allocation2 + $0x8] sm:$0xff] %vm352, %v439
      %448 = vst [vmem:[#allocation2 + $0x10] sm:$0xff] %v440
      %449 = vst.msk [vmem:[#allocation2 + $0x18] sm:$0xff] %vm352, %v441
      %450 = vst [vmem:[#allocation2 + $0x20] sm:$0xff] %v442
      %451 = vst.msk [vmem:[#allocation2 + $0x28] sm:$0xff] %vm352, %v443
      %452 = vst [vmem:[#allocation2 + $0x30] sm:$0xff] %v444
      %453 = vst.msk [vmem:[#allocation2 + $0x38] sm:$0xff] %vm352, %v445
      %v454 = vld [vmem:[#allocation2] sm:$0xff]
      %v455 = vld [vmem:[#allocation2 + $0x10] sm:$0xff]
      %v456 = vld [vmem:[#allocation2 + $0x20] sm:$0xff]
      %v457 = vld [vmem:[#allocation2 + $0x30] sm:$0xff]
      %v458 = vld [vmem:[#allocation2 + $0x8] sm:$0xff]
      %v459 = vld [vmem:[#allocation2 + $0x18] sm:$0xff]
      %v460 = vld [vmem:[#allocation2 + $0x28] sm:$0xff]
      %v461 = vld [vmem:[#allocation2 + $0x38] sm:$0xff]
      %466 = vrot.lane.b32.xlu0 %v454, 64
      %v467 = vpop.permute.xlu0 %466
      %468 = vrot.lane.b32.xlu0 %v455, 64
      %v469 = vpop.permute.xlu0 %468
      %470 = vrot.lane.b32.xlu0 %v456, 64
      %v471 = vpop.permute.xlu0 %470
      %472 = vrot.lane.b32.xlu0 %v457, 64
      %v473 = vpop.permute.xlu0 %472
      %vm474 = vcmask 130048
      %v476 = vsel %vm474, %v454, 0
      %v479 = vsel %vm474, %v455, 0
      %v482 = vsel %vm474, %v456, 0
      %v485 = vsel %vm474, %v457, 0
      %v488 = vsel %vm474, %v467, 0
      %v491 = vsel %vm474, %v469, 0
      %v494 = vsel %vm474, %v471, 0
      %v497 = vsel %vm474, %v473, 0
      %499 = vmatprep.subr.bf16.mxu0 0
      %500 = vmatpush1.bf16.xpose.msra.mxu0 %v488
      %501 = vmatprep.subr.bf16.mxu0 0
      %502 = vmatpush1.bf16.xpose.msra.mxu0 %v491
      %503 = vmatprep.subr.bf16.mxu0 0
      %504 = vmatpush1.bf16.xpose.msra.mxu0 %v494
      %505 = vmatprep.subr.bf16.mxu0 0
      %506 = vmatpush1.bf16.xpose.msra.mxu0 %v497
      %507 = vmatprep.subr.bf16.mxu0 0
      %508 = vmatpush1.bf16.xpose.msra.mxu0 0
      %509 = vmatprep.subr.bf16.mxu0 0
      %510 = vmatpush1.bf16.xpose.msra.mxu0 0
      %511 = vmatprep.subr.bf16.mxu0 0
      %512 = vmatpush1.bf16.xpose.msra.mxu0 0
      %513 = vmatprep.subr.bf16.mxu0 0
      %514 = vmatpush1.bf16.xpose.msra.mxu0 0
      %515 = vmatprep.subr.bf16.mxu0 0
      %516 = vmatpush1.bf16.xpose.msra.mxu0 0
      %517 = vmatprep.subr.bf16.mxu0 0
      %518 = vmatpush1.bf16.xpose.msra.mxu0 0
      %519 = vmatprep.subr.bf16.mxu0 0
      %520 = vmatpush1.bf16.xpose.msra.mxu0 0
      %521 = vmatprep.subr.bf16.mxu0 0
      %522 = vmatpush1.bf16.xpose.msra.mxu0 0
      %523 = vmatprep.subr.bf16.mxu0 0
      %524 = vmatpush1.bf16.xpose.msra.mxu0 0
      %525 = vmatprep.subr.bf16.mxu0 0
      %526 = vmatpush1.bf16.xpose.msra.mxu0 0
      %527 = vmatprep.subr.bf16.mxu0 0
      %528 = vmatpush1.bf16.xpose.msra.mxu0 0
      %529 = vmatprep.subr.bf16.mxu0 0
      %530 = vmatpush1.bf16.xpose.msra.mxu0 0
      %531 = vmatprep.mubr.bf16.mxu0 0
      %532 = vmatmul.mubr.bf16.gmra.mrb[0].mxu0 %v476
      %v533 = vpop.f32.mrb[0].mxu0
      %v534 = vadd.f32 0.0, %v533
      %v535 = vpop.f32.mrb[0].mxu0
      %v536 = vpop.f32.mrb[0].mxu0
      %v537 = vadd.f32 0.0, %v536
      %v538 = vpop.f32.mrb[0].mxu0
      %539 = vmatprep.mubr.bf16.mxu0 0
      %540 = vmatmul.mubr.bf16.gmra.mrb[0].mxu0 %v479
      %v541 = vpop.f32.mrb[0].mxu0
      %v542 = vadd.f32 0.0, %v541
      %v543 = vpop.f32.mrb[0].mxu0
      %v544 = vpop.f32.mrb[0].mxu0
      %v545 = vadd.f32 0.0, %v544
      %v546 = vpop.f32.mrb[0].mxu0
      %547 = vmatprep.mubr.bf16.mxu0 0
      %548 = vmatmul.mubr.bf16.gmra.mrb[0].mxu0 %v482
      %v549 = vpop.f32.mrb[0].mxu0
      %v550 = vadd.f32 0.0, %v549
      %v551 = vpop.f32.mrb[0].mxu0
      %v552 = vpop.f32.mrb[0].mxu0
      %v553 = vadd.f32 0.0, %v552
      %v554 = vpop.f32.mrb[0].mxu0
      %555 = vmatprep.mubr.bf16.mxu0 0
      %556 = vmatmul.mubr.bf16.gmra.mrb[0].mxu0 %v485
      %v557 = vpop.f32.mrb[0].mxu0
      %v558 = vadd.f32 0.0, %v557
      %v559 = vpop.f32.mrb[0].mxu0
      %v560 = vpop.f32.mrb[0].mxu0
      %v561 = vadd.f32 0.0, %v560
      %v562 = vpop.f32.mrb[0].mxu0
      %563 = vdwg.mxu0
      %v564 = vsel %vm352, %v534, -inf
      %565 = vmax.xlane.f32.xlu0 %v564
      %v566 = vpop.xlane.xlu0 %565
      %v567 = vsel %vm352, %v537, -inf
      %568 = vmax.xlane.f32.xlu0 %v567
      %v569 = vpop.xlane.xlu0 %568
      %v570 = vsel %vm352, %v542, -inf
      %571 = vmax.xlane.f32.xlu0 %v570
      %v572 = vpop.xlane.xlu0 %571
      %v573 = vsel %vm352, %v545, -inf
      %574 = vmax.xlane.f32.xlu0 %v573
      %v575 = vpop.xlane.xlu0 %574
      %v576 = vsel %vm352, %v550, -inf
      %577 = vmax.xlane.f32.xlu0 %v576
      %v578 = vpop.xlane.xlu0 %577
      %v579 = vsel %vm352, %v553, -inf
      %580 = vmax.xlane.f32.xlu0 %v579
      %v581 = vpop.xlane.xlu0 %580
      %v582 = vsel %vm352, %v558, -inf
      %583 = vmax.xlane.f32.xlu0 %v582
      %v584 = vpop.xlane.xlu0 %583
      %v585 = vsel %vm352, %v561, -inf
      %586 = vmax.xlane.f32.xlu0 %v585
      %v587 = vpop.xlane.xlu0 %586
      %v588 = vsub.f32 %v534, %v566
      %v589 = vsub.f32 %v537, %v569
      %v590 = vsub.f32 %v542, %v572
      %v591 = vsub.f32 %v545, %v575
      %v592 = vsub.f32 %v550, %v578
      %v593 = vsub.f32 %v553, %v581
      %v594 = vsub.f32 %v558, %v584
      %v595 = vsub.f32 %v561, %v587
      %v596 = vmul.f32 %v588, 1.442695
      %v597 = vpow.pop %v596
      %v598 = vmul.f32 %v589, 1.442695
      %v599 = vpow.pop %v598
      %v600 = vmul.f32 %v590, 1.442695
      %v601 = vpow.pop %v600
      %v602 = vmul.f32 %v591, 1.442695
      %v603 = vpow.pop %v602
      %v604 = vmul.f32 %v592, 1.442695
      %v605 = vpow.pop %v604
      %v606 = vmul.f32 %v593, 1.442695
      %v607 = vpow.pop %v606
      %v608 = vmul.f32 %v594, 1.442695
      %v609 = vpow.pop %v608
      %v610 = vmul.f32 %v595, 1.442695
      %v611 = vpow.pop %v610
      %v612 = vsel %vm352, %v597, 0.0
      %613 = vadd.xlane.f32.xlu0 %v612
      %v614 = vpop.xlane.xlu0 %613
      %v615 = vsel %vm352, %v599, 0.0
      %616 = vadd.xlane.f32.xlu0 %v615
      %v617 = vpop.xlane.xlu0 %616
      %v618 = vsel %vm352, %v601, 0.0
      %619 = vadd.xlane.f32.xlu0 %v618
      %v620 = vpop.xlane.xlu0 %619
      %v621 = vsel %vm352, %v603, 0.0
      %622 = vadd.xlane.f32.xlu0 %v621
      %v623 = vpop.xlane.xlu0 %622
      %v624 = vsel %vm352, %v605, 0.0
      %625 = vadd.xlane.f32.xlu0 %v624
      %v626 = vpop.xlane.xlu0 %625
      %v627 = vsel %vm352, %v607, 0.0
      %628 = vadd.xlane.f32.xlu0 %v627
      %v629 = vpop.xlane.xlu0 %628
      %v630 = vsel %vm352, %v609, 0.0
      %631 = vadd.xlane.f32.xlu0 %v630
      %v632 = vpop.xlane.xlu0 %631
      %v633 = vsel %vm352, %v611, 0.0
      %634 = vadd.xlane.f32.xlu0 %v633
      %v635 = vpop.xlane.xlu0 %634
      %v636 = vpack.c.bf16 %v599, %v597
      %v637 = vpack.c.bf16 %v603, %v601
      %v638 = vpack.c.bf16 %v607, %v605
      %v639 = vpack.c.bf16 %v611, %v609
      %v641 = vsel %vm352, %v636, 0
      %v644 = vsel %vm352, %v637, 0
      %v647 = vsel %vm352, %v638, 0
      %v650 = vsel %vm352, %v639, 0
      %652 = vmatprep.subr.bf16.mxu0 0
      %653 = vmatpush1.bf16.msra.mxu0 %v458
      %654 = vmatprep.subr.bf16.mxu0 0
      %655 = vmatpush1.bf16.msra.mxu0 %v459
      %656 = vmatprep.subr.bf16.mxu0 0
      %657 = vmatpush1.bf16.msra.mxu0 %v460
      %658 = vmatprep.subr.bf16.mxu0 0
      %659 = vmatpush1.bf16.msra.mxu0 %v461
      %660 = vmatprep.subr.bf16.mxu0 0
      %661 = vmatpush1.bf16.msra.mxu0 0
      %662 = vmatprep.subr.bf16.mxu0 0
      %663 = vmatpush1.bf16.msra.mxu0 0
      %664 = vmatprep.subr.bf16.mxu0 0
      %665 = vmatpush1.bf16.msra.mxu0 0
      %666 = vmatprep.subr.bf16.mxu0 0
      %667 = vmatpush1.bf16.msra.mxu0 0
      %668 = vmatprep.subr.bf16.mxu0 0
      %669 = vmatpush1.bf16.msra.mxu0 0
      %670 = vmatprep.subr.bf16.mxu0 0
      %671 = vmatpush1.bf16.msra.mxu0 0
      %672 = vmatprep.subr.bf16.mxu0 0
      %673 = vmatpush1.bf16.msra.mxu0 0
      %674 = vmatprep.subr.bf16.mxu0 0
      %675 = vmatpush1.bf16.msra.mxu0 0
      %676 = vmatprep.subr.bf16.mxu0 0
      %677 = vmatpush1.bf16.msra.mxu0 0
      %678 = vmatprep.subr.bf16.mxu0 0
      %679 = vmatpush1.bf16.msra.mxu0 0
      %680 = vmatprep.subr.bf16.mxu0 0
      %681 = vmatpush1.bf16.msra.mxu0 0
      %682 = vmatprep.subr.bf16.mxu0 0
      %683 = vmatpush1.bf16.msra.mxu0 0
      %684 = vmatprep.mubr.bf16.mxu0 0
      %685 = vmatmul.mubr.bf16.gmra.mrb[0].mxu0 %v641
      %v686 = vpop.f32.mrb[0].mxu0
      %v687 = vadd.f32 0.0, %v686
      %v688 = vpop.f32.mrb[0].mxu0
      %v689 = vpop.f32.mrb[0].mxu0
      %v690 = vadd.f32 0.0, %v689
      %v691 = vpop.f32.mrb[0].mxu0
      %692 = vmatprep.mubr.bf16.mxu0 0
      %693 = vmatmul.mubr.bf16.gmra.mrb[0].mxu0 %v644
      %v694 = vpop.f32.mrb[0].mxu0
      %v695 = vadd.f32 0.0, %v694
      %v696 = vpop.f32.mrb[0].mxu0
      %v697 = vpop.f32.mrb[0].mxu0
      %v698 = vadd.f32 0.0, %v697
      %v699 = vpop.f32.mrb[0].mxu0
      %700 = vmatprep.mubr.bf16.mxu0 0
      %701 = vmatmul.mubr.bf16.gmra.mrb[0].mxu0 %v647
      %v702 = vpop.f32.mrb[0].mxu0
      %v703 = vadd.f32 0.0, %v702
      %v704 = vpop.f32.mrb[0].mxu0
      %v705 = vpop.f32.mrb[0].mxu0
      %v706 = vadd.f32 0.0, %v705
      %v707 = vpop.f32.mrb[0].mxu0
      %708 = vmatprep.mubr.bf16.mxu0 0
      %709 = vmatmul.mubr.bf16.gmra.mrb[0].mxu0 %v650
      %v710 = vpop.f32.mrb[0].mxu0
      %v711 = vadd.f32 0.0, %v710
      %v712 = vpop.f32.mrb[0].mxu0
      %v713 = vpop.f32.mrb[0].mxu0
      %v714 = vadd.f32 0.0, %v713
      %v715 = vpop.f32.mrb[0].mxu0
      %716 = vdwg.mxu0
      %v717 = vrcp.pop %v614
      %v718 = vrcp.pop %v617
      %v719 = vrcp.pop %v620
      %v720 = vrcp.pop %v623
      %v721 = vrcp.pop %v626
      %v722 = vrcp.pop %v629
      %v723 = vrcp.pop %v632
      %v724 = vrcp.pop %v635
      %v725 = vmul.f32 %v687, %v717
      %v726 = vmul.f32 %v690, %v718
      %v727 = vmul.f32 %v695, %v719
      %v728 = vmul.f32 %v698, %v720
      %v729 = vmul.f32 %v703, %v721
      %v730 = vmul.f32 %v706, %v722
      %v731 = vmul.f32 %v711, %v723
      %v732 = vmul.f32 %v714, %v724
      %v733 = vpack.c.bf16 %v726, %v725
      %v734 = vpack.c.bf16 %v728, %v727
      %v735 = vpack.c.bf16 %v730, %v729
      %v736 = vpack.c.bf16 %v732, %v731
      %737 = vst.msk [vmem:[#allocation3] sm:$0xff] %vm474, %v733
      %738 = vst.msk [vmem:[#allocation3 + $0x8] sm:$0xff] %vm474, %v734
      %739 = vst.msk [vmem:[#allocation3 + $0x10] sm:$0xff] %vm474, %v735
      %740 = vst.msk [vmem:[#allocation3 + $0x18] sm:$0xff] %vm474, %v736
      %v741 = vld [vmem:[#allocation2] sm:$0xff]
      %v742 = vld [vmem:[#allocation2 + $0x10] sm:$0xff]
      %v743 = vld [vmem:[#allocation2 + $0x20] sm:$0xff]
      %v744 = vld [vmem:[#allocation2 + $0x30] sm:$0xff]
      %v745 = vld [vmem:[#allocation2 + $0x8] sm:$0xff]
      %v746 = vld [vmem:[#allocation2 + $0x18] sm:$0xff]
      %v747 = vld [vmem:[#allocation2 + $0x28] sm:$0xff]
      %v748 = vld [vmem:[#allocation2 + $0x38] sm:$0xff]
      %753 = vrot.lane.b32.xlu0 %v741, 112
      %v754 = vpop.permute.xlu0 %753
      %755 = vrot.lane.b32.xlu0 %v742, 112
      %v756 = vpop.permute.xlu0 %755
      %757 = vrot.lane.b32.xlu0 %v743, 112
      %v758 = vpop.permute.xlu0 %757
      %759 = vrot.lane.b32.xlu0 %v744, 112
      %v760 = vpop.permute.xlu0 %759
      %761 = vrot.lane.b32.xlu0 %v741, 48
      %v762 = vpop.permute.xlu0 %761
      %763 = vrot.lane.b32.xlu0 %v742, 48
      %v764 = vpop.permute.xlu0 %763
      %765 = vrot.lane.b32.xlu0 %v743, 48
      %v766 = vpop.permute.xlu0 %765
      %767 = vrot.lane.b32.xlu0 %v744, 48
      %v768 = vpop.permute.xlu0 %767
      %v770 = vsel %vm474, %v754, 0
      %v773 = vsel %vm474, %v756, 0
      %v776 = vsel %vm474, %v758, 0
      %v779 = vsel %vm474, %v760, 0
      %v782 = vsel %vm474, %v762, 0
      %v785 = vsel %vm474, %v764, 0
      %v788 = vsel %vm474, %v766, 0
      %v791 = vsel %vm474, %v768, 0
      %793 = vmatprep.subr.bf16.mxu0 0
      %794 = vmatpush1.bf16.xpose.msra.mxu0 %v782
      %795 = vmatprep.subr.bf16.mxu0 0
      %796 = vmatpush1.bf16.xpose.msra.mxu0 %v785
      %797 = vmatprep.subr.bf16.mxu0 0
      %798 = vmatpush1.bf16.xpose.msra.mxu0 %v788
      %799 = vmatprep.subr.bf16.mxu0 0
      %800 = vmatpush1.bf16.xpose.msra.mxu0 %v791
      %801 = vmatprep.subr.bf16.mxu0 0
      %802 = vmatpush1.bf16.xpose.msra.mxu0 0
      %803 = vmatprep.subr.bf16.mxu0 0
      %804 = vmatpush1.bf16.xpose.msra.mxu0 0
      %805 = vmatprep.subr.bf16.mxu0 0
      %806 = vmatpush1.bf16.xpose.msra.mxu0 0
      %807 = vmatprep.subr.bf16.mxu0 0
      %808 = vmatpush1.bf16.xpose.msra.mxu0 0
      %809 = vmatprep.subr.bf16.mxu0 0
      %810 = vmatpush1.bf16.xpose.msra.mxu0 0
      %811 = vmatprep.subr.bf16.mxu0 0
      %812 = vmatpush1.bf16.xpose.msra.mxu0 0
      %813 = vmatprep.subr.bf16.mxu0 0
      %814 = vmatpush1.bf16.xpose.msra.mxu0 0
      %815 = vmatprep.subr.bf16.mxu0 0
      %816 = vmatpush1.bf16.xpose.msra.mxu0 0
      %817 = vmatprep.subr.bf16.mxu0 0
      %818 = vmatpush1.bf16.xpose.msra.mxu0 0
      %819 = vmatprep.subr.bf16.mxu0 0
      %820 = vmatpush1.bf16.xpose.msra.mxu0 0
      %821 = vmatprep.subr.bf16.mxu0 0
      %822 = vmatpush1.bf16.xpose.msra.mxu0 0
      %823 = vmatprep.subr.bf16.mxu0 0
      %824 = vmatpush1.bf16.xpose.msra.mxu0 0
      %825 = vmatprep.mubr.bf16.mxu0 0
      %826 = vmatmul.mubr.bf16.gmra.mrb[0].mxu0 %v770
      %v827 = vpop.f32.mrb[0].mxu0
      %v828 = vadd.f32 0.0, %v827
      %v829 = vpop.f32.mrb[0].mxu0
      %v830 = vpop.f32.mrb[0].mxu0
      %v831 = vadd.f32 0.0, %v830
      %v832 = vpop.f32.mrb[0].mxu0
      %833 = vmatprep.mubr.bf16.mxu0 0
      %834 = vmatmul.mubr.bf16.gmra.mrb[0].mxu0 %v773
      %v835 = vpop.f32.mrb[0].mxu0
      %v836 = vadd.f32 0.0, %v835
      %v837 = vpop.f32.mrb[0].mxu0
      %v838 = vpop.f32.mrb[0].mxu0
      %v839 = vadd.f32 0.0, %v838
      %v840 = vpop.f32.mrb[0].mxu0
      %841 = vmatprep.mubr.bf16.mxu0 0
      %842 = vmatmul.mubr.bf16.gmra.mrb[0].mxu0 %v776
      %v843 = vpop.f32.mrb[0].mxu0
      %v844 = vadd.f32 0.0, %v843
      %v845 = vpop.f32.mrb[0].mxu0
      %v846 = vpop.f32.mrb[0].mxu0
      %v847 = vadd.f32 0.0, %v846
      %v848 = vpop.f32.mrb[0].mxu0
      %849 = vmatprep.mubr.bf16.mxu0 0
      %850 = vmatmul.mubr.bf16.gmra.mrb[0].mxu0 %v779
      %v851 = vpop.f32.mrb[0].mxu0
      %v852 = vadd.f32 0.0, %v851
      %v853 = vpop.f32.mrb[0].mxu0
      %v854 = vpop.f32.mrb[0].mxu0
      %v855 = vadd.f32 0.0, %v854
      %v856 = vpop.f32.mrb[0].mxu0
      %857 = vdwg.mxu0
      %v858 = vsel %vm352, %v828, -inf
      %859 = vmax.xlane.f32.xlu0 %v858
      %v860 = vpop.xlane.xlu0 %859
      %v861 = vsel %vm352, %v831, -inf
      %862 = vmax.xlane.f32.xlu0 %v861
      %v863 = vpop.xlane.xlu0 %862
      %v864 = vsel %vm352, %v836, -inf
      %865 = vmax.xlane.f32.xlu0 %v864
      %v866 = vpop.xlane.xlu0 %865
      %v867 = vsel %vm352, %v839, -inf
      %868 = vmax.xlane.f32.xlu0 %v867
      %v869 = vpop.xlane.xlu0 %868
      %v870 = vsel %vm352, %v844, -inf
      %871 = vmax.xlane.f32.xlu0 %v870
      %v872 = vpop.xlane.xlu0 %871
      %v873 = vsel %vm352, %v847, -inf
      %874 = vmax.xlane.f32.xlu0 %v873
      %v875 = vpop.xlane.xlu0 %874
      %v876 = vsel %vm352, %v852, -inf
      %877 = vmax.xlane.f32.xlu0 %v876
      %v878 = vpop.xlane.xlu0 %877
      %v879 = vsel %vm352, %v855, -inf
      %880 = vmax.xlane.f32.xlu0 %v879
      %v881 = vpop.xlane.xlu0 %880
      %v882 = vsub.f32 %v828, %v860
      %v883 = vsub.f32 %v831, %v863
      %v884 = vsub.f32 %v836, %v866
      %v885 = vsub.f32 %v839, %v869
      %v886 = vsub.f32 %v844, %v872
      %v887 = vsub.f32 %v847, %v875
      %v888 = vsub.f32 %v852, %v878
      %v889 = vsub.f32 %v855, %v881
      %v890 = vmul.f32 %v882, 1.442695
      %v891 = vpow.pop %v890
      %v892 = vmul.f32 %v883, 1.442695
      %v893 = vpow.pop %v892
      %v894 = vmul.f32 %v884, 1.442695
      %v895 = vpow.pop %v894
      %v896 = vmul.f32 %v885, 1.442695
      %v897 = vpow.pop %v896
      %v898 = vmul.f32 %v886, 1.442695
      %v899 = vpow.pop %v898
      %v900 = vmul.f32 %v887, 1.442695
      %v901 = vpow.pop %v900
      %v902 = vmul.f32 %v888, 1.442695
      %v903 = vpow.pop %v902
      %v904 = vmul.f32 %v889, 1.442695
      %v905 = vpow.pop %v904
      %v906 = vsel %vm352, %v891, 0.0
      %907 = vadd.xlane.f32.xlu0 %v906
      %v908 = vpop.xlane.xlu0 %907
      %v909 = vsel %vm352, %v893, 0.0
      %910 = vadd.xlane.f32.xlu0 %v909
      %v911 = vpop.xlane.xlu0 %910
      %v912 = vsel %vm352, %v895, 0.0
      %913 = vadd.xlane.f32.xlu0 %v912
      %v914 = vpop.xlane.xlu0 %913
      %v915 = vsel %vm352, %v897, 0.0
      %916 = vadd.xlane.f32.xlu0 %v915
      %v917 = vpop.xlane.xlu0 %916
      %v918 = vsel %vm352, %v899, 0.0
      %919 = vadd.xlane.f32.xlu0 %v918
      %v920 = vpop.xlane.xlu0 %919
      %v921 = vsel %vm352, %v901, 0.0
      %922 = vadd.xlane.f32.xlu0 %v921
      %v923 = vpop.xlane.xlu0 %922
      %v924 = vsel %vm352, %v903, 0.0
      %925 = vadd.xlane.f32.xlu0 %v924
      %v926 = vpop.xlane.xlu0 %925
      %v927 = vsel %vm352, %v905, 0.0
      %928 = vadd.xlane.f32.xlu0 %v927
      %v929 = vpop.xlane.xlu0 %928
      %v930 = vpack.c.bf16 %v893, %v891
      %v931 = vpack.c.bf16 %v897, %v895
      %v932 = vpack.c.bf16 %v901, %v899
      %v933 = vpack.c.bf16 %v905, %v903
      %938 = vrot.lane.b32.xlu0 %v745, 112
      %v939 = vpop.permute.xlu0 %938
      %940 = vrot.lane.b32.xlu0 %v746, 112
      %v941 = vpop.permute.xlu0 %940
      %942 = vrot.lane.b32.xlu0 %v747, 112
      %v943 = vpop.permute.xlu0 %942
      %944 = vrot.lane.b32.xlu0 %v748, 112
      %v945 = vpop.permute.xlu0 %944
      %v951 = vsel %vm352, %v930, 0
      %v954 = vsel %vm352, %v931, 0
      %v957 = vsel %vm352, %v932, 0
      %v960 = vsel %vm352, %v933, 0
      %962 = vmatprep.subr.bf16.mxu0 0
      %963 = vmatpush1.bf16.msra.mxu0 %v939
      %964 = vmatprep.subr.bf16.mxu0 0
      %965 = vmatpush1.bf16.msra.mxu0 %v941
      %966 = vmatprep.subr.bf16.mxu0 0
      %967 = vmatpush1.bf16.msra.mxu0 %v943
      %968 = vmatprep.subr.bf16.mxu0 0
      %969 = vmatpush1.bf16.msra.mxu0 %v945
      %970 = vmatprep.subr.bf16.mxu0 0
      %971 = vmatpush1.bf16.msra.mxu0 0
      %972 = vmatprep.subr.bf16.mxu0 0
      %973 = vmatpush1.bf16.msra.mxu0 0
      %974 = vmatprep.subr.bf16.mxu0 0
      %975 = vmatpush1.bf16.msra.mxu0 0
      %976 = vmatprep.subr.bf16.mxu0 0
      %977 = vmatpush1.bf16.msra.mxu0 0
      %978 = vmatprep.subr.bf16.mxu0 0
      %979 = vmatpush1.bf16.msra.mxu0 0
      %980 = vmatprep.subr.bf16.mxu0 0
      %981 = vmatpush1.bf16.msra.mxu0 0
      %982 = vmatprep.subr.bf16.mxu0 0
      %983 = vmatpush1.bf16.msra.mxu0 0
      %984 = vmatprep.subr.bf16.mxu0 0
      %985 = vmatpush1.bf16.msra.mxu0 0
      %986 = vmatprep.subr.bf16.mxu0 0
      %987 = vmatpush1.bf16.msra.mxu0 0
      %988 = vmatprep.subr.bf16.mxu0 0
      %989 = vmatpush1.bf16.msra.mxu0 0
      %990 = vmatprep.subr.bf16.mxu0 0
      %991 = vmatpush1.bf16.msra.mxu0 0
      %992 = vmatprep.subr.bf16.mxu0 0
      %993 = vmatpush1.bf16.msra.mxu0 0
      %994 = vmatprep.mubr.bf16.mxu0 0
      %995 = vmatmul.mubr.bf16.gmra.mrb[0].mxu0 %v951
      %v996 = vpop.f32.mrb[0].mxu0
      %v997 = vadd.f32 0.0, %v996
      %v998 = vpop.f32.mrb[0].mxu0
      %v999 = vpop.f32.mrb[0].mxu0
      %v1000 = vadd.f32 0.0, %v999
      %v1001 = vpop.f32.mrb[0].mxu0
      %1002 = vmatprep.mubr.bf16.mxu0 0
      %1003 = vmatmul.mubr.bf16.gmra.mrb[0].mxu0 %v954
      %v1004 = vpop.f32.mrb[0].mxu0
      %v1005 = vadd.f32 0.0, %v1004
      %v1006 = vpop.f32.mrb[0].mxu0
      %v1007 = vpop.f32.mrb[0].mxu0
      %v1008 = vadd.f32 0.0, %v1007
      %v1009 = vpop.f32.mrb[0].mxu0
      %1010 = vmatprep.mubr.bf16.mxu0 0
      %1011 = vmatmul.mubr.bf16.gmra.mrb[0].mxu0 %v957
      %v1012 = vpop.f32.mrb[0].mxu0
      %v1013 = vadd.f32 0.0, %v1012
      %v1014 = vpop.f32.mrb[0].mxu0
      %v1015 = vpop.f32.mrb[0].mxu0
      %v1016 = vadd.f32 0.0, %v1015
      %v1017 = vpop.f32.mrb[0].mxu0
      %1018 = vmatprep.mubr.bf16.mxu0 0
      %1019 = vmatmul.mubr.bf16.gmra.mrb[0].mxu0 %v960
      %v1020 = vpop.f32.mrb[0].mxu0
      %v1021 = vadd.f32 0.0, %v1020
      %v1022 = vpop.f32.mrb[0].mxu0
      %v1023 = vpop.f32.mrb[0].mxu0
      %v1024 = vadd.f32 0.0, %v1023
      %v1025 = vpop.f32.mrb[0].mxu0
      %1026 = vdwg.mxu0
      %v1027 = vrcp.pop %v908
      %v1028 = vrcp.pop %v911
      %v1029 = vrcp.pop %v914
      %v1030 = vrcp.pop %v917
      %v1031 = vrcp.pop %v920
      %v1032 = vrcp.pop %v923
      %v1033 = vrcp.pop %v926
      %v1034 = vrcp.pop %v929
      %v1035 = vmul.f32 %v997, %v1027
      %v1036 = vmul.f32 %v1000, %v1028
      %v1037 = vmul.f32 %v1005, %v1029
      %v1038 = vmul.f32 %v1008, %v1030
      %v1039 = vmul.f32 %v1013, %v1031
      %v1040 = vmul.f32 %v1016, %v1032
      %v1041 = vmul.f32 %v1021, %v1033
      %v1042 = vmul.f32 %v1024, %v1034
      %v1043 = vpack.c.bf16 %v1036, %v1035
      %v1044 = vpack.c.bf16 %v1038, %v1037
      %v1045 = vpack.c.bf16 %v1040, %v1039
      %v1046 = vpack.c.bf16 %v1042, %v1041
      %1051 = vrot.lane.b32.xlu0 %v1043, 16
      %v1052 = vpop.permute.xlu0 %1051
      %1053 = vrot.lane.b32.xlu0 %v1044, 16
      %v1054 = vpop.permute.xlu0 %1053
      %1055 = vrot.lane.b32.xlu0 %v1045, 16
      %v1056 = vpop.permute.xlu0 %1055
      %1057 = vrot.lane.b32.xlu0 %v1046, 16
      %v1058 = vpop.permute.xlu0 %1057
      %vm1063 = vcmask 261248
      %1064 = vst.msk [vmem:[#allocation3] sm:$0xff] %vm1063, %v1052
      %1065 = vst.msk [vmem:[#allocation3 + $0x8] sm:$0xff] %vm1063, %v1054
      %1066 = vst.msk [vmem:[#allocation3 + $0x10] sm:$0xff] %vm1063, %v1056
      %1067 = vst.msk [vmem:[#allocation3 + $0x18] sm:$0xff] %vm1063, %v1058
      %v1068 = vld [vmem:[#allocation2] sm:$0xff]
      %v1069 = vld [vmem:[#allocation2 + $0x10] sm:$0xff]
      %v1070 = vld [vmem:[#allocation2 + $0x20] sm:$0xff]
      %v1071 = vld [vmem:[#allocation2 + $0x30] sm:$0xff]
      %v1072 = vld [vmem:[#allocation2 + $0x8] sm:$0xff]
      %v1073 = vld [vmem:[#allocation2 + $0x18] sm:$0xff]
      %v1074 = vld [vmem:[#allocation2 + $0x28] sm:$0xff]
      %v1075 = vld [vmem:[#allocation2 + $0x38] sm:$0xff]
      %1080 = vrot.lane.b32.xlu0 %v1068, 96
      %v1081 = vpop.permute.xlu0 %1080
      %1082 = vrot.lane.b32.xlu0 %v1069, 96
      %v1083 = vpop.permute.xlu0 %1082
      %1084 = vrot.lane.b32.xlu0 %v1070, 96
      %v1085 = vpop.permute.xlu0 %1084
      %1086 = vrot.lane.b32.xlu0 %v1071, 96
      %v1087 = vpop.permute.xlu0 %1086
      %1088 = vrot.lane.b32.xlu0 %v1068, 32
      %v1089 = vpop.permute.xlu0 %1088
      %1090 = vrot.lane.b32.xlu0 %v1069, 32
      %v1091 = vpop.permute.xlu0 %1090
      %1092 = vrot.lane.b32.xlu0 %v1070, 32
      %v1093 = vpop.permute.xlu0 %1092
      %1094 = vrot.lane.b32.xlu0 %v1071, 32
      %v1095 = vpop.permute.xlu0 %1094
      %v1097 = vsel %vm474, %v1081, 0
      %v1100 = vsel %vm474, %v1083, 0
      %v1103 = vsel %vm474, %v1085, 0
      %v1106 = vsel %vm474, %v1087, 0
      %v1109 = vsel %vm474, %v1089, 0
      %v1112 = vsel %vm474, %v1091, 0
      %v1115 = vsel %vm474, %v1093, 0
      %v1118 = vsel %vm474, %v1095, 0
      %1120 = vmatprep.subr.bf16.mxu0 0
      %1121 = vmatpush1.bf16.xpose.msra.mxu0 %v1109
      %1122 = vmatprep.subr.bf16.mxu0 0
      %1123 = vmatpush1.bf16.xpose.msra.mxu0 %v1112
      %1124 = vmatprep.subr.bf16.mxu0 0
      %1125 = vmatpush1.bf16.xpose.msra.mxu0 %v1115
      %1126 = vmatprep.subr.bf16.mxu0 0
      %1127 = vmatpush1.bf16.xpose.msra.mxu0 %v1118
      %1128 = vmatprep.subr.bf16.mxu0 0
      %1129 = vmatpush1.bf16.xpose.msra.mxu0 0
      %1130 = vmatprep.subr.bf16.mxu0 0
      %1131 = vmatpush1.bf16.xpose.msra.mxu0 0
      %1132 = vmatprep.subr.bf16.mxu0 0
      %1133 = vmatpush1.bf16.xpose.msra.mxu0 0
      %1134 = vmatprep.subr.bf16.mxu0 0
      %1135 = vmatpush1.bf16.xpose.msra.mxu0 0
      %1136 = vmatprep.subr.bf16.mxu0 0
      %1137 = vmatpush1.bf16.xpose.msra.mxu0 0
      %1138 = vmatprep.subr.bf16.mxu0 0
      %1139 = vmatpush1.bf16.xpose.msra.mxu0 0
      %1140 = vmatprep.subr.bf16.mxu0 0
      %1141 = vmatpush1.bf16.xpose.msra.mxu0 0
      %1142 = vmatprep.subr.bf16.mxu0 0
      %1143 = vmatpush1.bf16.xpose.msra.mxu0 0
      %1144 = vmatprep.subr.bf16.mxu0 0
      %1145 = vmatpush1.bf16.xpose.msra.mxu0 0
      %1146 = vmatprep.subr.bf16.mxu0 0
      %1147 = vmatpush1.bf16.xpose.msra.mxu0 0
      %1148 = vmatprep.subr.bf16.mxu0 0
      %1149 = vmatpush1.bf16.xpose.msra.mxu0 0
      %1150 = vmatprep.subr.bf16.mxu0 0
      %1151 = vmatpush1.bf16.xpose.msra.mxu0 0
      %1152 = vmatprep.mubr.bf16.mxu0 0
      %1153 = vmatmul.mubr.bf16.gmra.mrb[0].mxu0 %v1097
      %v1154 = vpop.f32.mrb[0].mxu0
      %v1155 = vadd.f32 0.0, %v1154
      %v1156 = vpop.f32.mrb[0].mxu0
      %v1157 = vpop.f32.mrb[0].mxu0
      %v1158 = vadd.f32 0.0, %v1157
      %v1159 = vpop.f32.mrb[0].mxu0
      %1160 = vmatprep.mubr.bf16.mxu0 0
      %1161 = vmatmul.mubr.bf16.gmra.mrb[0].mxu0 %v1100
      %v1162 = vpop.f32.mrb[0].mxu0
      %v1163 = vadd.f32 0.0, %v1162
      %v1164 = vpop.f32.mrb[0].mxu0
      %v1165 = vpop.f32.mrb[0].mxu0
      %v1166 = vadd.f32 0.0, %v1165
      %v1167 = vpop.f32.mrb[0].mxu0
      %1168 = vmatprep.mubr.bf16.mxu0 0
      %1169 = vmatmul.mubr.bf16.gmra.mrb[0].mxu0 %v1103
      %v1170 = vpop.f32.mrb[0].mxu0
      %v1171 = vadd.f32 0.0, %v1170
      %v1172 = vpop.f32.mrb[0].mxu0
      %v1173 = vpop.f32.mrb[0].mxu0
      %v1174 = vadd.f32 0.0, %v1173
      %v1175 = vpop.f32.mrb[0].mxu0
      %1176 = vmatprep.mubr.bf16.mxu0 0
      %1177 = vmatmul.mubr.bf16.gmra.mrb[0].mxu0 %v1106
      %v1178 = vpop.f32.mrb[0].mxu0
      %v1179 = vadd.f32 0.0, %v1178
      %v1180 = vpop.f32.mrb[0].mxu0
      %v1181 = vpop.f32.mrb[0].mxu0
      %v1182 = vadd.f32 0.0, %v1181
      %v1183 = vpop.f32.mrb[0].mxu0
      %1184 = vdwg.mxu0
      %v1185 = vsel %vm352, %v1155, -inf
      %1186 = vmax.xlane.f32.xlu0 %v1185
      %v1187 = vpop.xlane.xlu0 %1186
      %v1188 = vsel %vm352, %v1158, -inf
      %1189 = vmax.xlane.f32.xlu0 %v1188
      %v1190 = vpop.xlane.xlu0 %1189
      %v1191 = vsel %vm352, %v1163, -inf
      %1192 = vmax.xlane.f32.xlu0 %v1191
      %v1193 = vpop.xlane.xlu0 %1192
      %v1194 = vsel %vm352, %v1166, -inf
      %1195 = vmax.xlane.f32.xlu0 %v1194
      %v1196 = vpop.xlane.xlu0 %1195
      %v1197 = vsel %vm352, %v1171, -inf
      %1198 = vmax.xlane.f32.xlu0 %v1197
      %v1199 = vpop.xlane.xlu0 %1198
      %v1200 = vsel %vm352, %v1174, -inf
      %1201 = vmax.xlane.f32.xlu0 %v1200
      %v1202 = vpop.xlane.xlu0 %1201
      %v1203 = vsel %vm352, %v1179, -inf
      %1204 = vmax.xlane.f32.xlu0 %v1203
      %v1205 = vpop.xlane.xlu0 %1204
      %v1206 = vsel %vm352, %v1182, -inf
      %1207 = vmax.xlane.f32.xlu0 %v1206
      %v1208 = vpop.xlane.xlu0 %1207
      %v1209 = vsub.f32 %v1155, %v1187
      %v1210 = vsub.f32 %v1158, %v1190
      %v1211 = vsub.f32 %v1163, %v1193
      %v1212 = vsub.f32 %v1166, %v1196
      %v1213 = vsub.f32 %v1171, %v1199
      %v1214 = vsub.f32 %v1174, %v1202
      %v1215 = vsub.f32 %v1179, %v1205
      %v1216 = vsub.f32 %v1182, %v1208
      %v1217 = vmul.f32 %v1209, 1.442695
      %v1218 = vpow.pop %v1217
      %v1219 = vmul.f32 %v1210, 1.442695
      %v1220 = vpow.pop %v1219
      %v1221 = vmul.f32 %v1211, 1.442695
      %v1222 = vpow.pop %v1221
      %v1223 = vmul.f32 %v1212, 1.442695
      %v1224 = vpow.pop %v1223
      %v1225 = vmul.f32 %v1213, 1.442695
      %v1226 = vpow.pop %v1225
      %v1227 = vmul.f32 %v1214, 1.442695
      %v1228 = vpow.pop %v1227
      %v1229 = vmul.f32 %v1215, 1.442695
      %v1230 = vpow.pop %v1229
      %v1231 = vmul.f32 %v1216, 1.442695
      %v1232 = vpow.pop %v1231
      %v1233 = vsel %vm352, %v1218, 0.0
      %1234 = vadd.xlane.f32.xlu0 %v1233
      %v1235 = vpop.xlane.xlu0 %1234
      %v1236 = vsel %vm352, %v1220, 0.0
      %1237 = vadd.xlane.f32.xlu0 %v1236
      %v1238 = vpop.xlane.xlu0 %1237
      %v1239 = vsel %vm352, %v1222, 0.0
      %1240 = vadd.xlane.f32.xlu0 %v1239
      %v1241 = vpop.xlane.xlu0 %1240
      %v1242 = vsel %vm352, %v1224, 0.0
      %1243 = vadd.xlane.f32.xlu0 %v1242
      %v1244 = vpop.xlane.xlu0 %1243
      %v1245 = vsel %vm352, %v1226, 0.0
      %1246 = vadd.xlane.f32.xlu0 %v1245
      %v1247 = vpop.xlane.xlu0 %1246
      %v1248 = vsel %vm352, %v1228, 0.0
      %1249 = vadd.xlane.f32.xlu0 %v1248
      %v1250 = vpop.xlane.xlu0 %1249
      %v1251 = vsel %vm352, %v1230, 0.0
      %1252 = vadd.xlane.f32.xlu0 %v1251
      %v1253 = vpop.xlane.xlu0 %1252
      %v1254 = vsel %vm352, %v1232, 0.0
      %1255 = vadd.xlane.f32.xlu0 %v1254
      %v1256 = vpop.xlane.xlu0 %1255
      %v1257 = vpack.c.bf16 %v1220, %v1218
      %v1258 = vpack.c.bf16 %v1224, %v1222
      %v1259 = vpack.c.bf16 %v1228, %v1226
      %v1260 = vpack.c.bf16 %v1232, %v1230
      %1265 = vrot.lane.b32.xlu0 %v1072, 96
      %v1266 = vpop.permute.xlu0 %1265
      %1267 = vrot.lane.b32.xlu0 %v1073, 96
      %v1268 = vpop.permute.xlu0 %1267
      %1269 = vrot.lane.b32.xlu0 %v1074, 96
      %v1270 = vpop.permute.xlu0 %1269
      %1271 = vrot.lane.b32.xlu0 %v1075, 96
      %v1272 = vpop.permute.xlu0 %1271
      %v1278 = vsel %vm352, %v1257, 0
      %v1281 = vsel %vm352, %v1258, 0
      %v1284 = vsel %vm352, %v1259, 0
      %v1287 = vsel %vm352, %v1260, 0
      %1289 = vmatprep.subr.bf16.mxu0 0
      %1290 = vmatpush1.bf16.msra.mxu0 %v1266
      %1291 = vmatprep.subr.bf16.mxu0 0
      %1292 = vmatpush1.bf16.msra.mxu0 %v1268
      %1293 = vmatprep.subr.bf16.mxu0 0
      %1294 = vmatpush1.bf16.msra.mxu0 %v1270
      %1295 = vmatprep.subr.bf16.mxu0 0
      %1296 = vmatpush1.bf16.msra.mxu0 %v1272
      %1297 = vmatprep.subr.bf16.mxu0 0
      %1298 = vmatpush1.bf16.msra.mxu0 0
      %1299 = vmatprep.subr.bf16.mxu0 0
      %1300 = vmatpush1.bf16.msra.mxu0 0
      %1301 = vmatprep.subr.bf16.mxu0 0
      %1302 = vmatpush1.bf16.msra.mxu0 0
      %1303 = vmatprep.subr.bf16.mxu0 0
      %1304 = vmatpush1.bf16.msra.mxu0 0
      %1305 = vmatprep.subr.bf16.mxu0 0
      %1306 = vmatpush1.bf16.msra.mxu0 0
      %1307 = vmatprep.subr.bf16.mxu0 0
      %1308 = vmatpush1.bf16.msra.mxu0 0
      %1309 = vmatprep.subr.bf16.mxu0 0
      %1310 = vmatpush1.bf16.msra.mxu0 0
      %1311 = vmatprep.subr.bf16.mxu0 0
      %1312 = vmatpush1.bf16.msra.mxu0 0
      %1313 = vmatprep.subr.bf16.mxu0 0
      %1314 = vmatpush1.bf16.msra.mxu0 0
      %1315 = vmatprep.subr.bf16.mxu0 0
      %1316 = vmatpush1.bf16.msra.mxu0 0
      %1317 = vmatprep.subr.bf16.mxu0 0
      %1318 = vmatpush1.bf16.msra.mxu0 0
      %1319 = vmatprep.subr.bf16.mxu0 0
      %1320 = vmatpush1.bf16.msra.mxu0 0
      %1321 = vmatprep.mubr.bf16.mxu0 0
      %1322 = vmatmul.mubr.bf16.gmra.mrb[0].mxu0 %v1278
      %v1323 = vpop.f32.mrb[0].mxu0
      %v1324 = vadd.f32 0.0, %v1323
      %v1325 = vpop.f32.mrb[0].mxu0
      %v1326 = vpop.f32.mrb[0].mxu0
      %v1327 = vadd.f32 0.0, %v1326
      %v1328 = vpop.f32.mrb[0].mxu0
      %1329 = vmatprep.mubr.bf16.mxu0 0
      %1330 = vmatmul.mubr.bf16.gmra.mrb[0].mxu0 %v1281
      %v1331 = vpop.f32.mrb[0].mxu0
      %v1332 = vadd.f32 0.0, %v1331
      %v1333 = vpop.f32.mrb[0].mxu0
      %v1334 = vpop.f32.mrb[0].mxu0
      %v1335 = vadd.f32 0.0, %v1334
      %v1336 = vpop.f32.mrb[0].mxu0
      %1337 = vmatprep.mubr.bf16.mxu0 0
      %1338 = vmatmul.mubr.bf16.gmra.mrb[0].mxu0 %v1284
      %v1339 = vpop.f32.mrb[0].mxu0
      %v1340 = vadd.f32 0.0, %v1339
      %v1341 = vpop.f32.mrb[0].mxu0
      %v1342 = vpop.f32.mrb[0].mxu0
      %v1343 = vadd.f32 0.0, %v1342
      %v1344 = vpop.f32.mrb[0].mxu0
      %1345 = vmatprep.mubr.bf16.mxu0 0
      %1346 = vmatmul.mubr.bf16.gmra.mrb[0].mxu0 %v1287
      %v1347 = vpop.f32.mrb[0].mxu0
      %v1348 = vadd.f32 0.0, %v1347
      %v1349 = vpop.f32.mrb[0].mxu0
      %v1350 = vpop.f32.mrb[0].mxu0
      %v1351 = vadd.f32 0.0, %v1350
      %v1352 = vpop.f32.mrb[0].mxu0
      %1353 = vdwg.mxu0
      %v1354 = vrcp.pop %v1235
      %v1355 = vrcp.pop %v1238
      %v1356 = vrcp.pop %v1241
      %v1357 = vrcp.pop %v1244
      %v1358 = vrcp.pop %v1247
      %v1359 = vrcp.pop %v1250
      %v1360 = vrcp.pop %v1253
      %v1361 = vrcp.pop %v1256
      %v1362 = vmul.f32 %v1324, %v1354
      %v1363 = vmul.f32 %v1327, %v1355
      %v1364 = vmul.f32 %v1332, %v1356
      %v1365 = vmul.f32 %v1335, %v1357
      %v1366 = vmul.f32 %v1340, %v1358
      %v1367 = vmul.f32 %v1343, %v1359
      %v1368 = vmul.f32 %v1348, %v1360
      %v1369 = vmul.f32 %v1351, %v1361
      %v1370 = vpack.c.bf16 %v1363, %v1362
      %v1371 = vpack.c.bf16 %v1365, %v1364
      %v1372 = vpack.c.bf16 %v1367, %v1366
      %v1373 = vpack.c.bf16 %v1369, %v1368
      %1378 = vrot.lane.b32.xlu0 %v1370, 32
      %v1379 = vpop.permute.xlu0 %1378
      %1380 = vrot.lane.b32.xlu0 %v1371, 32
      %v1381 = vpop.permute.xlu0 %1380
      %1382 = vrot.lane.b32.xlu0 %v1372, 32
      %v1383 = vpop.permute.xlu0 %1382
      %1384 = vrot.lane.b32.xlu0 %v1373, 32
      %v1385 = vpop.permute.xlu0 %1384
      %vm1390 = vcmask 392448
      %1391 = vst.msk [vmem:[#allocation3] sm:$0xff] %vm1390, %v1379
      %1392 = vst.msk [vmem:[#allocation3 + $0x8] sm:$0xff] %vm1390, %v1381
      %1393 = vst.msk [vmem:[#allocation3 + $0x10] sm:$0xff] %vm1390, %v1383
      %1394 = vst.msk [vmem:[#allocation3 + $0x18] sm:$0xff] %vm1390, %v1385
      %v1395 = vld [vmem:[#allocation2] sm:$0xff]
      %v1396 = vld [vmem:[#allocation2 + $0x10] sm:$0xff]
      %v1397 = vld [vmem:[#allocation2 + $0x20] sm:$0xff]
      %v1398 = vld [vmem:[#allocation2 + $0x30] sm:$0xff]
      %v1399 = vld [vmem:[#allocation2 + $0x8] sm:$0xff]
      %v1400 = vld [vmem:[#allocation2 + $0x18] sm:$0xff]
      %v1401 = vld [vmem:[#allocation2 + $0x28] sm:$0xff]
      %v1402 = vld [vmem:[#allocation2 + $0x38] sm:$0xff]
      %1407 = vrot.lane.b32.xlu0 %v1395, 80
      %v1408 = vpop.permute.xlu0 %1407
      %1409 = vrot.lane.b32.xlu0 %v1396, 80
      %v1410 = vpop.permute.xlu0 %1409
      %1411 = vrot.lane.b32.xlu0 %v1397, 80
      %v1412 = vpop.permute.xlu0 %1411
      %1413 = vrot.lane.b32.xlu0 %v1398, 80
      %v1414 = vpop.permute.xlu0 %1413
      %1415 = vrot.lane.b32.xlu0 %v1395, 16
      %v1416 = vpop.permute.xlu0 %1415
      %1417 = vrot.lane.b32.xlu0 %v1396, 16
      %v1418 = vpop.permute.xlu0 %1417
      %1419 = vrot.lane.b32.xlu0 %v1397, 16
      %v1420 = vpop.permute.xlu0 %1419
      %1421 = vrot.lane.b32.xlu0 %v1398, 16
      %v1422 = vpop.permute.xlu0 %1421
      %v1424 = vsel %vm474, %v1408, 0
      %v1427 = vsel %vm474, %v1410, 0
      %v1430 = vsel %vm474, %v1412, 0
      %v1433 = vsel %vm474, %v1414, 0
      %v1436 = vsel %vm474, %v1416, 0
      %v1439 = vsel %vm474, %v1418, 0
      %v1442 = vsel %vm474, %v1420, 0
      %v1445 = vsel %vm474, %v1422, 0
      %1447 = vmatprep.subr.bf16.mxu0 0
      %1448 = vmatpush1.bf16.xpose.msra.mxu0 %v1436
      %1449 = vmatprep.subr.bf16.mxu0 0
      %1450 = vmatpush1.bf16.xpose.msra.mxu0 %v1439
      %1451 = vmatprep.subr.bf16.mxu0 0
      %1452 = vmatpush1.bf16.xpose.msra.mxu0 %v1442
      %1453 = vmatprep.subr.bf16.mxu0 0
      %1454 = vmatpush1.bf16.xpose.msra.mxu0 %v1445
      %1455 = vmatprep.subr.bf16.mxu0 0
      %1456 = vmatpush1.bf16.xpose.msra.mxu0 0
      %1457 = vmatprep.subr.bf16.mxu0 0
      %1458 = vmatpush1.bf16.xpose.msra.mxu0 0
      %1459 = vmatprep.subr.bf16.mxu0 0
      %1460 = vmatpush1.bf16.xpose.msra.mxu0 0
      %1461 = vmatprep.subr.bf16.mxu0 0
      %1462 = vmatpush1.bf16.xpose.msra.mxu0 0
      %1463 = vmatprep.subr.bf16.mxu0 0
      %1464 = vmatpush1.bf16.xpose.msra.mxu0 0
      %1465 = vmatprep.subr.bf16.mxu0 0
      %1466 = vmatpush1.bf16.xpose.msra.mxu0 0
      %1467 = vmatprep.subr.bf16.mxu0 0
      %1468 = vmatpush1.bf16.xpose.msra.mxu0 0
      %1469 = vmatprep.subr.bf16.mxu0 0
      %1470 = vmatpush1.bf16.xpose.msra.mxu0 0
      %1471 = vmatprep.subr.bf16.mxu0 0
      %1472 = vmatpush1.bf16.xpose.msra.mxu0 0
      %1473 = vmatprep.subr.bf16.mxu0 0
      %1474 = vmatpush1.bf16.xpose.msra.mxu0 0
      %1475 = vmatprep.subr.bf16.mxu0 0
      %1476 = vmatpush1.bf16.xpose.msra.mxu0 0
      %1477 = vmatprep.subr.bf16.mxu0 0
      %1478 = vmatpush1.bf16.xpose.msra.mxu0 0
      %1479 = vmatprep.mubr.bf16.mxu0 0
      %1480 = vmatmul.mubr.bf16.gmra.mrb[0].mxu0 %v1424
      %v1481 = vpop.f32.mrb[0].mxu0
      %v1482 = vadd.f32 0.0, %v1481
      %v1483 = vpop.f32.mrb[0].mxu0
      %v1484 = vpop.f32.mrb[0].mxu0
      %v1485 = vadd.f32 0.0, %v1484
      %v1486 = vpop.f32.mrb[0].mxu0
      %1487 = vmatprep.mubr.bf16.mxu0 0
      %1488 = vmatmul.mubr.bf16.gmra.mrb[0].mxu0 %v1427
      %v1489 = vpop.f32.mrb[0].mxu0
      %v1490 = vadd.f32 0.0, %v1489
      %v1491 = vpop.f32.mrb[0].mxu0
      %v1492 = vpop.f32.mrb[0].mxu0
      %v1493 = vadd.f32 0.0, %v1492
      %v1494 = vpop.f32.mrb[0].mxu0
      %1495 = vmatprep.mubr.bf16.mxu0 0
      %1496 = vmatmul.mubr.bf16.gmra.mrb[0].mxu0 %v1430
      %v1497 = vpop.f32.mrb[0].mxu0
      %v1498 = vadd.f32 0.0, %v1497
      %v1499 = vpop.f32.mrb[0].mxu0
      %v1500 = vpop.f32.mrb[0].mxu0
      %v1501 = vadd.f32 0.0, %v1500
      %v1502 = vpop.f32.mrb[0].mxu0
      %1503 = vmatprep.mubr.bf16.mxu0 0
      %1504 = vmatmul.mubr.bf16.gmra.mrb[0].mxu0 %v1433
      %v1505 = vpop.f32.mrb[0].mxu0
      %v1506 = vadd.f32 0.0, %v1505
      %v1507 = vpop.f32.mrb[0].mxu0
      %v1508 = vpop.f32.mrb[0].mxu0
      %v1509 = vadd.f32 0.0, %v1508
      %v1510 = vpop.f32.mrb[0].mxu0
      %1511 = vdwg.mxu0
      %v1512 = vsel %vm352, %v1482, -inf
      %1513 = vmax.xlane.f32.xlu0 %v1512
      %v1514 = vpop.xlane.xlu0 %1513
      %v1515 = vsel %vm352, %v1485, -inf
      %1516 = vmax.xlane.f32.xlu0 %v1515
      %v1517 = vpop.xlane.xlu0 %1516
      %v1518 = vsel %vm352, %v1490, -inf
      %1519 = vmax.xlane.f32.xlu0 %v1518
      %v1520 = vpop.xlane.xlu0 %1519
      %v1521 = vsel %vm352, %v1493, -inf
      %1522 = vmax.xlane.f32.xlu0 %v1521
      %v1523 = vpop.xlane.xlu0 %1522
      %v1524 = vsel %vm352, %v1498, -inf
      %1525 = vmax.xlane.f32.xlu0 %v1524
      %v1526 = vpop.xlane.xlu0 %1525
      %v1527 = vsel %vm352, %v1501, -inf
      %1528 = vmax.xlane.f32.xlu0 %v1527
      %v1529 = vpop.xlane.xlu0 %1528
      %v1530 = vsel %vm352, %v1506, -inf
      %1531 = vmax.xlane.f32.xlu0 %v1530
      %v1532 = vpop.xlane.xlu0 %1531
      %v1533 = vsel %vm352, %v1509, -inf
      %1534 = vmax.xlane.f32.xlu0 %v1533
      %v1535 = vpop.xlane.xlu0 %1534
      %v1536 = vsub.f32 %v1482, %v1514
      %v1537 = vsub.f32 %v1485, %v1517
      %v1538 = vsub.f32 %v1490, %v1520
      %v1539 = vsub.f32 %v1493, %v1523
      %v1540 = vsub.f32 %v1498, %v1526
      %v1541 = vsub.f32 %v1501, %v1529
      %v1542 = vsub.f32 %v1506, %v1532
      %v1543 = vsub.f32 %v1509, %v1535
      %v1544 = vmul.f32 %v1536, 1.442695
      %v1545 = vpow.pop %v1544
      %v1546 = vmul.f32 %v1537, 1.442695
      %v1547 = vpow.pop %v1546
      %v1548 = vmul.f32 %v1538, 1.442695
      %v1549 = vpow.pop %v1548
      %v1550 = vmul.f32 %v1539, 1.442695
      %v1551 = vpow.pop %v1550
      %v1552 = vmul.f32 %v1540, 1.442695
      %v1553 = vpow.pop %v1552
      %v1554 = vmul.f32 %v1541, 1.442695
      %v1555 = vpow.pop %v1554
      %v1556 = vmul.f32 %v1542, 1.442695
      %v1557 = vpow.pop %v1556
      %v1558 = vmul.f32 %v1543, 1.442695
      %v1559 = vpow.pop %v1558
      %v1560 = vsel %vm352, %v1545, 0.0
      %1561 = vadd.xlane.f32.xlu0 %v1560
      %v1562 = vpop.xlane.xlu0 %1561
      %v1563 = vsel %vm352, %v1547, 0.0
      %1564 = vadd.xlane.f32.xlu0 %v1563
      %v1565 = vpop.xlane.xlu0 %1564
      %v1566 = vsel %vm352, %v1549, 0.0
      %1567 = vadd.xlane.f32.xlu0 %v1566
      %v1568 = vpop.xlane.xlu0 %1567
      %v1569 = vsel %vm352, %v1551, 0.0
      %1570 = vadd.xlane.f32.xlu0 %v1569
      %v1571 = vpop.xlane.xlu0 %1570
      %v1572 = vsel %vm352, %v1553, 0.0
      %1573 = vadd.xlane.f32.xlu0 %v1572
      %v1574 = vpop.xlane.xlu0 %1573
      %v1575 = vsel %vm352, %v1555, 0.0
      %1576 = vadd.xlane.f32.xlu0 %v1575
      %v1577 = vpop.xlane.xlu0 %1576
      %v1578 = vsel %vm352, %v1557, 0.0
      %1579 = vadd.xlane.f32.xlu0 %v1578
      %v1580 = vpop.xlane.xlu0 %1579
      %v1581 = vsel %vm352, %v1559, 0.0
      %1582 = vadd.xlane.f32.xlu0 %v1581
      %v1583 = vpop.xlane.xlu0 %1582
      %v1584 = vpack.c.bf16 %v1547, %v1545
      %v1585 = vpack.c.bf16 %v1551, %v1549
      %v1586 = vpack.c.bf16 %v1555, %v1553
      %v1587 = vpack.c.bf16 %v1559, %v1557
      %1592 = vrot.lane.b32.xlu0 %v1399, 80
      %v1593 = vpop.permute.xlu0 %1592
      %1594 = vrot.lane.b32.xlu0 %v1400, 80
      %v1595 = vpop.permute.xlu0 %1594
      %1596 = vrot.lane.b32.xlu0 %v1401, 80
      %v1597 = vpop.permute.xlu0 %1596
      %1598 = vrot.lane.b32.xlu0 %v1402, 80
      %v1599 = vpop.permute.xlu0 %1598
      %v1605 = vsel %vm352, %v1584, 0
      %v1608 = vsel %vm352, %v1585, 0
      %v1611 = vsel %vm352, %v1586, 0
      %v1614 = vsel %vm352, %v1587, 0
      %1616 = vmatprep.subr.bf16.mxu0 0
      %1617 = vmatpush1.bf16.msra.mxu0 %v1593
      %1618 = vmatprep.subr.bf16.mxu0 0
      %1619 = vmatpush1.bf16.msra.mxu0 %v1595
      %1620 = vmatprep.subr.bf16.mxu0 0
      %1621 = vmatpush1.bf16.msra.mxu0 %v1597
      %1622 = vmatprep.subr.bf16.mxu0 0
      %1623 = vmatpush1.bf16.msra.mxu0 %v1599
      %1624 = vmatprep.subr.bf16.mxu0 0
      %1625 = vmatpush1.bf16.msra.mxu0 0
      %1626 = vmatprep.subr.bf16.mxu0 0
      %1627 = vmatpush1.bf16.msra.mxu0 0
      %1628 = vmatprep.subr.bf16.mxu0 0
      %1629 = vmatpush1.bf16.msra.mxu0 0
      %1630 = vmatprep.subr.bf16.mxu0 0
      %1631 = vmatpush1.bf16.msra.mxu0 0
      %1632 = vmatprep.subr.bf16.mxu0 0
      %1633 = vmatpush1.bf16.msra.mxu0 0
      %1634 = vmatprep.subr.bf16.mxu0 0
      %1635 = vmatpush1.bf16.msra.mxu0 0
      %1636 = vmatprep.subr.bf16.mxu0 0
      %1637 = vmatpush1.bf16.msra.mxu0 0
      %1638 = vmatprep.subr.bf16.mxu0 0
      %1639 = vmatpush1.bf16.msra.mxu0 0
      %1640 = vmatprep.subr.bf16.mxu0 0
      %1641 = vmatpush1.bf16.msra.mxu0 0
      %1642 = vmatprep.subr.bf16.mxu0 0
      %1643 = vmatpush1.bf16.msra.mxu0 0
      %1644 = vmatprep.subr.bf16.mxu0 0
      %1645 = vmatpush1.bf16.msra.mxu0 0
      %1646 = vmatprep.subr.bf16.mxu0 0
      %1647 = vmatpush1.bf16.msra.mxu0 0
      %1648 = vmatprep.mubr.bf16.mxu0 0
      %1649 = vmatmul.mubr.bf16.gmra.mrb[0].mxu0 %v1605
      %v1650 = vpop.f32.mrb[0].mxu0
      %v1651 = vadd.f32 0.0, %v1650
      %v1652 = vpop.f32.mrb[0].mxu0
      %v1653 = vpop.f32.mrb[0].mxu0
      %v1654 = vadd.f32 0.0, %v1653
      %v1655 = vpop.f32.mrb[0].mxu0
      %1656 = vmatprep.mubr.bf16.mxu0 0
      %1657 = vmatmul.mubr.bf16.gmra.mrb[0].mxu0 %v1608
      %v1658 = vpop.f32.mrb[0].mxu0
      %v1659 = vadd.f32 0.0, %v1658
      %v1660 = vpop.f32.mrb[0].mxu0
      %v1661 = vpop.f32.mrb[0].mxu0
      %v1662 = vadd.f32 0.0, %v1661
      %v1663 = vpop.f32.mrb[0].mxu0
      %1664 = vmatprep.mubr.bf16.mxu0 0
      %1665 = vmatmul.mubr.bf16.gmra.mrb[0].mxu0 %v1611
      %v1666 = vpop.f32.mrb[0].mxu0
      %v1667 = vadd.f32 0.0, %v1666
      %v1668 = vpop.f32.mrb[0].mxu0
      %v1669 = vpop.f32.mrb[0].mxu0
      %v1670 = vadd.f32 0.0, %v1669
      %v1671 = vpop.f32.mrb[0].mxu0
      %1672 = vmatprep.mubr.bf16.mxu0 0
      %1673 = vmatmul.mubr.bf16.gmra.mrb[0].mxu0 %v1614
      %v1674 = vpop.f32.mrb[0].mxu0
      %v1675 = vadd.f32 0.0, %v1674
      %v1676 = vpop.f32.mrb[0].mxu0
      %v1677 = vpop.f32.mrb[0].mxu0
      %v1678 = vadd.f32 0.0, %v1677
      %v1679 = vpop.f32.mrb[0].mxu0
      %1680 = vdwg.mxu0
      %v1681 = vrcp.pop %v1562
      %v1682 = vrcp.pop %v1565
      %v1683 = vrcp.pop %v1568
      %v1684 = vrcp.pop %v1571
      %v1685 = vrcp.pop %v1574
      %v1686 = vrcp.pop %v1577
      %v1687 = vrcp.pop %v1580
      %v1688 = vrcp.pop %v1583
      %v1689 = vmul.f32 %v1651, %v1681
      %v1690 = vmul.f32 %v1654, %v1682
      %v1691 = vmul.f32 %v1659, %v1683
      %v1692 = vmul.f32 %v1662, %v1684
      %v1693 = vmul.f32 %v1667, %v1685
      %v1694 = vmul.f32 %v1670, %v1686
      %v1695 = vmul.f32 %v1675, %v1687
      %v1696 = vmul.f32 %v1678, %v1688
      %v1697 = vpack.c.bf16 %v1690, %v1689
      %v1698 = vpack.c.bf16 %v1692, %v1691
      %v1699 = vpack.c.bf16 %v1694, %v1693
      %v1700 = vpack.c.bf16 %v1696, %v1695
      %1705 = vrot.lane.b32.xlu0 %v1697, 48
      %v1706 = vpop.permute.xlu0 %1705
      %1707 = vrot.lane.b32.xlu0 %v1698, 48
      %v1708 = vpop.permute.xlu0 %1707
      %1709 = vrot.lane.b32.xlu0 %v1699, 48
      %v1710 = vpop.permute.xlu0 %1709
      %1711 = vrot.lane.b32.xlu0 %v1700, 48
      %v1712 = vpop.permute.xlu0 %1711
      %vm1717 = vcmask 523648
      %1718 = vst.msk [vmem:[#allocation3] sm:$0xff] %vm1717, %v1706
      %1719 = vst.msk [vmem:[#allocation3 + $0x8] sm:$0xff] %vm1717, %v1708
      %1720 = vst.msk [vmem:[#allocation3 + $0x10] sm:$0xff] %vm1717, %v1710
      %1721 = vst.msk [vmem:[#allocation3 + $0x18] sm:$0xff] %vm1717, %v1712
      %v1722 = vld [vmem:[#allocation3] sm:$0xff]
      %v1723 = vld [vmem:[#allocation3 + $0x8] sm:$0xff]
      %v1724 = vld [vmem:[#allocation3 + $0x10] sm:$0xff]
      %v1725 = vld [vmem:[#allocation3 + $0x18] sm:$0xff]
      %v1726 = vld [vmem:[%s3] sm:$0xf]
      %v1727 = vld [vmem:[%s3 + $0x4] sm:$0xf]
      %v1728 = vld [vmem:[%s3 + $0x8] sm:$0xf]
      %v1729 = vld [vmem:[%s3 + $0xc] sm:$0xf]
      %v1730 = vld [vmem:[%s3 + $0x10] sm:$0xf]
      %v1731 = vld [vmem:[%s3 + $0x14] sm:$0xf]
      %v1732 = vld [vmem:[%s3 + $0x18] sm:$0xf]
      %v1733 = vld [vmem:[%s3 + $0x1c] sm:$0xf]
      %v1734 = vld [vmem:[%s4] sm:$0x1]
      %v1736 = vlaneseq
      %v1737 = vshrl.u32 %v1736, 7
      %v1738 = vsub.s32 0, %v1737
      %v1739 = vrot.slane %v1734, %v1738
      %v1749 = vunpack.c.l.b16 %v1726
      %v1750 = vunpack.c.l.b16 %v1727
      %v1751 = vunpack.c.l.b16 %v1728
      %v1752 = vunpack.c.l.b16 %v1729
      %v1753 = vunpack.c.l.b16 %v1730
      %v1754 = vunpack.c.l.b16 %v1731
      %v1755 = vunpack.c.l.b16 %v1732
      %v1756 = vunpack.c.l.b16 %v1733
      %v1757 = vpack.c.b16 %v1750, %v1749
      %v1758 = vpack.c.b16 %v1752, %v1751
      %v1759 = vpack.c.b16 %v1754, %v1753
      %v1760 = vpack.c.b16 %v1756, %v1755
      %v1766 = vsel %vm352, %v1722, 0
      %v1769 = vsel %vm352, %v1723, 0
      %v1772 = vsel %vm352, %v1724, 0
      %v1775 = vsel %vm352, %v1725, 0
      %1777 = vmatprep.subr.bf16.mxu0 0
      %1778 = vmatpush1.bf16.msra.mxu0 %v1757
      %1779 = vmatprep.subr.bf16.mxu0 0
      %1780 = vmatpush1.bf16.msra.mxu0 %v1758
      %1781 = vmatprep.subr.bf16.mxu0 0
      %1782 = vmatpush1.bf16.msra.mxu0 %v1759
      %1783 = vmatprep.subr.bf16.mxu0 0
      %1784 = vmatpush1.bf16.msra.mxu0 %v1760
      %1785 = vmatprep.subr.bf16.mxu0 0
      %1786 = vmatpush1.bf16.msra.mxu0 0
      %1787 = vmatprep.subr.bf16.mxu0 0
      %1788 = vmatpush1.bf16.msra.mxu0 0
      %1789 = vmatprep.subr.bf16.mxu0 0
      %1790 = vmatpush1.bf16.msra.mxu0 0
      %1791 = vmatprep.subr.bf16.mxu0 0
      %1792 = vmatpush1.bf16.msra.mxu0 0
      %1793 = vmatprep.subr.bf16.mxu0 0
      %1794 = vmatpush1.bf16.msra.mxu0 0
      %1795 = vmatprep.subr.bf16.mxu0 0
      %1796 = vmatpush1.bf16.msra.mxu0 0
      %1797 = vmatprep.subr.bf16.mxu0 0
      %1798 = vmatpush1.bf16.msra.mxu0 0
      %1799 = vmatprep.subr.bf16.mxu0 0
      %1800 = vmatpush1.bf16.msra.mxu0 0
      %1801 = vmatprep.subr.bf16.mxu0 0
      %1802 = vmatpush1.bf16.msra.mxu0 0
      %1803 = vmatprep.subr.bf16.mxu0 0
      %1804 = vmatpush1.bf16.msra.mxu0 0
      %1805 = vmatprep.subr.bf16.mxu0 0
      %1806 = vmatpush1.bf16.msra.mxu0 0
      %1807 = vmatprep.subr.bf16.mxu0 0
      %1808 = vmatpush1.bf16.msra.mxu0 0
      %1809 = vmatprep.mubr.bf16.mxu0 0
      %1810 = vmatmul.mubr.bf16.gmra.mrb[0].mxu0 %v1766
      %v1811 = vpop.f32.mrb[0].mxu0
      %v1812 = vadd.f32 %v1739, %v1811
      %v1813 = vpop.f32.mrb[0].mxu0
      %v1814 = vpop.f32.mrb[0].mxu0
      %v1815 = vadd.f32 %v1739, %v1814
      %v1816 = vpop.f32.mrb[0].mxu0
      %1817 = vmatprep.mubr.bf16.mxu0 0
      %1818 = vmatmul.mubr.bf16.gmra.mrb[0].mxu0 %v1769
      %v1819 = vpop.f32.mrb[0].mxu0
      %v1820 = vadd.f32 %v1739, %v1819
      %v1821 = vpop.f32.mrb[0].mxu0
      %v1822 = vpop.f32.mrb[0].mxu0
      %v1823 = vadd.f32 %v1739, %v1822
      %v1824 = vpop.f32.mrb[0].mxu0
      %1825 = vmatprep.mubr.bf16.mxu0 0
      %1826 = vmatmul.mubr.bf16.gmra.mrb[0].mxu0 %v1772
      %v1827 = vpop.f32.mrb[0].mxu0
      %v1828 = vadd.f32 %v1739, %v1827
      %v1829 = vpop.f32.mrb[0].mxu0
      %v1830 = vpop.f32.mrb[0].mxu0
      %v1831 = vadd.f32 %v1739, %v1830
      %v1832 = vpop.f32.mrb[0].mxu0
      %1833 = vmatprep.mubr.bf16.mxu0 0
      %1834 = vmatmul.mubr.bf16.gmra.mrb[0].mxu0 %v1775
      %v1835 = vpop.f32.mrb[0].mxu0
      %v1836 = vadd.f32 %v1739, %v1835
      %v1837 = vpop.f32.mrb[0].mxu0
      %v1838 = vpop.f32.mrb[0].mxu0
      %v1839 = vadd.f32 %v1739, %v1838
      %v1840 = vpop.f32.mrb[0].mxu0
      %1841 = vdwg.mxu0
      %v1842 = vadd.f32 %v1812, %v280
      %v1843 = vadd.f32 %v1815, %v281
      %v1844 = vadd.f32 %v1820, %v282
      %v1845 = vadd.f32 %v1823, %v283
      %v1846 = vadd.f32 %v1828, %v284
      %v1847 = vadd.f32 %v1831, %v285
      %v1848 = vadd.f32 %v1836, %v286
      %v1849 = vadd.f32 %v1839, %v287
      %v1850 = vsel %vm352, %v1842, 0.0
      %1851 = vadd.xlane.f32.xlu0 %v1850
      %v1852 = vpop.xlane.xlu0 %1851
      %v1853 = vsel %vm352, %v1843, 0.0
      %1854 = vadd.xlane.f32.xlu0 %v1853
      %v1855 = vpop.xlane.xlu0 %1854
      %v1856 = vsel %vm352, %v1844, 0.0
      %1857 = vadd.xlane.f32.xlu0 %v1856
      %v1858 = vpop.xlane.xlu0 %1857
      %v1859 = vsel %vm352, %v1845, 0.0
      %1860 = vadd.xlane.f32.xlu0 %v1859
      %v1861 = vpop.xlane.xlu0 %1860
      %v1862 = vsel %vm352, %v1846, 0.0
      %1863 = vadd.xlane.f32.xlu0 %v1862
      %v1864 = vpop.xlane.xlu0 %1863
      %v1865 = vsel %vm352, %v1847, 0.0
      %1866 = vadd.xlane.f32.xlu0 %v1865
      %v1867 = vpop.xlane.xlu0 %1866
      %v1868 = vsel %vm352, %v1848, 0.0
      %1869 = vadd.xlane.f32.xlu0 %v1868
      %v1870 = vpop.xlane.xlu0 %1869
      %v1871 = vsel %vm352, %v1849, 0.0
      %1872 = vadd.xlane.f32.xlu0 %v1871
      %v1873 = vpop.xlane.xlu0 %1872
      %v1874 = vrcp.pop 64.0
      %v1875 = vmul.f32 %v1852, %v1874
      %v1876 = vmul.f32 %v1855, %v1874
      %v1877 = vmul.f32 %v1858, %v1874
      %v1878 = vmul.f32 %v1861, %v1874
      %v1879 = vmul.f32 %v1864, %v1874
      %v1880 = vmul.f32 %v1867, %v1874
      %v1881 = vmul.f32 %v1870, %v1874
      %v1882 = vmul.f32 %v1873, %v1874
      %v1883 = vsub.f32 %v1842, %v1875
      %v1884 = vsub.f32 %v1843, %v1876
      %v1885 = vsub.f32 %v1844, %v1877
      %v1886 = vsub.f32 %v1845, %v1878
      %v1887 = vsub.f32 %v1846, %v1879
      %v1888 = vsub.f32 %v1847, %v1880
      %v1889 = vsub.f32 %v1848, %v1881
      %v1890 = vsub.f32 %v1849, %v1882
      %v1891 = vmul.f32 %v1883, %v1883
      %v1892 = vmul.f32 %v1884, %v1884
      %v1893 = vmul.f32 %v1885, %v1885
      %v1894 = vmul.f32 %v1886, %v1886
      %v1895 = vmul.f32 %v1887, %v1887
      %v1896 = vmul.f32 %v1888, %v1888
      %v1897 = vmul.f32 %v1889, %v1889
      %v1898 = vmul.f32 %v1890, %v1890
      %v1899 = vsel %vm352, %v1891, 0.0
      %1900 = vadd.xlane.f32.xlu0 %v1899
      %v1901 = vpop.xlane.xlu0 %1900
      %v1902 = vsel %vm352, %v1892, 0.0
      %1903 = vadd.xlane.f32.xlu0 %v1902
      %v1904 = vpop.xlane.xlu0 %1903
      %v1905 = vsel %vm352, %v1893, 0.0
      %1906 = vadd.xlane.f32.xlu0 %v1905
      %v1907 = vpop.xlane.xlu0 %1906
      %v1908 = vsel %vm352, %v1894, 0.0
      %1909 = vadd.xlane.f32.xlu0 %v1908
      %v1910 = vpop.xlane.xlu0 %1909
      %v1911 = vsel %vm352, %v1895, 0.0
      %1912 = vadd.xlane.f32.xlu0 %v1911
      %v1913 = vpop.xlane.xlu0 %1912
      %v1914 = vsel %vm352, %v1896, 0.0
      %1915 = vadd.xlane.f32.xlu0 %v1914
      %v1916 = vpop.xlane.xlu0 %1915
      %v1917 = vsel %vm352, %v1897, 0.0
      %1918 = vadd.xlane.f32.xlu0 %v1917
      %v1919 = vpop.xlane.xlu0 %1918
      %v1920 = vsel %vm352, %v1898, 0.0
      %1921 = vadd.xlane.f32.xlu0 %v1920
      %v1922 = vpop.xlane.xlu0 %1921
      %v1923 = vmul.f32 %v1901, %v1874
      %v1924 = vmul.f32 %v1904, %v1874
      %v1925 = vmul.f32 %v1907, %v1874
      %v1926 = vmul.f32 %v1910, %v1874
      %v1927 = vmul.f32 %v1913, %v1874
      %v1928 = vmul.f32 %v1916, %v1874
      %v1929 = vmul.f32 %v1919, %v1874
      %v1930 = vmul.f32 %v1922, %v1874
      %v1931 = vadd.f32 %v1923, 1e-12
      %v1932 = vadd.f32 %v1924, 1e-12
      %v1933 = vadd.f32 %v1925, 1e-12
      %v1934 = vadd.f32 %v1926, 1e-12
      %v1935 = vadd.f32 %v1927, 1e-12
      %v1936 = vadd.f32 %v1928, 1e-12
      %v1937 = vadd.f32 %v1929, 1e-12
      %v1938 = vadd.f32 %v1930, 1e-12
      %v1939 = vrsqrt.pop %v1931
      %v1940 = vrsqrt.pop %v1932
      %v1941 = vrsqrt.pop %v1933
      %v1942 = vrsqrt.pop %v1934
      %v1943 = vrsqrt.pop %v1935
      %v1944 = vrsqrt.pop %v1936
      %v1945 = vrsqrt.pop %v1937
      %v1946 = vrsqrt.pop %v1938
      %v1947 = vmul.f32 %v1883, %v1939
      %v1948 = vmul.f32 %v1884, %v1940
      %v1949 = vmul.f32 %v1885, %v1941
      %v1950 = vmul.f32 %v1886, %v1942
      %v1951 = vmul.f32 %v1887, %v1943
      %v1952 = vmul.f32 %v1888, %v1944
      %v1953 = vmul.f32 %v1889, %v1945
      %v1954 = vmul.f32 %v1890, %v1946
      %v1955 = vld [vmem:[%s5] sm:$0x1]
      %v1957 = vlaneseq
      %v1958 = vshrl.u32 %v1957, 7
      %v1959 = vsub.s32 0, %v1958
      %v1960 = vrot.slane %v1955, %v1959
      %v1962 = vmul.f32 %v1947, %v1960
      %v1963 = vmul.f32 %v1948, %v1960
      %v1964 = vmul.f32 %v1949, %v1960
      %v1965 = vmul.f32 %v1950, %v1960
      %v1966 = vmul.f32 %v1951, %v1960
      %v1967 = vmul.f32 %v1952, %v1960
      %v1968 = vmul.f32 %v1953, %v1960
      %v1969 = vmul.f32 %v1954, %v1960
      %v1970 = vld [vmem:[%s6] sm:$0x1]
      %v1972 = vlaneseq
      %v1973 = vshrl.u32 %v1972, 7
      %v1974 = vsub.s32 0, %v1973
      %v1975 = vrot.slane %v1970, %v1974
      %v1977 = vadd.f32 %v1962, %v1975
      %v1978 = vadd.f32 %v1963, %v1975
      %v1979 = vadd.f32 %v1964, %v1975
      %v1980 = vadd.f32 %v1965, %v1975
      %v1981 = vadd.f32 %v1966, %v1975
      %v1982 = vadd.f32 %v1967, %v1975
      %v1983 = vadd.f32 %v1968, %v1975
      %v1984 = vadd.f32 %v1969, %v1975
      %1985 = vst.msk [vmem:[%s278] sm:$0xff] %vm352, %v1977
      %1986 = vst.msk [vmem:[%s278 + $0x8] sm:$0xff] %vm352, %v1978
      %1987 = vst.msk [vmem:[%s278 + $0x10] sm:$0xff] %vm352, %v1979
      %1988 = vst.msk [vmem:[%s278 + $0x18] sm:$0xff] %vm352, %v1980
      %1989 = vst.msk [vmem:[%s278 + $0x20] sm:$0xff] %vm352, %v1981
      %1990 = vst.msk [vmem:[%s278 + $0x28] sm:$0xff] %vm352, %v1982
      %1991 = vst.msk [vmem:[%s278 + $0x30] sm:$0xff] %vm352, %v1983
      %1992 = vst.msk [vmem:[%s278 + $0x38] sm:$0xff] %vm352, %v1984
      %p1993 = scmp.lt.s32.totalorder %s18, 1
      %s1994 = scalar_select %p1993, %s18, 1
      %s1995 = smul.addr %s1994, 8
      %s1996 = smul.addr %s1995, 8
      %s1997 = scalar_lea.vmem %s7, %s1996
      // Predicated region
      $region49: #{encoder_projector_qformer.14} parent=47 // pred_check
        %p1998 = pneg %p188
      $region50: #{encoder_projector_qformer.14} parent=47 // pred_check_branch
        %2000 = sbr.rel (%p1998) target = $region52
      $region51: #{encoder_projector_qformer.14} parent=47 // pred_region
        _
      $region52: #{encoder_projector_qformer.14} parent=47 // pred_fallthru
        _
    $region48: #{encoder_projector_qformer.14} parent=5 // pred_fallthru
      _
    %p2001 = scmp.le.s32.totalorder 2, %s13
    // Predicated region
    $region53: #{encoder_projector_qformer.14} parent=5 // pred_check
      %p2002 = pneg %p2001
    $region54: #{encoder_projector_qformer.14} parent=5 // pred_check_branch
      %2004 = sbr.rel (%p2002) target = $region56
    $region55: #{encoder_projector_qformer.14} parent=5 // pred_region
      %s2005 = ssub.s32 %s13, 2
      // Predicated region
      $region57: #{encoder_projector_qformer.14} parent=55 // pred_check
        %p2006 = pneg %p194
      $region58: #{encoder_projector_qformer.14} parent=55 // pred_check_branch
        %2008 = sbr.rel (%p2006) target = $region60
      $region59: #{encoder_projector_qformer.14} parent=55 // pred_region
        %p2009 = scmp.lt.s32.totalorder %s19, 1
        %s2010 = scalar_select %p2009, %s19, 1
        %s2011 = smul.addr %s2010, 8
        %s2012 = smul.addr %s2011, 8
        %s2013 = scalar_lea.vmem %s7, %s2012
      $region60: #{encoder_projector_qformer.14} parent=55 // pred_fallthru
        _
    $region56: #{encoder_projector_qformer.14} parent=5 // pred_fallthru
      _
  $region6: #{encoder_projector_qformer.14} parent=0 // loop_footer
    %s17 = sadd.s32 1, %s13
  $region7: #{encoder_projector_qformer.14} parent=0 // loop_footer_branch
    %12 = sbr.rel target = $region3
  $region8: #{encoder_projector_qformer.14} parent=0 // loop_exit
    _

// kernel: encoder_projector_qformer.17
$region0: #{encoder_projector_qformer.17}
  #allocation0 [shape = 'u32[]', space=smem, size = 0x4, offset = 0x4, fixed_abs, tag = 'smem constant byte address 0x4 - core index']
  #allocation1 [shape = 'u32[144,128]{1,0:T(1,128)}', space=vmem, size = 0x12000, scoped, tag = 'internal scratch']
  %s0 = inlined_call_operand.vmem [shape: f32[128,128], index: 0, kind: input, shape index: {}]
  %s1 = inlined_call_operand.vmem [shape: f32[1,128], index: 1, kind: input, shape index: {}]
  %s2 = inlined_call_operand.vmem [shape: f32[1,128], index: 2, kind: input, shape index: {}]
  %s3 = inlined_call_operand.hbm [shape: f32[128,128], index: 3, kind: output, shape index: {}]
  %s4 = sld [smem:[#allocation0]]
  $region45: #{encoder_projector_qformer.17} parent=0
    _
  %s6 = ssub.s32 1, %s4
  %s7 = scalar_select 0, %s6, %s4
  $region1: #{encoder_projector_qformer.17} parent=0
    #allocation2 [shape = 'u8[65536]{0}', space=vmem, size = 0x10000, scoped, tag = 'output window, operand 0']
    #allocation3 [shape = 's32[2]{0}', space=sflag, size = 0x8, scoped, tag = 'scoped memory for encoder_projector_qformer.17']
    %8 = vsyncpa [#allocation3], 0
    %s9 = scalar_lea.sflag [#allocation3], 1
    %10 = vsyncpa %s9, 0
    loop: start=0, step=1, limit=4
    $region2: #{encoder_projector_qformer.17} parent=1 // loop_pre_header
      _
    $region3: #{encoder_projector_qformer.17} parent=1 // loop_header
      %s12 = sphi 0, %s16
      %p13 = scmp.ge.s32.totalorder %s12, 4
      %s22 = sphi 0, %s24
      %s25 = sphi 0, %s22
      %s26 = sphi 0, %s25
      %s42 = sphi 0, %s26
      %s46 = sphi 0, %s46
      %s48 = sphi 0, %s46
      %s49 = sphi 0, %s48
      %s63 = sphi 0, %s49
      %s67 = sphi 0, %s67
      %s69 = sphi 0, %s67
      %s70 = sphi 0, %s69
      %s84 = sphi 0, %s70
      %s90 = sphi 0, %s92
      %s93 = sphi 0, %s90
      %s94 = sphi 0, %s93
      %s110 = sphi 0, %s94
    $region4: #{encoder_projector_qformer.17} parent=1 // loop_header_branch
      %15 = sbr.rel (%p13) target = $region8
    $region5: #{encoder_projector_qformer.17} parent=1 // loop_body
      %s17 = ssub.s32 %s12, 1
      %s18 = ssub.s32 %s12, 2
      %s19 = sadd.s32 %s12, 1
      %s20 = ssub.s32 %s12, %s19
      %p21 = scmp.eq.s32.totalorder %s20, 0
      %s23 = sadd.s32 %s22, 1
      %s24 = scalar_select %p21, %s22, %s23
      %p27 = pneg %p21
      %p28 = scmp.eq.s32.totalorder %s12, 1
      %p29 = por %p27, %p28
      %p30 = scmp.ne.s32.totalorder %s22, %s25
      %p31 = scmp.eq.s32.totalorder %s12, 0
      %p32 = por %p30, %p31
      %p33 = scmp.ne.s32.totalorder %s22, %s25
      %p34 = scmp.eq.s32.totalorder %s17, 1
      %p35 = por %p33, %p34
      %p36 = scmp.ne.s32.totalorder %s25, %s26
      %p37 = scmp.eq.s32.totalorder %s17, 0
      %p38 = por %p36, %p37
      %p39 = scmp.ne.s32.totalorder %s25, %s26
      %p40 = scmp.eq.s32.totalorder %s18, 1
      %p41 = por %p39, %p40
      %p43 = scmp.ne.s32.totalorder %s26, %s42
      %p44 = scmp.eq.s32.totalorder %s18, 0
      %p45 = por %p43, %p44
      %s47 = sadd.s32 %s46, 1
      %p50 = scmp.eq.s32.totalorder %s12, 1
      %p51 = scmp.ne.s32.totalorder %s46, %s48
      %p52 = scmp.eq.s32.totalorder %s12, 0
      %p53 = por %p51, %p52
      %p54 = scmp.ne.s32.totalorder %s46, %s48
      %p55 = scmp.eq.s32.totalorder %s17, 1
      %p56 = por %p54, %p55
      %p57 = scmp.ne.s32.totalorder %s48, %s49
      %p58 = scmp.eq.s32.totalorder %s17, 0
      %p59 = por %p57, %p58
      %p60 = scmp.ne.s32.totalorder %s48, %s49
      %p61 = scmp.eq.s32.totalorder %s18, 1
      %p62 = por %p60, %p61
      %p64 = scmp.ne.s32.totalorder %s49, %s63
      %p65 = scmp.eq.s32.totalorder %s18, 0
      %p66 = por %p64, %p65
      %s68 = sadd.s32 %s67, 1
      %p71 = scmp.eq.s32.totalorder %s12, 1
      %p72 = scmp.ne.s32.totalorder %s67, %s69
      %p73 = scmp.eq.s32.totalorder %s12, 0
      %p74 = por %p72, %p73
      %p75 = scmp.ne.s32.totalorder %s67, %s69
      %p76 = scmp.eq.s32.totalorder %s17, 1
      %p77 = por %p75, %p76
      %p78 = scmp.ne.s32.totalorder %s69, %s70
      %p79 = scmp.eq.s32.totalorder %s17, 0
      %p80 = por %p78, %p79
      %p81 = scmp.ne.s32.totalorder %s69, %s70
      %p82 = scmp.eq.s32.totalorder %s18, 1
      %p83 = por %p81, %p82
      %p85 = scmp.ne.s32.totalorder %s70, %s84
      %p86 = scmp.eq.s32.totalorder %s18, 0
      %p87 = por %p85, %p86
      %s88 = ssub.s32 %s12, %s19
      %p89 = scmp.eq.s32.totalorder %s88, 0
      %s91 = sadd.s32 %s90, 1
      %s92 = scalar_select %p89, %s90, %s91
      %p95 = pneg %p89
      %p96 = scmp.eq.s32.totalorder %s12, 1
      %p97 = por %p95, %p96
      %p98 = scmp.ne.s32.totalorder %s90, %s93
      %p99 = scmp.eq.s32.totalorder %s12, 0
      %p100 = por %p98, %p99
      %p101 = scmp.ne.s32.totalorder %s90, %s93
      %p102 = scmp.eq.s32.totalorder %s17, 1
      %p103 = por %p101, %p102
      %p104 = scmp.ne.s32.totalorder %s93, %s94
      %p105 = scmp.eq.s32.totalorder %s17, 0
      %p106 = por %p104, %p105
      %p107 = scmp.ne.s32.totalorder %s93, %s94
      %p108 = scmp.eq.s32.totalorder %s18, 1
      %p109 = por %p107, %p108
      %p111 = scmp.ne.s32.totalorder %s94, %s110
      %p112 = scmp.eq.s32.totalorder %s18, 0
      %p113 = por %p111, %p112
      %p114 = scmp.le.s32.totalorder 1, %s12
      %p115 = scmp.lt.s32.totalorder %s12, 3
      %p116 = pnand %p114, %p115
      %p117 = pneg %p116
      // Predicated region
      $region9: #{encoder_projector_qformer.17} parent=5 // pred_check
        _
      $region10: #{encoder_projector_qformer.17} parent=5 // pred_check_branch
        %119 = sbr.rel (%p116) target = $region12
      $region11: #{encoder_projector_qformer.17} parent=5 // pred_region
        %s120 = ssub.s32 %s12, 1
        // Predicated region
        $region13: #{encoder_projector_qformer.17} parent=11 // pred_check
          %p121 = pneg %p59
        $region14: #{encoder_projector_qformer.17} parent=11 // pred_check_branch
          %123 = sbr.rel (%p121) target = $region16
        $region15: #{encoder_projector_qformer.17} parent=11 // pred_region
          _
        $region16: #{encoder_projector_qformer.17} parent=11 // pred_fallthru
          _
        // Predicated region
        $region17: #{encoder_projector_qformer.17} parent=11 // pred_check
          %p124 = pneg %p80
        $region18: #{encoder_projector_qformer.17} parent=11 // pred_check_branch
          %126 = sbr.rel (%p124) target = $region20
        $region19: #{encoder_projector_qformer.17} parent=11 // pred_region
          _
        $region20: #{encoder_projector_qformer.17} parent=11 // pred_fallthru
          _
      $region12: #{encoder_projector_qformer.17} parent=5 // pred_fallthru
        _
      %p127 = scmp.lt.s32.totalorder %s12, 2
      // Predicated region
      $region21: #{encoder_projector_qformer.17} parent=5 // pred_check
        %p128 = pneg %p127
      $region22: #{encoder_projector_qformer.17} parent=5 // pred_check_branch
        %130 = sbr.rel (%p128) target = $region24
      $region23: #{encoder_projector_qformer.17} parent=5 // pred_region
        // Predicated region
        $region25: #{encoder_projector_qformer.17} parent=23 // pred_check
          %p131 = pneg %p32
        $region26: #{encoder_projector_qformer.17} parent=23 // pred_check_branch
          %133 = sbr.rel (%p131) target = $region28
        $region27: #{encoder_projector_qformer.17} parent=23 // pred_region
          %s134 = smul.u32 8, %s12
          %p135 = scmp.lt.s32.totalorder %s134, 15
          %s136 = scalar_select %p135, %s134, 15
          %s137 = smul.addr %s136, 8
          %s138 = scalar_lea.vmem %s0, %s137
          %s139 = smul.u32 8, %s12
        $region28: #{encoder_projector_qformer.17} parent=23 // pred_fallthru
          _
      $region24: #{encoder_projector_qformer.17} parent=5 // pred_fallthru
        _
      %p140 = scmp.le.s32.totalorder 1, %s12
      %p141 = scmp.lt.s32.totalorder %s12, 3
      %p142 = pnand %p140, %p141
      %p143 = pneg %p142
      // Predicated region
      $region29: #{encoder_projector_qformer.17} parent=5 // pred_check
        _
      $region30: #{encoder_projector_qformer.17} parent=5 // pred_check_branch
        %145 = sbr.rel (%p142) target = $region32
      $region31: #{encoder_projector_qformer.17} parent=5 // pred_region
        %s146 = ssub.s32 %s12, 1
        %s147 = smul.u32 8, %s17
        %p148 = scmp.lt.s32.totalorder %s147, 15
        %s149 = scalar_select %p148, %s147, 15
        %s150 = smul.addr %s149, 8
        %s151 = scalar_lea.vmem %s0, %s150
        %p152 = pneg %p38
        %p153 = pneg %p35
        %p154 = pneg %p59
        %p155 = pneg %p56
        %p156 = pneg %p80
        %p157 = pneg %p77
        %p158 = pneg %p106
        %p159 = pneg %p103
        %s160 = sand.u32 %s93, 1
        %s161 = scalar_lea.sflag [#allocation3], %s160
        %s162 = sand.u32 %s93, 1
        %s163 = smul.addr %s162, 64
        %s164 = scalar_lea.vmem [#allocation2], %s163
        %s165 = smul.u32 8, %s17
        %p166 = scmp.lt.s32.totalorder %s165, 15
        %s167 = scalar_select %p166, %s165, 15
        %s168 = smul.addr %s167, 8
        %s169 = scalar_lea.vmem %s0, %s168
        %s170 = smul.u32 8, %s17
        %s171 = smul.u32 8, %s17
        %v172 = vld [vmem:[%s169] sm:$0xff]
        %v173 = vld [vmem:[%s169 + $0x8] sm:$0xff]
        %v174 = vld [vmem:[%s169 + $0x10] sm:$0xff]
        %v175 = vld [vmem:[%s169 + $0x18] sm:$0xff]
        %v176 = vld [vmem:[%s169 + $0x20] sm:$0xff]
        %v177 = vld [vmem:[%s169 + $0x28] sm:$0xff]
        %v178 = vld [vmem:[%s169 + $0x30] sm:$0xff]
        %v179 = vld [vmem:[%s169 + $0x38] sm:$0xff]
        %180 = vadd.xlane.f32.xlu0 %v172
        %v181 = vpop.xlane.xlu0 %180
        %182 = vadd.xlane.f32.xlu0 %v173
        %v183 = vpop.xlane.xlu0 %182
        %184 = vadd.xlane.f32.xlu0 %v174
        %v185 = vpop.xlane.xlu0 %184
        %186 = vadd.xlane.f32.xlu0 %v175
        %v187 = vpop.xlane.xlu0 %186
        %188 = vadd.xlane.f32.xlu0 %v176
        %v189 = vpop.xlane.xlu0 %188
        %190 = vadd.xlane.f32.xlu0 %v177
        %v191 = vpop.xlane.xlu0 %190
        %192 = vadd.xlane.f32.xlu0 %v178
        %v193 = vpop.xlane.xlu0 %192
        %194 = vadd.xlane.f32.xlu0 %v179
        %v195 = vpop.xlane.xlu0 %194
        %v196 = vrcp.pop 128.0
        %v197 = vmul.f32 %v181, %v196
        %v198 = vmul.f32 %v183, %v196
        %v199 = vmul.f32 %v185, %v196
        %v200 = vmul.f32 %v187, %v196
        %v201 = vmul.f32 %v189, %v196
        %v202 = vmul.f32 %v191, %v196
        %v203 = vmul.f32 %v193, %v196
        %v204 = vmul.f32 %v195, %v196
        %v205 = vsub.f32 %v172, %v197
        %v206 = vsub.f32 %v173, %v198
        %v207 = vsub.f32 %v174, %v199
        %v208 = vsub.f32 %v175, %v200
        %v209 = vsub.f32 %v176, %v201
        %v210 = vsub.f32 %v177, %v202
        %v211 = vsub.f32 %v178, %v203
        %v212 = vsub.f32 %v179, %v204
        %v213 = vmul.f32 %v205, %v205
        %v214 = vmul.f32 %v206, %v206
        %v215 = vmul.f32 %v207, %v207
        %v216 = vmul.f32 %v208, %v208
        %v217 = vmul.f32 %v209, %v209
        %v218 = vmul.f32 %v210, %v210
        %v219 = vmul.f32 %v211, %v211
        %v220 = vmul.f32 %v212, %v212
        %221 = vadd.xlane.f32.xlu0 %v213
        %v222 = vpop.xlane.xlu0 %221
        %223 = vadd.xlane.f32.xlu0 %v214
        %v224 = vpop.xlane.xlu0 %223
        %225 = vadd.xlane.f32.xlu0 %v215
        %v226 = vpop.xlane.xlu0 %225
        %227 = vadd.xlane.f32.xlu0 %v216
        %v228 = vpop.xlane.xlu0 %227
        %229 = vadd.xlane.f32.xlu0 %v217
        %v230 = vpop.xlane.xlu0 %229
        %231 = vadd.xlane.f32.xlu0 %v218
        %v232 = vpop.xlane.xlu0 %231
        %233 = vadd.xlane.f32.xlu0 %v219
        %v234 = vpop.xlane.xlu0 %233
        %235 = vadd.xlane.f32.xlu0 %v220
        %v236 = vpop.xlane.xlu0 %235
        %v237 = vmul.f32 %v222, %v196
        %v238 = vmul.f32 %v224, %v196
        %v239 = vmul.f32 %v226, %v196
        %v240 = vmul.f32 %v228, %v196
        %v241 = vmul.f32 %v230, %v196
        %v242 = vmul.f32 %v232, %v196
        %v243 = vmul.f32 %v234, %v196
        %v244 = vmul.f32 %v236, %v196
        %v245 = vadd.f32 %v237, 1e-05
        %v246 = vadd.f32 %v238, 1e-05
        %v247 = vadd.f32 %v239, 1e-05
        %v248 = vadd.f32 %v240, 1e-05
        %v249 = vadd.f32 %v241, 1e-05
        %v250 = vadd.f32 %v242, 1e-05
        %v251 = vadd.f32 %v243, 1e-05
        %v252 = vadd.f32 %v244, 1e-05
        %v253 = vrsqrt.pop %v245
        %v254 = vrsqrt.pop %v246
        %v255 = vrsqrt.pop %v247
        %v256 = vrsqrt.pop %v248
        %v257 = vrsqrt.pop %v249
        %v258 = vrsqrt.pop %v250
        %v259 = vrsqrt.pop %v251
        %v260 = vrsqrt.pop %v252
        %v261 = vmul.f32 %v205, %v253
        %v262 = vmul.f32 %v206, %v254
        %v263 = vmul.f32 %v207, %v255
        %v264 = vmul.f32 %v208, %v256
        %v265 = vmul.f32 %v209, %v257
        %v266 = vmul.f32 %v210, %v258
        %v267 = vmul.f32 %v211, %v259
        %v268 = vmul.f32 %v212, %v260
        %v269 = vld [vmem:[%s1] sm:$0x1]
        %v271 = vlaneseq
        %v272 = vshrl.u32 %v271, 7
        %v273 = vsub.s32 0, %v272
        %v274 = vrot.slane %v269, %v273
        %v276 = vmul.f32 %v261, %v274
        %v277 = vmul.f32 %v262, %v274
        %v278 = vmul.f32 %v263, %v274
        %v279 = vmul.f32 %v264, %v274
        %v280 = vmul.f32 %v265, %v274
        %v281 = vmul.f32 %v266, %v274
        %v282 = vmul.f32 %v267, %v274
        %v283 = vmul.f32 %v268, %v274
        %v284 = vld [vmem:[%s2] sm:$0x1]
        %v286 = vlaneseq
        %v287 = vshrl.u32 %v286, 7
        %v288 = vsub.s32 0, %v287
        %v289 = vrot.slane %v284, %v288
        %v291 = vadd.f32 %v276, %v289
        %v292 = vadd.f32 %v277, %v289
        %v293 = vadd.f32 %v278, %v289
        %v294 = vadd.f32 %v279, %v289
        %v295 = vadd.f32 %v280, %v289
        %v296 = vadd.f32 %v281, %v289
        %v297 = vadd.f32 %v282, %v289
        %v298 = vadd.f32 %v283, %v289
        %299 = vst [vmem:[%s164] sm:$0xff] %v291
        %300 = vst [vmem:[%s164 + $0x8] sm:$0xff] %v292
        %301 = vst [vmem:[%s164 + $0x10] sm:$0xff] %v293
        %302 = vst [vmem:[%s164 + $0x18] sm:$0xff] %v294
        %303 = vst [vmem:[%s164 + $0x20] sm:$0xff] %v295
        %304 = vst [vmem:[%s164 + $0x28] sm:$0xff] %v296
        %305 = vst [vmem:[%s164 + $0x30] sm:$0xff] %v297
        %306 = vst [vmem:[%s164 + $0x38] sm:$0xff] %v298
        %s307 = sand.u32 %s93, 1
        %s308 = scalar_lea.sflag [#allocation3], %s307
        %s309 = sand.u32 %s93, 1
        %s310 = smul.addr %s309, 64
        %s311 = scalar_lea.vmem [#allocation2], %s310
        // Predicated region
        $region33: #{encoder_projector_qformer.17} parent=31 // pred_check
          %p312 = pneg %p103
        $region34: #{encoder_projector_qformer.17} parent=31 // pred_check_branch
          %314 = sbr.rel (%p312) target = $region36
        $region35: #{encoder_projector_qformer.17} parent=31 // pred_region
          %s315 = smul.u32 8, %s17
          %s317 = ssub.s32 1024, 1024
          %318 = vsyncadd %s308, %s317
          %s319 = smul.addr %s315, 128
          %s320 = scalar_lea.hbm %s3, %s319
          %s321 = sshll.u32 %s311, 4
          %s322 = int_to_ptr.vmem [resolvable:$true] %s321
          %327 = dma.vmem_to_hbm [thread:$0]  %s322, 1024, %s320, %s308, 128, 128, 8
        $region36: #{encoder_projector_qformer.17} parent=31 // pred_fallthru
          _
      $region32: #{encoder_projector_qformer.17} parent=5 // pred_fallthru
        _
      %p328 = scmp.le.s32.totalorder 2, %s12
      // Predicated region
      $region37: #{encoder_projector_qformer.17} parent=5 // pred_check
        %p329 = pneg %p328
      $region38: #{encoder_projector_qformer.17} parent=5 // pred_check_branch
        %331 = sbr.rel (%p329) target = $region40
      $region39: #{encoder_projector_qformer.17} parent=5 // pred_region
        %s332 = ssub.s32 %s12, 2
        // Predicated region
        $region41: #{encoder_projector_qformer.17} parent=39 // pred_check
          %p333 = pneg %p109
        $region42: #{encoder_projector_qformer.17} parent=39 // pred_check_branch
          %335 = sbr.rel (%p333) target = $region44
        $region43: #{encoder_projector_qformer.17} parent=39 // pred_region
          %s336 = sand.u32 %s94, 1
          %s337 = scalar_lea.sflag [#allocation3], %s336
          %s338 = sand.u32 %s94, 1
          %s339 = smul.addr %s338, 64
          %s340 = scalar_lea.vmem [#allocation2], %s339
          %341 = dma.done %s337, 1024
        $region44: #{encoder_projector_qformer.17} parent=39 // pred_fallthru
          _
      $region40: #{encoder_projector_qformer.17} parent=5 // pred_fallthru
        _
    $region6: #{encoder_projector_qformer.17} parent=1 // loop_footer
      %s16 = sadd.s32 1, %s12
    $region7: #{encoder_projector_qformer.17} parent=1 // loop_footer_branch
      %11 = sbr.rel target = $region3
    $region8: #{encoder_projector_qformer.17} parent=1 // loop_exit
      _
    %342 = vsyncpa [#allocation3], 1
    %s343 = scalar_lea.sflag [#allocation3], 1
    %344 = vsyncpa %s343, 1

</llo_original>
